<compile_context>
chip_gen: v5e
topology: v5e:2x2
jax: 0.10.0
libtpu: 0.0.40
codegen_flags: <defaults>
</compile_context>

<pallas_src>
import jax
import jax.numpy as jnp
from jax.experimental import pallas as pl
from jax.experimental.pallas import tpu as pltpu

EPS = 1e-5      # nn.BatchNorm3d default eps
LANE = 128      # TPU lane width


def _round_up(x, m):
    return (x + m - 1) // m * m


def _pick_tile(m, cap=4096):
    """Largest multiple-of-8 divisor of m that is <= cap (falls back to m)."""
    if m <= cap:
        return m
    t = cap - (cap % 8)
    while t >= 8:
        if m % t == 0:
            return t
        t -= 8
    return m


# ---------------------------------------------------------------------------
# Kernel 1: 3x3x3 conv (stride=1, pad=1, no bias) for one sample.
#   - kw taps pre-folded into the lane dim (wrapper), kh taps folded into the
#     output lanes of the weight matrix -> 3 MXU matmuls per sample (one per kd).
#   - accumulates into y_ref (explicit VMEM accumulator, no giant live value).
#   - also emits per-sample BatchNorm partial moments (sum, sum of squares).
# ---------------------------------------------------------------------------
def _conv_stats_kernel(xw_ref, w_ref, y_ref, ssum_ref, ssq_ref):
    # xw_ref : (1, D+2, (H+2)*W, 3*CP)  bf16  (kw folded into lanes, halo included)
    # w_ref  : (3, 3*CP, 3*CPo)         bf16  (one matrix per kd, kh folded into out lanes)
    # y_ref  : (1, D, H*W, CPo)         f32   raw conv output (pre-BN) / accumulator
    # ssum_ref / ssq_ref : (1, 1, CPo)  f32   per-sample BN partial moments
    _, Dp, HpW, K = xw_ref.shape
    _, D, HW, CPo = y_ref.shape
    W = (HpW - HW) // 2          # Hp*W - H*W = 2*W
    CO3 = w_ref.shape[-1]        # 3 * CPo

    for kd in range(3):
        # Leading-dim slab slice + sublane-aligned merge -> contiguous MXU operand
        # (no per-tap relayout copy, unlike slicing the kh dim per tap).
        xs = xw_ref[0, kd:kd + D].reshape(D * HpW, K)                  # bf16
        # Single MXU matmul per kd; the 3 kh taps live in the output lane dim.
        r = jnp.dot(xs, w_ref[kd], preferred_element_type=jnp.float32)  # (D*HpW, 3*CPo) f32
        r = r.reshape(D, HpW, CO3)
        # Fold each kh tap back as a sublane-aligned row offset (kh*W is a multiple of 8
        # when W % 8 == 0); the extra halo rows are simply dropped.
        contrib = (r[:, 0 * W:0 * W + HW, 0 * CPo:1 * CPo]
                   + r[:, 1 * W:1 * W + HW, 1 * CPo:2 * CPo]
                   + r[:, 2 * W:2 * W + HW, 2 * CPo:3 * CPo])
        contrib = contrib.reshape(1, D, HW, CPo)
        if kd == 0:
            y_ref[...] = contrib
        else:
            y_ref[...] += contrib          # explicit VMEM accumulator

    y = y_ref[...]
    ssum_ref[...] = jnp.sum(y, axis=(1, 2)).reshape(1, 1, CPo)
    ssq_ref[...] = jnp.sum(y * y, axis=(1, 2)).reshape(1, 1, CPo)


# ---------------------------------------------------------------------------
# Kernel 2: fused BN affine (precomputed scale/shift) + ReLU, optional residual.
# Math stays in f32 vregs; only the final store casts to the output dtype.
# ---------------------------------------------------------------------------
def _bn_relu_kernel(y_ref, scale_ref, shift_ref, o_ref):
    o_ref[...] = jnp.maximum(
        y_ref[...] * scale_ref[...] + shift_ref[...], 0.0).astype(o_ref.dtype)


def _bn_add_relu_kernel(y_ref, res_ref, scale_ref, shift_ref, o_ref):
    o_ref[...] = jnp.maximum(
        y_ref[...] * scale_ref[...] + shift_ref[...] + res_ref[...], 0.0
    ).astype(o_ref.dtype)


# ---------------------------------------------------------------------------
# pallas_call wrappers
# ---------------------------------------------------------------------------
def _conv3d_with_stats(xw, w_taps, spatial):
    # xw     : (N, D+2, (H+2)*W, 3*CP) bf16
    # w_taps : (3, 3*CP, 3*CPo)        bf16
    D, H, W = spatial
    N, Dp, HpW, K = xw.shape
    CO3 = w_taps.shape[-1]
    CPo = CO3 // 3
    HW = H * W

    cost = pl.CostEstimate(
        flops=2 * N * 3 * D * HpW * K * CO3,
        transcendentals=0,
        bytes_accessed=(xw.size * xw.dtype.itemsize
                        + w_taps.size * w_taps.dtype.itemsize
                        + N * D * HW * CPo * 4 + 2 * N * CPo * 4),
    )
    # TODO(synk): add a depth-tile grid axis with a 2-plane halo (and raise vmem_limit_bytes)
    # for volumes whose per-sample blocks exceed v7x's 64 MiB VMEM; toy sizes fit the defaults.
    return pl.pallas_call(
        _conv_stats_kernel,
        grid=(N,),
        in_specs=[
            pl.BlockSpec((1, Dp, HpW, K), lambda n: (n, 0, 0, 0)),
            # TODO(synk): single-buffer this resident weight block (pipeline_mode=pl.Buffered(1))
            # to reclaim the redundant second copy at large channel counts.
            pl.BlockSpec((3, K, CO3), lambda n: (0, 0, 0)),
        ],
        out_specs=[
            pl.BlockSpec((1, D, HW, CPo), lambda n: (n, 0, 0, 0)),
            pl.BlockSpec((1, 1, CPo), lambda n: (n, 0, 0)),
            pl.BlockSpec((1, 1, CPo), lambda n: (n, 0, 0)),
        ],
        out_shape=[
            jax.ShapeDtypeStruct((N, D, HW, CPo), jnp.float32),
            jax.ShapeDtypeStruct((N, 1, CPo), jnp.float32),
            jax.ShapeDtypeStruct((N, 1, CPo), jnp.float32),
        ],
        compiler_params=pltpu.CompilerParams(dimension_semantics=("parallel",)),
        cost_estimate=cost,
    )(xw, w_taps)


def _bn_act(y, scale, shift, residual=None, out_dtype=jnp.float32):
    # y: (N, M, CP) f32; scale/shift: (1, 1, CP) f32; residual: (N, M, CP) f32 or None.
    N, M, CP = y.shape
    TM = _pick_tile(M)
    grid = (N, M // TM)
    blk = pl.BlockSpec((1, TM, CP), lambda n, m: (n, m, 0))
    vec = pl.BlockSpec((1, 1, CP), lambda n, m: (0, 0, 0))
    cp = pltpu.CompilerParams(dimension_semantics=("parallel", "parallel"))
    out_shape = jax.ShapeDtypeStruct((N, M, CP), out_dtype)
    if residual is None:
        return pl.pallas_call(
            _bn_relu_kernel, grid=grid, in_specs=[blk, vec, vec],
            out_specs=blk, out_shape=out_shape, compiler_params=cp,
        )(y, scale, shift)
    return pl.pallas_call(
        _bn_add_relu_kernel, grid=grid, in_specs=[blk, blk, vec, vec],
        out_specs=blk, out_shape=out_shape, compiler_params=cp,
    )(y, residual, scale, shift)


# ---------------------------------------------------------------------------
# Layout glue (plumbing only)
# ---------------------------------------------------------------------------
def _fold_kw(x_cp):
    # (N, D, H, W, CP) -> (N, D+2, (H+2)*W, 3*CP): spatial halo pad, fold the 3 kw taps into
    # the lane dim so every in-kernel access stays lane/sublane aligned.  Done at the caller's
    # dtype (bf16 for both convs).
    # TODO(synk): fuse this into _bn_act's output write (halo-padded kw-folded out_specs) to
    # drop the extra XLA pad+concat HBM round trip between the two convs.
    N, D, H, W, CP = x_cp.shape
    xp = jnp.pad(x_cp, ((0, 0), (1, 1), (1, 1), (1, 1), (0, 0)))
    folded = jnp.concatenate([xp[:, :, :, kw:kw + W, :] for kw in range(3)], axis=-1)
    return folded.reshape(N, D + 2, (H + 2) * W, 3 * CP)


def _weight_taps(w, CP, CPo):
    # torch conv weight (Cout, Cin, kd, kh, kw) -> (3, 3*CP, 3*CPo) bf16:
    #   row    index = kw*CP  + cin   (matches _fold_kw's lane order)
    #   column index = kh*CPo + cout  (kh folded into the output lanes)
    wt = jnp.transpose(w, (2, 4, 1, 3, 0))                     # (kd, kw, Cin, kh, Cout)
    Cin, Cout = wt.shape[2], wt.shape[4]
    wt = jnp.pad(wt, ((0, 0), (0, 0), (0, CP - Cin), (0, 0), (0, CPo - Cout)))
    return wt.reshape(3, 3 * CP, 3 * CPo).astype(jnp.bfloat16)


def _bn_scale_shift(ssum, ssq, gamma, beta, count, CP):
    # Tiny per-channel BN finalize from single-pass moments: scale = g*rsqrt(var+eps),
    # shift = b - mean*scale.  Padded channels have gamma=0 -> scale=shift=0.
    # Note: E[x^2]-E[x]^2 in f32 can lose precision when |mean| >> std (fine for this init).
    total = jnp.sum(ssum, axis=(0, 1))
    total_sq = jnp.sum(ssq, axis=(0, 1))
    mean = total / count
    var = jnp.maximum(total_sq / count - mean * mean, 0.0)     # biased var (training BN)
    inv = jax.lax.rsqrt(var + EPS)
    g = jnp.pad(gamma.astype(jnp.float32), (0, CP - gamma.shape[0]))
    b = jnp.pad(beta.astype(jnp.float32), (0, CP - beta.shape[0]))
    scale = g * inv
    shift = b - mean * scale
    return scale.reshape(1, 1, CP), shift.reshape(1, 1, CP)


# ---------------------------------------------------------------------------
# BasicBlock forward (inplanes == planes, stride=1, dilation=1, downsample=None)
# ---------------------------------------------------------------------------
def basic_block_forward(x_ncdhw, params):
    w1, g1, b1 = params["w1"], params["g1"], params["b1"]
    w2, g2, b2 = params["w2"], params["g2"], params["b2"]

    x = jnp.transpose(x_ncdhw, (0, 2, 3, 4, 1)).astype(jnp.float32)   # NDHWC
    N, D, H, W, Cin = x.shape
    Cout = w1.shape[0]
    assert Cin == Cout, "identity residual requires inplanes == planes (downsample=None)"
    CP = _round_up(Cin, LANE)
    CPo = _round_up(Cout, LANE)
    Ms = D * H * W
    M_total = N * Ms

    x_cp = jnp.pad(x, ((0, 0), (0, 0), (0, 0), (0, 0), (0, CP - Cin)))  # lane-pad channels (f32)

    # conv1 (bf16 HBM stream + MXU operands, f32 accumulation) -> BN1 moments -> BN1+ReLU (bf16)
    xw1 = _fold_kw(x_cp.astype(jnp.bfloat16))
    y1, s1, q1 = _conv3d_with_stats(xw1, _weight_taps(w1, CP, CPo), (D, H, W))
    scale1, shift1 = _bn_scale_shift(s1, q1, g1, b1, M_total, CPo)
    a1 = _bn_act(y1.reshape(N, Ms, CPo), scale1, shift1, out_dtype=jnp.bfloat16)

    # conv2 -> BN2 moments -> BN2 + f32 identity residual + ReLU
    xw2 = _fold_kw(a1.reshape(N, D, H, W, CP))                          # bf16 fold
    y2, s2, q2 = _conv3d_with_stats(xw2, _weight_taps(w2, CP, CPo), (D, H, W))
    scale2, shift2 = _bn_scale_shift(s2, q2, g2, b2, M_total, CPo)
    out = _bn_act(y2.reshape(N, Ms, CPo), scale2, shift2,
                  residual=x_cp.reshape(N, Ms, CP))

    out = out.reshape(N, D, H, W, CP)[..., :Cout]                       # drop lane padding
    return jnp.transpose(out, (0, 4, 1, 2, 3)).astype(x_ncdhw.dtype)    # back to NCDHW


# ---------------------------------------------------------------------------
# Deterministic parameter init (shapes from BasicBlock.__init__)
# ---------------------------------------------------------------------------
def init_params(key, inplanes, planes):
    k1, k2 = jax.random.split(key)
    bound1 = 1.0 / (inplanes * 27) ** 0.5
    bound2 = 1.0 / (planes * 27) ** 0.5
    return {
        "w1": jax.random.uniform(k1, (planes, inplanes, 3, 3, 3), jnp.float32, -bound1, bound1),
        "g1": jnp.ones((planes,), jnp.float32),
        "b1": jnp.zeros((planes,), jnp.float32),
        "w2": jax.random.uniform(k2, (planes, planes, 3, 3, 3), jnp.float32, -bound2, bound2),
        "g2": jnp.ones((planes,), jnp.float32),
        "b2": jnp.zeros((planes,), jnp.float32),
    }


# ---------------------------------------------------------------------------
# Pure-JAX f32 reference for self-check (training-mode BN forward; running stats
# are not modeled).  TODO(synk): running_mean/running_var buffer updates are stateful
# and out of scope for this forward-only kernel.
# ---------------------------------------------------------------------------
def reference_forward(x, params):
    def conv(x, w):
        return jax.lax.conv_general_dilated(
            x, w, window_strides=(1, 1, 1), padding=((1, 1), (1, 1), (1, 1)),
            dimension_numbers=("NCDHW", "OIDHW", "NCDHW"),
            precision=jax.lax.Precision.HIGHEST)

    def bn(y, g, b):
        mean = y.mean(axis=(0, 2, 3, 4), keepdims=True)
        var = ((y - mean) ** 2).mean(axis=(0, 2, 3, 4), keepdims=True)
        return ((y - mean) * jax.lax.rsqrt(var + EPS)
                * g.reshape(1, -1, 1, 1, 1) + b.reshape(1, -1, 1, 1, 1))

    out = jax.nn.relu(bn(conv(x, params["w1"]), params["g1"], params["b1"]))
    out = bn(conv(out, params["w2"]), params["g2"], params["b2"]) + x
    return jax.nn.relu(out)


if __name__ == "__main__":
    key = jax.random.PRNGKey(0)
    kx, kp = jax.random.split(key)

    N, Cin, D, H, W = 2, 4, 8, 8, 8   # inplanes == planes == 4 (downsample=None case)
    planes = 4

    x = jax.random.normal(kx, (N, Cin, D, H, W), jnp.float32)
    params = init_params(kp, Cin, planes)

    fwd = jax.jit(basic_block_forward)
    out = jax.block_until_ready(fwd(x, params))
    assert out.shape == (N, planes, D, H, W), out.shape

    ref = reference_forward(x, params)
    # bf16 MXU operands / bf16 inter-conv activation (f32 accumulation) vs f32 HIGHEST reference.
    if not jnp.allclose(out, ref, atol=5e-2, rtol=5e-2):
        max_err = jnp.max(jnp.abs(out - ref))
        raise AssertionError(f"Pallas output mismatch vs reference, max abs err = {max_err}")

    print("KERNEL_OK")
</pallas_src>

<mosaic_0001>
module attributes {stable_mosaic.version = 11 : i64} {
  func.func @_conv_stats_kernel(%arg0: i32, %arg1: memref<1x10x80x384xbf16, #tpu.memory_space<vmem>>, %arg2: memref<3x384x384xbf16, #tpu.memory_space<vmem>>, %arg3: memref<1x8x64x128xf32, #tpu.memory_space<vmem>>, %arg4: memref<1x1x128xf32, #tpu.memory_space<vmem>>, %arg5: memref<1x1x128xf32, #tpu.memory_space<vmem>>) attributes {dimension_semantics = [#tpu.dimension_semantics<parallel>], iteration_bounds = array<i64: 2>, scalar_prefetch = 0 : i64, scratch_operands = 0 : i64, tpu.core_type = #tpu.core_type<tc>, window_params = [{transform_indices = @transform_0, window_bounds = array<i64: 1, 10, 80, 384>}, {pipeline_mode = #tpu.pipeline_mode<synchronous>, transform_indices = @transform_1, window_bounds = array<i64: 3, 384, 384>}, {transform_indices = @transform_2, window_bounds = array<i64: 1, 8, 64, 128>}, {transform_indices = @transform_3, window_bounds = array<i64: 1, 1, 128>}, {transform_indices = @transform_4, window_bounds = array<i64: 1, 1, 128>}]} {
    %c0 = arith.constant 0 : index
    %c0_0 = arith.constant 0 : index
    %c0_1 = arith.constant 0 : index
    %c0_2 = arith.constant 0 : index
    %0 = vector.load %arg1[%c0, %c0_0, %c0_1, %c0_2] : memref<1x10x80x384xbf16, #tpu.memory_space<vmem>>, vector<1x8x80x384xbf16>
    %1 = vector.shape_cast %0 : vector<1x8x80x384xbf16> to vector<8x80x384xbf16>
    %2 = vector.shape_cast %1 : vector<8x80x384xbf16> to vector<640x384xbf16>
    %c0_3 = arith.constant 0 : index
    %c0_4 = arith.constant 0 : index
    %c0_5 = arith.constant 0 : index
    %3 = vector.load %arg2[%c0_3, %c0_4, %c0_5] : memref<3x384x384xbf16, #tpu.memory_space<vmem>>, vector<1x384x384xbf16>
    %4 = vector.shape_cast %3 : vector<1x384x384xbf16> to vector<384x384xbf16>
    %cst = arith.constant dense<0.000000e+00> : vector<640x384xf32>
    %5 = tpu.matmul %2, %4, %cst {dimension_numbers = #tpu.dot_dimension_numbers<[1], [0], [0], [1], [0, 0, 1, 1], [], []>} : vector<640x384xbf16>, vector<384x384xbf16>, vector<640x384xf32> -> vector<640x384xf32>
    %6 = vector.shape_cast %5 : vector<640x384xf32> to vector<8x80x384xf32>
    %7 = vector.extract_strided_slice %6 {offsets = [0, 0, 0], sizes = [8, 64, 128], strides = [1, 1, 1]} : vector<8x80x384xf32> to vector<8x64x128xf32>
    %8 = vector.extract_strided_slice %6 {offsets = [0, 8, 128], sizes = [8, 64, 128], strides = [1, 1, 1]} : vector<8x80x384xf32> to vector<8x64x128xf32>
    %9 = arith.addf %7, %8 : vector<8x64x128xf32>
    %10 = vector.extract_strided_slice %6 {offsets = [0, 16, 256], sizes = [8, 64, 128], strides = [1, 1, 1]} : vector<8x80x384xf32> to vector<8x64x128xf32>
    %11 = arith.addf %9, %10 : vector<8x64x128xf32>
    %12 = vector.shape_cast %11 : vector<8x64x128xf32> to vector<1x8x64x128xf32>
    %c0_6 = arith.constant 0 : index
    %c0_7 = arith.constant 0 : index
    %c0_8 = arith.constant 0 : index
    %c0_9 = arith.constant 0 : index
    %13 = vector.load %arg3[%c0_6, %c0_7, %c0_8, %c0_9] : memref<1x8x64x128xf32, #tpu.memory_space<vmem>>, vector<1x8x64x128xf32>
    tpu.vector_store %arg3[%c0_6, %c0_7, %c0_8, %c0_9], %12 {strides = array<i32>} : memref<1x8x64x128xf32, #tpu.memory_space<vmem>>, vector<1x8x64x128xf32>,
    %c0_10 = arith.constant 0 : index
    %c1 = arith.constant 1 : index
    %c0_11 = arith.constant 0 : index
    %c0_12 = arith.constant 0 : index
    %14 = vector.load %arg1[%c0_10, %c1, %c0_11, %c0_12] : memref<1x10x80x384xbf16, #tpu.memory_space<vmem>>, vector<1x8x80x384xbf16>
    %15 = vector.shape_cast %14 : vector<1x8x80x384xbf16> to vector<8x80x384xbf16>
    %16 = vector.shape_cast %15 : vector<8x80x384xbf16> to vector<640x384xbf16>
    %c1_13 = arith.constant 1 : index
    %c0_14 = arith.constant 0 : index
    %c0_15 = arith.constant 0 : index
    %17 = vector.load %arg2[%c1_13, %c0_14, %c0_15] : memref<3x384x384xbf16, #tpu.memory_space<vmem>>, vector<1x384x384xbf16>
    %18 = vector.shape_cast %17 : vector<1x384x384xbf16> to vector<384x384xbf16>
    %cst_16 = arith.constant dense<0.000000e+00> : vector<640x384xf32>
    %19 = tpu.matmul %16, %18, %cst_16 {dimension_numbers = #tpu.dot_dimension_numbers<[1], [0], [0], [1], [0, 0, 1, 1], [], []>} : vector<640x384xbf16>, vector<384x384xbf16>, vector<640x384xf32> -> vector<640x384xf32>
    %20 = vector.shape_cast %19 : vector<640x384xf32> to vector<8x80x384xf32>
    %21 = vector.extract_strided_slice %20 {offsets = [0, 0, 0], sizes = [8, 64, 128], strides = [1, 1, 1]} : vector<8x80x384xf32> to vector<8x64x128xf32>
    %22 = vector.extract_strided_slice %20 {offsets = [0, 8, 128], sizes = [8, 64, 128], strides = [1, 1, 1]} : vector<8x80x384xf32> to vector<8x64x128xf32>
    %23 = arith.addf %21, %22 : vector<8x64x128xf32>
    %24 = vector.extract_strided_slice %20 {offsets = [0, 16, 256], sizes = [8, 64, 128], strides = [1, 1, 1]} : vector<8x80x384xf32> to vector<8x64x128xf32>
    %25 = arith.addf %23, %24 : vector<8x64x128xf32>
    %26 = vector.shape_cast %25 : vector<8x64x128xf32> to vector<1x8x64x128xf32>
    %c0_17 = arith.constant 0 : index
    %c0_18 = arith.constant 0 : index
    %c0_19 = arith.constant 0 : index
    %c0_20 = arith.constant 0 : index
    %27 = vector.load %arg3[%c0_17, %c0_18, %c0_19, %c0_20] : memref<1x8x64x128xf32, #tpu.memory_space<vmem>>, vector<1x8x64x128xf32>
    %28 = arith.addf %27, %26 : vector<1x8x64x128xf32>
    %c0_21 = arith.constant 0 : index
    %c0_22 = arith.constant 0 : index
    %c0_23 = arith.constant 0 : index
    %c0_24 = arith.constant 0 : index
    %29 = vector.load %arg3[%c0_21, %c0_22, %c0_23, %c0_24] : memref<1x8x64x128xf32, #tpu.memory_space<vmem>>, vector<1x8x64x128xf32>
    tpu.vector_store %arg3[%c0_21, %c0_22, %c0_23, %c0_24], %28 {strides = array<i32>} : memref<1x8x64x128xf32, #tpu.memory_space<vmem>>, vector<1x8x64x128xf32>,
    %c0_25 = arith.constant 0 : index
    %c2 = arith.constant 2 : index
    %c0_26 = arith.constant 0 : index
    %c0_27 = arith.constant 0 : index
    %30 = vector.load %arg1[%c0_25, %c2, %c0_26, %c0_27] : memref<1x10x80x384xbf16, #tpu.memory_space<vmem>>, vector<1x8x80x384xbf16>
    %31 = vector.shape_cast %30 : vector<1x8x80x384xbf16> to vector<8x80x384xbf16>
    %32 = vector.shape_cast %31 : vector<8x80x384xbf16> to vector<640x384xbf16>
    %c2_28 = arith.constant 2 : index
    %c0_29 = arith.constant 0 : index
    %c0_30 = arith.constant 0 : index
    %33 = vector.load %arg2[%c2_28, %c0_29, %c0_30] : memref<3x384x384xbf16, #tpu.memory_space<vmem>>, vector<1x384x384xbf16>
    %34 = vector.shape_cast %33 : vector<1x384x384xbf16> to vector<384x384xbf16>
    %cst_31 = arith.constant dense<0.000000e+00> : vector<640x384xf32>
    %35 = tpu.matmul %32, %34, %cst_31 {dimension_numbers = #tpu.dot_dimension_numbers<[1], [0], [0], [1], [0, 0, 1, 1], [], []>} : vector<640x384xbf16>, vector<384x384xbf16>, vector<640x384xf32> -> vector<640x384xf32>
    %36 = vector.shape_cast %35 : vector<640x384xf32> to vector<8x80x384xf32>
    %37 = vector.extract_strided_slice %36 {offsets = [0, 0, 0], sizes = [8, 64, 128], strides = [1, 1, 1]} : vector<8x80x384xf32> to vector<8x64x128xf32>
    %38 = vector.extract_strided_slice %36 {offsets = [0, 8, 128], sizes = [8, 64, 128], strides = [1, 1, 1]} : vector<8x80x384xf32> to vector<8x64x128xf32>
    %39 = arith.addf %37, %38 : vector<8x64x128xf32>
    %40 = vector.extract_strided_slice %36 {offsets = [0, 16, 256], sizes = [8, 64, 128], strides = [1, 1, 1]} : vector<8x80x384xf32> to vector<8x64x128xf32>
    %41 = arith.addf %39, %40 : vector<8x64x128xf32>
    %42 = vector.shape_cast %41 : vector<8x64x128xf32> to vector<1x8x64x128xf32>
    %c0_32 = arith.constant 0 : index
    %c0_33 = arith.constant 0 : index
    %c0_34 = arith.constant 0 : index
    %c0_35 = arith.constant 0 : index
    %43 = vector.load %arg3[%c0_32, %c0_33, %c0_34, %c0_35] : memref<1x8x64x128xf32, #tpu.memory_space<vmem>>, vector<1x8x64x128xf32>
    %44 = arith.addf %43, %42 : vector<1x8x64x128xf32>
    %c0_36 = arith.constant 0 : index
    %c0_37 = arith.constant 0 : index
    %c0_38 = arith.constant 0 : index
    %c0_39 = arith.constant 0 : index
    %45 = vector.load %arg3[%c0_36, %c0_37, %c0_38, %c0_39] : memref<1x8x64x128xf32, #tpu.memory_space<vmem>>, vector<1x8x64x128xf32>
    tpu.vector_store %arg3[%c0_36, %c0_37, %c0_38, %c0_39], %44 {strides = array<i32>} : memref<1x8x64x128xf32, #tpu.memory_space<vmem>>, vector<1x8x64x128xf32>,
    %c0_40 = arith.constant 0 : index
    %c0_41 = arith.constant 0 : index
    %c0_42 = arith.constant 0 : index
    %c0_43 = arith.constant 0 : index
    %46 = vector.load %arg3[%c0_40, %c0_41, %c0_42, %c0_43] : memref<1x8x64x128xf32, #tpu.memory_space<vmem>>, vector<1x8x64x128xf32>
    %cst_44 = arith.constant dense<0.000000e+00> : vector<1x128xf32>
    %47 = vector.multi_reduction <add>, %46, %cst_44 [1, 2] : vector<1x8x64x128xf32> to vector<1x128xf32>
    %48 = vector.shape_cast %47 : vector<1x128xf32> to vector<1x1x128xf32>
    %c0_45 = arith.constant 0 : index
    %c0_46 = arith.constant 0 : index
    %c0_47 = arith.constant 0 : index
    %49 = vector.load %arg4[%c0_45, %c0_46, %c0_47] : memref<1x1x128xf32, #tpu.memory_space<vmem>>, vector<1x1x128xf32>
    tpu.vector_store %arg4[%c0_45, %c0_46, %c0_47], %48 {strides = array<i32>} : memref<1x1x128xf32, #tpu.memory_space<vmem>>, vector<1x1x128xf32>,
    %50 = arith.mulf %46, %46 : vector<1x8x64x128xf32>
    %cst_48 = arith.constant dense<0.000000e+00> : vector<1x128xf32>
    %51 = vector.multi_reduction <add>, %50, %cst_48 [1, 2] : vector<1x8x64x128xf32> to vector<1x128xf32>
    %52 = vector.shape_cast %51 : vector<1x128xf32> to vector<1x1x128xf32>
    %c0_49 = arith.constant 0 : index
    %c0_50 = arith.constant 0 : index
    %c0_51 = arith.constant 0 : index
    %53 = vector.load %arg5[%c0_49, %c0_50, %c0_51] : memref<1x1x128xf32, #tpu.memory_space<vmem>>, vector<1x1x128xf32>
    tpu.vector_store %arg5[%c0_49, %c0_50, %c0_51], %52 {strides = array<i32>} : memref<1x1x128xf32, #tpu.memory_space<vmem>>, vector<1x1x128xf32>,
    return
  }
  func.func @transform_0(%arg0: i32) -> (i32, i32, i32, i32) {
    %c0_i32 = arith.constant 0 : i32
    %c0_i32_0 = arith.constant 0 : i32
    %c0_i32_1 = arith.constant 0 : i32
    %c0_i32_2 = arith.constant 0 : i32
    return %arg0, %c0_i32, %c0_i32_0, %c0_i32_1 : i32, i32, i32, i32
  }
  func.func @transform_1(%arg0: i32) -> (i32, i32, i32) {
    %c0_i32 = arith.constant 0 : i32
    %c0_i32_0 = arith.constant 0 : i32
    %c0_i32_1 = arith.constant 0 : i32
    %c0_i32_2 = arith.constant 0 : i32
    return %c0_i32, %c0_i32_0, %c0_i32_1 : i32, i32, i32
  }
  func.func @transform_2(%arg0: i32) -> (i32, i32, i32, i32) {
    %c0_i32 = arith.constant 0 : i32
    %c0_i32_0 = arith.constant 0 : i32
    %c0_i32_1 = arith.constant 0 : i32
    %c0_i32_2 = arith.constant 0 : i32
    return %arg0, %c0_i32, %c0_i32_0, %c0_i32_1 : i32, i32, i32, i32
  }
  func.func @transform_3(%arg0: i32) -> (i32, i32, i32) {
    %c0_i32 = arith.constant 0 : i32
    %c0_i32_0 = arith.constant 0 : i32
    %c0_i32_1 = arith.constant 0 : i32
    return %arg0, %c0_i32, %c0_i32_0 : i32, i32, i32
  }
  func.func @transform_4(%arg0: i32) -> (i32, i32, i32) {
    %c0_i32 = arith.constant 0 : i32
    %c0_i32_0 = arith.constant 0 : i32
    %c0_i32_1 = arith.constant 0 : i32
    return %arg0, %c0_i32, %c0_i32_0 : i32, i32, i32
  }
}

module attributes {stable_mosaic.version = 11 : i64} {
  func.func @_bn_relu_kernel(%arg0: i32, %arg1: i32, %arg2: memref<1x512x128xf32, #tpu.memory_space<vmem>>, %arg3: memref<1x1x128xf32, #tpu.memory_space<vmem>>, %arg4: memref<1x1x128xf32, #tpu.memory_space<vmem>>, %arg5: memref<1x512x128xbf16, #tpu.memory_space<vmem>>) attributes {dimension_semantics = [#tpu.dimension_semantics<parallel>, #tpu.dimension_semantics<parallel>], iteration_bounds = array<i64: 2, 1>, scalar_prefetch = 0 : i64, scratch_operands = 0 : i64, tpu.core_type = #tpu.core_type<tc>, window_params = [{transform_indices = @transform_0, window_bounds = array<i64: 1, 512, 128>}, {pipeline_mode = #tpu.pipeline_mode<synchronous>, transform_indices = @transform_1, window_bounds = array<i64: 1, 1, 128>}, {pipeline_mode = #tpu.pipeline_mode<synchronous>, transform_indices = @transform_2, window_bounds = array<i64: 1, 1, 128>}, {transform_indices = @transform_3, window_bounds = array<i64: 1, 512, 128>}]} {
    %c0 = arith.constant 0 : index
    %c0_0 = arith.constant 0 : index
    %c0_1 = arith.constant 0 : index
    %0 = vector.load %arg2[%c0, %c0_0, %c0_1] : memref<1x512x128xf32, #tpu.memory_space<vmem>>, vector<1x512x128xf32>
    %c0_2 = arith.constant 0 : index
    %c0_3 = arith.constant 0 : index
    %c0_4 = arith.constant 0 : index
    %1 = vector.load %arg3[%c0_2, %c0_3, %c0_4] : memref<1x1x128xf32, #tpu.memory_space<vmem>>, vector<1x1x128xf32>
    %2 = vector.broadcast %1 : vector<1x1x128xf32> to vector<1x512x128xf32>
    %3 = arith.mulf %0, %2 : vector<1x512x128xf32>
    %c0_5 = arith.constant 0 : index
    %c0_6 = arith.constant 0 : index
    %c0_7 = arith.constant 0 : index
    %4 = vector.load %arg4[%c0_5, %c0_6, %c0_7] : memref<1x1x128xf32, #tpu.memory_space<vmem>>, vector<1x1x128xf32>
    %5 = vector.broadcast %4 : vector<1x1x128xf32> to vector<1x512x128xf32>
    %6 = arith.addf %3, %5 : vector<1x512x128xf32>
    %cst = arith.constant 0.000000e+00 : f32
    %7 = vector.broadcast %cst : f32 to vector<1x512x128xf32>
    %8 = arith.maximumf %6, %7 : vector<1x512x128xf32>
    %9 = arith.truncf %8 : vector<1x512x128xf32> to vector<1x512x128xbf16>
    %c0_8 = arith.constant 0 : index
    %c0_9 = arith.constant 0 : index
    %c0_10 = arith.constant 0 : index
    %10 = vector.load %arg5[%c0_8, %c0_9, %c0_10] : memref<1x512x128xbf16, #tpu.memory_space<vmem>>, vector<1x512x128xbf16>
    tpu.vector_store %arg5[%c0_8, %c0_9, %c0_10], %9 {strides = array<i32>} : memref<1x512x128xbf16, #tpu.memory_space<vmem>>, vector<1x512x128xbf16>,
    return
  }
  func.func @transform_0(%arg0: i32, %arg1: i32) -> (i32, i32, i32) {
    %c0_i32 = arith.constant 0 : i32
    %c0_i32_0 = arith.constant 0 : i32
    return %arg0, %arg1, %c0_i32 : i32, i32, i32
  }
  func.func @transform_1(%arg0: i32, %arg1: i32) -> (i32, i32, i32) {
    %c0_i32 = arith.constant 0 : i32
    %c0_i32_0 = arith.constant 0 : i32
    %c0_i32_1 = arith.constant 0 : i32
    %c0_i32_2 = arith.constant 0 : i32
    return %c0_i32, %c0_i32_0, %c0_i32_1 : i32, i32, i32
  }
  func.func @transform_2(%arg0: i32, %arg1: i32) -> (i32, i32, i32) {
    %c0_i32 = arith.constant 0 : i32
    %c0_i32_0 = arith.constant 0 : i32
    %c0_i32_1 = arith.constant 0 : i32
    %c0_i32_2 = arith.constant 0 : i32
    return %c0_i32, %c0_i32_0, %c0_i32_1 : i32, i32, i32
  }
  func.func @transform_3(%arg0: i32, %arg1: i32) -> (i32, i32, i32) {
    %c0_i32 = arith.constant 0 : i32
    %c0_i32_0 = arith.constant 0 : i32
    return %arg0, %arg1, %c0_i32 : i32, i32, i32
  }
}

module attributes {stable_mosaic.version = 11 : i64} {
  func.func @_bn_add_relu_kernel(%arg0: i32, %arg1: i32, %arg2: memref<1x512x128xf32, #tpu.memory_space<vmem>>, %arg3: memref<1x512x128xf32, #tpu.memory_space<vmem>>, %arg4: memref<1x1x128xf32, #tpu.memory_space<vmem>>, %arg5: memref<1x1x128xf32, #tpu.memory_space<vmem>>, %arg6: memref<1x512x128xf32, #tpu.memory_space<vmem>>) attributes {dimension_semantics = [#tpu.dimension_semantics<parallel>, #tpu.dimension_semantics<parallel>], iteration_bounds = array<i64: 2, 1>, scalar_prefetch = 0 : i64, scratch_operands = 0 : i64, tpu.core_type = #tpu.core_type<tc>, window_params = [{transform_indices = @transform_0, window_bounds = array<i64: 1, 512, 128>}, {transform_indices = @transform_1, window_bounds = array<i64: 1, 512, 128>}, {pipeline_mode = #tpu.pipeline_mode<synchronous>, transform_indices = @transform_2, window_bounds = array<i64: 1, 1, 128>}, {pipeline_mode = #tpu.pipeline_mode<synchronous>, transform_indices = @transform_3, window_bounds = array<i64: 1, 1, 128>}, {transform_indices = @transform_4, window_bounds = array<i64: 1, 512, 128>}]} {
    %c0 = arith.constant 0 : index
    %c0_0 = arith.constant 0 : index
    %c0_1 = arith.constant 0 : index
    %0 = vector.load %arg2[%c0, %c0_0, %c0_1] : memref<1x512x128xf32, #tpu.memory_space<vmem>>, vector<1x512x128xf32>
    %c0_2 = arith.constant 0 : index
    %c0_3 = arith.constant 0 : index
    %c0_4 = arith.constant 0 : index
    %1 = vector.load %arg4[%c0_2, %c0_3, %c0_4] : memref<1x1x128xf32, #tpu.memory_space<vmem>>, vector<1x1x128xf32>
    %2 = vector.broadcast %1 : vector<1x1x128xf32> to vector<1x512x128xf32>
    %3 = arith.mulf %0, %2 : vector<1x512x128xf32>
    %c0_5 = arith.constant 0 : index
    %c0_6 = arith.constant 0 : index
    %c0_7 = arith.constant 0 : index
    %4 = vector.load %arg5[%c0_5, %c0_6, %c0_7] : memref<1x1x128xf32, #tpu.memory_space<vmem>>, vector<1x1x128xf32>
    %5 = vector.broadcast %4 : vector<1x1x128xf32> to vector<1x512x128xf32>
    %6 = arith.addf %3, %5 : vector<1x512x128xf32>
    %c0_8 = arith.constant 0 : index
    %c0_9 = arith.constant 0 : index
    %c0_10 = arith.constant 0 : index
    %7 = vector.load %arg3[%c0_8, %c0_9, %c0_10] : memref<1x512x128xf32, #tpu.memory_space<vmem>>, vector<1x512x128xf32>
    %8 = arith.addf %6, %7 : vector<1x512x128xf32>
    %cst = arith.constant 0.000000e+00 : f32
    %9 = vector.broadcast %cst : f32 to vector<1x512x128xf32>
    %10 = arith.maximumf %8, %9 : vector<1x512x128xf32>
    %c0_11 = arith.constant 0 : index
    %c0_12 = arith.constant 0 : index
    %c0_13 = arith.constant 0 : index
    %11 = vector.load %arg6[%c0_11, %c0_12, %c0_13] : memref<1x512x128xf32, #tpu.memory_space<vmem>>, vector<1x512x128xf32>
    tpu.vector_store %arg6[%c0_11, %c0_12, %c0_13], %10 {strides = array<i32>} : memref<1x512x128xf32, #tpu.memory_space<vmem>>, vector<1x512x128xf32>,
    return
  }
  func.func @transform_0(%arg0: i32, %arg1: i32) -> (i32, i32, i32) {
    %c0_i32 = arith.constant 0 : i32
    %c0_i32_0 = arith.constant 0 : i32
    return %arg0, %arg1, %c0_i32 : i32, i32, i32
  }
  func.func @transform_1(%arg0: i32, %arg1: i32) -> (i32, i32, i32) {
    %c0_i32 = arith.constant 0 : i32
    %c0_i32_0 = arith.constant 0 : i32
    return %arg0, %arg1, %c0_i32 : i32, i32, i32
  }
  func.func @transform_2(%arg0: i32, %arg1: i32) -> (i32, i32, i32) {
    %c0_i32 = arith.constant 0 : i32
    %c0_i32_0 = arith.constant 0 : i32
    %c0_i32_1 = arith.constant 0 : i32
    %c0_i32_2 = arith.constant 0 : i32
    return %c0_i32, %c0_i32_0, %c0_i32_1 : i32, i32, i32
  }
  func.func @transform_3(%arg0: i32, %arg1: i32) -> (i32, i32, i32) {
    %c0_i32 = arith.constant 0 : i32
    %c0_i32_0 = arith.constant 0 : i32
    %c0_i32_1 = arith.constant 0 : i32
    %c0_i32_2 = arith.constant 0 : i32
    return %c0_i32, %c0_i32_0, %c0_i32_1 : i32, i32, i32
  }
  func.func @transform_4(%arg0: i32, %arg1: i32) -> (i32, i32, i32) {
    %c0_i32 = arith.constant 0 : i32
    %c0_i32_0 = arith.constant 0 : i32
    return %arg0, %arg1, %c0_i32 : i32, i32, i32
  }
}

</mosaic_0001>

<llo_original>
// kernel: basic_block_forward.5
$region0: #{basic_block_forward.5}
  #allocation0 [shape = 'u32[]', space=smem, size = 0x4, offset = 0x4, fixed_abs, tag = 'smem constant byte address 0x4 - core index']
  #allocation1 [shape = 'u32[72,128]{1,0:T(1,128)}', space=vmem, size = 0x9000, scoped, tag = 'internal scratch']
  %s0 = inlined_call_operand.vmem [shape: f32[2,512,128], index: 0, kind: input, shape index: {}]
  %s1 = inlined_call_operand.vmem [shape: f32[1,1,128], index: 1, kind: input, shape index: {}]
  %s2 = inlined_call_operand.vmem [shape: f32[1,1,128], index: 2, kind: input, shape index: {}]
  %s3 = inlined_call_operand.vmem [shape: bf16[2,512,128], index: 3, kind: output, shape index: {}]
  %s4 = sld [smem:[#allocation0]]
  $region45: #{basic_block_forward.5} parent=0
    _
  %s6 = ssub.s32 1, %s4
  %s7 = scalar_select 0, %s6, %s4
  loop: start=0, step=1, limit=4
  $region2: #{basic_block_forward.5} parent=0 // loop_pre_header
    _
  $region3: #{basic_block_forward.5} parent=0 // loop_header
    %s9 = sphi 0, %s13
    %p10 = scmp.ge.s32.totalorder %s9, 4
    %s16 = sphi 0, %s28
    %s17 = sphi 0, %s24
    %s18 = sphi 0, %s16
    %s19 = sphi 0, %s17
    %s20 = sphi 0, %s18
    %s21 = sphi 0, %s19
    %s33 = sphi 0, %s35
    %s36 = sphi 0, %s33
    %s37 = sphi 0, %s36
    %s53 = sphi 0, %s37
    %s57 = sphi 0, %s57
    %s59 = sphi 0, %s57
    %s60 = sphi 0, %s59
    %s74 = sphi 0, %s60
    %s78 = sphi 0, %s78
    %s80 = sphi 0, %s78
    %s81 = sphi 0, %s80
    %s95 = sphi 0, %s81
    %s103 = sphi 0, %s105
    %s106 = sphi 0, %s103
    %s107 = sphi 0, %s106
    %s123 = sphi 0, %s107
  $region4: #{basic_block_forward.5} parent=0 // loop_header_branch
    %12 = sbr.rel (%p10) target = $region8
  $region5: #{basic_block_forward.5} parent=0 // loop_body
    %s14 = ssub.s32 %s9, 1
    %s15 = ssub.s32 %s9, 2
    %s22 = sadd.s32 1, %s17
    %p23 = scmp.ge.s32.totalorder %s22, 1
    %s24 = scalar_select %p23, 0, %s22
    %s25 = sadd.s32 1, %s16
    %s26 = scalar_select %p23, %s25, %s16
    %p27 = scmp.ge.s32.totalorder %s26, 2
    %s28 = scalar_select %p27, 0, %s26
    %s29 = ssub.s32 %s16, %s28
    %s30 = ssub.s32 %s17, %s24
    %s31 = sor.u32 %s29, %s30
    %p32 = scmp.eq.s32.totalorder %s31, 0
    %s34 = sadd.s32 %s33, 1
    %s35 = scalar_select %p32, %s33, %s34
    %p38 = pneg %p32
    %p39 = scmp.eq.s32.totalorder %s9, 1
    %p40 = por %p38, %p39
    %p41 = scmp.ne.s32.totalorder %s33, %s36
    %p42 = scmp.eq.s32.totalorder %s9, 0
    %p43 = por %p41, %p42
    %p44 = scmp.ne.s32.totalorder %s33, %s36
    %p45 = scmp.eq.s32.totalorder %s14, 1
    %p46 = por %p44, %p45
    %p47 = scmp.ne.s32.totalorder %s36, %s37
    %p48 = scmp.eq.s32.totalorder %s14, 0
    %p49 = por %p47, %p48
    %p50 = scmp.ne.s32.totalorder %s36, %s37
    %p51 = scmp.eq.s32.totalorder %s15, 1
    %p52 = por %p50, %p51
    %p54 = scmp.ne.s32.totalorder %s37, %s53
    %p55 = scmp.eq.s32.totalorder %s15, 0
    %p56 = por %p54, %p55
    %s58 = sadd.s32 %s57, 1
    %p61 = scmp.eq.s32.totalorder %s9, 1
    %p62 = scmp.ne.s32.totalorder %s57, %s59
    %p63 = scmp.eq.s32.totalorder %s9, 0
    %p64 = por %p62, %p63
    %p65 = scmp.ne.s32.totalorder %s57, %s59
    %p66 = scmp.eq.s32.totalorder %s14, 1
    %p67 = por %p65, %p66
    %p68 = scmp.ne.s32.totalorder %s59, %s60
    %p69 = scmp.eq.s32.totalorder %s14, 0
    %p70 = por %p68, %p69
    %p71 = scmp.ne.s32.totalorder %s59, %s60
    %p72 = scmp.eq.s32.totalorder %s15, 1
    %p73 = por %p71, %p72
    %p75 = scmp.ne.s32.totalorder %s60, %s74
    %p76 = scmp.eq.s32.totalorder %s15, 0
    %p77 = por %p75, %p76
    %s79 = sadd.s32 %s78, 1
    %p82 = scmp.eq.s32.totalorder %s9, 1
    %p83 = scmp.ne.s32.totalorder %s78, %s80
    %p84 = scmp.eq.s32.totalorder %s9, 0
    %p85 = por %p83, %p84
    %p86 = scmp.ne.s32.totalorder %s78, %s80
    %p87 = scmp.eq.s32.totalorder %s14, 1
    %p88 = por %p86, %p87
    %p89 = scmp.ne.s32.totalorder %s80, %s81
    %p90 = scmp.eq.s32.totalorder %s14, 0
    %p91 = por %p89, %p90
    %p92 = scmp.ne.s32.totalorder %s80, %s81
    %p93 = scmp.eq.s32.totalorder %s15, 1
    %p94 = por %p92, %p93
    %p96 = scmp.ne.s32.totalorder %s81, %s95
    %p97 = scmp.eq.s32.totalorder %s15, 0
    %p98 = por %p96, %p97
    %s99 = ssub.s32 %s16, %s28
    %s100 = ssub.s32 %s17, %s24
    %s101 = sor.u32 %s99, %s100
    %p102 = scmp.eq.s32.totalorder %s101, 0
    %s104 = sadd.s32 %s103, 1
    %s105 = scalar_select %p102, %s103, %s104
    %p108 = pneg %p102
    %p109 = scmp.eq.s32.totalorder %s9, 1
    %p110 = por %p108, %p109
    %p111 = scmp.ne.s32.totalorder %s103, %s106
    %p112 = scmp.eq.s32.totalorder %s9, 0
    %p113 = por %p111, %p112
    %p114 = scmp.ne.s32.totalorder %s103, %s106
    %p115 = scmp.eq.s32.totalorder %s14, 1
    %p116 = por %p114, %p115
    %p117 = scmp.ne.s32.totalorder %s106, %s107
    %p118 = scmp.eq.s32.totalorder %s14, 0
    %p119 = por %p117, %p118
    %p120 = scmp.ne.s32.totalorder %s106, %s107
    %p121 = scmp.eq.s32.totalorder %s15, 1
    %p122 = por %p120, %p121
    %p124 = scmp.ne.s32.totalorder %s107, %s123
    %p125 = scmp.eq.s32.totalorder %s15, 0
    %p126 = por %p124, %p125
    %p127 = scmp.le.s32.totalorder 1, %s9
    %p128 = scmp.lt.s32.totalorder %s9, 3
    %p129 = pnand %p127, %p128
    %p130 = pneg %p129
    // Predicated region
    $region9: #{basic_block_forward.5} parent=5 // pred_check
      _
    $region10: #{basic_block_forward.5} parent=5 // pred_check_branch
      %132 = sbr.rel (%p129) target = $region12
    $region11: #{basic_block_forward.5} parent=5 // pred_region
      %s133 = ssub.s32 %s9, 1
      // Predicated region
      $region13: #{basic_block_forward.5} parent=11 // pred_check
        %p134 = pneg %p70
      $region14: #{basic_block_forward.5} parent=11 // pred_check_branch
        %136 = sbr.rel (%p134) target = $region16
      $region15: #{basic_block_forward.5} parent=11 // pred_region
        _
      $region16: #{basic_block_forward.5} parent=11 // pred_fallthru
        _
      // Predicated region
      $region17: #{basic_block_forward.5} parent=11 // pred_check
        %p137 = pneg %p91
      $region18: #{basic_block_forward.5} parent=11 // pred_check_branch
        %139 = sbr.rel (%p137) target = $region20
      $region19: #{basic_block_forward.5} parent=11 // pred_region
        _
      $region20: #{basic_block_forward.5} parent=11 // pred_fallthru
        _
    $region12: #{basic_block_forward.5} parent=5 // pred_fallthru
      _
    %p140 = scmp.lt.s32.totalorder %s9, 2
    // Predicated region
    $region21: #{basic_block_forward.5} parent=5 // pred_check
      %p141 = pneg %p140
    $region22: #{basic_block_forward.5} parent=5 // pred_check_branch
      %143 = sbr.rel (%p141) target = $region24
    $region23: #{basic_block_forward.5} parent=5 // pred_region
      // Predicated region
      $region25: #{basic_block_forward.5} parent=23 // pred_check
        %p144 = pneg %p43
      $region26: #{basic_block_forward.5} parent=23 // pred_check_branch
        %146 = sbr.rel (%p144) target = $region28
      $region27: #{basic_block_forward.5} parent=23 // pred_region
        %s147 = smul.u32 64, %s17
        %p148 = scmp.lt.s32.totalorder %s16, 1
        %s149 = scalar_select %p148, %s16, 1
        %p150 = scmp.lt.s32.totalorder %s147, 63
        %s151 = scalar_select %p150, %s147, 63
        %s152 = smul.addr %s149, 64
        %s153 = sadd.s32 %s151, %s152
        %s154 = smul.addr %s153, 8
        %s155 = scalar_lea.vmem %s0, %s154
        %s156 = smul.u32 64, %s17
      $region28: #{basic_block_forward.5} parent=23 // pred_fallthru
        _
    $region24: #{basic_block_forward.5} parent=5 // pred_fallthru
      _
    %p157 = scmp.le.s32.totalorder 1, %s9
    %p158 = scmp.lt.s32.totalorder %s9, 3
    %p159 = pnand %p157, %p158
    %p160 = pneg %p159
    // Predicated region
    $region29: #{basic_block_forward.5} parent=5 // pred_check
      _
    $region30: #{basic_block_forward.5} parent=5 // pred_check_branch
      %162 = sbr.rel (%p159) target = $region32
    $region31: #{basic_block_forward.5} parent=5 // pred_region
      %s163 = ssub.s32 %s9, 1
      %s164 = smul.u32 64, %s19
      %p165 = scmp.lt.s32.totalorder %s18, 1
      %s166 = scalar_select %p165, %s18, 1
      %p167 = scmp.lt.s32.totalorder %s164, 63
      %s168 = scalar_select %p167, %s164, 63
      %s169 = smul.addr %s166, 64
      %s170 = sadd.s32 %s168, %s169
      %s171 = smul.addr %s170, 8
      %s172 = scalar_lea.vmem %s0, %s171
      %p173 = pneg %p49
      %p174 = pneg %p46
      %p175 = pneg %p70
      %p176 = pneg %p67
      %p177 = pneg %p91
      %p178 = pneg %p88
      %p179 = pneg %p119
      %p180 = pneg %p116
      %s181 = smul.u32 64, %s19
      %p182 = scmp.lt.s32.totalorder %s18, 1
      %s183 = scalar_select %p182, %s18, 1
      %p184 = scmp.lt.s32.totalorder %s181, 63
      %s185 = scalar_select %p184, %s181, 63
      %s186 = smul.addr %s183, 64
      %s187 = sadd.s32 %s185, %s186
      %s188 = smul.addr %s187, 4
      %s189 = scalar_lea.vmem %s3, %s188
      %s190 = smul.u32 64, %s19
      %p191 = scmp.lt.s32.totalorder %s18, 1
      %s192 = scalar_select %p191, %s18, 1
      %p193 = scmp.lt.s32.totalorder %s190, 63
      %s194 = scalar_select %p193, %s190, 63
      %s195 = smul.addr %s192, 64
      %s196 = sadd.s32 %s194, %s195
      %s197 = smul.addr %s196, 8
      %s198 = scalar_lea.vmem %s0, %s197
      %s199 = smul.u32 64, %s19
      %s200 = smul.u32 64, %s19
      %p201 = scmp.lt.s32.totalorder %s18, 1
      %s202 = scalar_select %p201, %s18, 1
      %p203 = scmp.lt.s32.totalorder %s200, 63
      %s204 = scalar_select %p203, %s200, 63
      %s205 = smul.addr %s202, 64
      %s206 = sadd.s32 %s204, %s205
      %s207 = smul.addr %s206, 4
      %s208 = scalar_lea.vmem %s3, %s207
      %s209 = smul.u32 64, %s19
      %v210 = vld [vmem:[%s198] sm:$0xff]
      %v211 = vld [vmem:[%s198 + $0x8] sm:$0xff]
      %v212 = vld [vmem:[%s198 + $0x10] sm:$0xff]
      %v213 = vld [vmem:[%s198 + $0x18] sm:$0xff]
      %v214 = vld [vmem:[%s198 + $0x20] sm:$0xff]
      %v215 = vld [vmem:[%s198 + $0x28] sm:$0xff]
      %v216 = vld [vmem:[%s198 + $0x30] sm:$0xff]
      %v217 = vld [vmem:[%s198 + $0x38] sm:$0xff]
      %v218 = vld [vmem:[%s198 + $0x40] sm:$0xff]
      %v219 = vld [vmem:[%s198 + $0x48] sm:$0xff]
      %v220 = vld [vmem:[%s198 + $0x50] sm:$0xff]
      %v221 = vld [vmem:[%s198 + $0x58] sm:$0xff]
      %v222 = vld [vmem:[%s198 + $0x60] sm:$0xff]
      %v223 = vld [vmem:[%s198 + $0x68] sm:$0xff]
      %v224 = vld [vmem:[%s198 + $0x70] sm:$0xff]
      %v225 = vld [vmem:[%s198 + $0x78] sm:$0xff]
      %v226 = vld [vmem:[%s198 + $0x80] sm:$0xff]
      %v227 = vld [vmem:[%s198 + $0x88] sm:$0xff]
      %v228 = vld [vmem:[%s198 + $0x90] sm:$0xff]
      %v229 = vld [vmem:[%s198 + $0x98] sm:$0xff]
      %v230 = vld [vmem:[%s198 + $0xa0] sm:$0xff]
      %v231 = vld [vmem:[%s198 + $0xa8] sm:$0xff]
      %v232 = vld [vmem:[%s198 + $0xb0] sm:$0xff]
      %v233 = vld [vmem:[%s198 + $0xb8] sm:$0xff]
      %v234 = vld [vmem:[%s198 + $0xc0] sm:$0xff]
      %v235 = vld [vmem:[%s198 + $0xc8] sm:$0xff]
      %v236 = vld [vmem:[%s198 + $0xd0] sm:$0xff]
      %v237 = vld [vmem:[%s198 + $0xd8] sm:$0xff]
      %v238 = vld [vmem:[%s198 + $0xe0] sm:$0xff]
      %v239 = vld [vmem:[%s198 + $0xe8] sm:$0xff]
      %v240 = vld [vmem:[%s198 + $0xf0] sm:$0xff]
      %v241 = vld [vmem:[%s198 + $0xf8] sm:$0xff]
      %v242 = vld [vmem:[%s198 + $0x100] sm:$0xff]
      %v243 = vld [vmem:[%s198 + $0x108] sm:$0xff]
      %v244 = vld [vmem:[%s198 + $0x110] sm:$0xff]
      %v245 = vld [vmem:[%s198 + $0x118] sm:$0xff]
      %v246 = vld [vmem:[%s198 + $0x120] sm:$0xff]
      %v247 = vld [vmem:[%s198 + $0x128] sm:$0xff]
      %v248 = vld [vmem:[%s198 + $0x130] sm:$0xff]
      %v249 = vld [vmem:[%s198 + $0x138] sm:$0xff]
      %v250 = vld [vmem:[%s198 + $0x140] sm:$0xff]
      %v251 = vld [vmem:[%s198 + $0x148] sm:$0xff]
      %v252 = vld [vmem:[%s198 + $0x150] sm:$0xff]
      %v253 = vld [vmem:[%s198 + $0x158] sm:$0xff]
      %v254 = vld [vmem:[%s198 + $0x160] sm:$0xff]
      %v255 = vld [vmem:[%s198 + $0x168] sm:$0xff]
      %v256 = vld [vmem:[%s198 + $0x170] sm:$0xff]
      %v257 = vld [vmem:[%s198 + $0x178] sm:$0xff]
      %v258 = vld [vmem:[%s198 + $0x180] sm:$0xff]
      %v259 = vld [vmem:[%s198 + $0x188] sm:$0xff]
      %v260 = vld [vmem:[%s198 + $0x190] sm:$0xff]
      %v261 = vld [vmem:[%s198 + $0x198] sm:$0xff]
      %v262 = vld [vmem:[%s198 + $0x1a0] sm:$0xff]
      %v263 = vld [vmem:[%s198 + $0x1a8] sm:$0xff]
      %v264 = vld [vmem:[%s198 + $0x1b0] sm:$0xff]
      %v265 = vld [vmem:[%s198 + $0x1b8] sm:$0xff]
      %v266 = vld [vmem:[%s198 + $0x1c0] sm:$0xff]
      %v267 = vld [vmem:[%s198 + $0x1c8] sm:$0xff]
      %v268 = vld [vmem:[%s198 + $0x1d0] sm:$0xff]
      %v269 = vld [vmem:[%s198 + $0x1d8] sm:$0xff]
      %v270 = vld [vmem:[%s198 + $0x1e0] sm:$0xff]
      %v271 = vld [vmem:[%s198 + $0x1e8] sm:$0xff]
      %v272 = vld [vmem:[%s198 + $0x1f0] sm:$0xff]
      %v273 = vld [vmem:[%s198 + $0x1f8] sm:$0xff]
      %v274 = vld [vmem:[%s1] sm:$0x1]
      %v276 = vperm.slane %v274, 0
      %v278 = vmul.f32 %v210, %v276
      %v279 = vmul.f32 %v211, %v276
      %v280 = vmul.f32 %v212, %v276
      %v281 = vmul.f32 %v213, %v276
      %v282 = vmul.f32 %v214, %v276
      %v283 = vmul.f32 %v215, %v276
      %v284 = vmul.f32 %v216, %v276
      %v285 = vmul.f32 %v217, %v276
      %v286 = vmul.f32 %v218, %v276
      %v287 = vmul.f32 %v219, %v276
      %v288 = vmul.f32 %v220, %v276
      %v289 = vmul.f32 %v221, %v276
      %v290 = vmul.f32 %v222, %v276
      %v291 = vmul.f32 %v223, %v276
      %v292 = vmul.f32 %v224, %v276
      %v293 = vmul.f32 %v225, %v276
      %v294 = vmul.f32 %v226, %v276
      %v295 = vmul.f32 %v227, %v276
      %v296 = vmul.f32 %v228, %v276
      %v297 = vmul.f32 %v229, %v276
      %v298 = vmul.f32 %v230, %v276
      %v299 = vmul.f32 %v231, %v276
      %v300 = vmul.f32 %v232, %v276
      %v301 = vmul.f32 %v233, %v276
      %v302 = vmul.f32 %v234, %v276
      %v303 = vmul.f32 %v235, %v276
      %v304 = vmul.f32 %v236, %v276
      %v305 = vmul.f32 %v237, %v276
      %v306 = vmul.f32 %v238, %v276
      %v307 = vmul.f32 %v239, %v276
      %v308 = vmul.f32 %v240, %v276
      %v309 = vmul.f32 %v241, %v276
      %v310 = vmul.f32 %v242, %v276
      %v311 = vmul.f32 %v243, %v276
      %v312 = vmul.f32 %v244, %v276
      %v313 = vmul.f32 %v245, %v276
      %v314 = vmul.f32 %v246, %v276
      %v315 = vmul.f32 %v247, %v276
      %v316 = vmul.f32 %v248, %v276
      %v317 = vmul.f32 %v249, %v276
      %v318 = vmul.f32 %v250, %v276
      %v319 = vmul.f32 %v251, %v276
      %v320 = vmul.f32 %v252, %v276
      %v321 = vmul.f32 %v253, %v276
      %v322 = vmul.f32 %v254, %v276
      %v323 = vmul.f32 %v255, %v276
      %v324 = vmul.f32 %v256, %v276
      %v325 = vmul.f32 %v257, %v276
      %v326 = vmul.f32 %v258, %v276
      %v327 = vmul.f32 %v259, %v276
      %v328 = vmul.f32 %v260, %v276
      %v329 = vmul.f32 %v261, %v276
      %v330 = vmul.f32 %v262, %v276
      %v331 = vmul.f32 %v263, %v276
      %v332 = vmul.f32 %v264, %v276
      %v333 = vmul.f32 %v265, %v276
      %v334 = vmul.f32 %v266, %v276
      %v335 = vmul.f32 %v267, %v276
      %v336 = vmul.f32 %v268, %v276
      %v337 = vmul.f32 %v269, %v276
      %v338 = vmul.f32 %v270, %v276
      %v339 = vmul.f32 %v271, %v276
      %v340 = vmul.f32 %v272, %v276
      %v341 = vmul.f32 %v273, %v276
      %v342 = vld [vmem:[%s2] sm:$0x1]
      %v344 = vperm.slane %v342, 0
      %v346 = vadd.f32 %v278, %v344
      %v347 = vadd.f32 %v279, %v344
      %v348 = vadd.f32 %v280, %v344
      %v349 = vadd.f32 %v281, %v344
      %v350 = vadd.f32 %v282, %v344
      %v351 = vadd.f32 %v283, %v344
      %v352 = vadd.f32 %v284, %v344
      %v353 = vadd.f32 %v285, %v344
      %v354 = vadd.f32 %v286, %v344
      %v355 = vadd.f32 %v287, %v344
      %v356 = vadd.f32 %v288, %v344
      %v357 = vadd.f32 %v289, %v344
      %v358 = vadd.f32 %v290, %v344
      %v359 = vadd.f32 %v291, %v344
      %v360 = vadd.f32 %v292, %v344
      %v361 = vadd.f32 %v293, %v344
      %v362 = vadd.f32 %v294, %v344
      %v363 = vadd.f32 %v295, %v344
      %v364 = vadd.f32 %v296, %v344
      %v365 = vadd.f32 %v297, %v344
      %v366 = vadd.f32 %v298, %v344
      %v367 = vadd.f32 %v299, %v344
      %v368 = vadd.f32 %v300, %v344
      %v369 = vadd.f32 %v301, %v344
      %v370 = vadd.f32 %v302, %v344
      %v371 = vadd.f32 %v303, %v344
      %v372 = vadd.f32 %v304, %v344
      %v373 = vadd.f32 %v305, %v344
      %v374 = vadd.f32 %v306, %v344
      %v375 = vadd.f32 %v307, %v344
      %v376 = vadd.f32 %v308, %v344
      %v377 = vadd.f32 %v309, %v344
      %v378 = vadd.f32 %v310, %v344
      %v379 = vadd.f32 %v311, %v344
      %v380 = vadd.f32 %v312, %v344
      %v381 = vadd.f32 %v313, %v344
      %v382 = vadd.f32 %v314, %v344
      %v383 = vadd.f32 %v315, %v344
      %v384 = vadd.f32 %v316, %v344
      %v385 = vadd.f32 %v317, %v344
      %v386 = vadd.f32 %v318, %v344
      %v387 = vadd.f32 %v319, %v344
      %v388 = vadd.f32 %v320, %v344
      %v389 = vadd.f32 %v321, %v344
      %v390 = vadd.f32 %v322, %v344
      %v391 = vadd.f32 %v323, %v344
      %v392 = vadd.f32 %v324, %v344
      %v393 = vadd.f32 %v325, %v344
      %v394 = vadd.f32 %v326, %v344
      %v395 = vadd.f32 %v327, %v344
      %v396 = vadd.f32 %v328, %v344
      %v397 = vadd.f32 %v329, %v344
      %v398 = vadd.f32 %v330, %v344
      %v399 = vadd.f32 %v331, %v344
      %v400 = vadd.f32 %v332, %v344
      %v401 = vadd.f32 %v333, %v344
      %v402 = vadd.f32 %v334, %v344
      %v403 = vadd.f32 %v335, %v344
      %v404 = vadd.f32 %v336, %v344
      %v405 = vadd.f32 %v337, %v344
      %v406 = vadd.f32 %v338, %v344
      %v407 = vadd.f32 %v339, %v344
      %v408 = vadd.f32 %v340, %v344
      %v409 = vadd.f32 %v341, %v344
      %v410 = vmax.f32 %v346, 0.0
      %v411 = vmax.f32 %v347, 0.0
      %v412 = vmax.f32 %v348, 0.0
      %v413 = vmax.f32 %v349, 0.0
      %v414 = vmax.f32 %v350, 0.0
      %v415 = vmax.f32 %v351, 0.0
      %v416 = vmax.f32 %v352, 0.0
      %v417 = vmax.f32 %v353, 0.0
      %v418 = vmax.f32 %v354, 0.0
      %v419 = vmax.f32 %v355, 0.0
      %v420 = vmax.f32 %v356, 0.0
      %v421 = vmax.f32 %v357, 0.0
      %v422 = vmax.f32 %v358, 0.0
      %v423 = vmax.f32 %v359, 0.0
      %v424 = vmax.f32 %v360, 0.0
      %v425 = vmax.f32 %v361, 0.0
      %v426 = vmax.f32 %v362, 0.0
      %v427 = vmax.f32 %v363, 0.0
      %v428 = vmax.f32 %v364, 0.0
      %v429 = vmax.f32 %v365, 0.0
      %v430 = vmax.f32 %v366, 0.0
      %v431 = vmax.f32 %v367, 0.0
      %v432 = vmax.f32 %v368, 0.0
      %v433 = vmax.f32 %v369, 0.0
      %v434 = vmax.f32 %v370, 0.0
      %v435 = vmax.f32 %v371, 0.0
      %v436 = vmax.f32 %v372, 0.0
      %v437 = vmax.f32 %v373, 0.0
      %v438 = vmax.f32 %v374, 0.0
      %v439 = vmax.f32 %v375, 0.0
      %v440 = vmax.f32 %v376, 0.0
      %v441 = vmax.f32 %v377, 0.0
      %v442 = vmax.f32 %v378, 0.0
      %v443 = vmax.f32 %v379, 0.0
      %v444 = vmax.f32 %v380, 0.0
      %v445 = vmax.f32 %v381, 0.0
      %v446 = vmax.f32 %v382, 0.0
      %v447 = vmax.f32 %v383, 0.0
      %v448 = vmax.f32 %v384, 0.0
      %v449 = vmax.f32 %v385, 0.0
      %v450 = vmax.f32 %v386, 0.0
      %v451 = vmax.f32 %v387, 0.0
      %v452 = vmax.f32 %v388, 0.0
      %v453 = vmax.f32 %v389, 0.0
      %v454 = vmax.f32 %v390, 0.0
      %v455 = vmax.f32 %v391, 0.0
      %v456 = vmax.f32 %v392, 0.0
      %v457 = vmax.f32 %v393, 0.0
      %v458 = vmax.f32 %v394, 0.0
      %v459 = vmax.f32 %v395, 0.0
      %v460 = vmax.f32 %v396, 0.0
      %v461 = vmax.f32 %v397, 0.0
      %v462 = vmax.f32 %v398, 0.0
      %v463 = vmax.f32 %v399, 0.0
      %v464 = vmax.f32 %v400, 0.0
      %v465 = vmax.f32 %v401, 0.0
      %v466 = vmax.f32 %v402, 0.0
      %v467 = vmax.f32 %v403, 0.0
      %v468 = vmax.f32 %v404, 0.0
      %v469 = vmax.f32 %v405, 0.0
      %v470 = vmax.f32 %v406, 0.0
      %v471 = vmax.f32 %v407, 0.0
      %v472 = vmax.f32 %v408, 0.0
      %v473 = vmax.f32 %v409, 0.0
      %v474 = vpack.c.bf16 %v410, %v410
      %v475 = vpack.c.bf16 %v411, %v411
      %v476 = vpack.c.bf16 %v412, %v412
      %v477 = vpack.c.bf16 %v413, %v413
      %v478 = vpack.c.bf16 %v414, %v414
      %v479 = vpack.c.bf16 %v415, %v415
      %v480 = vpack.c.bf16 %v416, %v416
      %v481 = vpack.c.bf16 %v417, %v417
      %v482 = vpack.c.bf16 %v418, %v418
      %v483 = vpack.c.bf16 %v419, %v419
      %v484 = vpack.c.bf16 %v420, %v420
      %v485 = vpack.c.bf16 %v421, %v421
      %v486 = vpack.c.bf16 %v422, %v422
      %v487 = vpack.c.bf16 %v423, %v423
      %v488 = vpack.c.bf16 %v424, %v424
      %v489 = vpack.c.bf16 %v425, %v425
      %v490 = vpack.c.bf16 %v426, %v426
      %v491 = vpack.c.bf16 %v427, %v427
      %v492 = vpack.c.bf16 %v428, %v428
      %v493 = vpack.c.bf16 %v429, %v429
      %v494 = vpack.c.bf16 %v430, %v430
      %v495 = vpack.c.bf16 %v431, %v431
      %v496 = vpack.c.bf16 %v432, %v432
      %v497 = vpack.c.bf16 %v433, %v433
      %v498 = vpack.c.bf16 %v434, %v434
      %v499 = vpack.c.bf16 %v435, %v435
      %v500 = vpack.c.bf16 %v436, %v436
      %v501 = vpack.c.bf16 %v437, %v437
      %v502 = vpack.c.bf16 %v438, %v438
      %v503 = vpack.c.bf16 %v439, %v439
      %v504 = vpack.c.bf16 %v440, %v440
      %v505 = vpack.c.bf16 %v441, %v441
      %v506 = vpack.c.bf16 %v442, %v442
      %v507 = vpack.c.bf16 %v443, %v443
      %v508 = vpack.c.bf16 %v444, %v444
      %v509 = vpack.c.bf16 %v445, %v445
      %v510 = vpack.c.bf16 %v446, %v446
      %v511 = vpack.c.bf16 %v447, %v447
      %v512 = vpack.c.bf16 %v448, %v448
      %v513 = vpack.c.bf16 %v449, %v449
      %v514 = vpack.c.bf16 %v450, %v450
      %v515 = vpack.c.bf16 %v451, %v451
      %v516 = vpack.c.bf16 %v452, %v452
      %v517 = vpack.c.bf16 %v453, %v453
      %v518 = vpack.c.bf16 %v454, %v454
      %v519 = vpack.c.bf16 %v455, %v455
      %v520 = vpack.c.bf16 %v456, %v456
      %v521 = vpack.c.bf16 %v457, %v457
      %v522 = vpack.c.bf16 %v458, %v458
      %v523 = vpack.c.bf16 %v459, %v459
      %v524 = vpack.c.bf16 %v460, %v460
      %v525 = vpack.c.bf16 %v461, %v461
      %v526 = vpack.c.bf16 %v462, %v462
      %v527 = vpack.c.bf16 %v463, %v463
      %v528 = vpack.c.bf16 %v464, %v464
      %v529 = vpack.c.bf16 %v465, %v465
      %v530 = vpack.c.bf16 %v466, %v466
      %v531 = vpack.c.bf16 %v467, %v467
      %v532 = vpack.c.bf16 %v468, %v468
      %v533 = vpack.c.bf16 %v469, %v469
      %v534 = vpack.c.bf16 %v470, %v470
      %v535 = vpack.c.bf16 %v471, %v471
      %v536 = vpack.c.bf16 %v472, %v472
      %v537 = vpack.c.bf16 %v473, %v473
      %538 = vst [vmem:[%s208] sm:$0xf] %v474
      %539 = vst [vmem:[%s208 + $0x4] sm:$0xf] %v475
      %540 = vst [vmem:[%s208 + $0x8] sm:$0xf] %v476
      %541 = vst [vmem:[%s208 + $0xc] sm:$0xf] %v477
      %542 = vst [vmem:[%s208 + $0x10] sm:$0xf] %v478
      %543 = vst [vmem:[%s208 + $0x14] sm:$0xf] %v479
      %544 = vst [vmem:[%s208 + $0x18] sm:$0xf] %v480
      %545 = vst [vmem:[%s208 + $0x1c] sm:$0xf] %v481
      %546 = vst [vmem:[%s208 + $0x20] sm:$0xf] %v482
      %547 = vst [vmem:[%s208 + $0x24] sm:$0xf] %v483
      %548 = vst [vmem:[%s208 + $0x28] sm:$0xf] %v484
      %549 = vst [vmem:[%s208 + $0x2c] sm:$0xf] %v485
      %550 = vst [vmem:[%s208 + $0x30] sm:$0xf] %v486
      %551 = vst [vmem:[%s208 + $0x34] sm:$0xf] %v487
      %552 = vst [vmem:[%s208 + $0x38] sm:$0xf] %v488
      %553 = vst [vmem:[%s208 + $0x3c] sm:$0xf] %v489
      %554 = vst [vmem:[%s208 + $0x40] sm:$0xf] %v490
      %555 = vst [vmem:[%s208 + $0x44] sm:$0xf] %v491
      %556 = vst [vmem:[%s208 + $0x48] sm:$0xf] %v492
      %557 = vst [vmem:[%s208 + $0x4c] sm:$0xf] %v493
      %558 = vst [vmem:[%s208 + $0x50] sm:$0xf] %v494
      %559 = vst [vmem:[%s208 + $0x54] sm:$0xf] %v495
      %560 = vst [vmem:[%s208 + $0x58] sm:$0xf] %v496
      %561 = vst [vmem:[%s208 + $0x5c] sm:$0xf] %v497
      %562 = vst [vmem:[%s208 + $0x60] sm:$0xf] %v498
      %563 = vst [vmem:[%s208 + $0x64] sm:$0xf] %v499
      %564 = vst [vmem:[%s208 + $0x68] sm:$0xf] %v500
      %565 = vst [vmem:[%s208 + $0x6c] sm:$0xf] %v501
      %566 = vst [vmem:[%s208 + $0x70] sm:$0xf] %v502
      %567 = vst [vmem:[%s208 + $0x74] sm:$0xf] %v503
      %568 = vst [vmem:[%s208 + $0x78] sm:$0xf] %v504
      %569 = vst [vmem:[%s208 + $0x7c] sm:$0xf] %v505
      %570 = vst [vmem:[%s208 + $0x80] sm:$0xf] %v506
      %571 = vst [vmem:[%s208 + $0x84] sm:$0xf] %v507
      %572 = vst [vmem:[%s208 + $0x88] sm:$0xf] %v508
      %573 = vst [vmem:[%s208 + $0x8c] sm:$0xf] %v509
      %574 = vst [vmem:[%s208 + $0x90] sm:$0xf] %v510
      %575 = vst [vmem:[%s208 + $0x94] sm:$0xf] %v511
      %576 = vst [vmem:[%s208 + $0x98] sm:$0xf] %v512
      %577 = vst [vmem:[%s208 + $0x9c] sm:$0xf] %v513
      %578 = vst [vmem:[%s208 + $0xa0] sm:$0xf] %v514
      %579 = vst [vmem:[%s208 + $0xa4] sm:$0xf] %v515
      %580 = vst [vmem:[%s208 + $0xa8] sm:$0xf] %v516
      %581 = vst [vmem:[%s208 + $0xac] sm:$0xf] %v517
      %582 = vst [vmem:[%s208 + $0xb0] sm:$0xf] %v518
      %583 = vst [vmem:[%s208 + $0xb4] sm:$0xf] %v519
      %584 = vst [vmem:[%s208 + $0xb8] sm:$0xf] %v520
      %585 = vst [vmem:[%s208 + $0xbc] sm:$0xf] %v521
      %586 = vst [vmem:[%s208 + $0xc0] sm:$0xf] %v522
      %587 = vst [vmem:[%s208 + $0xc4] sm:$0xf] %v523
      %588 = vst [vmem:[%s208 + $0xc8] sm:$0xf] %v524
      %589 = vst [vmem:[%s208 + $0xcc] sm:$0xf] %v525
      %590 = vst [vmem:[%s208 + $0xd0] sm:$0xf] %v526
      %591 = vst [vmem:[%s208 + $0xd4] sm:$0xf] %v527
      %592 = vst [vmem:[%s208 + $0xd8] sm:$0xf] %v528
      %593 = vst [vmem:[%s208 + $0xdc] sm:$0xf] %v529
      %594 = vst [vmem:[%s208 + $0xe0] sm:$0xf] %v530
      %595 = vst [vmem:[%s208 + $0xe4] sm:$0xf] %v531
      %596 = vst [vmem:[%s208 + $0xe8] sm:$0xf] %v532
      %597 = vst [vmem:[%s208 + $0xec] sm:$0xf] %v533
      %598 = vst [vmem:[%s208 + $0xf0] sm:$0xf] %v534
      %599 = vst [vmem:[%s208 + $0xf4] sm:$0xf] %v535
      %600 = vst [vmem:[%s208 + $0xf8] sm:$0xf] %v536
      %601 = vst [vmem:[%s208 + $0xfc] sm:$0xf] %v537
      %s602 = smul.u32 64, %s19
      %p603 = scmp.lt.s32.totalorder %s18, 1
      %s604 = scalar_select %p603, %s18, 1
      %p605 = scmp.lt.s32.totalorder %s602, 63
      %s606 = scalar_select %p605, %s602, 63
      %s607 = smul.addr %s604, 64
      %s608 = sadd.s32 %s606, %s607
      %s609 = smul.addr %s608, 4
      %s610 = scalar_lea.vmem %s3, %s609
      // Predicated region
      $region33: #{basic_block_forward.5} parent=31 // pred_check
        %p611 = pneg %p116
      $region34: #{basic_block_forward.5} parent=31 // pred_check_branch
        %613 = sbr.rel (%p611) target = $region36
      $region35: #{basic_block_forward.5} parent=31 // pred_region
        %s614 = smul.u32 64, %s19
      $region36: #{basic_block_forward.5} parent=31 // pred_fallthru
        _
    $region32: #{basic_block_forward.5} parent=5 // pred_fallthru
      _
    %p615 = scmp.le.s32.totalorder 2, %s9
    // Predicated region
    $region37: #{basic_block_forward.5} parent=5 // pred_check
      %p616 = pneg %p615
    $region38: #{basic_block_forward.5} parent=5 // pred_check_branch
      %618 = sbr.rel (%p616) target = $region40
    $region39: #{basic_block_forward.5} parent=5 // pred_region
      %s619 = ssub.s32 %s9, 2
      // Predicated region
      $region41: #{basic_block_forward.5} parent=39 // pred_check
        %p620 = pneg %p122
      $region42: #{basic_block_forward.5} parent=39 // pred_check_branch
        %622 = sbr.rel (%p620) target = $region44
      $region43: #{basic_block_forward.5} parent=39 // pred_region
        %s623 = smul.u32 64, %s21
        %p624 = scmp.lt.s32.totalorder %s20, 1
        %s625 = scalar_select %p624, %s20, 1
        %p626 = scmp.lt.s32.totalorder %s623, 63
        %s627 = scalar_select %p626, %s623, 63
        %s628 = smul.addr %s625, 64
        %s629 = sadd.s32 %s627, %s628
        %s630 = smul.addr %s629, 4
        %s631 = scalar_lea.vmem %s3, %s630
      $region44: #{basic_block_forward.5} parent=39 // pred_fallthru
        _
    $region40: #{basic_block_forward.5} parent=5 // pred_fallthru
      _
  $region6: #{basic_block_forward.5} parent=0 // loop_footer
    %s13 = sadd.s32 1, %s9
  $region7: #{basic_block_forward.5} parent=0 // loop_footer_branch
    %8 = sbr.rel target = $region3
  $region8: #{basic_block_forward.5} parent=0 // loop_exit
    _

// kernel: basic_block_forward.7
$region0: #{basic_block_forward.7}
  #allocation0 [shape = 'u32[]', space=smem, size = 0x4, offset = 0x4, fixed_abs, tag = 'smem constant byte address 0x4 - core index']
  #allocation1 [shape = 'u32[72,128]{1,0:T(1,128)}', space=vmem, size = 0x9000, scoped, tag = 'internal scratch']
  %s0 = inlined_call_operand.vmem [shape: f32[2,512,128], index: 0, kind: input, shape index: {}]
  %s1 = inlined_call_operand.vmem [shape: f32[2,512,128], index: 1, kind: input, shape index: {}]
  %s2 = inlined_call_operand.vmem [shape: f32[1,1,128], index: 2, kind: input, shape index: {}]
  %s3 = inlined_call_operand.vmem [shape: f32[1,1,128], index: 3, kind: input, shape index: {}]
  %s4 = inlined_call_operand.vmem [shape: f32[2,512,128], index: 4, kind: output, shape index: {}]
  %s5 = sld [smem:[#allocation0]]
  $region49: #{basic_block_forward.7} parent=0
    _
  %s7 = ssub.s32 1, %s5
  %s8 = scalar_select 0, %s7, %s5
  loop: start=0, step=1, limit=4
  $region2: #{basic_block_forward.7} parent=0 // loop_pre_header
    _
  $region3: #{basic_block_forward.7} parent=0 // loop_header
    %s10 = sphi 0, %s14
    %p11 = scmp.ge.s32.totalorder %s10, 4
    %s17 = sphi 0, %s29
    %s18 = sphi 0, %s25
    %s19 = sphi 0, %s17
    %s20 = sphi 0, %s18
    %s21 = sphi 0, %s19
    %s22 = sphi 0, %s20
    %s34 = sphi 0, %s36
    %s37 = sphi 0, %s34
    %s38 = sphi 0, %s37
    %s54 = sphi 0, %s38
    %s62 = sphi 0, %s64
    %s65 = sphi 0, %s62
    %s66 = sphi 0, %s65
    %s82 = sphi 0, %s66
    %s86 = sphi 0, %s86
    %s88 = sphi 0, %s86
    %s89 = sphi 0, %s88
    %s103 = sphi 0, %s89
    %s107 = sphi 0, %s107
    %s109 = sphi 0, %s107
    %s110 = sphi 0, %s109
    %s124 = sphi 0, %s110
    %s132 = sphi 0, %s134
    %s135 = sphi 0, %s132
    %s136 = sphi 0, %s135
    %s152 = sphi 0, %s136
  $region4: #{basic_block_forward.7} parent=0 // loop_header_branch
    %13 = sbr.rel (%p11) target = $region8
  $region5: #{basic_block_forward.7} parent=0 // loop_body
    %s15 = ssub.s32 %s10, 1
    %s16 = ssub.s32 %s10, 2
    %s23 = sadd.s32 1, %s18
    %p24 = scmp.ge.s32.totalorder %s23, 1
    %s25 = scalar_select %p24, 0, %s23
    %s26 = sadd.s32 1, %s17
    %s27 = scalar_select %p24, %s26, %s17
    %p28 = scmp.ge.s32.totalorder %s27, 2
    %s29 = scalar_select %p28, 0, %s27
    %s30 = ssub.s32 %s17, %s29
    %s31 = ssub.s32 %s18, %s25
    %s32 = sor.u32 %s30, %s31
    %p33 = scmp.eq.s32.totalorder %s32, 0
    %s35 = sadd.s32 %s34, 1
    %s36 = scalar_select %p33, %s34, %s35
    %p39 = pneg %p33
    %p40 = scmp.eq.s32.totalorder %s10, 1
    %p41 = por %p39, %p40
    %p42 = scmp.ne.s32.totalorder %s34, %s37
    %p43 = scmp.eq.s32.totalorder %s10, 0
    %p44 = por %p42, %p43
    %p45 = scmp.ne.s32.totalorder %s34, %s37
    %p46 = scmp.eq.s32.totalorder %s15, 1
    %p47 = por %p45, %p46
    %p48 = scmp.ne.s32.totalorder %s37, %s38
    %p49 = scmp.eq.s32.totalorder %s15, 0
    %p50 = por %p48, %p49
    %p51 = scmp.ne.s32.totalorder %s37, %s38
    %p52 = scmp.eq.s32.totalorder %s16, 1
    %p53 = por %p51, %p52
    %p55 = scmp.ne.s32.totalorder %s38, %s54
    %p56 = scmp.eq.s32.totalorder %s16, 0
    %p57 = por %p55, %p56
    %s58 = ssub.s32 %s17, %s29
    %s59 = ssub.s32 %s18, %s25
    %s60 = sor.u32 %s58, %s59
    %p61 = scmp.eq.s32.totalorder %s60, 0
    %s63 = sadd.s32 %s62, 1
    %s64 = scalar_select %p61, %s62, %s63
    %p67 = pneg %p61
    %p68 = scmp.eq.s32.totalorder %s10, 1
    %p69 = por %p67, %p68
    %p70 = scmp.ne.s32.totalorder %s62, %s65
    %p71 = scmp.eq.s32.totalorder %s10, 0
    %p72 = por %p70, %p71
    %p73 = scmp.ne.s32.totalorder %s62, %s65
    %p74 = scmp.eq.s32.totalorder %s15, 1
    %p75 = por %p73, %p74
    %p76 = scmp.ne.s32.totalorder %s65, %s66
    %p77 = scmp.eq.s32.totalorder %s15, 0
    %p78 = por %p76, %p77
    %p79 = scmp.ne.s32.totalorder %s65, %s66
    %p80 = scmp.eq.s32.totalorder %s16, 1
    %p81 = por %p79, %p80
    %p83 = scmp.ne.s32.totalorder %s66, %s82
    %p84 = scmp.eq.s32.totalorder %s16, 0
    %p85 = por %p83, %p84
    %s87 = sadd.s32 %s86, 1
    %p90 = scmp.eq.s32.totalorder %s10, 1
    %p91 = scmp.ne.s32.totalorder %s86, %s88
    %p92 = scmp.eq.s32.totalorder %s10, 0
    %p93 = por %p91, %p92
    %p94 = scmp.ne.s32.totalorder %s86, %s88
    %p95 = scmp.eq.s32.totalorder %s15, 1
    %p96 = por %p94, %p95
    %p97 = scmp.ne.s32.totalorder %s88, %s89
    %p98 = scmp.eq.s32.totalorder %s15, 0
    %p99 = por %p97, %p98
    %p100 = scmp.ne.s32.totalorder %s88, %s89
    %p101 = scmp.eq.s32.totalorder %s16, 1
    %p102 = por %p100, %p101
    %p104 = scmp.ne.s32.totalorder %s89, %s103
    %p105 = scmp.eq.s32.totalorder %s16, 0
    %p106 = por %p104, %p105
    %s108 = sadd.s32 %s107, 1
    %p111 = scmp.eq.s32.totalorder %s10, 1
    %p112 = scmp.ne.s32.totalorder %s107, %s109
    %p113 = scmp.eq.s32.totalorder %s10, 0
    %p114 = por %p112, %p113
    %p115 = scmp.ne.s32.totalorder %s107, %s109
    %p116 = scmp.eq.s32.totalorder %s15, 1
    %p117 = por %p115, %p116
    %p118 = scmp.ne.s32.totalorder %s109, %s110
    %p119 = scmp.eq.s32.totalorder %s15, 0
    %p120 = por %p118, %p119
    %p121 = scmp.ne.s32.totalorder %s109, %s110
    %p122 = scmp.eq.s32.totalorder %s16, 1
    %p123 = por %p121, %p122
    %p125 = scmp.ne.s32.totalorder %s110, %s124
    %p126 = scmp.eq.s32.totalorder %s16, 0
    %p127 = por %p125, %p126
    %s128 = ssub.s32 %s17, %s29
    %s129 = ssub.s32 %s18, %s25
    %s130 = sor.u32 %s128, %s129
    %p131 = scmp.eq.s32.totalorder %s130, 0
    %s133 = sadd.s32 %s132, 1
    %s134 = scalar_select %p131, %s132, %s133
    %p137 = pneg %p131
    %p138 = scmp.eq.s32.totalorder %s10, 1
    %p139 = por %p137, %p138
    %p140 = scmp.ne.s32.totalorder %s132, %s135
    %p141 = scmp.eq.s32.totalorder %s10, 0
    %p142 = por %p140, %p141
    %p143 = scmp.ne.s32.totalorder %s132, %s135
    %p144 = scmp.eq.s32.totalorder %s15, 1
    %p145 = por %p143, %p144
    %p146 = scmp.ne.s32.totalorder %s135, %s136
    %p147 = scmp.eq.s32.totalorder %s15, 0
    %p148 = por %p146, %p147
    %p149 = scmp.ne.s32.totalorder %s135, %s136
    %p150 = scmp.eq.s32.totalorder %s16, 1
    %p151 = por %p149, %p150
    %p153 = scmp.ne.s32.totalorder %s136, %s152
    %p154 = scmp.eq.s32.totalorder %s16, 0
    %p155 = por %p153, %p154
    %p156 = scmp.le.s32.totalorder 1, %s10
    %p157 = scmp.lt.s32.totalorder %s10, 3
    %p158 = pnand %p156, %p157
    %p159 = pneg %p158
    // Predicated region
    $region9: #{basic_block_forward.7} parent=5 // pred_check
      _
    $region10: #{basic_block_forward.7} parent=5 // pred_check_branch
      %161 = sbr.rel (%p158) target = $region12
    $region11: #{basic_block_forward.7} parent=5 // pred_region
      %s162 = ssub.s32 %s10, 1
      // Predicated region
      $region13: #{basic_block_forward.7} parent=11 // pred_check
        %p163 = pneg %p99
      $region14: #{basic_block_forward.7} parent=11 // pred_check_branch
        %165 = sbr.rel (%p163) target = $region16
      $region15: #{basic_block_forward.7} parent=11 // pred_region
        _
      $region16: #{basic_block_forward.7} parent=11 // pred_fallthru
        _
      // Predicated region
      $region17: #{basic_block_forward.7} parent=11 // pred_check
        %p166 = pneg %p120
      $region18: #{basic_block_forward.7} parent=11 // pred_check_branch
        %168 = sbr.rel (%p166) target = $region20
      $region19: #{basic_block_forward.7} parent=11 // pred_region
        _
      $region20: #{basic_block_forward.7} parent=11 // pred_fallthru
        _
    $region12: #{basic_block_forward.7} parent=5 // pred_fallthru
      _
    %p169 = scmp.lt.s32.totalorder %s10, 2
    // Predicated region
    $region21: #{basic_block_forward.7} parent=5 // pred_check
      %p170 = pneg %p169
    $region22: #{basic_block_forward.7} parent=5 // pred_check_branch
      %172 = sbr.rel (%p170) target = $region24
    $region23: #{basic_block_forward.7} parent=5 // pred_region
      // Predicated region
      $region25: #{basic_block_forward.7} parent=23 // pred_check
        %p173 = pneg %p44
      $region26: #{basic_block_forward.7} parent=23 // pred_check_branch
        %175 = sbr.rel (%p173) target = $region28
      $region27: #{basic_block_forward.7} parent=23 // pred_region
        %s176 = smul.u32 64, %s18
        %p177 = scmp.lt.s32.totalorder %s17, 1
        %s178 = scalar_select %p177, %s17, 1
        %p179 = scmp.lt.s32.totalorder %s176, 63
        %s180 = scalar_select %p179, %s176, 63
        %s181 = smul.addr %s178, 64
        %s182 = sadd.s32 %s180, %s181
        %s183 = smul.addr %s182, 8
        %s184 = scalar_lea.vmem %s0, %s183
        %s185 = smul.u32 64, %s18
      $region28: #{basic_block_forward.7} parent=23 // pred_fallthru
        _
      // Predicated region
      $region29: #{basic_block_forward.7} parent=23 // pred_check
        %p186 = pneg %p72
      $region30: #{basic_block_forward.7} parent=23 // pred_check_branch
        %188 = sbr.rel (%p186) target = $region32
      $region31: #{basic_block_forward.7} parent=23 // pred_region
        %s189 = smul.u32 64, %s18
        %p190 = scmp.lt.s32.totalorder %s17, 1
        %s191 = scalar_select %p190, %s17, 1
        %p192 = scmp.lt.s32.totalorder %s189, 63
        %s193 = scalar_select %p192, %s189, 63
        %s194 = smul.addr %s191, 64
        %s195 = sadd.s32 %s193, %s194
        %s196 = smul.addr %s195, 8
        %s197 = scalar_lea.vmem %s1, %s196
        %s198 = smul.u32 64, %s18
      $region32: #{basic_block_forward.7} parent=23 // pred_fallthru
        _
    $region24: #{basic_block_forward.7} parent=5 // pred_fallthru
      _
    %p199 = scmp.le.s32.totalorder 1, %s10
    %p200 = scmp.lt.s32.totalorder %s10, 3
    %p201 = pnand %p199, %p200
    %p202 = pneg %p201
    // Predicated region
    $region33: #{basic_block_forward.7} parent=5 // pred_check
      _
    $region34: #{basic_block_forward.7} parent=5 // pred_check_branch
      %204 = sbr.rel (%p201) target = $region36
    $region35: #{basic_block_forward.7} parent=5 // pred_region
      %s205 = ssub.s32 %s10, 1
      %s206 = smul.u32 64, %s20
      %p207 = scmp.lt.s32.totalorder %s19, 1
      %s208 = scalar_select %p207, %s19, 1
      %p209 = scmp.lt.s32.totalorder %s206, 63
      %s210 = scalar_select %p209, %s206, 63
      %s211 = smul.addr %s208, 64
      %s212 = sadd.s32 %s210, %s211
      %s213 = smul.addr %s212, 8
      %s214 = scalar_lea.vmem %s0, %s213
      %p215 = pneg %p50
      %p216 = pneg %p47
      %s217 = smul.u32 64, %s20
      %p218 = scmp.lt.s32.totalorder %s19, 1
      %s219 = scalar_select %p218, %s19, 1
      %p220 = scmp.lt.s32.totalorder %s217, 63
      %s221 = scalar_select %p220, %s217, 63
      %s222 = smul.addr %s219, 64
      %s223 = sadd.s32 %s221, %s222
      %s224 = smul.addr %s223, 8
      %s225 = scalar_lea.vmem %s1, %s224
      %p226 = pneg %p78
      %p227 = pneg %p75
      %p228 = pneg %p99
      %p229 = pneg %p96
      %p230 = pneg %p120
      %p231 = pneg %p117
      %p232 = pneg %p148
      %p233 = pneg %p145
      %s234 = smul.u32 64, %s20
      %p235 = scmp.lt.s32.totalorder %s19, 1
      %s236 = scalar_select %p235, %s19, 1
      %p237 = scmp.lt.s32.totalorder %s234, 63
      %s238 = scalar_select %p237, %s234, 63
      %s239 = smul.addr %s236, 64
      %s240 = sadd.s32 %s238, %s239
      %s241 = smul.addr %s240, 8
      %s242 = scalar_lea.vmem %s4, %s241
      %s243 = smul.u32 64, %s20
      %p244 = scmp.lt.s32.totalorder %s19, 1
      %s245 = scalar_select %p244, %s19, 1
      %p246 = scmp.lt.s32.totalorder %s243, 63
      %s247 = scalar_select %p246, %s243, 63
      %s248 = smul.addr %s245, 64
      %s249 = sadd.s32 %s247, %s248
      %s250 = smul.addr %s249, 8
      %s251 = scalar_lea.vmem %s0, %s250
      %s252 = smul.u32 64, %s20
      %s253 = smul.u32 64, %s20
      %p254 = scmp.lt.s32.totalorder %s19, 1
      %s255 = scalar_select %p254, %s19, 1
      %p256 = scmp.lt.s32.totalorder %s253, 63
      %s257 = scalar_select %p256, %s253, 63
      %s258 = smul.addr %s255, 64
      %s259 = sadd.s32 %s257, %s258
      %s260 = smul.addr %s259, 8
      %s261 = scalar_lea.vmem %s1, %s260
      %s262 = smul.u32 64, %s20
      %s263 = smul.u32 64, %s20
      %p264 = scmp.lt.s32.totalorder %s19, 1
      %s265 = scalar_select %p264, %s19, 1
      %p266 = scmp.lt.s32.totalorder %s263, 63
      %s267 = scalar_select %p266, %s263, 63
      %s268 = smul.addr %s265, 64
      %s269 = sadd.s32 %s267, %s268
      %s270 = smul.addr %s269, 8
      %s271 = scalar_lea.vmem %s4, %s270
      %s272 = smul.u32 64, %s20
      %v273 = vld [vmem:[%s251] sm:$0xff]
      %v274 = vld [vmem:[%s251 + $0x8] sm:$0xff]
      %v275 = vld [vmem:[%s251 + $0x10] sm:$0xff]
      %v276 = vld [vmem:[%s251 + $0x18] sm:$0xff]
      %v277 = vld [vmem:[%s251 + $0x20] sm:$0xff]
      %v278 = vld [vmem:[%s251 + $0x28] sm:$0xff]
      %v279 = vld [vmem:[%s251 + $0x30] sm:$0xff]
      %v280 = vld [vmem:[%s251 + $0x38] sm:$0xff]
      %v281 = vld [vmem:[%s251 + $0x40] sm:$0xff]
      %v282 = vld [vmem:[%s251 + $0x48] sm:$0xff]
      %v283 = vld [vmem:[%s251 + $0x50] sm:$0xff]
      %v284 = vld [vmem:[%s251 + $0x58] sm:$0xff]
      %v285 = vld [vmem:[%s251 + $0x60] sm:$0xff]
      %v286 = vld [vmem:[%s251 + $0x68] sm:$0xff]
      %v287 = vld [vmem:[%s251 + $0x70] sm:$0xff]
      %v288 = vld [vmem:[%s251 + $0x78] sm:$0xff]
      %v289 = vld [vmem:[%s251 + $0x80] sm:$0xff]
      %v290 = vld [vmem:[%s251 + $0x88] sm:$0xff]
      %v291 = vld [vmem:[%s251 + $0x90] sm:$0xff]
      %v292 = vld [vmem:[%s251 + $0x98] sm:$0xff]
      %v293 = vld [vmem:[%s251 + $0xa0] sm:$0xff]
      %v294 = vld [vmem:[%s251 + $0xa8] sm:$0xff]
      %v295 = vld [vmem:[%s251 + $0xb0] sm:$0xff]
      %v296 = vld [vmem:[%s251 + $0xb8] sm:$0xff]
      %v297 = vld [vmem:[%s251 + $0xc0] sm:$0xff]
      %v298 = vld [vmem:[%s251 + $0xc8] sm:$0xff]
      %v299 = vld [vmem:[%s251 + $0xd0] sm:$0xff]
      %v300 = vld [vmem:[%s251 + $0xd8] sm:$0xff]
      %v301 = vld [vmem:[%s251 + $0xe0] sm:$0xff]
      %v302 = vld [vmem:[%s251 + $0xe8] sm:$0xff]
      %v303 = vld [vmem:[%s251 + $0xf0] sm:$0xff]
      %v304 = vld [vmem:[%s251 + $0xf8] sm:$0xff]
      %v305 = vld [vmem:[%s251 + $0x100] sm:$0xff]
      %v306 = vld [vmem:[%s251 + $0x108] sm:$0xff]
      %v307 = vld [vmem:[%s251 + $0x110] sm:$0xff]
      %v308 = vld [vmem:[%s251 + $0x118] sm:$0xff]
      %v309 = vld [vmem:[%s251 + $0x120] sm:$0xff]
      %v310 = vld [vmem:[%s251 + $0x128] sm:$0xff]
      %v311 = vld [vmem:[%s251 + $0x130] sm:$0xff]
      %v312 = vld [vmem:[%s251 + $0x138] sm:$0xff]
      %v313 = vld [vmem:[%s251 + $0x140] sm:$0xff]
      %v314 = vld [vmem:[%s251 + $0x148] sm:$0xff]
      %v315 = vld [vmem:[%s251 + $0x150] sm:$0xff]
      %v316 = vld [vmem:[%s251 + $0x158] sm:$0xff]
      %v317 = vld [vmem:[%s251 + $0x160] sm:$0xff]
      %v318 = vld [vmem:[%s251 + $0x168] sm:$0xff]
      %v319 = vld [vmem:[%s251 + $0x170] sm:$0xff]
      %v320 = vld [vmem:[%s251 + $0x178] sm:$0xff]
      %v321 = vld [vmem:[%s251 + $0x180] sm:$0xff]
      %v322 = vld [vmem:[%s251 + $0x188] sm:$0xff]
      %v323 = vld [vmem:[%s251 + $0x190] sm:$0xff]
      %v324 = vld [vmem:[%s251 + $0x198] sm:$0xff]
      %v325 = vld [vmem:[%s251 + $0x1a0] sm:$0xff]
      %v326 = vld [vmem:[%s251 + $0x1a8] sm:$0xff]
      %v327 = vld [vmem:[%s251 + $0x1b0] sm:$0xff]
      %v328 = vld [vmem:[%s251 + $0x1b8] sm:$0xff]
      %v329 = vld [vmem:[%s251 + $0x1c0] sm:$0xff]
      %v330 = vld [vmem:[%s251 + $0x1c8] sm:$0xff]
      %v331 = vld [vmem:[%s251 + $0x1d0] sm:$0xff]
      %v332 = vld [vmem:[%s251 + $0x1d8] sm:$0xff]
      %v333 = vld [vmem:[%s251 + $0x1e0] sm:$0xff]
      %v334 = vld [vmem:[%s251 + $0x1e8] sm:$0xff]
      %v335 = vld [vmem:[%s251 + $0x1f0] sm:$0xff]
      %v336 = vld [vmem:[%s251 + $0x1f8] sm:$0xff]
      %v337 = vld [vmem:[%s2] sm:$0x1]
      %v339 = vperm.slane %v337, 0
      %v341 = vmul.f32 %v273, %v339
      %v342 = vmul.f32 %v274, %v339
      %v343 = vmul.f32 %v275, %v339
      %v344 = vmul.f32 %v276, %v339
      %v345 = vmul.f32 %v277, %v339
      %v346 = vmul.f32 %v278, %v339
      %v347 = vmul.f32 %v279, %v339
      %v348 = vmul.f32 %v280, %v339
      %v349 = vmul.f32 %v281, %v339
      %v350 = vmul.f32 %v282, %v339
      %v351 = vmul.f32 %v283, %v339
      %v352 = vmul.f32 %v284, %v339
      %v353 = vmul.f32 %v285, %v339
      %v354 = vmul.f32 %v286, %v339
      %v355 = vmul.f32 %v287, %v339
      %v356 = vmul.f32 %v288, %v339
      %v357 = vmul.f32 %v289, %v339
      %v358 = vmul.f32 %v290, %v339
      %v359 = vmul.f32 %v291, %v339
      %v360 = vmul.f32 %v292, %v339
      %v361 = vmul.f32 %v293, %v339
      %v362 = vmul.f32 %v294, %v339
      %v363 = vmul.f32 %v295, %v339
      %v364 = vmul.f32 %v296, %v339
      %v365 = vmul.f32 %v297, %v339
      %v366 = vmul.f32 %v298, %v339
      %v367 = vmul.f32 %v299, %v339
      %v368 = vmul.f32 %v300, %v339
      %v369 = vmul.f32 %v301, %v339
      %v370 = vmul.f32 %v302, %v339
      %v371 = vmul.f32 %v303, %v339
      %v372 = vmul.f32 %v304, %v339
      %v373 = vmul.f32 %v305, %v339
      %v374 = vmul.f32 %v306, %v339
      %v375 = vmul.f32 %v307, %v339
      %v376 = vmul.f32 %v308, %v339
      %v377 = vmul.f32 %v309, %v339
      %v378 = vmul.f32 %v310, %v339
      %v379 = vmul.f32 %v311, %v339
      %v380 = vmul.f32 %v312, %v339
      %v381 = vmul.f32 %v313, %v339
      %v382 = vmul.f32 %v314, %v339
      %v383 = vmul.f32 %v315, %v339
      %v384 = vmul.f32 %v316, %v339
      %v385 = vmul.f32 %v317, %v339
      %v386 = vmul.f32 %v318, %v339
      %v387 = vmul.f32 %v319, %v339
      %v388 = vmul.f32 %v320, %v339
      %v389 = vmul.f32 %v321, %v339
      %v390 = vmul.f32 %v322, %v339
      %v391 = vmul.f32 %v323, %v339
      %v392 = vmul.f32 %v324, %v339
      %v393 = vmul.f32 %v325, %v339
      %v394 = vmul.f32 %v326, %v339
      %v395 = vmul.f32 %v327, %v339
      %v396 = vmul.f32 %v328, %v339
      %v397 = vmul.f32 %v329, %v339
      %v398 = vmul.f32 %v330, %v339
      %v399 = vmul.f32 %v331, %v339
      %v400 = vmul.f32 %v332, %v339
      %v401 = vmul.f32 %v333, %v339
      %v402 = vmul.f32 %v334, %v339
      %v403 = vmul.f32 %v335, %v339
      %v404 = vmul.f32 %v336, %v339
      %v405 = vld [vmem:[%s3] sm:$0x1]
      %v407 = vperm.slane %v405, 0
      %v409 = vadd.f32 %v341, %v407
      %v410 = vadd.f32 %v342, %v407
      %v411 = vadd.f32 %v343, %v407
      %v412 = vadd.f32 %v344, %v407
      %v413 = vadd.f32 %v345, %v407
      %v414 = vadd.f32 %v346, %v407
      %v415 = vadd.f32 %v347, %v407
      %v416 = vadd.f32 %v348, %v407
      %v417 = vadd.f32 %v349, %v407
      %v418 = vadd.f32 %v350, %v407
      %v419 = vadd.f32 %v351, %v407
      %v420 = vadd.f32 %v352, %v407
      %v421 = vadd.f32 %v353, %v407
      %v422 = vadd.f32 %v354, %v407
      %v423 = vadd.f32 %v355, %v407
      %v424 = vadd.f32 %v356, %v407
      %v425 = vadd.f32 %v357, %v407
      %v426 = vadd.f32 %v358, %v407
      %v427 = vadd.f32 %v359, %v407
      %v428 = vadd.f32 %v360, %v407
      %v429 = vadd.f32 %v361, %v407
      %v430 = vadd.f32 %v362, %v407
      %v431 = vadd.f32 %v363, %v407
      %v432 = vadd.f32 %v364, %v407
      %v433 = vadd.f32 %v365, %v407
      %v434 = vadd.f32 %v366, %v407
      %v435 = vadd.f32 %v367, %v407
      %v436 = vadd.f32 %v368, %v407
      %v437 = vadd.f32 %v369, %v407
      %v438 = vadd.f32 %v370, %v407
      %v439 = vadd.f32 %v371, %v407
      %v440 = vadd.f32 %v372, %v407
      %v441 = vadd.f32 %v373, %v407
      %v442 = vadd.f32 %v374, %v407
      %v443 = vadd.f32 %v375, %v407
      %v444 = vadd.f32 %v376, %v407
      %v445 = vadd.f32 %v377, %v407
      %v446 = vadd.f32 %v378, %v407
      %v447 = vadd.f32 %v379, %v407
      %v448 = vadd.f32 %v380, %v407
      %v449 = vadd.f32 %v381, %v407
      %v450 = vadd.f32 %v382, %v407
      %v451 = vadd.f32 %v383, %v407
      %v452 = vadd.f32 %v384, %v407
      %v453 = vadd.f32 %v385, %v407
      %v454 = vadd.f32 %v386, %v407
      %v455 = vadd.f32 %v387, %v407
      %v456 = vadd.f32 %v388, %v407
      %v457 = vadd.f32 %v389, %v407
      %v458 = vadd.f32 %v390, %v407
      %v459 = vadd.f32 %v391, %v407
      %v460 = vadd.f32 %v392, %v407
      %v461 = vadd.f32 %v393, %v407
      %v462 = vadd.f32 %v394, %v407
      %v463 = vadd.f32 %v395, %v407
      %v464 = vadd.f32 %v396, %v407
      %v465 = vadd.f32 %v397, %v407
      %v466 = vadd.f32 %v398, %v407
      %v467 = vadd.f32 %v399, %v407
      %v468 = vadd.f32 %v400, %v407
      %v469 = vadd.f32 %v401, %v407
      %v470 = vadd.f32 %v402, %v407
      %v471 = vadd.f32 %v403, %v407
      %v472 = vadd.f32 %v404, %v407
      %v473 = vld [vmem:[%s261] sm:$0xff]
      %v474 = vld [vmem:[%s261 + $0x8] sm:$0xff]
      %v475 = vld [vmem:[%s261 + $0x10] sm:$0xff]
      %v476 = vld [vmem:[%s261 + $0x18] sm:$0xff]
      %v477 = vld [vmem:[%s261 + $0x20] sm:$0xff]
      %v478 = vld [vmem:[%s261 + $0x28] sm:$0xff]
      %v479 = vld [vmem:[%s261 + $0x30] sm:$0xff]
      %v480 = vld [vmem:[%s261 + $0x38] sm:$0xff]
      %v481 = vld [vmem:[%s261 + $0x40] sm:$0xff]
      %v482 = vld [vmem:[%s261 + $0x48] sm:$0xff]
      %v483 = vld [vmem:[%s261 + $0x50] sm:$0xff]
      %v484 = vld [vmem:[%s261 + $0x58] sm:$0xff]
      %v485 = vld [vmem:[%s261 + $0x60] sm:$0xff]
      %v486 = vld [vmem:[%s261 + $0x68] sm:$0xff]
      %v487 = vld [vmem:[%s261 + $0x70] sm:$0xff]
      %v488 = vld [vmem:[%s261 + $0x78] sm:$0xff]
      %v489 = vld [vmem:[%s261 + $0x80] sm:$0xff]
      %v490 = vld [vmem:[%s261 + $0x88] sm:$0xff]
      %v491 = vld [vmem:[%s261 + $0x90] sm:$0xff]
      %v492 = vld [vmem:[%s261 + $0x98] sm:$0xff]
      %v493 = vld [vmem:[%s261 + $0xa0] sm:$0xff]
      %v494 = vld [vmem:[%s261 + $0xa8] sm:$0xff]
      %v495 = vld [vmem:[%s261 + $0xb0] sm:$0xff]
      %v496 = vld [vmem:[%s261 + $0xb8] sm:$0xff]
      %v497 = vld [vmem:[%s261 + $0xc0] sm:$0xff]
      %v498 = vld [vmem:[%s261 + $0xc8] sm:$0xff]
      %v499 = vld [vmem:[%s261 + $0xd0] sm:$0xff]
      %v500 = vld [vmem:[%s261 + $0xd8] sm:$0xff]
      %v501 = vld [vmem:[%s261 + $0xe0] sm:$0xff]
      %v502 = vld [vmem:[%s261 + $0xe8] sm:$0xff]
      %v503 = vld [vmem:[%s261 + $0xf0] sm:$0xff]
      %v504 = vld [vmem:[%s261 + $0xf8] sm:$0xff]
      %v505 = vld [vmem:[%s261 + $0x100] sm:$0xff]
      %v506 = vld [vmem:[%s261 + $0x108] sm:$0xff]
      %v507 = vld [vmem:[%s261 + $0x110] sm:$0xff]
      %v508 = vld [vmem:[%s261 + $0x118] sm:$0xff]
      %v509 = vld [vmem:[%s261 + $0x120] sm:$0xff]
      %v510 = vld [vmem:[%s261 + $0x128] sm:$0xff]
      %v511 = vld [vmem:[%s261 + $0x130] sm:$0xff]
      %v512 = vld [vmem:[%s261 + $0x138] sm:$0xff]
      %v513 = vld [vmem:[%s261 + $0x140] sm:$0xff]
      %v514 = vld [vmem:[%s261 + $0x148] sm:$0xff]
      %v515 = vld [vmem:[%s261 + $0x150] sm:$0xff]
      %v516 = vld [vmem:[%s261 + $0x158] sm:$0xff]
      %v517 = vld [vmem:[%s261 + $0x160] sm:$0xff]
      %v518 = vld [vmem:[%s261 + $0x168] sm:$0xff]
      %v519 = vld [vmem:[%s261 + $0x170] sm:$0xff]
      %v520 = vld [vmem:[%s261 + $0x178] sm:$0xff]
      %v521 = vld [vmem:[%s261 + $0x180] sm:$0xff]
      %v522 = vld [vmem:[%s261 + $0x188] sm:$0xff]
      %v523 = vld [vmem:[%s261 + $0x190] sm:$0xff]
      %v524 = vld [vmem:[%s261 + $0x198] sm:$0xff]
      %v525 = vld [vmem:[%s261 + $0x1a0] sm:$0xff]
      %v526 = vld [vmem:[%s261 + $0x1a8] sm:$0xff]
      %v527 = vld [vmem:[%s261 + $0x1b0] sm:$0xff]
      %v528 = vld [vmem:[%s261 + $0x1b8] sm:$0xff]
      %v529 = vld [vmem:[%s261 + $0x1c0] sm:$0xff]
      %v530 = vld [vmem:[%s261 + $0x1c8] sm:$0xff]
      %v531 = vld [vmem:[%s261 + $0x1d0] sm:$0xff]
      %v532 = vld [vmem:[%s261 + $0x1d8] sm:$0xff]
      %v533 = vld [vmem:[%s261 + $0x1e0] sm:$0xff]
      %v534 = vld [vmem:[%s261 + $0x1e8] sm:$0xff]
      %v535 = vld [vmem:[%s261 + $0x1f0] sm:$0xff]
      %v536 = vld [vmem:[%s261 + $0x1f8] sm:$0xff]
      %v537 = vadd.f32 %v409, %v473
      %v538 = vadd.f32 %v410, %v474
      %v539 = vadd.f32 %v411, %v475
      %v540 = vadd.f32 %v412, %v476
      %v541 = vadd.f32 %v413, %v477
      %v542 = vadd.f32 %v414, %v478
      %v543 = vadd.f32 %v415, %v479
      %v544 = vadd.f32 %v416, %v480
      %v545 = vadd.f32 %v417, %v481
      %v546 = vadd.f32 %v418, %v482
      %v547 = vadd.f32 %v419, %v483
      %v548 = vadd.f32 %v420, %v484
      %v549 = vadd.f32 %v421, %v485
      %v550 = vadd.f32 %v422, %v486
      %v551 = vadd.f32 %v423, %v487
      %v552 = vadd.f32 %v424, %v488
      %v553 = vadd.f32 %v425, %v489
      %v554 = vadd.f32 %v426, %v490
      %v555 = vadd.f32 %v427, %v491
      %v556 = vadd.f32 %v428, %v492
      %v557 = vadd.f32 %v429, %v493
      %v558 = vadd.f32 %v430, %v494
      %v559 = vadd.f32 %v431, %v495
      %v560 = vadd.f32 %v432, %v496
      %v561 = vadd.f32 %v433, %v497
      %v562 = vadd.f32 %v434, %v498
      %v563 = vadd.f32 %v435, %v499
      %v564 = vadd.f32 %v436, %v500
      %v565 = vadd.f32 %v437, %v501
      %v566 = vadd.f32 %v438, %v502
      %v567 = vadd.f32 %v439, %v503
      %v568 = vadd.f32 %v440, %v504
      %v569 = vadd.f32 %v441, %v505
      %v570 = vadd.f32 %v442, %v506
      %v571 = vadd.f32 %v443, %v507
      %v572 = vadd.f32 %v444, %v508
      %v573 = vadd.f32 %v445, %v509
      %v574 = vadd.f32 %v446, %v510
      %v575 = vadd.f32 %v447, %v511
      %v576 = vadd.f32 %v448, %v512
      %v577 = vadd.f32 %v449, %v513
      %v578 = vadd.f32 %v450, %v514
      %v579 = vadd.f32 %v451, %v515
      %v580 = vadd.f32 %v452, %v516
      %v581 = vadd.f32 %v453, %v517
      %v582 = vadd.f32 %v454, %v518
      %v583 = vadd.f32 %v455, %v519
      %v584 = vadd.f32 %v456, %v520
      %v585 = vadd.f32 %v457, %v521
      %v586 = vadd.f32 %v458, %v522
      %v587 = vadd.f32 %v459, %v523
      %v588 = vadd.f32 %v460, %v524
      %v589 = vadd.f32 %v461, %v525
      %v590 = vadd.f32 %v462, %v526
      %v591 = vadd.f32 %v463, %v527
      %v592 = vadd.f32 %v464, %v528
      %v593 = vadd.f32 %v465, %v529
      %v594 = vadd.f32 %v466, %v530
      %v595 = vadd.f32 %v467, %v531
      %v596 = vadd.f32 %v468, %v532
      %v597 = vadd.f32 %v469, %v533
      %v598 = vadd.f32 %v470, %v534
      %v599 = vadd.f32 %v471, %v535
      %v600 = vadd.f32 %v472, %v536
      %v601 = vmax.f32 %v537, 0.0
      %v602 = vmax.f32 %v538, 0.0
      %v603 = vmax.f32 %v539, 0.0
      %v604 = vmax.f32 %v540, 0.0
      %v605 = vmax.f32 %v541, 0.0
      %v606 = vmax.f32 %v542, 0.0
      %v607 = vmax.f32 %v543, 0.0
      %v608 = vmax.f32 %v544, 0.0
      %v609 = vmax.f32 %v545, 0.0
      %v610 = vmax.f32 %v546, 0.0
      %v611 = vmax.f32 %v547, 0.0
      %v612 = vmax.f32 %v548, 0.0
      %v613 = vmax.f32 %v549, 0.0
      %v614 = vmax.f32 %v550, 0.0
      %v615 = vmax.f32 %v551, 0.0
      %v616 = vmax.f32 %v552, 0.0
      %v617 = vmax.f32 %v553, 0.0
      %v618 = vmax.f32 %v554, 0.0
      %v619 = vmax.f32 %v555, 0.0
      %v620 = vmax.f32 %v556, 0.0
      %v621 = vmax.f32 %v557, 0.0
      %v622 = vmax.f32 %v558, 0.0
      %v623 = vmax.f32 %v559, 0.0
      %v624 = vmax.f32 %v560, 0.0
      %v625 = vmax.f32 %v561, 0.0
      %v626 = vmax.f32 %v562, 0.0
      %v627 = vmax.f32 %v563, 0.0
      %v628 = vmax.f32 %v564, 0.0
      %v629 = vmax.f32 %v565, 0.0
      %v630 = vmax.f32 %v566, 0.0
      %v631 = vmax.f32 %v567, 0.0
      %v632 = vmax.f32 %v568, 0.0
      %v633 = vmax.f32 %v569, 0.0
      %v634 = vmax.f32 %v570, 0.0
      %v635 = vmax.f32 %v571, 0.0
      %v636 = vmax.f32 %v572, 0.0
      %v637 = vmax.f32 %v573, 0.0
      %v638 = vmax.f32 %v574, 0.0
      %v639 = vmax.f32 %v575, 0.0
      %v640 = vmax.f32 %v576, 0.0
      %v641 = vmax.f32 %v577, 0.0
      %v642 = vmax.f32 %v578, 0.0
      %v643 = vmax.f32 %v579, 0.0
      %v644 = vmax.f32 %v580, 0.0
      %v645 = vmax.f32 %v581, 0.0
      %v646 = vmax.f32 %v582, 0.0
      %v647 = vmax.f32 %v583, 0.0
      %v648 = vmax.f32 %v584, 0.0
      %v649 = vmax.f32 %v585, 0.0
      %v650 = vmax.f32 %v586, 0.0
      %v651 = vmax.f32 %v587, 0.0
      %v652 = vmax.f32 %v588, 0.0
      %v653 = vmax.f32 %v589, 0.0
      %v654 = vmax.f32 %v590, 0.0
      %v655 = vmax.f32 %v591, 0.0
      %v656 = vmax.f32 %v592, 0.0
      %v657 = vmax.f32 %v593, 0.0
      %v658 = vmax.f32 %v594, 0.0
      %v659 = vmax.f32 %v595, 0.0
      %v660 = vmax.f32 %v596, 0.0
      %v661 = vmax.f32 %v597, 0.0
      %v662 = vmax.f32 %v598, 0.0
      %v663 = vmax.f32 %v599, 0.0
      %v664 = vmax.f32 %v600, 0.0
      %665 = vst [vmem:[%s271] sm:$0xff] %v601
      %666 = vst [vmem:[%s271 + $0x8] sm:$0xff] %v602
      %667 = vst [vmem:[%s271 + $0x10] sm:$0xff] %v603
      %668 = vst [vmem:[%s271 + $0x18] sm:$0xff] %v604
      %669 = vst [vmem:[%s271 + $0x20] sm:$0xff] %v605
      %670 = vst [vmem:[%s271 + $0x28] sm:$0xff] %v606
      %671 = vst [vmem:[%s271 + $0x30] sm:$0xff] %v607
      %672 = vst [vmem:[%s271 + $0x38] sm:$0xff] %v608
      %673 = vst [vmem:[%s271 + $0x40] sm:$0xff] %v609
      %674 = vst [vmem:[%s271 + $0x48] sm:$0xff] %v610
      %675 = vst [vmem:[%s271 + $0x50] sm:$0xff] %v611
      %676 = vst [vmem:[%s271 + $0x58] sm:$0xff] %v612
      %677 = vst [vmem:[%s271 + $0x60] sm:$0xff] %v613
      %678 = vst [vmem:[%s271 + $0x68] sm:$0xff] %v614
      %679 = vst [vmem:[%s271 + $0x70] sm:$0xff] %v615
      %680 = vst [vmem:[%s271 + $0x78] sm:$0xff] %v616
      %681 = vst [vmem:[%s271 + $0x80] sm:$0xff] %v617
      %682 = vst [vmem:[%s271 + $0x88] sm:$0xff] %v618
      %683 = vst [vmem:[%s271 + $0x90] sm:$0xff] %v619
      %684 = vst [vmem:[%s271 + $0x98] sm:$0xff] %v620
      %685 = vst [vmem:[%s271 + $0xa0] sm:$0xff] %v621
      %686 = vst [vmem:[%s271 + $0xa8] sm:$0xff] %v622
      %687 = vst [vmem:[%s271 + $0xb0] sm:$0xff] %v623
      %688 = vst [vmem:[%s271 + $0xb8] sm:$0xff] %v624
      %689 = vst [vmem:[%s271 + $0xc0] sm:$0xff] %v625
      %690 = vst [vmem:[%s271 + $0xc8] sm:$0xff] %v626
      %691 = vst [vmem:[%s271 + $0xd0] sm:$0xff] %v627
      %692 = vst [vmem:[%s271 + $0xd8] sm:$0xff] %v628
      %693 = vst [vmem:[%s271 + $0xe0] sm:$0xff] %v629
      %694 = vst [vmem:[%s271 + $0xe8] sm:$0xff] %v630
      %695 = vst [vmem:[%s271 + $0xf0] sm:$0xff] %v631
      %696 = vst [vmem:[%s271 + $0xf8] sm:$0xff] %v632
      %697 = vst [vmem:[%s271 + $0x100] sm:$0xff] %v633
      %698 = vst [vmem:[%s271 + $0x108] sm:$0xff] %v634
      %699 = vst [vmem:[%s271 + $0x110] sm:$0xff] %v635
      %700 = vst [vmem:[%s271 + $0x118] sm:$0xff] %v636
      %701 = vst [vmem:[%s271 + $0x120] sm:$0xff] %v637
      %702 = vst [vmem:[%s271 + $0x128] sm:$0xff] %v638
      %703 = vst [vmem:[%s271 + $0x130] sm:$0xff] %v639
      %704 = vst [vmem:[%s271 + $0x138] sm:$0xff] %v640
      %705 = vst [vmem:[%s271 + $0x140] sm:$0xff] %v641
      %706 = vst [vmem:[%s271 + $0x148] sm:$0xff] %v642
      %707 = vst [vmem:[%s271 + $0x150] sm:$0xff] %v643
      %708 = vst [vmem:[%s271 + $0x158] sm:$0xff] %v644
      %709 = vst [vmem:[%s271 + $0x160] sm:$0xff] %v645
      %710 = vst [vmem:[%s271 + $0x168] sm:$0xff] %v646
      %711 = vst [vmem:[%s271 + $0x170] sm:$0xff] %v647
      %712 = vst [vmem:[%s271 + $0x178] sm:$0xff] %v648
      %713 = vst [vmem:[%s271 + $0x180] sm:$0xff] %v649
      %714 = vst [vmem:[%s271 + $0x188] sm:$0xff] %v650
      %715 = vst [vmem:[%s271 + $0x190] sm:$0xff] %v651
      %716 = vst [vmem:[%s271 + $0x198] sm:$0xff] %v652
      %717 = vst [vmem:[%s271 + $0x1a0] sm:$0xff] %v653
      %718 = vst [vmem:[%s271 + $0x1a8] sm:$0xff] %v654
      %719 = vst [vmem:[%s271 + $0x1b0] sm:$0xff] %v655
      %720 = vst [vmem:[%s271 + $0x1b8] sm:$0xff] %v656
      %721 = vst [vmem:[%s271 + $0x1c0] sm:$0xff] %v657
      %722 = vst [vmem:[%s271 + $0x1c8] sm:$0xff] %v658
      %723 = vst [vmem:[%s271 + $0x1d0] sm:$0xff] %v659
      %724 = vst [vmem:[%s271 + $0x1d8] sm:$0xff] %v660
      %725 = vst [vmem:[%s271 + $0x1e0] sm:$0xff] %v661
      %726 = vst [vmem:[%s271 + $0x1e8] sm:$0xff] %v662
      %727 = vst [vmem:[%s271 + $0x1f0] sm:$0xff] %v663
      %728 = vst [vmem:[%s271 + $0x1f8] sm:$0xff] %v664
      %s729 = smul.u32 64, %s20
      %p730 = scmp.lt.s32.totalorder %s19, 1
      %s731 = scalar_select %p730, %s19, 1
      %p732 = scmp.lt.s32.totalorder %s729, 63
      %s733 = scalar_select %p732, %s729, 63
      %s734 = smul.addr %s731, 64
      %s735 = sadd.s32 %s733, %s734
      %s736 = smul.addr %s735, 8
      %s737 = scalar_lea.vmem %s4, %s736
      // Predicated region
      $region37: #{basic_block_forward.7} parent=35 // pred_check
        %p738 = pneg %p145
      $region38: #{basic_block_forward.7} parent=35 // pred_check_branch
        %740 = sbr.rel (%p738) target = $region40
      $region39: #{basic_block_forward.7} parent=35 // pred_region
        %s741 = smul.u32 64, %s20
      $region40: #{basic_block_forward.7} parent=35 // pred_fallthru
        _
    $region36: #{basic_block_forward.7} parent=5 // pred_fallthru
      _
    %p742 = scmp.le.s32.totalorder 2, %s10
    // Predicated region
    $region41: #{basic_block_forward.7} parent=5 // pred_check
      %p743 = pneg %p742
    $region42: #{basic_block_forward.7} parent=5 // pred_check_branch
      %745 = sbr.rel (%p743) target = $region44
    $region43: #{basic_block_forward.7} parent=5 // pred_region
      %s746 = ssub.s32 %s10, 2
      // Predicated region
      $region45: #{basic_block_forward.7} parent=43 // pred_check
        %p747 = pneg %p151
      $region46: #{basic_block_forward.7} parent=43 // pred_check_branch
        %749 = sbr.rel (%p747) target = $region48
      $region47: #{basic_block_forward.7} parent=43 // pred_region
        %s750 = smul.u32 64, %s22
        %p751 = scmp.lt.s32.totalorder %s21, 1
        %s752 = scalar_select %p751, %s21, 1
        %p753 = scmp.lt.s32.totalorder %s750, 63
        %s754 = scalar_select %p753, %s750, 63
        %s755 = smul.addr %s752, 64
        %s756 = sadd.s32 %s754, %s755
        %s757 = smul.addr %s756, 8
        %s758 = scalar_lea.vmem %s4, %s757
      $region48: #{basic_block_forward.7} parent=43 // pred_fallthru
        _
    $region44: #{basic_block_forward.7} parent=5 // pred_fallthru
      _
  $region6: #{basic_block_forward.7} parent=0 // loop_footer
    %s14 = sadd.s32 1, %s10
  $region7: #{basic_block_forward.7} parent=0 // loop_footer_branch
    %9 = sbr.rel target = $region3
  $region8: #{basic_block_forward.7} parent=0 // loop_exit
    _

// kernel: basic_block_forward.4
$region0: #{basic_block_forward.4}
  #allocation0 [shape = 'u32[]', space=smem, size = 0x4, offset = 0x4, fixed_abs, tag = 'smem constant byte address 0x4 - core index']
  #allocation1 [shape = 'u32[72,128]{1,0:T(1,128)}', space=vmem, size = 0x9000, scoped, tag = 'internal scratch']
  %s0 = inlined_call_operand.vmem [shape: bf16[2,10,80,384], index: 0, kind: input, shape index: {}]
  %s1 = inlined_call_operand.vmem [shape: bf16[3,384,384], index: 1, kind: input, shape index: {}]
  %s2 = inlined_call_operand.vmem [shape: f32[2,8,64,128], index: 2, kind: output, shape index: {0}]
  %s3 = inlined_call_operand.vmem [shape: f32[2,1,128], index: 3, kind: output, shape index: {1}]
  %s4 = inlined_call_operand.vmem [shape: f32[2,1,128], index: 4, kind: output, shape index: {2}]
  %5 = xla_tuple %s2, %s3, %s4
  %s6 = sld [smem:[#allocation0]]
  $region57: #{basic_block_forward.4} parent=0
    _
  %s8 = ssub.s32 1, %s6
  %s9 = scalar_select 0, %s8, %s6
  loop: start=0, step=1, limit=4
  $region2: #{basic_block_forward.4} parent=0 // loop_pre_header
    _
  $region3: #{basic_block_forward.4} parent=0 // loop_header
    %s11 = sphi 0, %s15
    %p12 = scmp.ge.s32.totalorder %s11, 4
    %s21 = sphi 0, %s23
    %s24 = sphi 0, %s21
    %s25 = sphi 0, %s24
    %s41 = sphi 0, %s25
    %s45 = sphi 0, %s45
    %s47 = sphi 0, %s45
    %s48 = sphi 0, %s47
    %s62 = sphi 0, %s48
    %s68 = sphi 0, %s70
    %s71 = sphi 0, %s68
    %s72 = sphi 0, %s71
    %s88 = sphi 0, %s72
    %s94 = sphi 0, %s96
    %s97 = sphi 0, %s94
    %s98 = sphi 0, %s97
    %s114 = sphi 0, %s98
    %s120 = sphi 0, %s122
    %s123 = sphi 0, %s120
    %s124 = sphi 0, %s123
    %s140 = sphi 0, %s124
  $region4: #{basic_block_forward.4} parent=0 // loop_header_branch
    %14 = sbr.rel (%p12) target = $region8
  $region5: #{basic_block_forward.4} parent=0 // loop_body
    %s16 = ssub.s32 %s11, 1
    %s17 = ssub.s32 %s11, 2
    %s18 = sadd.s32 %s11, 1
    %s19 = ssub.s32 %s11, %s18
    %p20 = scmp.eq.s32.totalorder %s19, 0
    %s22 = sadd.s32 %s21, 1
    %s23 = scalar_select %p20, %s21, %s22
    %p26 = pneg %p20
    %p27 = scmp.eq.s32.totalorder %s11, 1
    %p28 = por %p26, %p27
    %p29 = scmp.ne.s32.totalorder %s21, %s24
    %p30 = scmp.eq.s32.totalorder %s11, 0
    %p31 = por %p29, %p30
    %p32 = scmp.ne.s32.totalorder %s21, %s24
    %p33 = scmp.eq.s32.totalorder %s16, 1
    %p34 = por %p32, %p33
    %p35 = scmp.ne.s32.totalorder %s24, %s25
    %p36 = scmp.eq.s32.totalorder %s16, 0
    %p37 = por %p35, %p36
    %p38 = scmp.ne.s32.totalorder %s24, %s25
    %p39 = scmp.eq.s32.totalorder %s17, 1
    %p40 = por %p38, %p39
    %p42 = scmp.ne.s32.totalorder %s25, %s41
    %p43 = scmp.eq.s32.totalorder %s17, 0
    %p44 = por %p42, %p43
    %s46 = sadd.s32 %s45, 1
    %p49 = scmp.eq.s32.totalorder %s11, 1
    %p50 = scmp.ne.s32.totalorder %s45, %s47
    %p51 = scmp.eq.s32.totalorder %s11, 0
    %p52 = por %p50, %p51
    %p53 = scmp.ne.s32.totalorder %s45, %s47
    %p54 = scmp.eq.s32.totalorder %s16, 1
    %p55 = por %p53, %p54
    %p56 = scmp.ne.s32.totalorder %s47, %s48
    %p57 = scmp.eq.s32.totalorder %s16, 0
    %p58 = por %p56, %p57
    %p59 = scmp.ne.s32.totalorder %s47, %s48
    %p60 = scmp.eq.s32.totalorder %s17, 1
    %p61 = por %p59, %p60
    %p63 = scmp.ne.s32.totalorder %s48, %s62
    %p64 = scmp.eq.s32.totalorder %s17, 0
    %p65 = por %p63, %p64
    %s66 = ssub.s32 %s11, %s18
    %p67 = scmp.eq.s32.totalorder %s66, 0
    %s69 = sadd.s32 %s68, 1
    %s70 = scalar_select %p67, %s68, %s69
    %p73 = pneg %p67
    %p74 = scmp.eq.s32.totalorder %s11, 1
    %p75 = por %p73, %p74
    %p76 = scmp.ne.s32.totalorder %s68, %s71
    %p77 = scmp.eq.s32.totalorder %s11, 0
    %p78 = por %p76, %p77
    %p79 = scmp.ne.s32.totalorder %s68, %s71
    %p80 = scmp.eq.s32.totalorder %s16, 1
    %p81 = por %p79, %p80
    %p82 = scmp.ne.s32.totalorder %s71, %s72
    %p83 = scmp.eq.s32.totalorder %s16, 0
    %p84 = por %p82, %p83
    %p85 = scmp.ne.s32.totalorder %s71, %s72
    %p86 = scmp.eq.s32.totalorder %s17, 1
    %p87 = por %p85, %p86
    %p89 = scmp.ne.s32.totalorder %s72, %s88
    %p90 = scmp.eq.s32.totalorder %s17, 0
    %p91 = por %p89, %p90
    %s92 = ssub.s32 %s11, %s18
    %p93 = scmp.eq.s32.totalorder %s92, 0
    %s95 = sadd.s32 %s94, 1
    %s96 = scalar_select %p93, %s94, %s95
    %p99 = pneg %p93
    %p100 = scmp.eq.s32.totalorder %s11, 1
    %p101 = por %p99, %p100
    %p102 = scmp.ne.s32.totalorder %s94, %s97
    %p103 = scmp.eq.s32.totalorder %s11, 0
    %p104 = por %p102, %p103
    %p105 = scmp.ne.s32.totalorder %s94, %s97
    %p106 = scmp.eq.s32.totalorder %s16, 1
    %p107 = por %p105, %p106
    %p108 = scmp.ne.s32.totalorder %s97, %s98
    %p109 = scmp.eq.s32.totalorder %s16, 0
    %p110 = por %p108, %p109
    %p111 = scmp.ne.s32.totalorder %s97, %s98
    %p112 = scmp.eq.s32.totalorder %s17, 1
    %p113 = por %p111, %p112
    %p115 = scmp.ne.s32.totalorder %s98, %s114
    %p116 = scmp.eq.s32.totalorder %s17, 0
    %p117 = por %p115, %p116
    %s118 = ssub.s32 %s11, %s18
    %p119 = scmp.eq.s32.totalorder %s118, 0
    %s121 = sadd.s32 %s120, 1
    %s122 = scalar_select %p119, %s120, %s121
    %p125 = pneg %p119
    %p126 = scmp.eq.s32.totalorder %s11, 1
    %p127 = por %p125, %p126
    %p128 = scmp.ne.s32.totalorder %s120, %s123
    %p129 = scmp.eq.s32.totalorder %s11, 0
    %p130 = por %p128, %p129
    %p131 = scmp.ne.s32.totalorder %s120, %s123
    %p132 = scmp.eq.s32.totalorder %s16, 1
    %p133 = por %p131, %p132
    %p134 = scmp.ne.s32.totalorder %s123, %s124
    %p135 = scmp.eq.s32.totalorder %s16, 0
    %p136 = por %p134, %p135
    %p137 = scmp.ne.s32.totalorder %s123, %s124
    %p138 = scmp.eq.s32.totalorder %s17, 1
    %p139 = por %p137, %p138
    %p141 = scmp.ne.s32.totalorder %s124, %s140
    %p142 = scmp.eq.s32.totalorder %s17, 0
    %p143 = por %p141, %p142
    %p144 = scmp.le.s32.totalorder 1, %s11
    %p145 = scmp.lt.s32.totalorder %s11, 3
    %p146 = pnand %p144, %p145
    %p147 = pneg %p146
    // Predicated region
    $region9: #{basic_block_forward.4} parent=5 // pred_check
      _
    $region10: #{basic_block_forward.4} parent=5 // pred_check_branch
      %149 = sbr.rel (%p146) target = $region12
    $region11: #{basic_block_forward.4} parent=5 // pred_region
      %s150 = ssub.s32 %s11, 1
      // Predicated region
      $region13: #{basic_block_forward.4} parent=11 // pred_check
        %p151 = pneg %p58
      $region14: #{basic_block_forward.4} parent=11 // pred_check_branch
        %153 = sbr.rel (%p151) target = $region16
      $region15: #{basic_block_forward.4} parent=11 // pred_region
        _
      $region16: #{basic_block_forward.4} parent=11 // pred_fallthru
        _
    $region12: #{basic_block_forward.4} parent=5 // pred_fallthru
      _
    %p154 = scmp.lt.s32.totalorder %s11, 2
    // Predicated region
    $region17: #{basic_block_forward.4} parent=5 // pred_check
      %p155 = pneg %p154
    $region18: #{basic_block_forward.4} parent=5 // pred_check_branch
      %157 = sbr.rel (%p155) target = $region20
    $region19: #{basic_block_forward.4} parent=5 // pred_region
      // Predicated region
      $region21: #{basic_block_forward.4} parent=19 // pred_check
        %p158 = pneg %p31
      $region22: #{basic_block_forward.4} parent=19 // pred_check_branch
        %160 = sbr.rel (%p158) target = $region24
      $region23: #{basic_block_forward.4} parent=19 // pred_region
        %p161 = scmp.lt.s32.totalorder %s11, 1
        %s162 = scalar_select %p161, %s11, 1
        %s163 = smul.addr %s162, 300
        %s164 = smul.addr %s163, 4
        %s165 = scalar_lea.vmem %s0, %s164
      $region24: #{basic_block_forward.4} parent=19 // pred_fallthru
        _
    $region20: #{basic_block_forward.4} parent=5 // pred_fallthru
      _
    %p166 = scmp.le.s32.totalorder 1, %s11
    %p167 = scmp.lt.s32.totalorder %s11, 3
    %p168 = pnand %p166, %p167
    %p169 = pneg %p168
    // Predicated region
    $region25: #{basic_block_forward.4} parent=5 // pred_check
      _
    $region26: #{basic_block_forward.4} parent=5 // pred_check_branch
      %171 = sbr.rel (%p168) target = $region28
    $region27: #{basic_block_forward.4} parent=5 // pred_region
      %s172 = ssub.s32 %s11, 1
      %p173 = scmp.lt.s32.totalorder %s16, 1
      %s174 = scalar_select %p173, %s16, 1
      %s175 = smul.addr %s174, 300
      %s176 = smul.addr %s175, 4
      %s177 = scalar_lea.vmem %s0, %s176
      %p178 = pneg %p37
      %p179 = pneg %p34
      %p180 = pneg %p58
      %p181 = pneg %p55
      %p182 = pneg %p84
      %p183 = pneg %p81
      %p184 = scmp.lt.s32.totalorder %s16, 1
      %s185 = scalar_select %p184, %s16, 1
      %s186 = smul.addr %s185, 64
      %s187 = smul.addr %s186, 8
      %s188 = scalar_lea.vmem %s2, %s187
      %p189 = pneg %p110
      %p190 = pneg %p107
      %p191 = scmp.lt.s32.totalorder %s16, 1
      %s192 = scalar_select %p191, %s16, 1
      %s193 = scalar_lea.vmem %s3, %s192
      %p194 = pneg %p136
      %p195 = pneg %p133
      %p196 = scmp.lt.s32.totalorder %s16, 1
      %s197 = scalar_select %p196, %s16, 1
      %s198 = scalar_lea.vmem %s4, %s197
      %p199 = scmp.lt.s32.totalorder %s16, 1
      %s200 = scalar_select %p199, %s16, 1
      %s201 = smul.addr %s200, 300
      %s202 = smul.addr %s201, 4
      %s203 = scalar_lea.vmem %s0, %s202
      %p204 = scmp.lt.s32.totalorder %s16, 1
      %s205 = scalar_select %p204, %s16, 1
      %s206 = smul.addr %s205, 64
      %s207 = smul.addr %s206, 8
      %s208 = scalar_lea.vmem %s2, %s207
      %p209 = scmp.lt.s32.totalorder %s16, 1
      %s210 = scalar_select %p209, %s16, 1
      %s211 = scalar_lea.vmem %s3, %s210
      %p212 = scmp.lt.s32.totalorder %s16, 1
      %s213 = scalar_select %p212, %s16, 1
      %s214 = scalar_lea.vmem %s4, %s213
      %v215 = vld [vmem:[%s203] sm:$0xff]
      %v216 = vld [vmem:[%s203 + $0x8] sm:$0xf]
      %v217 = vld [vmem:[%s203 + $0xc] sm:$0xff]
      %v218 = vld [vmem:[%s203 + $0x14] sm:$0xf]
      %v219 = vld [vmem:[%s203 + $0x18] sm:$0xff]
      %v220 = vld [vmem:[%s203 + $0x20] sm:$0xf]
      %v221 = vld [vmem:[%s203 + $0x24] sm:$0xff]
      %v222 = vld [vmem:[%s203 + $0x2c] sm:$0xf]
      %v223 = vld [vmem:[%s203 + $0x30] sm:$0xff]
      %v224 = vld [vmem:[%s203 + $0x38] sm:$0xf]
      %v225 = vld [vmem:[%s203 + $0x3c] sm:$0xff]
      %v226 = vld [vmem:[%s203 + $0x44] sm:$0xf]
      %v227 = vld [vmem:[%s203 + $0x48] sm:$0xff]
      %v228 = vld [vmem:[%s203 + $0x50] sm:$0xf]
      %v229 = vld [vmem:[%s203 + $0x54] sm:$0xff]
      %v230 = vld [vmem:[%s203 + $0x5c] sm:$0xf]
      %v231 = vld [vmem:[%s203 + $0x60] sm:$0xff]
      %v232 = vld [vmem:[%s203 + $0x68] sm:$0xf]
      %v233 = vld [vmem:[%s203 + $0x6c] sm:$0xff]
      %v234 = vld [vmem:[%s203 + $0x74] sm:$0xf]
      %v235 = vld [vmem:[%s203 + $0x78] sm:$0xff]
      %v236 = vld [vmem:[%s203 + $0x80] sm:$0xf]
      %v237 = vld [vmem:[%s203 + $0x84] sm:$0xff]
      %v238 = vld [vmem:[%s203 + $0x8c] sm:$0xf]
      %v239 = vld [vmem:[%s203 + $0x90] sm:$0xff]
      %v240 = vld [vmem:[%s203 + $0x98] sm:$0xf]
      %v241 = vld [vmem:[%s203 + $0x9c] sm:$0xff]
      %v242 = vld [vmem:[%s203 + $0xa4] sm:$0xf]
      %v243 = vld [vmem:[%s203 + $0xa8] sm:$0xff]
      %v244 = vld [vmem:[%s203 + $0xb0] sm:$0xf]
      %v245 = vld [vmem:[%s203 + $0xb4] sm:$0xff]
      %v246 = vld [vmem:[%s203 + $0xbc] sm:$0xf]
      %v247 = vld [vmem:[%s203 + $0xc0] sm:$0xff]
      %v248 = vld [vmem:[%s203 + $0xc8] sm:$0xf]
      %v249 = vld [vmem:[%s203 + $0xcc] sm:$0xff]
      %v250 = vld [vmem:[%s203 + $0xd4] sm:$0xf]
      %v251 = vld [vmem:[%s203 + $0xd8] sm:$0xff]
      %v252 = vld [vmem:[%s203 + $0xe0] sm:$0xf]
      %v253 = vld [vmem:[%s203 + $0xe4] sm:$0xff]
      %v254 = vld [vmem:[%s203 + $0xec] sm:$0xf]
      %v255 = vld [vmem:[%s203 + $0xf0] sm:$0xff]
      %v256 = vld [vmem:[%s203 + $0xf8] sm:$0xf]
      %v257 = vld [vmem:[%s203 + $0xfc] sm:$0xff]
      %v258 = vld [vmem:[%s203 + $0x104] sm:$0xf]
      %v259 = vld [vmem:[%s203 + $0x108] sm:$0xff]
      %v260 = vld [vmem:[%s203 + $0x110] sm:$0xf]
      %v261 = vld [vmem:[%s203 + $0x114] sm:$0xff]
      %v262 = vld [vmem:[%s203 + $0x11c] sm:$0xf]
      %v263 = vld [vmem:[%s203 + $0x120] sm:$0xff]
      %v264 = vld [vmem:[%s203 + $0x128] sm:$0xf]
      %v265 = vld [vmem:[%s203 + $0x12c] sm:$0xff]
      %v266 = vld [vmem:[%s203 + $0x134] sm:$0xf]
      %v267 = vld [vmem:[%s203 + $0x138] sm:$0xff]
      %v268 = vld [vmem:[%s203 + $0x140] sm:$0xf]
      %v269 = vld [vmem:[%s203 + $0x144] sm:$0xff]
      %v270 = vld [vmem:[%s203 + $0x14c] sm:$0xf]
      %v271 = vld [vmem:[%s203 + $0x150] sm:$0xff]
      %v272 = vld [vmem:[%s203 + $0x158] sm:$0xf]
      %v273 = vld [vmem:[%s203 + $0x15c] sm:$0xff]
      %v274 = vld [vmem:[%s203 + $0x164] sm:$0xf]
      %v275 = vld [vmem:[%s203 + $0x168] sm:$0xff]
      %v276 = vld [vmem:[%s203 + $0x170] sm:$0xf]
      %v277 = vld [vmem:[%s203 + $0x174] sm:$0xff]
      %v278 = vld [vmem:[%s203 + $0x17c] sm:$0xf]
      %v279 = vld [vmem:[%s203 + $0x180] sm:$0xff]
      %v280 = vld [vmem:[%s203 + $0x188] sm:$0xf]
      %v281 = vld [vmem:[%s203 + $0x18c] sm:$0xff]
      %v282 = vld [vmem:[%s203 + $0x194] sm:$0xf]
      %v283 = vld [vmem:[%s203 + $0x198] sm:$0xff]
      %v284 = vld [vmem:[%s203 + $0x1a0] sm:$0xf]
      %v285 = vld [vmem:[%s203 + $0x1a4] sm:$0xff]
      %v286 = vld [vmem:[%s203 + $0x1ac] sm:$0xf]
      %v287 = vld [vmem:[%s203 + $0x1b0] sm:$0xff]
      %v288 = vld [vmem:[%s203 + $0x1b8] sm:$0xf]
      %v289 = vld [vmem:[%s203 + $0x1bc] sm:$0xff]
      %v290 = vld [vmem:[%s203 + $0x1c4] sm:$0xf]
      %v291 = vld [vmem:[%s203 + $0x1c8] sm:$0xff]
      %v292 = vld [vmem:[%s203 + $0x1d0] sm:$0xf]
      %v293 = vld [vmem:[%s203 + $0x1d4] sm:$0xff]
      %v294 = vld [vmem:[%s203 + $0x1dc] sm:$0xf]
      %v295 = vld [vmem:[%s203 + $0x1e0] sm:$0xff]
      %v296 = vld [vmem:[%s203 + $0x1e8] sm:$0xf]
      %v297 = vld [vmem:[%s203 + $0x1ec] sm:$0xff]
      %v298 = vld [vmem:[%s203 + $0x1f4] sm:$0xf]
      %v299 = vld [vmem:[%s203 + $0x1f8] sm:$0xff]
      %v300 = vld [vmem:[%s203 + $0x200] sm:$0xf]
      %v301 = vld [vmem:[%s203 + $0x204] sm:$0xff]
      %v302 = vld [vmem:[%s203 + $0x20c] sm:$0xf]
      %v303 = vld [vmem:[%s203 + $0x210] sm:$0xff]
      %v304 = vld [vmem:[%s203 + $0x218] sm:$0xf]
      %v305 = vld [vmem:[%s203 + $0x21c] sm:$0xff]
      %v306 = vld [vmem:[%s203 + $0x224] sm:$0xf]
      %v307 = vld [vmem:[%s203 + $0x228] sm:$0xff]
      %v308 = vld [vmem:[%s203 + $0x230] sm:$0xf]
      %v309 = vld [vmem:[%s203 + $0x234] sm:$0xff]
      %v310 = vld [vmem:[%s203 + $0x23c] sm:$0xf]
      %v311 = vld [vmem:[%s203 + $0x240] sm:$0xff]
      %v312 = vld [vmem:[%s203 + $0x248] sm:$0xf]
      %v313 = vld [vmem:[%s203 + $0x24c] sm:$0xff]
      %v314 = vld [vmem:[%s203 + $0x254] sm:$0xf]
      %v315 = vld [vmem:[%s203 + $0x258] sm:$0xff]
      %v316 = vld [vmem:[%s203 + $0x260] sm:$0xf]
      %v317 = vld [vmem:[%s203 + $0x264] sm:$0xff]
      %v318 = vld [vmem:[%s203 + $0x26c] sm:$0xf]
      %v319 = vld [vmem:[%s203 + $0x270] sm:$0xff]
      %v320 = vld [vmem:[%s203 + $0x278] sm:$0xf]
      %v321 = vld [vmem:[%s203 + $0x27c] sm:$0xff]
      %v322 = vld [vmem:[%s203 + $0x284] sm:$0xf]
      %v323 = vld [vmem:[%s203 + $0x288] sm:$0xff]
      %v324 = vld [vmem:[%s203 + $0x290] sm:$0xf]
      %v325 = vld [vmem:[%s203 + $0x294] sm:$0xff]
      %v326 = vld [vmem:[%s203 + $0x29c] sm:$0xf]
      %v327 = vld [vmem:[%s203 + $0x2a0] sm:$0xff]
      %v328 = vld [vmem:[%s203 + $0x2a8] sm:$0xf]
      %v329 = vld [vmem:[%s203 + $0x2ac] sm:$0xff]
      %v330 = vld [vmem:[%s203 + $0x2b4] sm:$0xf]
      %v331 = vld [vmem:[%s203 + $0x2b8] sm:$0xff]
      %v332 = vld [vmem:[%s203 + $0x2c0] sm:$0xf]
      %v333 = vld [vmem:[%s203 + $0x2c4] sm:$0xff]
      %v334 = vld [vmem:[%s203 + $0x2cc] sm:$0xf]
      %v335 = vld [vmem:[%s203 + $0x2d0] sm:$0xff]
      %v336 = vld [vmem:[%s203 + $0x2d8] sm:$0xf]
      %v337 = vld [vmem:[%s203 + $0x2dc] sm:$0xff]
      %v338 = vld [vmem:[%s203 + $0x2e4] sm:$0xf]
      %v339 = vld [vmem:[%s203 + $0x2e8] sm:$0xff]
      %v340 = vld [vmem:[%s203 + $0x2f0] sm:$0xf]
      %v341 = vld [vmem:[%s203 + $0x2f4] sm:$0xff]
      %v342 = vld [vmem:[%s203 + $0x2fc] sm:$0xf]
      %v343 = vld [vmem:[%s203 + $0x300] sm:$0xff]
      %v344 = vld [vmem:[%s203 + $0x308] sm:$0xf]
      %v345 = vld [vmem:[%s203 + $0x30c] sm:$0xff]
      %v346 = vld [vmem:[%s203 + $0x314] sm:$0xf]
      %v347 = vld [vmem:[%s203 + $0x318] sm:$0xff]
      %v348 = vld [vmem:[%s203 + $0x320] sm:$0xf]
      %v349 = vld [vmem:[%s203 + $0x324] sm:$0xff]
      %v350 = vld [vmem:[%s203 + $0x32c] sm:$0xf]
      %v351 = vld [vmem:[%s203 + $0x330] sm:$0xff]
      %v352 = vld [vmem:[%s203 + $0x338] sm:$0xf]
      %v353 = vld [vmem:[%s203 + $0x33c] sm:$0xff]
      %v354 = vld [vmem:[%s203 + $0x344] sm:$0xf]
      %v355 = vld [vmem:[%s203 + $0x348] sm:$0xff]
      %v356 = vld [vmem:[%s203 + $0x350] sm:$0xf]
      %v357 = vld [vmem:[%s203 + $0x354] sm:$0xff]
      %v358 = vld [vmem:[%s203 + $0x35c] sm:$0xf]
      %v359 = vld [vmem:[%s203 + $0x360] sm:$0xff]
      %v360 = vld [vmem:[%s203 + $0x368] sm:$0xf]
      %v361 = vld [vmem:[%s203 + $0x36c] sm:$0xff]
      %v362 = vld [vmem:[%s203 + $0x374] sm:$0xf]
      %v363 = vld [vmem:[%s203 + $0x378] sm:$0xff]
      %v364 = vld [vmem:[%s203 + $0x380] sm:$0xf]
      %v365 = vld [vmem:[%s203 + $0x384] sm:$0xff]
      %v366 = vld [vmem:[%s203 + $0x38c] sm:$0xf]
      %v367 = vld [vmem:[%s203 + $0x390] sm:$0xff]
      %v368 = vld [vmem:[%s203 + $0x398] sm:$0xf]
      %v369 = vld [vmem:[%s203 + $0x39c] sm:$0xff]
      %v370 = vld [vmem:[%s203 + $0x3a4] sm:$0xf]
      %v371 = vld [vmem:[%s203 + $0x3a8] sm:$0xff]
      %v372 = vld [vmem:[%s203 + $0x3b0] sm:$0xf]
      %v373 = vld [vmem:[%s203 + $0x3b4] sm:$0xff]
      %v374 = vld [vmem:[%s203 + $0x3bc] sm:$0xf]
      %v375 = vld [vmem:[%s1] sm:$0xff]
      %v376 = vld [vmem:[%s1 + $0x8] sm:$0xf]
      %v377 = vld [vmem:[%s1 + $0xc] sm:$0xff]
      %v378 = vld [vmem:[%s1 + $0x14] sm:$0xf]
      %v379 = vld [vmem:[%s1 + $0x18] sm:$0xff]
      %v380 = vld [vmem:[%s1 + $0x20] sm:$0xf]
      %v381 = vld [vmem:[%s1 + $0x24] sm:$0xff]
      %v382 = vld [vmem:[%s1 + $0x2c] sm:$0xf]
      %v383 = vld [vmem:[%s1 + $0x30] sm:$0xff]
      %v384 = vld [vmem:[%s1 + $0x38] sm:$0xf]
      %v385 = vld [vmem:[%s1 + $0x3c] sm:$0xff]
      %v386 = vld [vmem:[%s1 + $0x44] sm:$0xf]
      %v387 = vld [vmem:[%s1 + $0x48] sm:$0xff]
      %v388 = vld [vmem:[%s1 + $0x50] sm:$0xf]
      %v389 = vld [vmem:[%s1 + $0x54] sm:$0xff]
      %v390 = vld [vmem:[%s1 + $0x5c] sm:$0xf]
      %v391 = vld [vmem:[%s1 + $0x60] sm:$0xff]
      %v392 = vld [vmem:[%s1 + $0x68] sm:$0xf]
      %v393 = vld [vmem:[%s1 + $0x6c] sm:$0xff]
      %v394 = vld [vmem:[%s1 + $0x74] sm:$0xf]
      %v395 = vld [vmem:[%s1 + $0x78] sm:$0xff]
      %v396 = vld [vmem:[%s1 + $0x80] sm:$0xf]
      %v397 = vld [vmem:[%s1 + $0x84] sm:$0xff]
      %v398 = vld [vmem:[%s1 + $0x8c] sm:$0xf]
      %v399 = vld [vmem:[%s1 + $0x90] sm:$0xff]
      %v400 = vld [vmem:[%s1 + $0x98] sm:$0xf]
      %v401 = vld [vmem:[%s1 + $0x9c] sm:$0xff]
      %v402 = vld [vmem:[%s1 + $0xa4] sm:$0xf]
      %v403 = vld [vmem:[%s1 + $0xa8] sm:$0xff]
      %v404 = vld [vmem:[%s1 + $0xb0] sm:$0xf]
      %v405 = vld [vmem:[%s1 + $0xb4] sm:$0xff]
      %v406 = vld [vmem:[%s1 + $0xbc] sm:$0xf]
      %v407 = vld [vmem:[%s1 + $0xc0] sm:$0xff]
      %v408 = vld [vmem:[%s1 + $0xc8] sm:$0xf]
      %v409 = vld [vmem:[%s1 + $0xcc] sm:$0xff]
      %v410 = vld [vmem:[%s1 + $0xd4] sm:$0xf]
      %v411 = vld [vmem:[%s1 + $0xd8] sm:$0xff]
      %v412 = vld [vmem:[%s1 + $0xe0] sm:$0xf]
      %v413 = vld [vmem:[%s1 + $0xe4] sm:$0xff]
      %v414 = vld [vmem:[%s1 + $0xec] sm:$0xf]
      %v415 = vld [vmem:[%s1 + $0xf0] sm:$0xff]
      %v416 = vld [vmem:[%s1 + $0xf8] sm:$0xf]
      %v417 = vld [vmem:[%s1 + $0xfc] sm:$0xff]
      %v418 = vld [vmem:[%s1 + $0x104] sm:$0xf]
      %v419 = vld [vmem:[%s1 + $0x108] sm:$0xff]
      %v420 = vld [vmem:[%s1 + $0x110] sm:$0xf]
      %v421 = vld [vmem:[%s1 + $0x114] sm:$0xff]
      %v422 = vld [vmem:[%s1 + $0x11c] sm:$0xf]
      %v423 = vld [vmem:[%s1 + $0x120] sm:$0xff]
      %v424 = vld [vmem:[%s1 + $0x128] sm:$0xf]
      %v425 = vld [vmem:[%s1 + $0x12c] sm:$0xff]
      %v426 = vld [vmem:[%s1 + $0x134] sm:$0xf]
      %v427 = vld [vmem:[%s1 + $0x138] sm:$0xff]
      %v428 = vld [vmem:[%s1 + $0x140] sm:$0xf]
      %v429 = vld [vmem:[%s1 + $0x144] sm:$0xff]
      %v430 = vld [vmem:[%s1 + $0x14c] sm:$0xf]
      %v431 = vld [vmem:[%s1 + $0x150] sm:$0xff]
      %v432 = vld [vmem:[%s1 + $0x158] sm:$0xf]
      %v433 = vld [vmem:[%s1 + $0x15c] sm:$0xff]
      %v434 = vld [vmem:[%s1 + $0x164] sm:$0xf]
      %v435 = vld [vmem:[%s1 + $0x168] sm:$0xff]
      %v436 = vld [vmem:[%s1 + $0x170] sm:$0xf]
      %v437 = vld [vmem:[%s1 + $0x174] sm:$0xff]
      %v438 = vld [vmem:[%s1 + $0x17c] sm:$0xf]
      %v439 = vld [vmem:[%s1 + $0x180] sm:$0xff]
      %v440 = vld [vmem:[%s1 + $0x188] sm:$0xf]
      %v441 = vld [vmem:[%s1 + $0x18c] sm:$0xff]
      %v442 = vld [vmem:[%s1 + $0x194] sm:$0xf]
      %v443 = vld [vmem:[%s1 + $0x198] sm:$0xff]
      %v444 = vld [vmem:[%s1 + $0x1a0] sm:$0xf]
      %v445 = vld [vmem:[%s1 + $0x1a4] sm:$0xff]
      %v446 = vld [vmem:[%s1 + $0x1ac] sm:$0xf]
      %v447 = vld [vmem:[%s1 + $0x1b0] sm:$0xff]
      %v448 = vld [vmem:[%s1 + $0x1b8] sm:$0xf]
      %v449 = vld [vmem:[%s1 + $0x1bc] sm:$0xff]
      %v450 = vld [vmem:[%s1 + $0x1c4] sm:$0xf]
      %v451 = vld [vmem:[%s1 + $0x1c8] sm:$0xff]
      %v452 = vld [vmem:[%s1 + $0x1d0] sm:$0xf]
      %v453 = vld [vmem:[%s1 + $0x1d4] sm:$0xff]
      %v454 = vld [vmem:[%s1 + $0x1dc] sm:$0xf]
      %v455 = vld [vmem:[%s1 + $0x1e0] sm:$0xff]
      %v456 = vld [vmem:[%s1 + $0x1e8] sm:$0xf]
      %v457 = vld [vmem:[%s1 + $0x1ec] sm:$0xff]
      %v458 = vld [vmem:[%s1 + $0x1f4] sm:$0xf]
      %v459 = vld [vmem:[%s1 + $0x1f8] sm:$0xff]
      %v460 = vld [vmem:[%s1 + $0x200] sm:$0xf]
      %v461 = vld [vmem:[%s1 + $0x204] sm:$0xff]
      %v462 = vld [vmem:[%s1 + $0x20c] sm:$0xf]
      %v463 = vld [vmem:[%s1 + $0x210] sm:$0xff]
      %v464 = vld [vmem:[%s1 + $0x218] sm:$0xf]
      %v465 = vld [vmem:[%s1 + $0x21c] sm:$0xff]
      %v466 = vld [vmem:[%s1 + $0x224] sm:$0xf]
      %v467 = vld [vmem:[%s1 + $0x228] sm:$0xff]
      %v468 = vld [vmem:[%s1 + $0x230] sm:$0xf]
      %v469 = vld [vmem:[%s1 + $0x234] sm:$0xff]
      %v470 = vld [vmem:[%s1 + $0x23c] sm:$0xf]
      %v631 = vunpack.c.l.b16 %v215
      %v632 = vunpack.c.h.b16 %v215
      %v633 = vunpack.c.l.b16 %v216
      %v634 = vunpack.c.l.b16 %v217
      %v635 = vunpack.c.h.b16 %v217
      %v636 = vunpack.c.l.b16 %v218
      %v637 = vunpack.c.l.b16 %v219
      %v638 = vunpack.c.h.b16 %v219
      %v639 = vunpack.c.l.b16 %v220
      %v640 = vunpack.c.l.b16 %v221
      %v641 = vunpack.c.h.b16 %v221
      %v642 = vunpack.c.l.b16 %v222
      %v643 = vunpack.c.l.b16 %v223
      %v644 = vunpack.c.h.b16 %v223
      %v645 = vunpack.c.l.b16 %v224
      %v646 = vunpack.c.l.b16 %v225
      %v647 = vunpack.c.h.b16 %v225
      %v648 = vunpack.c.l.b16 %v226
      %v649 = vunpack.c.l.b16 %v227
      %v650 = vunpack.c.h.b16 %v227
      %v651 = vunpack.c.l.b16 %v228
      %v652 = vunpack.c.l.b16 %v229
      %v653 = vunpack.c.h.b16 %v229
      %v654 = vunpack.c.l.b16 %v230
      %v655 = vunpack.c.l.b16 %v231
      %v656 = vunpack.c.h.b16 %v231
      %v657 = vunpack.c.l.b16 %v232
      %v658 = vunpack.c.l.b16 %v233
      %v659 = vunpack.c.h.b16 %v233
      %v660 = vunpack.c.l.b16 %v234
      %v661 = vunpack.c.l.b16 %v235
      %v662 = vunpack.c.h.b16 %v235
      %v663 = vunpack.c.l.b16 %v236
      %v664 = vunpack.c.l.b16 %v237
      %v665 = vunpack.c.h.b16 %v237
      %v666 = vunpack.c.l.b16 %v238
      %v667 = vunpack.c.l.b16 %v239
      %v668 = vunpack.c.h.b16 %v239
      %v669 = vunpack.c.l.b16 %v240
      %v670 = vunpack.c.l.b16 %v241
      %v671 = vunpack.c.h.b16 %v241
      %v672 = vunpack.c.l.b16 %v242
      %v673 = vunpack.c.l.b16 %v243
      %v674 = vunpack.c.h.b16 %v243
      %v675 = vunpack.c.l.b16 %v244
      %v676 = vunpack.c.l.b16 %v245
      %v677 = vunpack.c.h.b16 %v245
      %v678 = vunpack.c.l.b16 %v246
      %v679 = vunpack.c.l.b16 %v247
      %v680 = vunpack.c.h.b16 %v247
      %v681 = vunpack.c.l.b16 %v248
      %v682 = vunpack.c.l.b16 %v249
      %v683 = vunpack.c.h.b16 %v249
      %v684 = vunpack.c.l.b16 %v250
      %v685 = vunpack.c.l.b16 %v251
      %v686 = vunpack.c.h.b16 %v251
      %v687 = vunpack.c.l.b16 %v252
      %v688 = vunpack.c.l.b16 %v253
      %v689 = vunpack.c.h.b16 %v253
      %v690 = vunpack.c.l.b16 %v254
      %v691 = vunpack.c.l.b16 %v255
      %v692 = vunpack.c.h.b16 %v255
      %v693 = vunpack.c.l.b16 %v256
      %v694 = vunpack.c.l.b16 %v257
      %v695 = vunpack.c.h.b16 %v257
      %v696 = vunpack.c.l.b16 %v258
      %v697 = vunpack.c.l.b16 %v259
      %v698 = vunpack.c.h.b16 %v259
      %v699 = vunpack.c.l.b16 %v260
      %v700 = vunpack.c.l.b16 %v261
      %v701 = vunpack.c.h.b16 %v261
      %v702 = vunpack.c.l.b16 %v262
      %v703 = vunpack.c.l.b16 %v263
      %v704 = vunpack.c.h.b16 %v263
      %v705 = vunpack.c.l.b16 %v264
      %v706 = vunpack.c.l.b16 %v265
      %v707 = vunpack.c.h.b16 %v265
      %v708 = vunpack.c.l.b16 %v266
      %v709 = vunpack.c.l.b16 %v267
      %v710 = vunpack.c.h.b16 %v267
      %v711 = vunpack.c.l.b16 %v268
      %v712 = vunpack.c.l.b16 %v269
      %v713 = vunpack.c.h.b16 %v269
      %v714 = vunpack.c.l.b16 %v270
      %v715 = vunpack.c.l.b16 %v271
      %v716 = vunpack.c.h.b16 %v271
      %v717 = vunpack.c.l.b16 %v272
      %v718 = vunpack.c.l.b16 %v273
      %v719 = vunpack.c.h.b16 %v273
      %v720 = vunpack.c.l.b16 %v274
      %v721 = vunpack.c.l.b16 %v275
      %v722 = vunpack.c.h.b16 %v275
      %v723 = vunpack.c.l.b16 %v276
      %v724 = vunpack.c.l.b16 %v277
      %v725 = vunpack.c.h.b16 %v277
      %v726 = vunpack.c.l.b16 %v278
      %v727 = vunpack.c.l.b16 %v279
      %v728 = vunpack.c.h.b16 %v279
      %v729 = vunpack.c.l.b16 %v280
      %v730 = vunpack.c.l.b16 %v281
      %v731 = vunpack.c.h.b16 %v281
      %v732 = vunpack.c.l.b16 %v282
      %v733 = vunpack.c.l.b16 %v283
      %v734 = vunpack.c.h.b16 %v283
      %v735 = vunpack.c.l.b16 %v284
      %v736 = vunpack.c.l.b16 %v285
      %v737 = vunpack.c.h.b16 %v285
      %v738 = vunpack.c.l.b16 %v286
      %v739 = vunpack.c.l.b16 %v287
      %v740 = vunpack.c.h.b16 %v287
      %v741 = vunpack.c.l.b16 %v288
      %v742 = vunpack.c.l.b16 %v289
      %v743 = vunpack.c.h.b16 %v289
      %v744 = vunpack.c.l.b16 %v290
      %v745 = vunpack.c.l.b16 %v291
      %v746 = vunpack.c.h.b16 %v291
      %v747 = vunpack.c.l.b16 %v292
      %v748 = vunpack.c.l.b16 %v293
      %v749 = vunpack.c.h.b16 %v293
      %v750 = vunpack.c.l.b16 %v294
      %v751 = vunpack.c.l.b16 %v295
      %v752 = vunpack.c.h.b16 %v295
      %v753 = vunpack.c.l.b16 %v296
      %v754 = vunpack.c.l.b16 %v297
      %v755 = vunpack.c.h.b16 %v297
      %v756 = vunpack.c.l.b16 %v298
      %v757 = vunpack.c.l.b16 %v299
      %v758 = vunpack.c.h.b16 %v299
      %v759 = vunpack.c.l.b16 %v300
      %v760 = vunpack.c.l.b16 %v301
      %v761 = vunpack.c.h.b16 %v301
      %v762 = vunpack.c.l.b16 %v302
      %v763 = vunpack.c.l.b16 %v303
      %v764 = vunpack.c.h.b16 %v303
      %v765 = vunpack.c.l.b16 %v304
      %v766 = vunpack.c.l.b16 %v305
      %v767 = vunpack.c.h.b16 %v305
      %v768 = vunpack.c.l.b16 %v306
      %v769 = vunpack.c.l.b16 %v307
      %v770 = vunpack.c.h.b16 %v307
      %v771 = vunpack.c.l.b16 %v308
      %v772 = vunpack.c.l.b16 %v309
      %v773 = vunpack.c.h.b16 %v309
      %v774 = vunpack.c.l.b16 %v310
      %v775 = vunpack.c.l.b16 %v311
      %v776 = vunpack.c.h.b16 %v311
      %v777 = vunpack.c.l.b16 %v312
      %v778 = vunpack.c.l.b16 %v313
      %v779 = vunpack.c.h.b16 %v313
      %v780 = vunpack.c.l.b16 %v314
      %v781 = vunpack.c.l.b16 %v315
      %v782 = vunpack.c.h.b16 %v315
      %v783 = vunpack.c.l.b16 %v316
      %v784 = vunpack.c.l.b16 %v317
      %v785 = vunpack.c.h.b16 %v317
      %v786 = vunpack.c.l.b16 %v318
      %v787 = vunpack.c.l.b16 %v319
      %v788 = vunpack.c.h.b16 %v319
      %v789 = vunpack.c.l.b16 %v320
      %v790 = vunpack.c.l.b16 %v321
      %v791 = vunpack.c.h.b16 %v321
      %v792 = vunpack.c.l.b16 %v322
      %v793 = vunpack.c.l.b16 %v323
      %v794 = vunpack.c.h.b16 %v323
      %v795 = vunpack.c.l.b16 %v324
      %v796 = vunpack.c.l.b16 %v325
      %v797 = vunpack.c.h.b16 %v325
      %v798 = vunpack.c.l.b16 %v326
      %v799 = vunpack.c.l.b16 %v327
      %v800 = vunpack.c.h.b16 %v327
      %v801 = vunpack.c.l.b16 %v328
      %v802 = vunpack.c.l.b16 %v329
      %v803 = vunpack.c.h.b16 %v329
      %v804 = vunpack.c.l.b16 %v330
      %v805 = vunpack.c.l.b16 %v331
      %v806 = vunpack.c.h.b16 %v331
      %v807 = vunpack.c.l.b16 %v332
      %v808 = vunpack.c.l.b16 %v333
      %v809 = vunpack.c.h.b16 %v333
      %v810 = vunpack.c.l.b16 %v334
      %v811 = vunpack.c.l.b16 %v335
      %v812 = vunpack.c.h.b16 %v335
      %v813 = vunpack.c.l.b16 %v336
      %v814 = vunpack.c.l.b16 %v337
      %v815 = vunpack.c.h.b16 %v337
      %v816 = vunpack.c.l.b16 %v338
      %v817 = vunpack.c.l.b16 %v339
      %v818 = vunpack.c.h.b16 %v339
      %v819 = vunpack.c.l.b16 %v340
      %v820 = vunpack.c.l.b16 %v341
      %v821 = vunpack.c.h.b16 %v341
      %v822 = vunpack.c.l.b16 %v342
      %v823 = vunpack.c.l.b16 %v343
      %v824 = vunpack.c.h.b16 %v343
      %v825 = vunpack.c.l.b16 %v344
      %v826 = vunpack.c.l.b16 %v345
      %v827 = vunpack.c.h.b16 %v345
      %v828 = vunpack.c.l.b16 %v346
      %v829 = vunpack.c.l.b16 %v347
      %v830 = vunpack.c.h.b16 %v347
      %v831 = vunpack.c.l.b16 %v348
      %v832 = vunpack.c.l.b16 %v349
      %v833 = vunpack.c.h.b16 %v349
      %v834 = vunpack.c.l.b16 %v350
      %v835 = vunpack.c.l.b16 %v351
      %v836 = vunpack.c.h.b16 %v351
      %v837 = vunpack.c.l.b16 %v352
      %v838 = vunpack.c.l.b16 %v353
      %v839 = vunpack.c.h.b16 %v353
      %v840 = vunpack.c.l.b16 %v354
      %v841 = vunpack.c.l.b16 %v355
      %v842 = vunpack.c.h.b16 %v355
      %v843 = vunpack.c.l.b16 %v356
      %v844 = vunpack.c.l.b16 %v357
      %v845 = vunpack.c.h.b16 %v357
      %v846 = vunpack.c.l.b16 %v358
      %v847 = vunpack.c.l.b16 %v359
      %v848 = vunpack.c.h.b16 %v359
      %v849 = vunpack.c.l.b16 %v360
      %v850 = vunpack.c.l.b16 %v361
      %v851 = vunpack.c.h.b16 %v361
      %v852 = vunpack.c.l.b16 %v362
      %v853 = vunpack.c.l.b16 %v363
      %v854 = vunpack.c.h.b16 %v363
      %v855 = vunpack.c.l.b16 %v364
      %v856 = vunpack.c.l.b16 %v365
      %v857 = vunpack.c.h.b16 %v365
      %v858 = vunpack.c.l.b16 %v366
      %v859 = vunpack.c.l.b16 %v367
      %v860 = vunpack.c.h.b16 %v367
      %v861 = vunpack.c.l.b16 %v368
      %v862 = vunpack.c.l.b16 %v369
      %v863 = vunpack.c.h.b16 %v369
      %v864 = vunpack.c.l.b16 %v370
      %v865 = vunpack.c.l.b16 %v371
      %v866 = vunpack.c.h.b16 %v371
      %v867 = vunpack.c.l.b16 %v372
      %v868 = vunpack.c.l.b16 %v373
      %v869 = vunpack.c.h.b16 %v373
      %v870 = vunpack.c.l.b16 %v374
      %v871 = vpack.c.b16 %v634, %v631
      %v872 = vpack.c.b16 %v635, %v632
      %v873 = vpack.c.b16 %v636, %v633
      %v874 = vpack.c.b16 %v640, %v637
      %v875 = vpack.c.b16 %v641, %v638
      %v876 = vpack.c.b16 %v642, %v639
      %v877 = vpack.c.b16 %v646, %v643
      %v878 = vpack.c.b16 %v647, %v644
      %v879 = vpack.c.b16 %v648, %v645
      %v880 = vpack.c.b16 %v652, %v649
      %v881 = vpack.c.b16 %v653, %v650
      %v882 = vpack.c.b16 %v654, %v651
      %v883 = vpack.c.b16 %v658, %v655
      %v884 = vpack.c.b16 %v659, %v656
      %v885 = vpack.c.b16 %v660, %v657
      %v886 = vpack.c.b16 %v664, %v661
      %v887 = vpack.c.b16 %v665, %v662
      %v888 = vpack.c.b16 %v666, %v663
      %v889 = vpack.c.b16 %v670, %v667
      %v890 = vpack.c.b16 %v671, %v668
      %v891 = vpack.c.b16 %v672, %v669
      %v892 = vpack.c.b16 %v676, %v673
      %v893 = vpack.c.b16 %v677, %v674
      %v894 = vpack.c.b16 %v678, %v675
      %v895 = vpack.c.b16 %v682, %v679
      %v896 = vpack.c.b16 %v683, %v680
      %v897 = vpack.c.b16 %v684, %v681
      %v898 = vpack.c.b16 %v688, %v685
      %v899 = vpack.c.b16 %v689, %v686
      %v900 = vpack.c.b16 %v690, %v687
      %v901 = vpack.c.b16 %v694, %v691
      %v902 = vpack.c.b16 %v695, %v692
      %v903 = vpack.c.b16 %v696, %v693
      %v904 = vpack.c.b16 %v700, %v697
      %v905 = vpack.c.b16 %v701, %v698
      %v906 = vpack.c.b16 %v702, %v699
      %v907 = vpack.c.b16 %v706, %v703
      %v908 = vpack.c.b16 %v707, %v704
      %v909 = vpack.c.b16 %v708, %v705
      %v910 = vpack.c.b16 %v712, %v709
      %v911 = vpack.c.b16 %v713, %v710
      %v912 = vpack.c.b16 %v714, %v711
      %v913 = vpack.c.b16 %v718, %v715
      %v914 = vpack.c.b16 %v719, %v716
      %v915 = vpack.c.b16 %v720, %v717
      %v916 = vpack.c.b16 %v724, %v721
      %v917 = vpack.c.b16 %v725, %v722
      %v918 = vpack.c.b16 %v726, %v723
      %v919 = vpack.c.b16 %v730, %v727
      %v920 = vpack.c.b16 %v731, %v728
      %v921 = vpack.c.b16 %v732, %v729
      %v922 = vpack.c.b16 %v736, %v733
      %v923 = vpack.c.b16 %v737, %v734
      %v924 = vpack.c.b16 %v738, %v735
      %v925 = vpack.c.b16 %v742, %v739
      %v926 = vpack.c.b16 %v743, %v740
      %v927 = vpack.c.b16 %v744, %v741
      %v928 = vpack.c.b16 %v748, %v745
      %v929 = vpack.c.b16 %v749, %v746
      %v930 = vpack.c.b16 %v750, %v747
      %v931 = vpack.c.b16 %v754, %v751
      %v932 = vpack.c.b16 %v755, %v752
      %v933 = vpack.c.b16 %v756, %v753
      %v934 = vpack.c.b16 %v760, %v757
      %v935 = vpack.c.b16 %v761, %v758
      %v936 = vpack.c.b16 %v762, %v759
      %v937 = vpack.c.b16 %v766, %v763
      %v938 = vpack.c.b16 %v767, %v764
      %v939 = vpack.c.b16 %v768, %v765
      %v940 = vpack.c.b16 %v772, %v769
      %v941 = vpack.c.b16 %v773, %v770
      %v942 = vpack.c.b16 %v774, %v771
      %v943 = vpack.c.b16 %v778, %v775
      %v944 = vpack.c.b16 %v779, %v776
      %v945 = vpack.c.b16 %v780, %v777
      %v946 = vpack.c.b16 %v784, %v781
      %v947 = vpack.c.b16 %v785, %v782
      %v948 = vpack.c.b16 %v786, %v783
      %v949 = vpack.c.b16 %v790, %v787
      %v950 = vpack.c.b16 %v791, %v788
      %v951 = vpack.c.b16 %v792, %v789
      %v952 = vpack.c.b16 %v796, %v793
      %v953 = vpack.c.b16 %v797, %v794
      %v954 = vpack.c.b16 %v798, %v795
      %v955 = vpack.c.b16 %v802, %v799
      %v956 = vpack.c.b16 %v803, %v800
      %v957 = vpack.c.b16 %v804, %v801
      %v958 = vpack.c.b16 %v808, %v805
      %v959 = vpack.c.b16 %v809, %v806
      %v960 = vpack.c.b16 %v810, %v807
      %v961 = vpack.c.b16 %v814, %v811
      %v962 = vpack.c.b16 %v815, %v812
      %v963 = vpack.c.b16 %v816, %v813
      %v964 = vpack.c.b16 %v820, %v817
      %v965 = vpack.c.b16 %v821, %v818
      %v966 = vpack.c.b16 %v822, %v819
      %v967 = vpack.c.b16 %v826, %v823
      %v968 = vpack.c.b16 %v827, %v824
      %v969 = vpack.c.b16 %v828, %v825
      %v970 = vpack.c.b16 %v832, %v829
      %v971 = vpack.c.b16 %v833, %v830
      %v972 = vpack.c.b16 %v834, %v831
      %v973 = vpack.c.b16 %v838, %v835
      %v974 = vpack.c.b16 %v839, %v836
      %v975 = vpack.c.b16 %v840, %v837
      %v976 = vpack.c.b16 %v844, %v841
      %v977 = vpack.c.b16 %v845, %v842
      %v978 = vpack.c.b16 %v846, %v843
      %v979 = vpack.c.b16 %v850, %v847
      %v980 = vpack.c.b16 %v851, %v848
      %v981 = vpack.c.b16 %v852, %v849
      %v982 = vpack.c.b16 %v856, %v853
      %v983 = vpack.c.b16 %v857, %v854
      %v984 = vpack.c.b16 %v858, %v855
      %v985 = vpack.c.b16 %v862, %v859
      %v986 = vpack.c.b16 %v863, %v860
      %v987 = vpack.c.b16 %v864, %v861
      %v988 = vpack.c.b16 %v868, %v865
      %v989 = vpack.c.b16 %v869, %v866
      %v990 = vpack.c.b16 %v870, %v867
      %v1207 = vunpack.c.l.b16 %v375
      %v1208 = vunpack.c.h.b16 %v375
      %v1209 = vunpack.c.l.b16 %v376
      %v1210 = vunpack.c.l.b16 %v377
      %v1211 = vunpack.c.h.b16 %v377
      %v1212 = vunpack.c.l.b16 %v378
      %v1213 = vunpack.c.l.b16 %v379
      %v1214 = vunpack.c.h.b16 %v379
      %v1215 = vunpack.c.l.b16 %v380
      %v1216 = vunpack.c.l.b16 %v381
      %v1217 = vunpack.c.h.b16 %v381
      %v1218 = vunpack.c.l.b16 %v382
      %v1219 = vunpack.c.l.b16 %v383
      %v1220 = vunpack.c.h.b16 %v383
      %v1221 = vunpack.c.l.b16 %v384
      %v1222 = vunpack.c.l.b16 %v385
      %v1223 = vunpack.c.h.b16 %v385
      %v1224 = vunpack.c.l.b16 %v386
      %v1225 = vunpack.c.l.b16 %v387
      %v1226 = vunpack.c.h.b16 %v387
      %v1227 = vunpack.c.l.b16 %v388
      %v1228 = vunpack.c.l.b16 %v389
      %v1229 = vunpack.c.h.b16 %v389
      %v1230 = vunpack.c.l.b16 %v390
      %v1231 = vunpack.c.l.b16 %v391
      %v1232 = vunpack.c.h.b16 %v391
      %v1233 = vunpack.c.l.b16 %v392
      %v1234 = vunpack.c.l.b16 %v393
      %v1235 = vunpack.c.h.b16 %v393
      %v1236 = vunpack.c.l.b16 %v394
      %v1237 = vunpack.c.l.b16 %v395
      %v1238 = vunpack.c.h.b16 %v395
      %v1239 = vunpack.c.l.b16 %v396
      %v1240 = vunpack.c.l.b16 %v397
      %v1241 = vunpack.c.h.b16 %v397
      %v1242 = vunpack.c.l.b16 %v398
      %v1243 = vunpack.c.l.b16 %v399
      %v1244 = vunpack.c.h.b16 %v399
      %v1245 = vunpack.c.l.b16 %v400
      %v1246 = vunpack.c.l.b16 %v401
      %v1247 = vunpack.c.h.b16 %v401
      %v1248 = vunpack.c.l.b16 %v402
      %v1249 = vunpack.c.l.b16 %v403
      %v1250 = vunpack.c.h.b16 %v403
      %v1251 = vunpack.c.l.b16 %v404
      %v1252 = vunpack.c.l.b16 %v405
      %v1253 = vunpack.c.h.b16 %v405
      %v1254 = vunpack.c.l.b16 %v406
      %v1255 = vunpack.c.l.b16 %v407
      %v1256 = vunpack.c.h.b16 %v407
      %v1257 = vunpack.c.l.b16 %v408
      %v1258 = vunpack.c.l.b16 %v409
      %v1259 = vunpack.c.h.b16 %v409
      %v1260 = vunpack.c.l.b16 %v410
      %v1261 = vunpack.c.l.b16 %v411
      %v1262 = vunpack.c.h.b16 %v411
      %v1263 = vunpack.c.l.b16 %v412
      %v1264 = vunpack.c.l.b16 %v413
      %v1265 = vunpack.c.h.b16 %v413
      %v1266 = vunpack.c.l.b16 %v414
      %v1267 = vunpack.c.l.b16 %v415
      %v1268 = vunpack.c.h.b16 %v415
      %v1269 = vunpack.c.l.b16 %v416
      %v1270 = vunpack.c.l.b16 %v417
      %v1271 = vunpack.c.h.b16 %v417
      %v1272 = vunpack.c.l.b16 %v418
      %v1273 = vunpack.c.l.b16 %v419
      %v1274 = vunpack.c.h.b16 %v419
      %v1275 = vunpack.c.l.b16 %v420
      %v1276 = vunpack.c.l.b16 %v421
      %v1277 = vunpack.c.h.b16 %v421
      %v1278 = vunpack.c.l.b16 %v422
      %v1279 = vunpack.c.l.b16 %v423
      %v1280 = vunpack.c.h.b16 %v423
      %v1281 = vunpack.c.l.b16 %v424
      %v1282 = vunpack.c.l.b16 %v425
      %v1283 = vunpack.c.h.b16 %v425
      %v1284 = vunpack.c.l.b16 %v426
      %v1285 = vunpack.c.l.b16 %v427
      %v1286 = vunpack.c.h.b16 %v427
      %v1287 = vunpack.c.l.b16 %v428
      %v1288 = vunpack.c.l.b16 %v429
      %v1289 = vunpack.c.h.b16 %v429
      %v1290 = vunpack.c.l.b16 %v430
      %v1291 = vunpack.c.l.b16 %v431
      %v1292 = vunpack.c.h.b16 %v431
      %v1293 = vunpack.c.l.b16 %v432
      %v1294 = vunpack.c.l.b16 %v433
      %v1295 = vunpack.c.h.b16 %v433
      %v1296 = vunpack.c.l.b16 %v434
      %v1297 = vunpack.c.l.b16 %v435
      %v1298 = vunpack.c.h.b16 %v435
      %v1299 = vunpack.c.l.b16 %v436
      %v1300 = vunpack.c.l.b16 %v437
      %v1301 = vunpack.c.h.b16 %v437
      %v1302 = vunpack.c.l.b16 %v438
      %v1303 = vunpack.c.l.b16 %v439
      %v1304 = vunpack.c.h.b16 %v439
      %v1305 = vunpack.c.l.b16 %v440
      %v1306 = vunpack.c.l.b16 %v441
      %v1307 = vunpack.c.h.b16 %v441
      %v1308 = vunpack.c.l.b16 %v442
      %v1309 = vunpack.c.l.b16 %v443
      %v1310 = vunpack.c.h.b16 %v443
      %v1311 = vunpack.c.l.b16 %v444
      %v1312 = vunpack.c.l.b16 %v445
      %v1313 = vunpack.c.h.b16 %v445
      %v1314 = vunpack.c.l.b16 %v446
      %v1315 = vunpack.c.l.b16 %v447
      %v1316 = vunpack.c.h.b16 %v447
      %v1317 = vunpack.c.l.b16 %v448
      %v1318 = vunpack.c.l.b16 %v449
      %v1319 = vunpack.c.h.b16 %v449
      %v1320 = vunpack.c.l.b16 %v450
      %v1321 = vunpack.c.l.b16 %v451
      %v1322 = vunpack.c.h.b16 %v451
      %v1323 = vunpack.c.l.b16 %v452
      %v1324 = vunpack.c.l.b16 %v453
      %v1325 = vunpack.c.h.b16 %v453
      %v1326 = vunpack.c.l.b16 %v454
      %v1327 = vunpack.c.l.b16 %v455
      %v1328 = vunpack.c.h.b16 %v455
      %v1329 = vunpack.c.l.b16 %v456
      %v1330 = vunpack.c.l.b16 %v457
      %v1331 = vunpack.c.h.b16 %v457
      %v1332 = vunpack.c.l.b16 %v458
      %v1333 = vunpack.c.l.b16 %v459
      %v1334 = vunpack.c.h.b16 %v459
      %v1335 = vunpack.c.l.b16 %v460
      %v1336 = vunpack.c.l.b16 %v461
      %v1337 = vunpack.c.h.b16 %v461
      %v1338 = vunpack.c.l.b16 %v462
      %v1339 = vunpack.c.l.b16 %v463
      %v1340 = vunpack.c.h.b16 %v463
      %v1341 = vunpack.c.l.b16 %v464
      %v1342 = vunpack.c.l.b16 %v465
      %v1343 = vunpack.c.h.b16 %v465
      %v1344 = vunpack.c.l.b16 %v466
      %v1345 = vunpack.c.l.b16 %v467
      %v1346 = vunpack.c.h.b16 %v467
      %v1347 = vunpack.c.l.b16 %v468
      %v1348 = vunpack.c.l.b16 %v469
      %v1349 = vunpack.c.h.b16 %v469
      %v1350 = vunpack.c.l.b16 %v470
      %v1351 = vpack.c.b16 %v1210, %v1207
      %v1352 = vpack.c.b16 %v1211, %v1208
      %v1353 = vpack.c.b16 %v1212, %v1209
      %v1354 = vpack.c.b16 %v1216, %v1213
      %v1355 = vpack.c.b16 %v1217, %v1214
      %v1356 = vpack.c.b16 %v1218, %v1215
      %v1357 = vpack.c.b16 %v1222, %v1219
      %v1358 = vpack.c.b16 %v1223, %v1220
      %v1359 = vpack.c.b16 %v1224, %v1221
      %v1360 = vpack.c.b16 %v1228, %v1225
      %v1361 = vpack.c.b16 %v1229, %v1226
      %v1362 = vpack.c.b16 %v1230, %v1227
      %v1363 = vpack.c.b16 %v1234, %v1231
      %v1364 = vpack.c.b16 %v1235, %v1232
      %v1365 = vpack.c.b16 %v1236, %v1233
      %v1366 = vpack.c.b16 %v1240, %v1237
      %v1367 = vpack.c.b16 %v1241, %v1238
      %v1368 = vpack.c.b16 %v1242, %v1239
      %v1369 = vpack.c.b16 %v1246, %v1243
      %v1370 = vpack.c.b16 %v1247, %v1244
      %v1371 = vpack.c.b16 %v1248, %v1245
      %v1372 = vpack.c.b16 %v1252, %v1249
      %v1373 = vpack.c.b16 %v1253, %v1250
      %v1374 = vpack.c.b16 %v1254, %v1251
      %v1375 = vpack.c.b16 %v1258, %v1255
      %v1376 = vpack.c.b16 %v1259, %v1256
      %v1377 = vpack.c.b16 %v1260, %v1257
      %v1378 = vpack.c.b16 %v1264, %v1261
      %v1379 = vpack.c.b16 %v1265, %v1262
      %v1380 = vpack.c.b16 %v1266, %v1263
      %v1381 = vpack.c.b16 %v1270, %v1267
      %v1382 = vpack.c.b16 %v1271, %v1268
      %v1383 = vpack.c.b16 %v1272, %v1269
      %v1384 = vpack.c.b16 %v1276, %v1273
      %v1385 = vpack.c.b16 %v1277, %v1274
      %v1386 = vpack.c.b16 %v1278, %v1275
      %v1387 = vpack.c.b16 %v1282, %v1279
      %v1388 = vpack.c.b16 %v1283, %v1280
      %v1389 = vpack.c.b16 %v1284, %v1281
      %v1390 = vpack.c.b16 %v1288, %v1285
      %v1391 = vpack.c.b16 %v1289, %v1286
      %v1392 = vpack.c.b16 %v1290, %v1287
      %v1393 = vpack.c.b16 %v1294, %v1291
      %v1394 = vpack.c.b16 %v1295, %v1292
      %v1395 = vpack.c.b16 %v1296, %v1293
      %v1396 = vpack.c.b16 %v1300, %v1297
      %v1397 = vpack.c.b16 %v1301, %v1298
      %v1398 = vpack.c.b16 %v1302, %v1299
      %v1399 = vpack.c.b16 %v1306, %v1303
      %v1400 = vpack.c.b16 %v1307, %v1304
      %v1401 = vpack.c.b16 %v1308, %v1305
      %v1402 = vpack.c.b16 %v1312, %v1309
      %v1403 = vpack.c.b16 %v1313, %v1310
      %v1404 = vpack.c.b16 %v1314, %v1311
      %v1405 = vpack.c.b16 %v1318, %v1315
      %v1406 = vpack.c.b16 %v1319, %v1316
      %v1407 = vpack.c.b16 %v1320, %v1317
      %v1408 = vpack.c.b16 %v1324, %v1321
      %v1409 = vpack.c.b16 %v1325, %v1322
      %v1410 = vpack.c.b16 %v1326, %v1323
      %v1411 = vpack.c.b16 %v1330, %v1327
      %v1412 = vpack.c.b16 %v1331, %v1328
      %v1413 = vpack.c.b16 %v1332, %v1329
      %v1414 = vpack.c.b16 %v1336, %v1333
      %v1415 = vpack.c.b16 %v1337, %v1334
      %v1416 = vpack.c.b16 %v1338, %v1335
      %v1417 = vpack.c.b16 %v1342, %v1339
      %v1418 = vpack.c.b16 %v1343, %v1340
      %v1419 = vpack.c.b16 %v1344, %v1341
      %v1420 = vpack.c.b16 %v1348, %v1345
      %v1421 = vpack.c.b16 %v1349, %v1346
      %v1422 = vpack.c.b16 %v1350, %v1347
      %1495 = vmatpush.bf16.msra.mxu0 %v1372
      %1496 = vmatpush.bf16.msra.mxu0 %v1369
      %1497 = vmatpush.bf16.msra.mxu0 %v1366
      %1498 = vmatpush.bf16.msra.mxu0 %v1363
      %1499 = vmatpush.bf16.msra.mxu0 %v1360
      %1500 = vmatpush.bf16.msra.mxu0 %v1357
      %1501 = vmatpush.bf16.msra.mxu0 %v1354
      %1502 = vmatpush.bf16.msra.mxu0 %v1351
      %1503 = vmatmul.bf16.gmra.mxu0 %v871
      %v1504 = vpop.f32.mrf.mxu0
      %v1505 = vadd.f32 0.0, %v1504
      %v1506 = vpop.f32.mrf.mxu0
      %v1507 = vadd.f32 0.0, %v1506
      %1508 = vmatmul.bf16.gmra.mxu0 %v874
      %v1509 = vpop.f32.mrf.mxu0
      %v1510 = vadd.f32 0.0, %v1509
      %v1511 = vpop.f32.mrf.mxu0
      %v1512 = vadd.f32 0.0, %v1511
      %1513 = vmatmul.bf16.gmra.mxu0 %v877
      %v1514 = vpop.f32.mrf.mxu0
      %v1515 = vadd.f32 0.0, %v1514
      %v1516 = vpop.f32.mrf.mxu0
      %v1517 = vadd.f32 0.0, %v1516
      %1518 = vmatmul.bf16.gmra.mxu0 %v880
      %v1519 = vpop.f32.mrf.mxu0
      %v1520 = vadd.f32 0.0, %v1519
      %v1521 = vpop.f32.mrf.mxu0
      %v1522 = vadd.f32 0.0, %v1521
      %1523 = vmatmul.bf16.gmra.mxu0 %v883
      %v1524 = vpop.f32.mrf.mxu0
      %v1525 = vpop.f32.mrf.mxu0
      %1526 = vmatmul.bf16.gmra.mxu0 %v886
      %v1527 = vpop.f32.mrf.mxu0
      %v1528 = vadd.f32 0.0, %v1527
      %v1529 = vpop.f32.mrf.mxu0
      %v1530 = vadd.f32 0.0, %v1529
      %1531 = vmatmul.bf16.gmra.mxu0 %v889
      %v1532 = vpop.f32.mrf.mxu0
      %v1533 = vadd.f32 0.0, %v1532
      %v1534 = vpop.f32.mrf.mxu0
      %v1535 = vadd.f32 0.0, %v1534
      %1536 = vmatmul.bf16.gmra.mxu0 %v892
      %v1537 = vpop.f32.mrf.mxu0
      %v1538 = vadd.f32 0.0, %v1537
      %v1539 = vpop.f32.mrf.mxu0
      %v1540 = vadd.f32 0.0, %v1539
      %1541 = vmatmul.bf16.gmra.mxu0 %v895
      %v1542 = vpop.f32.mrf.mxu0
      %v1543 = vadd.f32 0.0, %v1542
      %v1544 = vpop.f32.mrf.mxu0
      %v1545 = vadd.f32 0.0, %v1544
      %1546 = vmatmul.bf16.gmra.mxu0 %v898
      %v1547 = vpop.f32.mrf.mxu0
      %v1548 = vpop.f32.mrf.mxu0
      %1549 = vmatmul.bf16.gmra.mxu0 %v901
      %v1550 = vpop.f32.mrf.mxu0
      %v1551 = vadd.f32 0.0, %v1550
      %v1552 = vpop.f32.mrf.mxu0
      %v1553 = vadd.f32 0.0, %v1552
      %1554 = vmatmul.bf16.gmra.mxu0 %v904
      %v1555 = vpop.f32.mrf.mxu0
      %v1556 = vadd.f32 0.0, %v1555
      %v1557 = vpop.f32.mrf.mxu0
      %v1558 = vadd.f32 0.0, %v1557
      %1559 = vmatmul.bf16.gmra.mxu0 %v907
      %v1560 = vpop.f32.mrf.mxu0
      %v1561 = vadd.f32 0.0, %v1560
      %v1562 = vpop.f32.mrf.mxu0
      %v1563 = vadd.f32 0.0, %v1562
      %1564 = vmatmul.bf16.gmra.mxu0 %v910
      %v1565 = vpop.f32.mrf.mxu0
      %v1566 = vadd.f32 0.0, %v1565
      %v1567 = vpop.f32.mrf.mxu0
      %v1568 = vadd.f32 0.0, %v1567
      %1569 = vmatmul.bf16.gmra.mxu0 %v913
      %v1570 = vpop.f32.mrf.mxu0
      %v1571 = vpop.f32.mrf.mxu0
      %1572 = vmatmul.bf16.gmra.mxu0 %v916
      %v1573 = vpop.f32.mrf.mxu0
      %v1574 = vadd.f32 0.0, %v1573
      %v1575 = vpop.f32.mrf.mxu0
      %v1576 = vadd.f32 0.0, %v1575
      %1577 = vmatmul.bf16.gmra.mxu0 %v919
      %v1578 = vpop.f32.mrf.mxu0
      %v1579 = vadd.f32 0.0, %v1578
      %v1580 = vpop.f32.mrf.mxu0
      %v1581 = vadd.f32 0.0, %v1580
      %1582 = vmatmul.bf16.gmra.mxu0 %v922
      %v1583 = vpop.f32.mrf.mxu0
      %v1584 = vadd.f32 0.0, %v1583
      %v1585 = vpop.f32.mrf.mxu0
      %v1586 = vadd.f32 0.0, %v1585
      %1587 = vmatmul.bf16.gmra.mxu0 %v925
      %v1588 = vpop.f32.mrf.mxu0
      %v1589 = vadd.f32 0.0, %v1588
      %v1590 = vpop.f32.mrf.mxu0
      %v1591 = vadd.f32 0.0, %v1590
      %1592 = vmatmul.bf16.gmra.mxu0 %v928
      %v1593 = vpop.f32.mrf.mxu0
      %v1594 = vpop.f32.mrf.mxu0
      %1595 = vmatmul.bf16.gmra.mxu0 %v931
      %v1596 = vpop.f32.mrf.mxu0
      %v1597 = vadd.f32 0.0, %v1596
      %v1598 = vpop.f32.mrf.mxu0
      %v1599 = vadd.f32 0.0, %v1598
      %1600 = vmatmul.bf16.gmra.mxu0 %v934
      %v1601 = vpop.f32.mrf.mxu0
      %v1602 = vadd.f32 0.0, %v1601
      %v1603 = vpop.f32.mrf.mxu0
      %v1604 = vadd.f32 0.0, %v1603
      %1605 = vmatmul.bf16.gmra.mxu0 %v937
      %v1606 = vpop.f32.mrf.mxu0
      %v1607 = vadd.f32 0.0, %v1606
      %v1608 = vpop.f32.mrf.mxu0
      %v1609 = vadd.f32 0.0, %v1608
      %1610 = vmatmul.bf16.gmra.mxu0 %v940
      %v1611 = vpop.f32.mrf.mxu0
      %v1612 = vadd.f32 0.0, %v1611
      %v1613 = vpop.f32.mrf.mxu0
      %v1614 = vadd.f32 0.0, %v1613
      %1615 = vmatmul.bf16.gmra.mxu0 %v943
      %v1616 = vpop.f32.mrf.mxu0
      %v1617 = vpop.f32.mrf.mxu0
      %1618 = vmatmul.bf16.gmra.mxu0 %v946
      %v1619 = vpop.f32.mrf.mxu0
      %v1620 = vadd.f32 0.0, %v1619
      %v1621 = vpop.f32.mrf.mxu0
      %v1622 = vadd.f32 0.0, %v1621
      %1623 = vmatmul.bf16.gmra.mxu0 %v949
      %v1624 = vpop.f32.mrf.mxu0
      %v1625 = vadd.f32 0.0, %v1624
      %v1626 = vpop.f32.mrf.mxu0
      %v1627 = vadd.f32 0.0, %v1626
      %1628 = vmatmul.bf16.gmra.mxu0 %v952
      %v1629 = vpop.f32.mrf.mxu0
      %v1630 = vadd.f32 0.0, %v1629
      %v1631 = vpop.f32.mrf.mxu0
      %v1632 = vadd.f32 0.0, %v1631
      %1633 = vmatmul.bf16.gmra.mxu0 %v955
      %v1634 = vpop.f32.mrf.mxu0
      %v1635 = vadd.f32 0.0, %v1634
      %v1636 = vpop.f32.mrf.mxu0
      %v1637 = vadd.f32 0.0, %v1636
      %1638 = vmatmul.bf16.gmra.mxu0 %v958
      %v1639 = vpop.f32.mrf.mxu0
      %v1640 = vpop.f32.mrf.mxu0
      %1641 = vmatmul.bf16.gmra.mxu0 %v961
      %v1642 = vpop.f32.mrf.mxu0
      %v1643 = vadd.f32 0.0, %v1642
      %v1644 = vpop.f32.mrf.mxu0
      %v1645 = vadd.f32 0.0, %v1644
      %1646 = vmatmul.bf16.gmra.mxu0 %v964
      %v1647 = vpop.f32.mrf.mxu0
      %v1648 = vadd.f32 0.0, %v1647
      %v1649 = vpop.f32.mrf.mxu0
      %v1650 = vadd.f32 0.0, %v1649
      %1651 = vmatmul.bf16.gmra.mxu0 %v967
      %v1652 = vpop.f32.mrf.mxu0
      %v1653 = vadd.f32 0.0, %v1652
      %v1654 = vpop.f32.mrf.mxu0
      %v1655 = vadd.f32 0.0, %v1654
      %1656 = vmatmul.bf16.gmra.mxu0 %v970
      %v1657 = vpop.f32.mrf.mxu0
      %v1658 = vadd.f32 0.0, %v1657
      %v1659 = vpop.f32.mrf.mxu0
      %v1660 = vadd.f32 0.0, %v1659
      %1661 = vmatmul.bf16.gmra.mxu0 %v973
      %v1662 = vpop.f32.mrf.mxu0
      %v1663 = vpop.f32.mrf.mxu0
      %1664 = vmatmul.bf16.gmra.mxu0 %v976
      %v1665 = vpop.f32.mrf.mxu0
      %v1666 = vadd.f32 0.0, %v1665
      %v1667 = vpop.f32.mrf.mxu0
      %v1668 = vadd.f32 0.0, %v1667
      %1669 = vmatmul.bf16.gmra.mxu0 %v979
      %v1670 = vpop.f32.mrf.mxu0
      %v1671 = vadd.f32 0.0, %v1670
      %v1672 = vpop.f32.mrf.mxu0
      %v1673 = vadd.f32 0.0, %v1672
      %1674 = vmatmul.bf16.gmra.mxu0 %v982
      %v1675 = vpop.f32.mrf.mxu0
      %v1676 = vadd.f32 0.0, %v1675
      %v1677 = vpop.f32.mrf.mxu0
      %v1678 = vadd.f32 0.0, %v1677
      %1679 = vmatmul.bf16.gmra.mxu0 %v985
      %v1680 = vpop.f32.mrf.mxu0
      %v1681 = vadd.f32 0.0, %v1680
      %v1682 = vpop.f32.mrf.mxu0
      %v1683 = vadd.f32 0.0, %v1682
      %1684 = vmatmul.bf16.gmra.mxu0 %v988
      %v1685 = vpop.f32.mrf.mxu0
      %v1686 = vpop.f32.mrf.mxu0
      %1687 = vdwg.mxu0
      %1688 = vmatpush.bf16.msra.mxu0 %v1396
      %1689 = vmatpush.bf16.msra.mxu0 %v1393
      %1690 = vmatpush.bf16.msra.mxu0 %v1390
      %1691 = vmatpush.bf16.msra.mxu0 %v1387
      %1692 = vmatpush.bf16.msra.mxu0 %v1384
      %1693 = vmatpush.bf16.msra.mxu0 %v1381
      %1694 = vmatpush.bf16.msra.mxu0 %v1378
      %1695 = vmatpush.bf16.msra.mxu0 %v1375
      %1696 = vmatmul.bf16.gmra.mxu0 %v872
      %v1697 = vpop.f32.mrf.mxu0
      %v1698 = vadd.f32 %v1505, %v1697
      %v1699 = vpop.f32.mrf.mxu0
      %v1700 = vadd.f32 %v1507, %v1699
      %1701 = vmatmul.bf16.gmra.mxu0 %v875
      %v1702 = vpop.f32.mrf.mxu0
      %v1703 = vadd.f32 %v1510, %v1702
      %v1704 = vpop.f32.mrf.mxu0
      %v1705 = vadd.f32 %v1512, %v1704
      %1706 = vmatmul.bf16.gmra.mxu0 %v878
      %v1707 = vpop.f32.mrf.mxu0
      %v1708 = vadd.f32 %v1515, %v1707
      %v1709 = vpop.f32.mrf.mxu0
      %v1710 = vadd.f32 %v1517, %v1709
      %1711 = vmatmul.bf16.gmra.mxu0 %v881
      %v1712 = vpop.f32.mrf.mxu0
      %v1713 = vadd.f32 %v1520, %v1712
      %v1714 = vpop.f32.mrf.mxu0
      %v1715 = vadd.f32 %v1522, %v1714
      %1716 = vmatmul.bf16.gmra.mxu0 %v884
      %v1717 = vpop.f32.mrf.mxu0
      %v1718 = vpop.f32.mrf.mxu0
      %1719 = vmatmul.bf16.gmra.mxu0 %v887
      %v1720 = vpop.f32.mrf.mxu0
      %v1721 = vadd.f32 %v1528, %v1720
      %v1722 = vpop.f32.mrf.mxu0
      %v1723 = vadd.f32 %v1530, %v1722
      %1724 = vmatmul.bf16.gmra.mxu0 %v890
      %v1725 = vpop.f32.mrf.mxu0
      %v1726 = vadd.f32 %v1533, %v1725
      %v1727 = vpop.f32.mrf.mxu0
      %v1728 = vadd.f32 %v1535, %v1727
      %1729 = vmatmul.bf16.gmra.mxu0 %v893
      %v1730 = vpop.f32.mrf.mxu0
      %v1731 = vadd.f32 %v1538, %v1730
      %v1732 = vpop.f32.mrf.mxu0
      %v1733 = vadd.f32 %v1540, %v1732
      %1734 = vmatmul.bf16.gmra.mxu0 %v896
      %v1735 = vpop.f32.mrf.mxu0
      %v1736 = vadd.f32 %v1543, %v1735
      %v1737 = vpop.f32.mrf.mxu0
      %v1738 = vadd.f32 %v1545, %v1737
      %1739 = vmatmul.bf16.gmra.mxu0 %v899
      %v1740 = vpop.f32.mrf.mxu0
      %v1741 = vpop.f32.mrf.mxu0
      %1742 = vmatmul.bf16.gmra.mxu0 %v902
      %v1743 = vpop.f32.mrf.mxu0
      %v1744 = vadd.f32 %v1551, %v1743
      %v1745 = vpop.f32.mrf.mxu0
      %v1746 = vadd.f32 %v1553, %v1745
      %1747 = vmatmul.bf16.gmra.mxu0 %v905
      %v1748 = vpop.f32.mrf.mxu0
      %v1749 = vadd.f32 %v1556, %v1748
      %v1750 = vpop.f32.mrf.mxu0
      %v1751 = vadd.f32 %v1558, %v1750
      %1752 = vmatmul.bf16.gmra.mxu0 %v908
      %v1753 = vpop.f32.mrf.mxu0
      %v1754 = vadd.f32 %v1561, %v1753
      %v1755 = vpop.f32.mrf.mxu0
      %v1756 = vadd.f32 %v1563, %v1755
      %1757 = vmatmul.bf16.gmra.mxu0 %v911
      %v1758 = vpop.f32.mrf.mxu0
      %v1759 = vadd.f32 %v1566, %v1758
      %v1760 = vpop.f32.mrf.mxu0
      %v1761 = vadd.f32 %v1568, %v1760
      %1762 = vmatmul.bf16.gmra.mxu0 %v914
      %v1763 = vpop.f32.mrf.mxu0
      %v1764 = vpop.f32.mrf.mxu0
      %1765 = vmatmul.bf16.gmra.mxu0 %v917
      %v1766 = vpop.f32.mrf.mxu0
      %v1767 = vadd.f32 %v1574, %v1766
      %v1768 = vpop.f32.mrf.mxu0
      %v1769 = vadd.f32 %v1576, %v1768
      %1770 = vmatmul.bf16.gmra.mxu0 %v920
      %v1771 = vpop.f32.mrf.mxu0
      %v1772 = vadd.f32 %v1579, %v1771
      %v1773 = vpop.f32.mrf.mxu0
      %v1774 = vadd.f32 %v1581, %v1773
      %1775 = vmatmul.bf16.gmra.mxu0 %v923
      %v1776 = vpop.f32.mrf.mxu0
      %v1777 = vadd.f32 %v1584, %v1776
      %v1778 = vpop.f32.mrf.mxu0
      %v1779 = vadd.f32 %v1586, %v1778
      %1780 = vmatmul.bf16.gmra.mxu0 %v926
      %v1781 = vpop.f32.mrf.mxu0
      %v1782 = vadd.f32 %v1589, %v1781
      %v1783 = vpop.f32.mrf.mxu0
      %v1784 = vadd.f32 %v1591, %v1783
      %1785 = vmatmul.bf16.gmra.mxu0 %v929
      %v1786 = vpop.f32.mrf.mxu0
      %v1787 = vpop.f32.mrf.mxu0
      %1788 = vmatmul.bf16.gmra.mxu0 %v932
      %v1789 = vpop.f32.mrf.mxu0
      %v1790 = vadd.f32 %v1597, %v1789
      %v1791 = vpop.f32.mrf.mxu0
      %v1792 = vadd.f32 %v1599, %v1791
      %1793 = vmatmul.bf16.gmra.mxu0 %v935
      %v1794 = vpop.f32.mrf.mxu0
      %v1795 = vadd.f32 %v1602, %v1794
      %v1796 = vpop.f32.mrf.mxu0
      %v1797 = vadd.f32 %v1604, %v1796
      %1798 = vmatmul.bf16.gmra.mxu0 %v938
      %v1799 = vpop.f32.mrf.mxu0
      %v1800 = vadd.f32 %v1607, %v1799
      %v1801 = vpop.f32.mrf.mxu0
      %v1802 = vadd.f32 %v1609, %v1801
      %1803 = vmatmul.bf16.gmra.mxu0 %v941
      %v1804 = vpop.f32.mrf.mxu0
      %v1805 = vadd.f32 %v1612, %v1804
      %v1806 = vpop.f32.mrf.mxu0
      %v1807 = vadd.f32 %v1614, %v1806
      %1808 = vmatmul.bf16.gmra.mxu0 %v944
      %v1809 = vpop.f32.mrf.mxu0
      %v1810 = vpop.f32.mrf.mxu0
      %1811 = vmatmul.bf16.gmra.mxu0 %v947
      %v1812 = vpop.f32.mrf.mxu0
      %v1813 = vadd.f32 %v1620, %v1812
      %v1814 = vpop.f32.mrf.mxu0
      %v1815 = vadd.f32 %v1622, %v1814
      %1816 = vmatmul.bf16.gmra.mxu0 %v950
      %v1817 = vpop.f32.mrf.mxu0
      %v1818 = vadd.f32 %v1625, %v1817
      %v1819 = vpop.f32.mrf.mxu0
      %v1820 = vadd.f32 %v1627, %v1819
      %1821 = vmatmul.bf16.gmra.mxu0 %v953
      %v1822 = vpop.f32.mrf.mxu0
      %v1823 = vadd.f32 %v1630, %v1822
      %v1824 = vpop.f32.mrf.mxu0
      %v1825 = vadd.f32 %v1632, %v1824
      %1826 = vmatmul.bf16.gmra.mxu0 %v956
      %v1827 = vpop.f32.mrf.mxu0
      %v1828 = vadd.f32 %v1635, %v1827
      %v1829 = vpop.f32.mrf.mxu0
      %v1830 = vadd.f32 %v1637, %v1829
      %1831 = vmatmul.bf16.gmra.mxu0 %v959
      %v1832 = vpop.f32.mrf.mxu0
      %v1833 = vpop.f32.mrf.mxu0
      %1834 = vmatmul.bf16.gmra.mxu0 %v962
      %v1835 = vpop.f32.mrf.mxu0
      %v1836 = vadd.f32 %v1643, %v1835
      %v1837 = vpop.f32.mrf.mxu0
      %v1838 = vadd.f32 %v1645, %v1837
      %1839 = vmatmul.bf16.gmra.mxu0 %v965
      %v1840 = vpop.f32.mrf.mxu0
      %v1841 = vadd.f32 %v1648, %v1840
      %v1842 = vpop.f32.mrf.mxu0
      %v1843 = vadd.f32 %v1650, %v1842
      %1844 = vmatmul.bf16.gmra.mxu0 %v968
      %v1845 = vpop.f32.mrf.mxu0
      %v1846 = vadd.f32 %v1653, %v1845
      %v1847 = vpop.f32.mrf.mxu0
      %v1848 = vadd.f32 %v1655, %v1847
      %1849 = vmatmul.bf16.gmra.mxu0 %v971
      %v1850 = vpop.f32.mrf.mxu0
      %v1851 = vadd.f32 %v1658, %v1850
      %v1852 = vpop.f32.mrf.mxu0
      %v1853 = vadd.f32 %v1660, %v1852
      %1854 = vmatmul.bf16.gmra.mxu0 %v974
      %v1855 = vpop.f32.mrf.mxu0
      %v1856 = vpop.f32.mrf.mxu0
      %1857 = vmatmul.bf16.gmra.mxu0 %v977
      %v1858 = vpop.f32.mrf.mxu0
      %v1859 = vadd.f32 %v1666, %v1858
      %v1860 = vpop.f32.mrf.mxu0
      %v1861 = vadd.f32 %v1668, %v1860
      %1862 = vmatmul.bf16.gmra.mxu0 %v980
      %v1863 = vpop.f32.mrf.mxu0
      %v1864 = vadd.f32 %v1671, %v1863
      %v1865 = vpop.f32.mrf.mxu0
      %v1866 = vadd.f32 %v1673, %v1865
      %1867 = vmatmul.bf16.gmra.mxu0 %v983
      %v1868 = vpop.f32.mrf.mxu0
      %v1869 = vadd.f32 %v1676, %v1868
      %v1870 = vpop.f32.mrf.mxu0
      %v1871 = vadd.f32 %v1678, %v1870
      %1872 = vmatmul.bf16.gmra.mxu0 %v986
      %v1873 = vpop.f32.mrf.mxu0
      %v1874 = vadd.f32 %v1681, %v1873
      %v1875 = vpop.f32.mrf.mxu0
      %v1876 = vadd.f32 %v1683, %v1875
      %1877 = vmatmul.bf16.gmra.mxu0 %v989
      %v1878 = vpop.f32.mrf.mxu0
      %v1879 = vpop.f32.mrf.mxu0
      %1880 = vdwg.mxu0
      %1881 = vmatpush.bf16.msra.mxu0 %v1420
      %1882 = vmatpush.bf16.msra.mxu0 %v1417
      %1883 = vmatpush.bf16.msra.mxu0 %v1414
      %1884 = vmatpush.bf16.msra.mxu0 %v1411
      %1885 = vmatpush.bf16.msra.mxu0 %v1408
      %1886 = vmatpush.bf16.msra.mxu0 %v1405
      %1887 = vmatpush.bf16.msra.mxu0 %v1402
      %1888 = vmatpush.bf16.msra.mxu0 %v1399
      %1889 = vmatmul.bf16.gmra.mxu0 %v873
      %v1890 = vpop.f32.mrf.mxu0
      %v1891 = vadd.f32 %v1698, %v1890
      %v1892 = vpop.f32.mrf.mxu0
      %v1893 = vadd.f32 %v1700, %v1892
      %1894 = vmatmul.bf16.gmra.mxu0 %v876
      %v1895 = vpop.f32.mrf.mxu0
      %v1896 = vadd.f32 %v1703, %v1895
      %v1897 = vpop.f32.mrf.mxu0
      %v1898 = vadd.f32 %v1705, %v1897
      %1899 = vmatmul.bf16.gmra.mxu0 %v879
      %v1900 = vpop.f32.mrf.mxu0
      %v1901 = vadd.f32 %v1708, %v1900
      %v1902 = vpop.f32.mrf.mxu0
      %v1903 = vadd.f32 %v1710, %v1902
      %1904 = vmatmul.bf16.gmra.mxu0 %v882
      %v1905 = vpop.f32.mrf.mxu0
      %v1906 = vadd.f32 %v1713, %v1905
      %v1907 = vpop.f32.mrf.mxu0
      %v1908 = vadd.f32 %v1715, %v1907
      %1909 = vmatmul.bf16.gmra.mxu0 %v885
      %v1910 = vpop.f32.mrf.mxu0
      %v1911 = vpop.f32.mrf.mxu0
      %1912 = vmatmul.bf16.gmra.mxu0 %v888
      %v1913 = vpop.f32.mrf.mxu0
      %v1914 = vadd.f32 %v1721, %v1913
      %v1915 = vpop.f32.mrf.mxu0
      %v1916 = vadd.f32 %v1723, %v1915
      %1917 = vmatmul.bf16.gmra.mxu0 %v891
      %v1918 = vpop.f32.mrf.mxu0
      %v1919 = vadd.f32 %v1726, %v1918
      %v1920 = vpop.f32.mrf.mxu0
      %v1921 = vadd.f32 %v1728, %v1920
      %1922 = vmatmul.bf16.gmra.mxu0 %v894
      %v1923 = vpop.f32.mrf.mxu0
      %v1924 = vadd.f32 %v1731, %v1923
      %v1925 = vpop.f32.mrf.mxu0
      %v1926 = vadd.f32 %v1733, %v1925
      %1927 = vmatmul.bf16.gmra.mxu0 %v897
      %v1928 = vpop.f32.mrf.mxu0
      %v1929 = vadd.f32 %v1736, %v1928
      %v1930 = vpop.f32.mrf.mxu0
      %v1931 = vadd.f32 %v1738, %v1930
      %1932 = vmatmul.bf16.gmra.mxu0 %v900
      %v1933 = vpop.f32.mrf.mxu0
      %v1934 = vpop.f32.mrf.mxu0
      %1935 = vmatmul.bf16.gmra.mxu0 %v903
      %v1936 = vpop.f32.mrf.mxu0
      %v1937 = vadd.f32 %v1744, %v1936
      %v1938 = vpop.f32.mrf.mxu0
      %v1939 = vadd.f32 %v1746, %v1938
      %1940 = vmatmul.bf16.gmra.mxu0 %v906
      %v1941 = vpop.f32.mrf.mxu0
      %v1942 = vadd.f32 %v1749, %v1941
      %v1943 = vpop.f32.mrf.mxu0
      %v1944 = vadd.f32 %v1751, %v1943
      %1945 = vmatmul.bf16.gmra.mxu0 %v909
      %v1946 = vpop.f32.mrf.mxu0
      %v1947 = vadd.f32 %v1754, %v1946
      %v1948 = vpop.f32.mrf.mxu0
      %v1949 = vadd.f32 %v1756, %v1948
      %1950 = vmatmul.bf16.gmra.mxu0 %v912
      %v1951 = vpop.f32.mrf.mxu0
      %v1952 = vadd.f32 %v1759, %v1951
      %v1953 = vpop.f32.mrf.mxu0
      %v1954 = vadd.f32 %v1761, %v1953
      %1955 = vmatmul.bf16.gmra.mxu0 %v915
      %v1956 = vpop.f32.mrf.mxu0
      %v1957 = vpop.f32.mrf.mxu0
      %1958 = vmatmul.bf16.gmra.mxu0 %v918
      %v1959 = vpop.f32.mrf.mxu0
      %v1960 = vadd.f32 %v1767, %v1959
      %v1961 = vpop.f32.mrf.mxu0
      %v1962 = vadd.f32 %v1769, %v1961
      %1963 = vmatmul.bf16.gmra.mxu0 %v921
      %v1964 = vpop.f32.mrf.mxu0
      %v1965 = vadd.f32 %v1772, %v1964
      %v1966 = vpop.f32.mrf.mxu0
      %v1967 = vadd.f32 %v1774, %v1966
      %1968 = vmatmul.bf16.gmra.mxu0 %v924
      %v1969 = vpop.f32.mrf.mxu0
      %v1970 = vadd.f32 %v1777, %v1969
      %v1971 = vpop.f32.mrf.mxu0
      %v1972 = vadd.f32 %v1779, %v1971
      %1973 = vmatmul.bf16.gmra.mxu0 %v927
      %v1974 = vpop.f32.mrf.mxu0
      %v1975 = vadd.f32 %v1782, %v1974
      %v1976 = vpop.f32.mrf.mxu0
      %v1977 = vadd.f32 %v1784, %v1976
      %1978 = vmatmul.bf16.gmra.mxu0 %v930
      %v1979 = vpop.f32.mrf.mxu0
      %v1980 = vpop.f32.mrf.mxu0
      %1981 = vmatmul.bf16.gmra.mxu0 %v933
      %v1982 = vpop.f32.mrf.mxu0
      %v1983 = vadd.f32 %v1790, %v1982
      %v1984 = vpop.f32.mrf.mxu0
      %v1985 = vadd.f32 %v1792, %v1984
      %1986 = vmatmul.bf16.gmra.mxu0 %v936
      %v1987 = vpop.f32.mrf.mxu0
      %v1988 = vadd.f32 %v1795, %v1987
      %v1989 = vpop.f32.mrf.mxu0
      %v1990 = vadd.f32 %v1797, %v1989
      %1991 = vmatmul.bf16.gmra.mxu0 %v939
      %v1992 = vpop.f32.mrf.mxu0
      %v1993 = vadd.f32 %v1800, %v1992
      %v1994 = vpop.f32.mrf.mxu0
      %v1995 = vadd.f32 %v1802, %v1994
      %1996 = vmatmul.bf16.gmra.mxu0 %v942
      %v1997 = vpop.f32.mrf.mxu0
      %v1998 = vadd.f32 %v1805, %v1997
      %v1999 = vpop.f32.mrf.mxu0
      %v2000 = vadd.f32 %v1807, %v1999
      %2001 = vmatmul.bf16.gmra.mxu0 %v945
      %v2002 = vpop.f32.mrf.mxu0
      %v2003 = vpop.f32.mrf.mxu0
      %2004 = vmatmul.bf16.gmra.mxu0 %v948
      %v2005 = vpop.f32.mrf.mxu0
      %v2006 = vadd.f32 %v1813, %v2005
      %v2007 = vpop.f32.mrf.mxu0
      %v2008 = vadd.f32 %v1815, %v2007
      %2009 = vmatmul.bf16.gmra.mxu0 %v951
      %v2010 = vpop.f32.mrf.mxu0
      %v2011 = vadd.f32 %v1818, %v2010
      %v2012 = vpop.f32.mrf.mxu0
      %v2013 = vadd.f32 %v1820, %v2012
      %2014 = vmatmul.bf16.gmra.mxu0 %v954
      %v2015 = vpop.f32.mrf.mxu0
      %v2016 = vadd.f32 %v1823, %v2015
      %v2017 = vpop.f32.mrf.mxu0
      %v2018 = vadd.f32 %v1825, %v2017
      %2019 = vmatmul.bf16.gmra.mxu0 %v957
      %v2020 = vpop.f32.mrf.mxu0
      %v2021 = vadd.f32 %v1828, %v2020
      %v2022 = vpop.f32.mrf.mxu0
      %v2023 = vadd.f32 %v1830, %v2022
      %2024 = vmatmul.bf16.gmra.mxu0 %v960
      %v2025 = vpop.f32.mrf.mxu0
      %v2026 = vpop.f32.mrf.mxu0
      %2027 = vmatmul.bf16.gmra.mxu0 %v963
      %v2028 = vpop.f32.mrf.mxu0
      %v2029 = vadd.f32 %v1836, %v2028
      %v2030 = vpop.f32.mrf.mxu0
      %v2031 = vadd.f32 %v1838, %v2030
      %2032 = vmatmul.bf16.gmra.mxu0 %v966
      %v2033 = vpop.f32.mrf.mxu0
      %v2034 = vadd.f32 %v1841, %v2033
      %v2035 = vpop.f32.mrf.mxu0
      %v2036 = vadd.f32 %v1843, %v2035
      %2037 = vmatmul.bf16.gmra.mxu0 %v969
      %v2038 = vpop.f32.mrf.mxu0
      %v2039 = vadd.f32 %v1846, %v2038
      %v2040 = vpop.f32.mrf.mxu0
      %v2041 = vadd.f32 %v1848, %v2040
      %2042 = vmatmul.bf16.gmra.mxu0 %v972
      %v2043 = vpop.f32.mrf.mxu0
      %v2044 = vadd.f32 %v1851, %v2043
      %v2045 = vpop.f32.mrf.mxu0
      %v2046 = vadd.f32 %v1853, %v2045
      %2047 = vmatmul.bf16.gmra.mxu0 %v975
      %v2048 = vpop.f32.mrf.mxu0
      %v2049 = vpop.f32.mrf.mxu0
      %2050 = vmatmul.bf16.gmra.mxu0 %v978
      %v2051 = vpop.f32.mrf.mxu0
      %v2052 = vadd.f32 %v1859, %v2051
      %v2053 = vpop.f32.mrf.mxu0
      %v2054 = vadd.f32 %v1861, %v2053
      %2055 = vmatmul.bf16.gmra.mxu0 %v981
      %v2056 = vpop.f32.mrf.mxu0
      %v2057 = vadd.f32 %v1864, %v2056
      %v2058 = vpop.f32.mrf.mxu0
      %v2059 = vadd.f32 %v1866, %v2058
      %2060 = vmatmul.bf16.gmra.mxu0 %v984
      %v2061 = vpop.f32.mrf.mxu0
      %v2062 = vadd.f32 %v1869, %v2061
      %v2063 = vpop.f32.mrf.mxu0
      %v2064 = vadd.f32 %v1871, %v2063
      %2065 = vmatmul.bf16.gmra.mxu0 %v987
      %v2066 = vpop.f32.mrf.mxu0
      %v2067 = vadd.f32 %v1874, %v2066
      %v2068 = vpop.f32.mrf.mxu0
      %v2069 = vadd.f32 %v1876, %v2068
      %2070 = vmatmul.bf16.gmra.mxu0 %v990
      %v2071 = vpop.f32.mrf.mxu0
      %v2072 = vpop.f32.mrf.mxu0
      %2073 = vdwg.mxu0
      %2074 = vmatpush.bf16.msra.mxu0 %v1373
      %2075 = vmatpush.bf16.msra.mxu0 %v1370
      %2076 = vmatpush.bf16.msra.mxu0 %v1367
      %2077 = vmatpush.bf16.msra.mxu0 %v1364
      %2078 = vmatpush.bf16.msra.mxu0 %v1361
      %2079 = vmatpush.bf16.msra.mxu0 %v1358
      %2080 = vmatpush.bf16.msra.mxu0 %v1355
      %2081 = vmatpush.bf16.msra.mxu0 %v1352
      %2082 = vmatmul.bf16.gmra.mxu0 %v871
      %v2083 = vpop.f32.mrf.mxu0
      %v2084 = vpop.f32.mrf.mxu0
      %v2085 = vadd.f32 0.0, %v2084
      %2086 = vmatmul.bf16.gmra.mxu0 %v874
      %v2087 = vpop.f32.mrf.mxu0
      %v2088 = vadd.f32 0.0, %v2087
      %v2089 = vpop.f32.mrf.mxu0
      %v2090 = vadd.f32 0.0, %v2089
      %2091 = vmatmul.bf16.gmra.mxu0 %v877
      %v2092 = vpop.f32.mrf.mxu0
      %v2093 = vadd.f32 0.0, %v2092
      %v2094 = vpop.f32.mrf.mxu0
      %v2095 = vadd.f32 0.0, %v2094
      %2096 = vmatmul.bf16.gmra.mxu0 %v880
      %v2097 = vpop.f32.mrf.mxu0
      %v2098 = vadd.f32 0.0, %v2097
      %v2099 = vpop.f32.mrf.mxu0
      %v2100 = vadd.f32 0.0, %v2099
      %2101 = vmatmul.bf16.gmra.mxu0 %v883
      %v2102 = vpop.f32.mrf.mxu0
      %v2103 = vadd.f32 0.0, %v2102
      %v2104 = vpop.f32.mrf.mxu0
      %2105 = vmatmul.bf16.gmra.mxu0 %v886
      %v2106 = vpop.f32.mrf.mxu0
      %v2107 = vpop.f32.mrf.mxu0
      %v2108 = vadd.f32 0.0, %v2107
      %2109 = vmatmul.bf16.gmra.mxu0 %v889
      %v2110 = vpop.f32.mrf.mxu0
      %v2111 = vadd.f32 0.0, %v2110
      %v2112 = vpop.f32.mrf.mxu0
      %v2113 = vadd.f32 0.0, %v2112
      %2114 = vmatmul.bf16.gmra.mxu0 %v892
      %v2115 = vpop.f32.mrf.mxu0
      %v2116 = vadd.f32 0.0, %v2115
      %v2117 = vpop.f32.mrf.mxu0
      %v2118 = vadd.f32 0.0, %v2117
      %2119 = vmatmul.bf16.gmra.mxu0 %v895
      %v2120 = vpop.f32.mrf.mxu0
      %v2121 = vadd.f32 0.0, %v2120
      %v2122 = vpop.f32.mrf.mxu0
      %v2123 = vadd.f32 0.0, %v2122
      %2124 = vmatmul.bf16.gmra.mxu0 %v898
      %v2125 = vpop.f32.mrf.mxu0
      %v2126 = vadd.f32 0.0, %v2125
      %v2127 = vpop.f32.mrf.mxu0
      %2128 = vmatmul.bf16.gmra.mxu0 %v901
      %v2129 = vpop.f32.mrf.mxu0
      %v2130 = vpop.f32.mrf.mxu0
      %v2131 = vadd.f32 0.0, %v2130
      %2132 = vmatmul.bf16.gmra.mxu0 %v904
      %v2133 = vpop.f32.mrf.mxu0
      %v2134 = vadd.f32 0.0, %v2133
      %v2135 = vpop.f32.mrf.mxu0
      %v2136 = vadd.f32 0.0, %v2135
      %2137 = vmatmul.bf16.gmra.mxu0 %v907
      %v2138 = vpop.f32.mrf.mxu0
      %v2139 = vadd.f32 0.0, %v2138
      %v2140 = vpop.f32.mrf.mxu0
      %v2141 = vadd.f32 0.0, %v2140
      %2142 = vmatmul.bf16.gmra.mxu0 %v910
      %v2143 = vpop.f32.mrf.mxu0
      %v2144 = vadd.f32 0.0, %v2143
      %v2145 = vpop.f32.mrf.mxu0
      %v2146 = vadd.f32 0.0, %v2145
      %2147 = vmatmul.bf16.gmra.mxu0 %v913
      %v2148 = vpop.f32.mrf.mxu0
      %v2149 = vadd.f32 0.0, %v2148
      %v2150 = vpop.f32.mrf.mxu0
      %2151 = vmatmul.bf16.gmra.mxu0 %v916
      %v2152 = vpop.f32.mrf.mxu0
      %v2153 = vpop.f32.mrf.mxu0
      %v2154 = vadd.f32 0.0, %v2153
      %2155 = vmatmul.bf16.gmra.mxu0 %v919
      %v2156 = vpop.f32.mrf.mxu0
      %v2157 = vadd.f32 0.0, %v2156
      %v2158 = vpop.f32.mrf.mxu0
      %v2159 = vadd.f32 0.0, %v2158
      %2160 = vmatmul.bf16.gmra.mxu0 %v922
      %v2161 = vpop.f32.mrf.mxu0
      %v2162 = vadd.f32 0.0, %v2161
      %v2163 = vpop.f32.mrf.mxu0
      %v2164 = vadd.f32 0.0, %v2163
      %2165 = vmatmul.bf16.gmra.mxu0 %v925
      %v2166 = vpop.f32.mrf.mxu0
      %v2167 = vadd.f32 0.0, %v2166
      %v2168 = vpop.f32.mrf.mxu0
      %v2169 = vadd.f32 0.0, %v2168
      %2170 = vmatmul.bf16.gmra.mxu0 %v928
      %v2171 = vpop.f32.mrf.mxu0
      %v2172 = vadd.f32 0.0, %v2171
      %v2173 = vpop.f32.mrf.mxu0
      %2174 = vmatmul.bf16.gmra.mxu0 %v931
      %v2175 = vpop.f32.mrf.mxu0
      %v2176 = vpop.f32.mrf.mxu0
      %v2177 = vadd.f32 0.0, %v2176
      %2178 = vmatmul.bf16.gmra.mxu0 %v934
      %v2179 = vpop.f32.mrf.mxu0
      %v2180 = vadd.f32 0.0, %v2179
      %v2181 = vpop.f32.mrf.mxu0
      %v2182 = vadd.f32 0.0, %v2181
      %2183 = vmatmul.bf16.gmra.mxu0 %v937
      %v2184 = vpop.f32.mrf.mxu0
      %v2185 = vadd.f32 0.0, %v2184
      %v2186 = vpop.f32.mrf.mxu0
      %v2187 = vadd.f32 0.0, %v2186
      %2188 = vmatmul.bf16.gmra.mxu0 %v940
      %v2189 = vpop.f32.mrf.mxu0
      %v2190 = vadd.f32 0.0, %v2189
      %v2191 = vpop.f32.mrf.mxu0
      %v2192 = vadd.f32 0.0, %v2191
      %2193 = vmatmul.bf16.gmra.mxu0 %v943
      %v2194 = vpop.f32.mrf.mxu0
      %v2195 = vadd.f32 0.0, %v2194
      %v2196 = vpop.f32.mrf.mxu0
      %2197 = vmatmul.bf16.gmra.mxu0 %v946
      %v2198 = vpop.f32.mrf.mxu0
      %v2199 = vpop.f32.mrf.mxu0
      %v2200 = vadd.f32 0.0, %v2199
      %2201 = vmatmul.bf16.gmra.mxu0 %v949
      %v2202 = vpop.f32.mrf.mxu0
      %v2203 = vadd.f32 0.0, %v2202
      %v2204 = vpop.f32.mrf.mxu0
      %v2205 = vadd.f32 0.0, %v2204
      %2206 = vmatmul.bf16.gmra.mxu0 %v952
      %v2207 = vpop.f32.mrf.mxu0
      %v2208 = vadd.f32 0.0, %v2207
      %v2209 = vpop.f32.mrf.mxu0
      %v2210 = vadd.f32 0.0, %v2209
      %2211 = vmatmul.bf16.gmra.mxu0 %v955
      %v2212 = vpop.f32.mrf.mxu0
      %v2213 = vadd.f32 0.0, %v2212
      %v2214 = vpop.f32.mrf.mxu0
      %v2215 = vadd.f32 0.0, %v2214
      %2216 = vmatmul.bf16.gmra.mxu0 %v958
      %v2217 = vpop.f32.mrf.mxu0
      %v2218 = vadd.f32 0.0, %v2217
      %v2219 = vpop.f32.mrf.mxu0
      %2220 = vmatmul.bf16.gmra.mxu0 %v961
      %v2221 = vpop.f32.mrf.mxu0
      %v2222 = vpop.f32.mrf.mxu0
      %v2223 = vadd.f32 0.0, %v2222
      %2224 = vmatmul.bf16.gmra.mxu0 %v964
      %v2225 = vpop.f32.mrf.mxu0
      %v2226 = vadd.f32 0.0, %v2225
      %v2227 = vpop.f32.mrf.mxu0
      %v2228 = vadd.f32 0.0, %v2227
      %2229 = vmatmul.bf16.gmra.mxu0 %v967
      %v2230 = vpop.f32.mrf.mxu0
      %v2231 = vadd.f32 0.0, %v2230
      %v2232 = vpop.f32.mrf.mxu0
      %v2233 = vadd.f32 0.0, %v2232
      %2234 = vmatmul.bf16.gmra.mxu0 %v970
      %v2235 = vpop.f32.mrf.mxu0
      %v2236 = vadd.f32 0.0, %v2235
      %v2237 = vpop.f32.mrf.mxu0
      %v2238 = vadd.f32 0.0, %v2237
      %2239 = vmatmul.bf16.gmra.mxu0 %v973
      %v2240 = vpop.f32.mrf.mxu0
      %v2241 = vadd.f32 0.0, %v2240
      %v2242 = vpop.f32.mrf.mxu0
      %2243 = vmatmul.bf16.gmra.mxu0 %v976
      %v2244 = vpop.f32.mrf.mxu0
      %v2245 = vpop.f32.mrf.mxu0
      %v2246 = vadd.f32 0.0, %v2245
      %2247 = vmatmul.bf16.gmra.mxu0 %v979
      %v2248 = vpop.f32.mrf.mxu0
      %v2249 = vadd.f32 0.0, %v2248
      %v2250 = vpop.f32.mrf.mxu0
      %v2251 = vadd.f32 0.0, %v2250
      %2252 = vmatmul.bf16.gmra.mxu0 %v982
      %v2253 = vpop.f32.mrf.mxu0
      %v2254 = vadd.f32 0.0, %v2253
      %v2255 = vpop.f32.mrf.mxu0
      %v2256 = vadd.f32 0.0, %v2255
      %2257 = vmatmul.bf16.gmra.mxu0 %v985
      %v2258 = vpop.f32.mrf.mxu0
      %v2259 = vadd.f32 0.0, %v2258
      %v2260 = vpop.f32.mrf.mxu0
      %v2261 = vadd.f32 0.0, %v2260
      %2262 = vmatmul.bf16.gmra.mxu0 %v988
      %v2263 = vpop.f32.mrf.mxu0
      %v2264 = vadd.f32 0.0, %v2263
      %v2265 = vpop.f32.mrf.mxu0
      %2266 = vdwg.mxu0
      %2267 = vmatpush.bf16.msra.mxu0 %v1397
      %2268 = vmatpush.bf16.msra.mxu0 %v1394
      %2269 = vmatpush.bf16.msra.mxu0 %v1391
      %2270 = vmatpush.bf16.msra.mxu0 %v1388
      %2271 = vmatpush.bf16.msra.mxu0 %v1385
      %2272 = vmatpush.bf16.msra.mxu0 %v1382
      %2273 = vmatpush.bf16.msra.mxu0 %v1379
      %2274 = vmatpush.bf16.msra.mxu0 %v1376
      %2275 = vmatmul.bf16.gmra.mxu0 %v872
      %v2276 = vpop.f32.mrf.mxu0
      %v2277 = vpop.f32.mrf.mxu0
      %v2278 = vadd.f32 %v2085, %v2277
      %2279 = vmatmul.bf16.gmra.mxu0 %v875
      %v2280 = vpop.f32.mrf.mxu0
      %v2281 = vadd.f32 %v2088, %v2280
      %v2282 = vpop.f32.mrf.mxu0
      %v2283 = vadd.f32 %v2090, %v2282
      %2284 = vmatmul.bf16.gmra.mxu0 %v878
      %v2285 = vpop.f32.mrf.mxu0
      %v2286 = vadd.f32 %v2093, %v2285
      %v2287 = vpop.f32.mrf.mxu0
      %v2288 = vadd.f32 %v2095, %v2287
      %2289 = vmatmul.bf16.gmra.mxu0 %v881
      %v2290 = vpop.f32.mrf.mxu0
      %v2291 = vadd.f32 %v2098, %v2290
      %v2292 = vpop.f32.mrf.mxu0
      %v2293 = vadd.f32 %v2100, %v2292
      %2294 = vmatmul.bf16.gmra.mxu0 %v884
      %v2295 = vpop.f32.mrf.mxu0
      %v2296 = vadd.f32 %v2103, %v2295
      %v2297 = vpop.f32.mrf.mxu0
      %2298 = vmatmul.bf16.gmra.mxu0 %v887
      %v2299 = vpop.f32.mrf.mxu0
      %v2300 = vpop.f32.mrf.mxu0
      %v2301 = vadd.f32 %v2108, %v2300
      %2302 = vmatmul.bf16.gmra.mxu0 %v890
      %v2303 = vpop.f32.mrf.mxu0
      %v2304 = vadd.f32 %v2111, %v2303
      %v2305 = vpop.f32.mrf.mxu0
      %v2306 = vadd.f32 %v2113, %v2305
      %2307 = vmatmul.bf16.gmra.mxu0 %v893
      %v2308 = vpop.f32.mrf.mxu0
      %v2309 = vadd.f32 %v2116, %v2308
      %v2310 = vpop.f32.mrf.mxu0
      %v2311 = vadd.f32 %v2118, %v2310
      %2312 = vmatmul.bf16.gmra.mxu0 %v896
      %v2313 = vpop.f32.mrf.mxu0
      %v2314 = vadd.f32 %v2121, %v2313
      %v2315 = vpop.f32.mrf.mxu0
      %v2316 = vadd.f32 %v2123, %v2315
      %2317 = vmatmul.bf16.gmra.mxu0 %v899
      %v2318 = vpop.f32.mrf.mxu0
      %v2319 = vadd.f32 %v2126, %v2318
      %v2320 = vpop.f32.mrf.mxu0
      %2321 = vmatmul.bf16.gmra.mxu0 %v902
      %v2322 = vpop.f32.mrf.mxu0
      %v2323 = vpop.f32.mrf.mxu0
      %v2324 = vadd.f32 %v2131, %v2323
      %2325 = vmatmul.bf16.gmra.mxu0 %v905
      %v2326 = vpop.f32.mrf.mxu0
      %v2327 = vadd.f32 %v2134, %v2326
      %v2328 = vpop.f32.mrf.mxu0
      %v2329 = vadd.f32 %v2136, %v2328
      %2330 = vmatmul.bf16.gmra.mxu0 %v908
      %v2331 = vpop.f32.mrf.mxu0
      %v2332 = vadd.f32 %v2139, %v2331
      %v2333 = vpop.f32.mrf.mxu0
      %v2334 = vadd.f32 %v2141, %v2333
      %2335 = vmatmul.bf16.gmra.mxu0 %v911
      %v2336 = vpop.f32.mrf.mxu0
      %v2337 = vadd.f32 %v2144, %v2336
      %v2338 = vpop.f32.mrf.mxu0
      %v2339 = vadd.f32 %v2146, %v2338
      %2340 = vmatmul.bf16.gmra.mxu0 %v914
      %v2341 = vpop.f32.mrf.mxu0
      %v2342 = vadd.f32 %v2149, %v2341
      %v2343 = vpop.f32.mrf.mxu0
      %2344 = vmatmul.bf16.gmra.mxu0 %v917
      %v2345 = vpop.f32.mrf.mxu0
      %v2346 = vpop.f32.mrf.mxu0
      %v2347 = vadd.f32 %v2154, %v2346
      %2348 = vmatmul.bf16.gmra.mxu0 %v920
      %v2349 = vpop.f32.mrf.mxu0
      %v2350 = vadd.f32 %v2157, %v2349
      %v2351 = vpop.f32.mrf.mxu0
      %v2352 = vadd.f32 %v2159, %v2351
      %2353 = vmatmul.bf16.gmra.mxu0 %v923
      %v2354 = vpop.f32.mrf.mxu0
      %v2355 = vadd.f32 %v2162, %v2354
      %v2356 = vpop.f32.mrf.mxu0
      %v2357 = vadd.f32 %v2164, %v2356
      %2358 = vmatmul.bf16.gmra.mxu0 %v926
      %v2359 = vpop.f32.mrf.mxu0
      %v2360 = vadd.f32 %v2167, %v2359
      %v2361 = vpop.f32.mrf.mxu0
      %v2362 = vadd.f32 %v2169, %v2361
      %2363 = vmatmul.bf16.gmra.mxu0 %v929
      %v2364 = vpop.f32.mrf.mxu0
      %v2365 = vadd.f32 %v2172, %v2364
      %v2366 = vpop.f32.mrf.mxu0
      %2367 = vmatmul.bf16.gmra.mxu0 %v932
      %v2368 = vpop.f32.mrf.mxu0
      %v2369 = vpop.f32.mrf.mxu0
      %v2370 = vadd.f32 %v2177, %v2369
      %2371 = vmatmul.bf16.gmra.mxu0 %v935
      %v2372 = vpop.f32.mrf.mxu0
      %v2373 = vadd.f32 %v2180, %v2372
      %v2374 = vpop.f32.mrf.mxu0
      %v2375 = vadd.f32 %v2182, %v2374
      %2376 = vmatmul.bf16.gmra.mxu0 %v938
      %v2377 = vpop.f32.mrf.mxu0
      %v2378 = vadd.f32 %v2185, %v2377
      %v2379 = vpop.f32.mrf.mxu0
      %v2380 = vadd.f32 %v2187, %v2379
      %2381 = vmatmul.bf16.gmra.mxu0 %v941
      %v2382 = vpop.f32.mrf.mxu0
      %v2383 = vadd.f32 %v2190, %v2382
      %v2384 = vpop.f32.mrf.mxu0
      %v2385 = vadd.f32 %v2192, %v2384
      %2386 = vmatmul.bf16.gmra.mxu0 %v944
      %v2387 = vpop.f32.mrf.mxu0
      %v2388 = vadd.f32 %v2195, %v2387
      %v2389 = vpop.f32.mrf.mxu0
      %2390 = vmatmul.bf16.gmra.mxu0 %v947
      %v2391 = vpop.f32.mrf.mxu0
      %v2392 = vpop.f32.mrf.mxu0
      %v2393 = vadd.f32 %v2200, %v2392
      %2394 = vmatmul.bf16.gmra.mxu0 %v950
      %v2395 = vpop.f32.mrf.mxu0
      %v2396 = vadd.f32 %v2203, %v2395
      %v2397 = vpop.f32.mrf.mxu0
      %v2398 = vadd.f32 %v2205, %v2397
      %2399 = vmatmul.bf16.gmra.mxu0 %v953
      %v2400 = vpop.f32.mrf.mxu0
      %v2401 = vadd.f32 %v2208, %v2400
      %v2402 = vpop.f32.mrf.mxu0
      %v2403 = vadd.f32 %v2210, %v2402
      %2404 = vmatmul.bf16.gmra.mxu0 %v956
      %v2405 = vpop.f32.mrf.mxu0
      %v2406 = vadd.f32 %v2213, %v2405
      %v2407 = vpop.f32.mrf.mxu0
      %v2408 = vadd.f32 %v2215, %v2407
      %2409 = vmatmul.bf16.gmra.mxu0 %v959
      %v2410 = vpop.f32.mrf.mxu0
      %v2411 = vadd.f32 %v2218, %v2410
      %v2412 = vpop.f32.mrf.mxu0
      %2413 = vmatmul.bf16.gmra.mxu0 %v962
      %v2414 = vpop.f32.mrf.mxu0
      %v2415 = vpop.f32.mrf.mxu0
      %v2416 = vadd.f32 %v2223, %v2415
      %2417 = vmatmul.bf16.gmra.mxu0 %v965
      %v2418 = vpop.f32.mrf.mxu0
      %v2419 = vadd.f32 %v2226, %v2418
      %v2420 = vpop.f32.mrf.mxu0
      %v2421 = vadd.f32 %v2228, %v2420
      %2422 = vmatmul.bf16.gmra.mxu0 %v968
      %v2423 = vpop.f32.mrf.mxu0
      %v2424 = vadd.f32 %v2231, %v2423
      %v2425 = vpop.f32.mrf.mxu0
      %v2426 = vadd.f32 %v2233, %v2425
      %2427 = vmatmul.bf16.gmra.mxu0 %v971
      %v2428 = vpop.f32.mrf.mxu0
      %v2429 = vadd.f32 %v2236, %v2428
      %v2430 = vpop.f32.mrf.mxu0
      %v2431 = vadd.f32 %v2238, %v2430
      %2432 = vmatmul.bf16.gmra.mxu0 %v974
      %v2433 = vpop.f32.mrf.mxu0
      %v2434 = vadd.f32 %v2241, %v2433
      %v2435 = vpop.f32.mrf.mxu0
      %2436 = vmatmul.bf16.gmra.mxu0 %v977
      %v2437 = vpop.f32.mrf.mxu0
      %v2438 = vpop.f32.mrf.mxu0
      %v2439 = vadd.f32 %v2246, %v2438
      %2440 = vmatmul.bf16.gmra.mxu0 %v980
      %v2441 = vpop.f32.mrf.mxu0
      %v2442 = vadd.f32 %v2249, %v2441
      %v2443 = vpop.f32.mrf.mxu0
      %v2444 = vadd.f32 %v2251, %v2443
      %2445 = vmatmul.bf16.gmra.mxu0 %v983
      %v2446 = vpop.f32.mrf.mxu0
      %v2447 = vadd.f32 %v2254, %v2446
      %v2448 = vpop.f32.mrf.mxu0
      %v2449 = vadd.f32 %v2256, %v2448
      %2450 = vmatmul.bf16.gmra.mxu0 %v986
      %v2451 = vpop.f32.mrf.mxu0
      %v2452 = vadd.f32 %v2259, %v2451
      %v2453 = vpop.f32.mrf.mxu0
      %v2454 = vadd.f32 %v2261, %v2453
      %2455 = vmatmul.bf16.gmra.mxu0 %v989
      %v2456 = vpop.f32.mrf.mxu0
      %v2457 = vadd.f32 %v2264, %v2456
      %v2458 = vpop.f32.mrf.mxu0
      %2459 = vdwg.mxu0
      %2460 = vmatpush.bf16.msra.mxu0 %v1421
      %2461 = vmatpush.bf16.msra.mxu0 %v1418
      %2462 = vmatpush.bf16.msra.mxu0 %v1415
      %2463 = vmatpush.bf16.msra.mxu0 %v1412
      %2464 = vmatpush.bf16.msra.mxu0 %v1409
      %2465 = vmatpush.bf16.msra.mxu0 %v1406
      %2466 = vmatpush.bf16.msra.mxu0 %v1403
      %2467 = vmatpush.bf16.msra.mxu0 %v1400
      %2468 = vmatmul.bf16.gmra.mxu0 %v873
      %v2469 = vpop.f32.mrf.mxu0
      %v2470 = vpop.f32.mrf.mxu0
      %v2471 = vadd.f32 %v2278, %v2470
      %2472 = vmatmul.bf16.gmra.mxu0 %v876
      %v2473 = vpop.f32.mrf.mxu0
      %v2474 = vadd.f32 %v2281, %v2473
      %v2475 = vpop.f32.mrf.mxu0
      %v2476 = vadd.f32 %v2283, %v2475
      %2477 = vmatmul.bf16.gmra.mxu0 %v879
      %v2478 = vpop.f32.mrf.mxu0
      %v2479 = vadd.f32 %v2286, %v2478
      %v2480 = vpop.f32.mrf.mxu0
      %v2481 = vadd.f32 %v2288, %v2480
      %2482 = vmatmul.bf16.gmra.mxu0 %v882
      %v2483 = vpop.f32.mrf.mxu0
      %v2484 = vadd.f32 %v2291, %v2483
      %v2485 = vpop.f32.mrf.mxu0
      %v2486 = vadd.f32 %v2293, %v2485
      %2487 = vmatmul.bf16.gmra.mxu0 %v885
      %v2488 = vpop.f32.mrf.mxu0
      %v2489 = vadd.f32 %v2296, %v2488
      %v2490 = vpop.f32.mrf.mxu0
      %2491 = vmatmul.bf16.gmra.mxu0 %v888
      %v2492 = vpop.f32.mrf.mxu0
      %v2493 = vpop.f32.mrf.mxu0
      %v2494 = vadd.f32 %v2301, %v2493
      %2495 = vmatmul.bf16.gmra.mxu0 %v891
      %v2496 = vpop.f32.mrf.mxu0
      %v2497 = vadd.f32 %v2304, %v2496
      %v2498 = vpop.f32.mrf.mxu0
      %v2499 = vadd.f32 %v2306, %v2498
      %2500 = vmatmul.bf16.gmra.mxu0 %v894
      %v2501 = vpop.f32.mrf.mxu0
      %v2502 = vadd.f32 %v2309, %v2501
      %v2503 = vpop.f32.mrf.mxu0
      %v2504 = vadd.f32 %v2311, %v2503
      %2505 = vmatmul.bf16.gmra.mxu0 %v897
      %v2506 = vpop.f32.mrf.mxu0
      %v2507 = vadd.f32 %v2314, %v2506
      %v2508 = vpop.f32.mrf.mxu0
      %v2509 = vadd.f32 %v2316, %v2508
      %2510 = vmatmul.bf16.gmra.mxu0 %v900
      %v2511 = vpop.f32.mrf.mxu0
      %v2512 = vadd.f32 %v2319, %v2511
      %v2513 = vpop.f32.mrf.mxu0
      %2514 = vmatmul.bf16.gmra.mxu0 %v903
      %v2515 = vpop.f32.mrf.mxu0
      %v2516 = vpop.f32.mrf.mxu0
      %v2517 = vadd.f32 %v2324, %v2516
      %2518 = vmatmul.bf16.gmra.mxu0 %v906
      %v2519 = vpop.f32.mrf.mxu0
      %v2520 = vadd.f32 %v2327, %v2519
      %v2521 = vpop.f32.mrf.mxu0
      %v2522 = vadd.f32 %v2329, %v2521
      %2523 = vmatmul.bf16.gmra.mxu0 %v909
      %v2524 = vpop.f32.mrf.mxu0
      %v2525 = vadd.f32 %v2332, %v2524
      %v2526 = vpop.f32.mrf.mxu0
      %v2527 = vadd.f32 %v2334, %v2526
      %2528 = vmatmul.bf16.gmra.mxu0 %v912
      %v2529 = vpop.f32.mrf.mxu0
      %v2530 = vadd.f32 %v2337, %v2529
      %v2531 = vpop.f32.mrf.mxu0
      %v2532 = vadd.f32 %v2339, %v2531
      %2533 = vmatmul.bf16.gmra.mxu0 %v915
      %v2534 = vpop.f32.mrf.mxu0
      %v2535 = vadd.f32 %v2342, %v2534
      %v2536 = vpop.f32.mrf.mxu0
      %2537 = vmatmul.bf16.gmra.mxu0 %v918
      %v2538 = vpop.f32.mrf.mxu0
      %v2539 = vpop.f32.mrf.mxu0
      %v2540 = vadd.f32 %v2347, %v2539
      %2541 = vmatmul.bf16.gmra.mxu0 %v921
      %v2542 = vpop.f32.mrf.mxu0
      %v2543 = vadd.f32 %v2350, %v2542
      %v2544 = vpop.f32.mrf.mxu0
      %v2545 = vadd.f32 %v2352, %v2544
      %2546 = vmatmul.bf16.gmra.mxu0 %v924
      %v2547 = vpop.f32.mrf.mxu0
      %v2548 = vadd.f32 %v2355, %v2547
      %v2549 = vpop.f32.mrf.mxu0
      %v2550 = vadd.f32 %v2357, %v2549
      %2551 = vmatmul.bf16.gmra.mxu0 %v927
      %v2552 = vpop.f32.mrf.mxu0
      %v2553 = vadd.f32 %v2360, %v2552
      %v2554 = vpop.f32.mrf.mxu0
      %v2555 = vadd.f32 %v2362, %v2554
      %2556 = vmatmul.bf16.gmra.mxu0 %v930
      %v2557 = vpop.f32.mrf.mxu0
      %v2558 = vadd.f32 %v2365, %v2557
      %v2559 = vpop.f32.mrf.mxu0
      %2560 = vmatmul.bf16.gmra.mxu0 %v933
      %v2561 = vpop.f32.mrf.mxu0
      %v2562 = vpop.f32.mrf.mxu0
      %v2563 = vadd.f32 %v2370, %v2562
      %2564 = vmatmul.bf16.gmra.mxu0 %v936
      %v2565 = vpop.f32.mrf.mxu0
      %v2566 = vadd.f32 %v2373, %v2565
      %v2567 = vpop.f32.mrf.mxu0
      %v2568 = vadd.f32 %v2375, %v2567
      %2569 = vmatmul.bf16.gmra.mxu0 %v939
      %v2570 = vpop.f32.mrf.mxu0
      %v2571 = vadd.f32 %v2378, %v2570
      %v2572 = vpop.f32.mrf.mxu0
      %v2573 = vadd.f32 %v2380, %v2572
      %2574 = vmatmul.bf16.gmra.mxu0 %v942
      %v2575 = vpop.f32.mrf.mxu0
      %v2576 = vadd.f32 %v2383, %v2575
      %v2577 = vpop.f32.mrf.mxu0
      %v2578 = vadd.f32 %v2385, %v2577
      %2579 = vmatmul.bf16.gmra.mxu0 %v945
      %v2580 = vpop.f32.mrf.mxu0
      %v2581 = vadd.f32 %v2388, %v2580
      %v2582 = vpop.f32.mrf.mxu0
      %2583 = vmatmul.bf16.gmra.mxu0 %v948
      %v2584 = vpop.f32.mrf.mxu0
      %v2585 = vpop.f32.mrf.mxu0
      %v2586 = vadd.f32 %v2393, %v2585
      %2587 = vmatmul.bf16.gmra.mxu0 %v951
      %v2588 = vpop.f32.mrf.mxu0
      %v2589 = vadd.f32 %v2396, %v2588
      %v2590 = vpop.f32.mrf.mxu0
      %v2591 = vadd.f32 %v2398, %v2590
      %2592 = vmatmul.bf16.gmra.mxu0 %v954
      %v2593 = vpop.f32.mrf.mxu0
      %v2594 = vadd.f32 %v2401, %v2593
      %v2595 = vpop.f32.mrf.mxu0
      %v2596 = vadd.f32 %v2403, %v2595
      %2597 = vmatmul.bf16.gmra.mxu0 %v957
      %v2598 = vpop.f32.mrf.mxu0
      %v2599 = vadd.f32 %v2406, %v2598
      %v2600 = vpop.f32.mrf.mxu0
      %v2601 = vadd.f32 %v2408, %v2600
      %2602 = vmatmul.bf16.gmra.mxu0 %v960
      %v2603 = vpop.f32.mrf.mxu0
      %v2604 = vadd.f32 %v2411, %v2603
      %v2605 = vpop.f32.mrf.mxu0
      %2606 = vmatmul.bf16.gmra.mxu0 %v963
      %v2607 = vpop.f32.mrf.mxu0
      %v2608 = vpop.f32.mrf.mxu0
      %v2609 = vadd.f32 %v2416, %v2608
      %2610 = vmatmul.bf16.gmra.mxu0 %v966
      %v2611 = vpop.f32.mrf.mxu0
      %v2612 = vadd.f32 %v2419, %v2611
      %v2613 = vpop.f32.mrf.mxu0
      %v2614 = vadd.f32 %v2421, %v2613
      %2615 = vmatmul.bf16.gmra.mxu0 %v969
      %v2616 = vpop.f32.mrf.mxu0
      %v2617 = vadd.f32 %v2424, %v2616
      %v2618 = vpop.f32.mrf.mxu0
      %v2619 = vadd.f32 %v2426, %v2618
      %2620 = vmatmul.bf16.gmra.mxu0 %v972
      %v2621 = vpop.f32.mrf.mxu0
      %v2622 = vadd.f32 %v2429, %v2621
      %v2623 = vpop.f32.mrf.mxu0
      %v2624 = vadd.f32 %v2431, %v2623
      %2625 = vmatmul.bf16.gmra.mxu0 %v975
      %v2626 = vpop.f32.mrf.mxu0
      %v2627 = vadd.f32 %v2434, %v2626
      %v2628 = vpop.f32.mrf.mxu0
      %2629 = vmatmul.bf16.gmra.mxu0 %v978
      %v2630 = vpop.f32.mrf.mxu0
      %v2631 = vpop.f32.mrf.mxu0
      %v2632 = vadd.f32 %v2439, %v2631
      %2633 = vmatmul.bf16.gmra.mxu0 %v981
      %v2634 = vpop.f32.mrf.mxu0
      %v2635 = vadd.f32 %v2442, %v2634
      %v2636 = vpop.f32.mrf.mxu0
      %v2637 = vadd.f32 %v2444, %v2636
      %2638 = vmatmul.bf16.gmra.mxu0 %v984
      %v2639 = vpop.f32.mrf.mxu0
      %v2640 = vadd.f32 %v2447, %v2639
      %v2641 = vpop.f32.mrf.mxu0
      %v2642 = vadd.f32 %v2449, %v2641
      %2643 = vmatmul.bf16.gmra.mxu0 %v987
      %v2644 = vpop.f32.mrf.mxu0
      %v2645 = vadd.f32 %v2452, %v2644
      %v2646 = vpop.f32.mrf.mxu0
      %v2647 = vadd.f32 %v2454, %v2646
      %2648 = vmatmul.bf16.gmra.mxu0 %v990
      %v2649 = vpop.f32.mrf.mxu0
      %v2650 = vadd.f32 %v2457, %v2649
      %v2651 = vpop.f32.mrf.mxu0
      %2652 = vdwg.mxu0
      %2653 = vmatpush.bf16.msra.mxu0 %v1374
      %2654 = vmatpush.bf16.msra.mxu0 %v1371
      %2655 = vmatpush.bf16.msra.mxu0 %v1368
      %2656 = vmatpush.bf16.msra.mxu0 %v1365
      %2657 = vmatpush.bf16.msra.mxu0 %v1362
      %2658 = vmatpush.bf16.msra.mxu0 %v1359
      %2659 = vmatpush.bf16.msra.mxu0 %v1356
      %2660 = vmatpush.bf16.msra.mxu0 %v1353
      %2661 = vmatmul.bf16.gmra.mxu0 %v871
      %v2662 = vpop.f32.mrf.mxu0
      %v2663 = vpop.f32.mrf.mxu0
      %2664 = vmatmul.bf16.gmra.mxu0 %v874
      %v2665 = vpop.f32.mrf.mxu0
      %v2666 = vadd.f32 0.0, %v2665
      %v2667 = vpop.f32.mrf.mxu0
      %v2668 = vadd.f32 0.0, %v2667
      %2669 = vmatmul.bf16.gmra.mxu0 %v877
      %v2670 = vpop.f32.mrf.mxu0
      %v2671 = vadd.f32 0.0, %v2670
      %v2672 = vpop.f32.mrf.mxu0
      %v2673 = vadd.f32 0.0, %v2672
      %2674 = vmatmul.bf16.gmra.mxu0 %v880
      %v2675 = vpop.f32.mrf.mxu0
      %v2676 = vadd.f32 0.0, %v2675
      %v2677 = vpop.f32.mrf.mxu0
      %v2678 = vadd.f32 0.0, %v2677
      %2679 = vmatmul.bf16.gmra.mxu0 %v883
      %v2680 = vpop.f32.mrf.mxu0
      %v2681 = vadd.f32 0.0, %v2680
      %v2682 = vpop.f32.mrf.mxu0
      %v2683 = vadd.f32 0.0, %v2682
      %2684 = vmatmul.bf16.gmra.mxu0 %v886
      %v2685 = vpop.f32.mrf.mxu0
      %v2686 = vpop.f32.mrf.mxu0
      %2687 = vmatmul.bf16.gmra.mxu0 %v889
      %v2688 = vpop.f32.mrf.mxu0
      %v2689 = vadd.f32 0.0, %v2688
      %v2690 = vpop.f32.mrf.mxu0
      %v2691 = vadd.f32 0.0, %v2690
      %2692 = vmatmul.bf16.gmra.mxu0 %v892
      %v2693 = vpop.f32.mrf.mxu0
      %v2694 = vadd.f32 0.0, %v2693
      %v2695 = vpop.f32.mrf.mxu0
      %v2696 = vadd.f32 0.0, %v2695
      %2697 = vmatmul.bf16.gmra.mxu0 %v895
      %v2698 = vpop.f32.mrf.mxu0
      %v2699 = vadd.f32 0.0, %v2698
      %v2700 = vpop.f32.mrf.mxu0
      %v2701 = vadd.f32 0.0, %v2700
      %2702 = vmatmul.bf16.gmra.mxu0 %v898
      %v2703 = vpop.f32.mrf.mxu0
      %v2704 = vadd.f32 0.0, %v2703
      %v2705 = vpop.f32.mrf.mxu0
      %v2706 = vadd.f32 0.0, %v2705
      %2707 = vmatmul.bf16.gmra.mxu0 %v901
      %v2708 = vpop.f32.mrf.mxu0
      %v2709 = vpop.f32.mrf.mxu0
      %2710 = vmatmul.bf16.gmra.mxu0 %v904
      %v2711 = vpop.f32.mrf.mxu0
      %v2712 = vadd.f32 0.0, %v2711
      %v2713 = vpop.f32.mrf.mxu0
      %v2714 = vadd.f32 0.0, %v2713
      %2715 = vmatmul.bf16.gmra.mxu0 %v907
      %v2716 = vpop.f32.mrf.mxu0
      %v2717 = vadd.f32 0.0, %v2716
      %v2718 = vpop.f32.mrf.mxu0
      %v2719 = vadd.f32 0.0, %v2718
      %2720 = vmatmul.bf16.gmra.mxu0 %v910
      %v2721 = vpop.f32.mrf.mxu0
      %v2722 = vadd.f32 0.0, %v2721
      %v2723 = vpop.f32.mrf.mxu0
      %v2724 = vadd.f32 0.0, %v2723
      %2725 = vmatmul.bf16.gmra.mxu0 %v913
      %v2726 = vpop.f32.mrf.mxu0
      %v2727 = vadd.f32 0.0, %v2726
      %v2728 = vpop.f32.mrf.mxu0
      %v2729 = vadd.f32 0.0, %v2728
      %2730 = vmatmul.bf16.gmra.mxu0 %v916
      %v2731 = vpop.f32.mrf.mxu0
      %v2732 = vpop.f32.mrf.mxu0
      %2733 = vmatmul.bf16.gmra.mxu0 %v919
      %v2734 = vpop.f32.mrf.mxu0
      %v2735 = vadd.f32 0.0, %v2734
      %v2736 = vpop.f32.mrf.mxu0
      %v2737 = vadd.f32 0.0, %v2736
      %2738 = vmatmul.bf16.gmra.mxu0 %v922
      %v2739 = vpop.f32.mrf.mxu0
      %v2740 = vadd.f32 0.0, %v2739
      %v2741 = vpop.f32.mrf.mxu0
      %v2742 = vadd.f32 0.0, %v2741
      %2743 = vmatmul.bf16.gmra.mxu0 %v925
      %v2744 = vpop.f32.mrf.mxu0
      %v2745 = vadd.f32 0.0, %v2744
      %v2746 = vpop.f32.mrf.mxu0
      %v2747 = vadd.f32 0.0, %v2746
      %2748 = vmatmul.bf16.gmra.mxu0 %v928
      %v2749 = vpop.f32.mrf.mxu0
      %v2750 = vadd.f32 0.0, %v2749
      %v2751 = vpop.f32.mrf.mxu0
      %v2752 = vadd.f32 0.0, %v2751
      %2753 = vmatmul.bf16.gmra.mxu0 %v931
      %v2754 = vpop.f32.mrf.mxu0
      %v2755 = vpop.f32.mrf.mxu0
      %2756 = vmatmul.bf16.gmra.mxu0 %v934
      %v2757 = vpop.f32.mrf.mxu0
      %v2758 = vadd.f32 0.0, %v2757
      %v2759 = vpop.f32.mrf.mxu0
      %v2760 = vadd.f32 0.0, %v2759
      %2761 = vmatmul.bf16.gmra.mxu0 %v937
      %v2762 = vpop.f32.mrf.mxu0
      %v2763 = vadd.f32 0.0, %v2762
      %v2764 = vpop.f32.mrf.mxu0
      %v2765 = vadd.f32 0.0, %v2764
      %2766 = vmatmul.bf16.gmra.mxu0 %v940
      %v2767 = vpop.f32.mrf.mxu0
      %v2768 = vadd.f32 0.0, %v2767
      %v2769 = vpop.f32.mrf.mxu0
      %v2770 = vadd.f32 0.0, %v2769
      %2771 = vmatmul.bf16.gmra.mxu0 %v943
      %v2772 = vpop.f32.mrf.mxu0
      %v2773 = vadd.f32 0.0, %v2772
      %v2774 = vpop.f32.mrf.mxu0
      %v2775 = vadd.f32 0.0, %v2774
      %2776 = vmatmul.bf16.gmra.mxu0 %v946
      %v2777 = vpop.f32.mrf.mxu0
      %v2778 = vpop.f32.mrf.mxu0
      %2779 = vmatmul.bf16.gmra.mxu0 %v949
      %v2780 = vpop.f32.mrf.mxu0
      %v2781 = vadd.f32 0.0, %v2780
      %v2782 = vpop.f32.mrf.mxu0
      %v2783 = vadd.f32 0.0, %v2782
      %2784 = vmatmul.bf16.gmra.mxu0 %v952
      %v2785 = vpop.f32.mrf.mxu0
      %v2786 = vadd.f32 0.0, %v2785
      %v2787 = vpop.f32.mrf.mxu0
      %v2788 = vadd.f32 0.0, %v2787
      %2789 = vmatmul.bf16.gmra.mxu0 %v955
      %v2790 = vpop.f32.mrf.mxu0
      %v2791 = vadd.f32 0.0, %v2790
      %v2792 = vpop.f32.mrf.mxu0
      %v2793 = vadd.f32 0.0, %v2792
      %2794 = vmatmul.bf16.gmra.mxu0 %v958
      %v2795 = vpop.f32.mrf.mxu0
      %v2796 = vadd.f32 0.0, %v2795
      %v2797 = vpop.f32.mrf.mxu0
      %v2798 = vadd.f32 0.0, %v2797
      %2799 = vmatmul.bf16.gmra.mxu0 %v961
      %v2800 = vpop.f32.mrf.mxu0
      %v2801 = vpop.f32.mrf.mxu0
      %2802 = vmatmul.bf16.gmra.mxu0 %v964
      %v2803 = vpop.f32.mrf.mxu0
      %v2804 = vadd.f32 0.0, %v2803
      %v2805 = vpop.f32.mrf.mxu0
      %v2806 = vadd.f32 0.0, %v2805
      %2807 = vmatmul.bf16.gmra.mxu0 %v967
      %v2808 = vpop.f32.mrf.mxu0
      %v2809 = vadd.f32 0.0, %v2808
      %v2810 = vpop.f32.mrf.mxu0
      %v2811 = vadd.f32 0.0, %v2810
      %2812 = vmatmul.bf16.gmra.mxu0 %v970
      %v2813 = vpop.f32.mrf.mxu0
      %v2814 = vadd.f32 0.0, %v2813
      %v2815 = vpop.f32.mrf.mxu0
      %v2816 = vadd.f32 0.0, %v2815
      %2817 = vmatmul.bf16.gmra.mxu0 %v973
      %v2818 = vpop.f32.mrf.mxu0
      %v2819 = vadd.f32 0.0, %v2818
      %v2820 = vpop.f32.mrf.mxu0
      %v2821 = vadd.f32 0.0, %v2820
      %2822 = vmatmul.bf16.gmra.mxu0 %v976
      %v2823 = vpop.f32.mrf.mxu0
      %v2824 = vpop.f32.mrf.mxu0
      %2825 = vmatmul.bf16.gmra.mxu0 %v979
      %v2826 = vpop.f32.mrf.mxu0
      %v2827 = vadd.f32 0.0, %v2826
      %v2828 = vpop.f32.mrf.mxu0
      %v2829 = vadd.f32 0.0, %v2828
      %2830 = vmatmul.bf16.gmra.mxu0 %v982
      %v2831 = vpop.f32.mrf.mxu0
      %v2832 = vadd.f32 0.0, %v2831
      %v2833 = vpop.f32.mrf.mxu0
      %v2834 = vadd.f32 0.0, %v2833
      %2835 = vmatmul.bf16.gmra.mxu0 %v985
      %v2836 = vpop.f32.mrf.mxu0
      %v2837 = vadd.f32 0.0, %v2836
      %v2838 = vpop.f32.mrf.mxu0
      %v2839 = vadd.f32 0.0, %v2838
      %2840 = vmatmul.bf16.gmra.mxu0 %v988
      %v2841 = vpop.f32.mrf.mxu0
      %v2842 = vadd.f32 0.0, %v2841
      %v2843 = vpop.f32.mrf.mxu0
      %v2844 = vadd.f32 0.0, %v2843
      %2845 = vdwg.mxu0
      %2846 = vmatpush.bf16.msra.mxu0 %v1398
      %2847 = vmatpush.bf16.msra.mxu0 %v1395
      %2848 = vmatpush.bf16.msra.mxu0 %v1392
      %2849 = vmatpush.bf16.msra.mxu0 %v1389
      %2850 = vmatpush.bf16.msra.mxu0 %v1386
      %2851 = vmatpush.bf16.msra.mxu0 %v1383
      %2852 = vmatpush.bf16.msra.mxu0 %v1380
      %2853 = vmatpush.bf16.msra.mxu0 %v1377
      %2854 = vmatmul.bf16.gmra.mxu0 %v872
      %v2855 = vpop.f32.mrf.mxu0
      %v2856 = vpop.f32.mrf.mxu0
      %2857 = vmatmul.bf16.gmra.mxu0 %v875
      %v2858 = vpop.f32.mrf.mxu0
      %v2859 = vadd.f32 %v2666, %v2858
      %v2860 = vpop.f32.mrf.mxu0
      %v2861 = vadd.f32 %v2668, %v2860
      %2862 = vmatmul.bf16.gmra.mxu0 %v878
      %v2863 = vpop.f32.mrf.mxu0
      %v2864 = vadd.f32 %v2671, %v2863
      %v2865 = vpop.f32.mrf.mxu0
      %v2866 = vadd.f32 %v2673, %v2865
      %2867 = vmatmul.bf16.gmra.mxu0 %v881
      %v2868 = vpop.f32.mrf.mxu0
      %v2869 = vadd.f32 %v2676, %v2868
      %v2870 = vpop.f32.mrf.mxu0
      %v2871 = vadd.f32 %v2678, %v2870
      %2872 = vmatmul.bf16.gmra.mxu0 %v884
      %v2873 = vpop.f32.mrf.mxu0
      %v2874 = vadd.f32 %v2681, %v2873
      %v2875 = vpop.f32.mrf.mxu0
      %v2876 = vadd.f32 %v2683, %v2875
      %2877 = vmatmul.bf16.gmra.mxu0 %v887
      %v2878 = vpop.f32.mrf.mxu0
      %v2879 = vpop.f32.mrf.mxu0
      %2880 = vmatmul.bf16.gmra.mxu0 %v890
      %v2881 = vpop.f32.mrf.mxu0
      %v2882 = vadd.f32 %v2689, %v2881
      %v2883 = vpop.f32.mrf.mxu0
      %v2884 = vadd.f32 %v2691, %v2883
      %2885 = vmatmul.bf16.gmra.mxu0 %v893
      %v2886 = vpop.f32.mrf.mxu0
      %v2887 = vadd.f32 %v2694, %v2886
      %v2888 = vpop.f32.mrf.mxu0
      %v2889 = vadd.f32 %v2696, %v2888
      %2890 = vmatmul.bf16.gmra.mxu0 %v896
      %v2891 = vpop.f32.mrf.mxu0
      %v2892 = vadd.f32 %v2699, %v2891
      %v2893 = vpop.f32.mrf.mxu0
      %v2894 = vadd.f32 %v2701, %v2893
      %2895 = vmatmul.bf16.gmra.mxu0 %v899
      %v2896 = vpop.f32.mrf.mxu0
      %v2897 = vadd.f32 %v2704, %v2896
      %v2898 = vpop.f32.mrf.mxu0
      %v2899 = vadd.f32 %v2706, %v2898
      %2900 = vmatmul.bf16.gmra.mxu0 %v902
      %v2901 = vpop.f32.mrf.mxu0
      %v2902 = vpop.f32.mrf.mxu0
      %2903 = vmatmul.bf16.gmra.mxu0 %v905
      %v2904 = vpop.f32.mrf.mxu0
      %v2905 = vadd.f32 %v2712, %v2904
      %v2906 = vpop.f32.mrf.mxu0
      %v2907 = vadd.f32 %v2714, %v2906
      %2908 = vmatmul.bf16.gmra.mxu0 %v908
      %v2909 = vpop.f32.mrf.mxu0
      %v2910 = vadd.f32 %v2717, %v2909
      %v2911 = vpop.f32.mrf.mxu0
      %v2912 = vadd.f32 %v2719, %v2911
      %2913 = vmatmul.bf16.gmra.mxu0 %v911
      %v2914 = vpop.f32.mrf.mxu0
      %v2915 = vadd.f32 %v2722, %v2914
      %v2916 = vpop.f32.mrf.mxu0
      %v2917 = vadd.f32 %v2724, %v2916
      %2918 = vmatmul.bf16.gmra.mxu0 %v914
      %v2919 = vpop.f32.mrf.mxu0
      %v2920 = vadd.f32 %v2727, %v2919
      %v2921 = vpop.f32.mrf.mxu0
      %v2922 = vadd.f32 %v2729, %v2921
      %2923 = vmatmul.bf16.gmra.mxu0 %v917
      %v2924 = vpop.f32.mrf.mxu0
      %v2925 = vpop.f32.mrf.mxu0
      %2926 = vmatmul.bf16.gmra.mxu0 %v920
      %v2927 = vpop.f32.mrf.mxu0
      %v2928 = vadd.f32 %v2735, %v2927
      %v2929 = vpop.f32.mrf.mxu0
      %v2930 = vadd.f32 %v2737, %v2929
      %2931 = vmatmul.bf16.gmra.mxu0 %v923
      %v2932 = vpop.f32.mrf.mxu0
      %v2933 = vadd.f32 %v2740, %v2932
      %v2934 = vpop.f32.mrf.mxu0
      %v2935 = vadd.f32 %v2742, %v2934
      %2936 = vmatmul.bf16.gmra.mxu0 %v926
      %v2937 = vpop.f32.mrf.mxu0
      %v2938 = vadd.f32 %v2745, %v2937
      %v2939 = vpop.f32.mrf.mxu0
      %v2940 = vadd.f32 %v2747, %v2939
      %2941 = vmatmul.bf16.gmra.mxu0 %v929
      %v2942 = vpop.f32.mrf.mxu0
      %v2943 = vadd.f32 %v2750, %v2942
      %v2944 = vpop.f32.mrf.mxu0
      %v2945 = vadd.f32 %v2752, %v2944
      %2946 = vmatmul.bf16.gmra.mxu0 %v932
      %v2947 = vpop.f32.mrf.mxu0
      %v2948 = vpop.f32.mrf.mxu0
      %2949 = vmatmul.bf16.gmra.mxu0 %v935
      %v2950 = vpop.f32.mrf.mxu0
      %v2951 = vadd.f32 %v2758, %v2950
      %v2952 = vpop.f32.mrf.mxu0
      %v2953 = vadd.f32 %v2760, %v2952
      %2954 = vmatmul.bf16.gmra.mxu0 %v938
      %v2955 = vpop.f32.mrf.mxu0
      %v2956 = vadd.f32 %v2763, %v2955
      %v2957 = vpop.f32.mrf.mxu0
      %v2958 = vadd.f32 %v2765, %v2957
      %2959 = vmatmul.bf16.gmra.mxu0 %v941
      %v2960 = vpop.f32.mrf.mxu0
      %v2961 = vadd.f32 %v2768, %v2960
      %v2962 = vpop.f32.mrf.mxu0
      %v2963 = vadd.f32 %v2770, %v2962
      %2964 = vmatmul.bf16.gmra.mxu0 %v944
      %v2965 = vpop.f32.mrf.mxu0
      %v2966 = vadd.f32 %v2773, %v2965
      %v2967 = vpop.f32.mrf.mxu0
      %v2968 = vadd.f32 %v2775, %v2967
      %2969 = vmatmul.bf16.gmra.mxu0 %v947
      %v2970 = vpop.f32.mrf.mxu0
      %v2971 = vpop.f32.mrf.mxu0
      %2972 = vmatmul.bf16.gmra.mxu0 %v950
      %v2973 = vpop.f32.mrf.mxu0
      %v2974 = vadd.f32 %v2781, %v2973
      %v2975 = vpop.f32.mrf.mxu0
      %v2976 = vadd.f32 %v2783, %v2975
      %2977 = vmatmul.bf16.gmra.mxu0 %v953
      %v2978 = vpop.f32.mrf.mxu0
      %v2979 = vadd.f32 %v2786, %v2978
      %v2980 = vpop.f32.mrf.mxu0
      %v2981 = vadd.f32 %v2788, %v2980
      %2982 = vmatmul.bf16.gmra.mxu0 %v956
      %v2983 = vpop.f32.mrf.mxu0
      %v2984 = vadd.f32 %v2791, %v2983
      %v2985 = vpop.f32.mrf.mxu0
      %v2986 = vadd.f32 %v2793, %v2985
      %2987 = vmatmul.bf16.gmra.mxu0 %v959
      %v2988 = vpop.f32.mrf.mxu0
      %v2989 = vadd.f32 %v2796, %v2988
      %v2990 = vpop.f32.mrf.mxu0
      %v2991 = vadd.f32 %v2798, %v2990
      %2992 = vmatmul.bf16.gmra.mxu0 %v962
      %v2993 = vpop.f32.mrf.mxu0
      %v2994 = vpop.f32.mrf.mxu0
      %2995 = vmatmul.bf16.gmra.mxu0 %v965
      %v2996 = vpop.f32.mrf.mxu0
      %v2997 = vadd.f32 %v2804, %v2996
      %v2998 = vpop.f32.mrf.mxu0
      %v2999 = vadd.f32 %v2806, %v2998
      %3000 = vmatmul.bf16.gmra.mxu0 %v968
      %v3001 = vpop.f32.mrf.mxu0
      %v3002 = vadd.f32 %v2809, %v3001
      %v3003 = vpop.f32.mrf.mxu0
      %v3004 = vadd.f32 %v2811, %v3003
      %3005 = vmatmul.bf16.gmra.mxu0 %v971
      %v3006 = vpop.f32.mrf.mxu0
      %v3007 = vadd.f32 %v2814, %v3006
      %v3008 = vpop.f32.mrf.mxu0
      %v3009 = vadd.f32 %v2816, %v3008
      %3010 = vmatmul.bf16.gmra.mxu0 %v974
      %v3011 = vpop.f32.mrf.mxu0
      %v3012 = vadd.f32 %v2819, %v3011
      %v3013 = vpop.f32.mrf.mxu0
      %v3014 = vadd.f32 %v2821, %v3013
      %3015 = vmatmul.bf16.gmra.mxu0 %v977
      %v3016 = vpop.f32.mrf.mxu0
      %v3017 = vpop.f32.mrf.mxu0
      %3018 = vmatmul.bf16.gmra.mxu0 %v980
      %v3019 = vpop.f32.mrf.mxu0
      %v3020 = vadd.f32 %v2827, %v3019
      %v3021 = vpop.f32.mrf.mxu0
      %v3022 = vadd.f32 %v2829, %v3021
      %3023 = vmatmul.bf16.gmra.mxu0 %v983
      %v3024 = vpop.f32.mrf.mxu0
      %v3025 = vadd.f32 %v2832, %v3024
      %v3026 = vpop.f32.mrf.mxu0
      %v3027 = vadd.f32 %v2834, %v3026
      %3028 = vmatmul.bf16.gmra.mxu0 %v986
      %v3029 = vpop.f32.mrf.mxu0
      %v3030 = vadd.f32 %v2837, %v3029
      %v3031 = vpop.f32.mrf.mxu0
      %v3032 = vadd.f32 %v2839, %v3031
      %3033 = vmatmul.bf16.gmra.mxu0 %v989
      %v3034 = vpop.f32.mrf.mxu0
      %v3035 = vadd.f32 %v2842, %v3034
      %v3036 = vpop.f32.mrf.mxu0
      %v3037 = vadd.f32 %v2844, %v3036
      %3038 = vdwg.mxu0
      %3039 = vmatpush.bf16.msra.mxu0 %v1422
      %3040 = vmatpush.bf16.msra.mxu0 %v1419
      %3041 = vmatpush.bf16.msra.mxu0 %v1416
      %3042 = vmatpush.bf16.msra.mxu0 %v1413
      %3043 = vmatpush.bf16.msra.mxu0 %v1410
      %3044 = vmatpush.bf16.msra.mxu0 %v1407
      %3045 = vmatpush.bf16.msra.mxu0 %v1404
      %3046 = vmatpush.bf16.msra.mxu0 %v1401
      %3047 = vmatmul.bf16.gmra.mxu0 %v873
      %v3048 = vpop.f32.mrf.mxu0
      %v3049 = vpop.f32.mrf.mxu0
      %3050 = vmatmul.bf16.gmra.mxu0 %v876
      %v3051 = vpop.f32.mrf.mxu0
      %v3052 = vadd.f32 %v2859, %v3051
      %v3053 = vpop.f32.mrf.mxu0
      %v3054 = vadd.f32 %v2861, %v3053
      %3055 = vmatmul.bf16.gmra.mxu0 %v879
      %v3056 = vpop.f32.mrf.mxu0
      %v3057 = vadd.f32 %v2864, %v3056
      %v3058 = vpop.f32.mrf.mxu0
      %v3059 = vadd.f32 %v2866, %v3058
      %3060 = vmatmul.bf16.gmra.mxu0 %v882
      %v3061 = vpop.f32.mrf.mxu0
      %v3062 = vadd.f32 %v2869, %v3061
      %v3063 = vpop.f32.mrf.mxu0
      %v3064 = vadd.f32 %v2871, %v3063
      %3065 = vmatmul.bf16.gmra.mxu0 %v885
      %v3066 = vpop.f32.mrf.mxu0
      %v3067 = vadd.f32 %v2874, %v3066
      %v3068 = vpop.f32.mrf.mxu0
      %v3069 = vadd.f32 %v2876, %v3068
      %3070 = vmatmul.bf16.gmra.mxu0 %v888
      %v3071 = vpop.f32.mrf.mxu0
      %v3072 = vpop.f32.mrf.mxu0
      %3073 = vmatmul.bf16.gmra.mxu0 %v891
      %v3074 = vpop.f32.mrf.mxu0
      %v3075 = vadd.f32 %v2882, %v3074
      %v3076 = vpop.f32.mrf.mxu0
      %v3077 = vadd.f32 %v2884, %v3076
      %3078 = vmatmul.bf16.gmra.mxu0 %v894
      %v3079 = vpop.f32.mrf.mxu0
      %v3080 = vadd.f32 %v2887, %v3079
      %v3081 = vpop.f32.mrf.mxu0
      %v3082 = vadd.f32 %v2889, %v3081
      %3083 = vmatmul.bf16.gmra.mxu0 %v897
      %v3084 = vpop.f32.mrf.mxu0
      %v3085 = vadd.f32 %v2892, %v3084
      %v3086 = vpop.f32.mrf.mxu0
      %v3087 = vadd.f32 %v2894, %v3086
      %3088 = vmatmul.bf16.gmra.mxu0 %v900
      %v3089 = vpop.f32.mrf.mxu0
      %v3090 = vadd.f32 %v2897, %v3089
      %v3091 = vpop.f32.mrf.mxu0
      %v3092 = vadd.f32 %v2899, %v3091
      %3093 = vmatmul.bf16.gmra.mxu0 %v903
      %v3094 = vpop.f32.mrf.mxu0
      %v3095 = vpop.f32.mrf.mxu0
      %3096 = vmatmul.bf16.gmra.mxu0 %v906
      %v3097 = vpop.f32.mrf.mxu0
      %v3098 = vadd.f32 %v2905, %v3097
      %v3099 = vpop.f32.mrf.mxu0
      %v3100 = vadd.f32 %v2907, %v3099
      %3101 = vmatmul.bf16.gmra.mxu0 %v909
      %v3102 = vpop.f32.mrf.mxu0
      %v3103 = vadd.f32 %v2910, %v3102
      %v3104 = vpop.f32.mrf.mxu0
      %v3105 = vadd.f32 %v2912, %v3104
      %3106 = vmatmul.bf16.gmra.mxu0 %v912
      %v3107 = vpop.f32.mrf.mxu0
      %v3108 = vadd.f32 %v2915, %v3107
      %v3109 = vpop.f32.mrf.mxu0
      %v3110 = vadd.f32 %v2917, %v3109
      %3111 = vmatmul.bf16.gmra.mxu0 %v915
      %v3112 = vpop.f32.mrf.mxu0
      %v3113 = vadd.f32 %v2920, %v3112
      %v3114 = vpop.f32.mrf.mxu0
      %v3115 = vadd.f32 %v2922, %v3114
      %3116 = vmatmul.bf16.gmra.mxu0 %v918
      %v3117 = vpop.f32.mrf.mxu0
      %v3118 = vpop.f32.mrf.mxu0
      %3119 = vmatmul.bf16.gmra.mxu0 %v921
      %v3120 = vpop.f32.mrf.mxu0
      %v3121 = vadd.f32 %v2928, %v3120
      %v3122 = vpop.f32.mrf.mxu0
      %v3123 = vadd.f32 %v2930, %v3122
      %3124 = vmatmul.bf16.gmra.mxu0 %v924
      %v3125 = vpop.f32.mrf.mxu0
      %v3126 = vadd.f32 %v2933, %v3125
      %v3127 = vpop.f32.mrf.mxu0
      %v3128 = vadd.f32 %v2935, %v3127
      %3129 = vmatmul.bf16.gmra.mxu0 %v927
      %v3130 = vpop.f32.mrf.mxu0
      %v3131 = vadd.f32 %v2938, %v3130
      %v3132 = vpop.f32.mrf.mxu0
      %v3133 = vadd.f32 %v2940, %v3132
      %3134 = vmatmul.bf16.gmra.mxu0 %v930
      %v3135 = vpop.f32.mrf.mxu0
      %v3136 = vadd.f32 %v2943, %v3135
      %v3137 = vpop.f32.mrf.mxu0
      %v3138 = vadd.f32 %v2945, %v3137
      %3139 = vmatmul.bf16.gmra.mxu0 %v933
      %v3140 = vpop.f32.mrf.mxu0
      %v3141 = vpop.f32.mrf.mxu0
      %3142 = vmatmul.bf16.gmra.mxu0 %v936
      %v3143 = vpop.f32.mrf.mxu0
      %v3144 = vadd.f32 %v2951, %v3143
      %v3145 = vpop.f32.mrf.mxu0
      %v3146 = vadd.f32 %v2953, %v3145
      %3147 = vmatmul.bf16.gmra.mxu0 %v939
      %v3148 = vpop.f32.mrf.mxu0
      %v3149 = vadd.f32 %v2956, %v3148
      %v3150 = vpop.f32.mrf.mxu0
      %v3151 = vadd.f32 %v2958, %v3150
      %3152 = vmatmul.bf16.gmra.mxu0 %v942
      %v3153 = vpop.f32.mrf.mxu0
      %v3154 = vadd.f32 %v2961, %v3153
      %v3155 = vpop.f32.mrf.mxu0
      %v3156 = vadd.f32 %v2963, %v3155
      %3157 = vmatmul.bf16.gmra.mxu0 %v945
      %v3158 = vpop.f32.mrf.mxu0
      %v3159 = vadd.f32 %v2966, %v3158
      %v3160 = vpop.f32.mrf.mxu0
      %v3161 = vadd.f32 %v2968, %v3160
      %3162 = vmatmul.bf16.gmra.mxu0 %v948
      %v3163 = vpop.f32.mrf.mxu0
      %v3164 = vpop.f32.mrf.mxu0
      %3165 = vmatmul.bf16.gmra.mxu0 %v951
      %v3166 = vpop.f32.mrf.mxu0
      %v3167 = vadd.f32 %v2974, %v3166
      %v3168 = vpop.f32.mrf.mxu0
      %v3169 = vadd.f32 %v2976, %v3168
      %3170 = vmatmul.bf16.gmra.mxu0 %v954
      %v3171 = vpop.f32.mrf.mxu0
      %v3172 = vadd.f32 %v2979, %v3171
      %v3173 = vpop.f32.mrf.mxu0
      %v3174 = vadd.f32 %v2981, %v3173
      %3175 = vmatmul.bf16.gmra.mxu0 %v957
      %v3176 = vpop.f32.mrf.mxu0
      %v3177 = vadd.f32 %v2984, %v3176
      %v3178 = vpop.f32.mrf.mxu0
      %v3179 = vadd.f32 %v2986, %v3178
      %3180 = vmatmul.bf16.gmra.mxu0 %v960
      %v3181 = vpop.f32.mrf.mxu0
      %v3182 = vadd.f32 %v2989, %v3181
      %v3183 = vpop.f32.mrf.mxu0
      %v3184 = vadd.f32 %v2991, %v3183
      %3185 = vmatmul.bf16.gmra.mxu0 %v963
      %v3186 = vpop.f32.mrf.mxu0
      %v3187 = vpop.f32.mrf.mxu0
      %3188 = vmatmul.bf16.gmra.mxu0 %v966
      %v3189 = vpop.f32.mrf.mxu0
      %v3190 = vadd.f32 %v2997, %v3189
      %v3191 = vpop.f32.mrf.mxu0
      %v3192 = vadd.f32 %v2999, %v3191
      %3193 = vmatmul.bf16.gmra.mxu0 %v969
      %v3194 = vpop.f32.mrf.mxu0
      %v3195 = vadd.f32 %v3002, %v3194
      %v3196 = vpop.f32.mrf.mxu0
      %v3197 = vadd.f32 %v3004, %v3196
      %3198 = vmatmul.bf16.gmra.mxu0 %v972
      %v3199 = vpop.f32.mrf.mxu0
      %v3200 = vadd.f32 %v3007, %v3199
      %v3201 = vpop.f32.mrf.mxu0
      %v3202 = vadd.f32 %v3009, %v3201
      %3203 = vmatmul.bf16.gmra.mxu0 %v975
      %v3204 = vpop.f32.mrf.mxu0
      %v3205 = vadd.f32 %v3012, %v3204
      %v3206 = vpop.f32.mrf.mxu0
      %v3207 = vadd.f32 %v3014, %v3206
      %3208 = vmatmul.bf16.gmra.mxu0 %v978
      %v3209 = vpop.f32.mrf.mxu0
      %v3210 = vpop.f32.mrf.mxu0
      %3211 = vmatmul.bf16.gmra.mxu0 %v981
      %v3212 = vpop.f32.mrf.mxu0
      %v3213 = vadd.f32 %v3020, %v3212
      %v3214 = vpop.f32.mrf.mxu0
      %v3215 = vadd.f32 %v3022, %v3214
      %3216 = vmatmul.bf16.gmra.mxu0 %v984
      %v3217 = vpop.f32.mrf.mxu0
      %v3218 = vadd.f32 %v3025, %v3217
      %v3219 = vpop.f32.mrf.mxu0
      %v3220 = vadd.f32 %v3027, %v3219
      %3221 = vmatmul.bf16.gmra.mxu0 %v987
      %v3222 = vpop.f32.mrf.mxu0
      %v3223 = vadd.f32 %v3030, %v3222
      %v3224 = vpop.f32.mrf.mxu0
      %v3225 = vadd.f32 %v3032, %v3224
      %3226 = vmatmul.bf16.gmra.mxu0 %v990
      %v3227 = vpop.f32.mrf.mxu0
      %v3228 = vadd.f32 %v3035, %v3227
      %v3229 = vpop.f32.mrf.mxu0
      %v3230 = vadd.f32 %v3037, %v3229
      %3231 = vdwg.mxu0
      %v3232 = vadd.f32 %v1891, %v2471
      %v3233 = vadd.f32 %v1893, %v2474
      %v3234 = vadd.f32 %v1896, %v2476
      %v3235 = vadd.f32 %v1898, %v2479
      %v3236 = vadd.f32 %v1901, %v2481
      %v3237 = vadd.f32 %v1903, %v2484
      %v3238 = vadd.f32 %v1906, %v2486
      %v3239 = vadd.f32 %v1908, %v2489
      %v3240 = vadd.f32 %v1914, %v2494
      %v3241 = vadd.f32 %v1916, %v2497
      %v3242 = vadd.f32 %v1919, %v2499
      %v3243 = vadd.f32 %v1921, %v2502
      %v3244 = vadd.f32 %v1924, %v2504
      %v3245 = vadd.f32 %v1926, %v2507
      %v3246 = vadd.f32 %v1929, %v2509
      %v3247 = vadd.f32 %v1931, %v2512
      %v3248 = vadd.f32 %v1937, %v2517
      %v3249 = vadd.f32 %v1939, %v2520
      %v3250 = vadd.f32 %v1942, %v2522
      %v3251 = vadd.f32 %v1944, %v2525
      %v3252 = vadd.f32 %v1947, %v2527
      %v3253 = vadd.f32 %v1949, %v2530
      %v3254 = vadd.f32 %v1952, %v2532
      %v3255 = vadd.f32 %v1954, %v2535
      %v3256 = vadd.f32 %v1960, %v2540
      %v3257 = vadd.f32 %v1962, %v2543
      %v3258 = vadd.f32 %v1965, %v2545
      %v3259 = vadd.f32 %v1967, %v2548
      %v3260 = vadd.f32 %v1970, %v2550
      %v3261 = vadd.f32 %v1972, %v2553
      %v3262 = vadd.f32 %v1975, %v2555
      %v3263 = vadd.f32 %v1977, %v2558
      %v3264 = vadd.f32 %v1983, %v2563
      %v3265 = vadd.f32 %v1985, %v2566
      %v3266 = vadd.f32 %v1988, %v2568
      %v3267 = vadd.f32 %v1990, %v2571
      %v3268 = vadd.f32 %v1993, %v2573
      %v3269 = vadd.f32 %v1995, %v2576
      %v3270 = vadd.f32 %v1998, %v2578
      %v3271 = vadd.f32 %v2000, %v2581
      %v3272 = vadd.f32 %v2006, %v2586
      %v3273 = vadd.f32 %v2008, %v2589
      %v3274 = vadd.f32 %v2011, %v2591
      %v3275 = vadd.f32 %v2013, %v2594
      %v3276 = vadd.f32 %v2016, %v2596
      %v3277 = vadd.f32 %v2018, %v2599
      %v3278 = vadd.f32 %v2021, %v2601
      %v3279 = vadd.f32 %v2023, %v2604
      %v3280 = vadd.f32 %v2029, %v2609
      %v3281 = vadd.f32 %v2031, %v2612
      %v3282 = vadd.f32 %v2034, %v2614
      %v3283 = vadd.f32 %v2036, %v2617
      %v3284 = vadd.f32 %v2039, %v2619
      %v3285 = vadd.f32 %v2041, %v2622
      %v3286 = vadd.f32 %v2044, %v2624
      %v3287 = vadd.f32 %v2046, %v2627
      %v3288 = vadd.f32 %v2052, %v2632
      %v3289 = vadd.f32 %v2054, %v2635
      %v3290 = vadd.f32 %v2057, %v2637
      %v3291 = vadd.f32 %v2059, %v2640
      %v3292 = vadd.f32 %v2062, %v2642
      %v3293 = vadd.f32 %v2064, %v2645
      %v3294 = vadd.f32 %v2067, %v2647
      %v3295 = vadd.f32 %v2069, %v2650
      %v3296 = vadd.f32 %v3232, %v3052
      %v3297 = vadd.f32 %v3233, %v3054
      %v3298 = vadd.f32 %v3234, %v3057
      %v3299 = vadd.f32 %v3235, %v3059
      %v3300 = vadd.f32 %v3236, %v3062
      %v3301 = vadd.f32 %v3237, %v3064
      %v3302 = vadd.f32 %v3238, %v3067
      %v3303 = vadd.f32 %v3239, %v3069
      %v3304 = vadd.f32 %v3240, %v3075
      %v3305 = vadd.f32 %v3241, %v3077
      %v3306 = vadd.f32 %v3242, %v3080
      %v3307 = vadd.f32 %v3243, %v3082
      %v3308 = vadd.f32 %v3244, %v3085
      %v3309 = vadd.f32 %v3245, %v3087
      %v3310 = vadd.f32 %v3246, %v3090
      %v3311 = vadd.f32 %v3247, %v3092
      %v3312 = vadd.f32 %v3248, %v3098
      %v3313 = vadd.f32 %v3249, %v3100
      %v3314 = vadd.f32 %v3250, %v3103
      %v3315 = vadd.f32 %v3251, %v3105
      %v3316 = vadd.f32 %v3252, %v3108
      %v3317 = vadd.f32 %v3253, %v3110
      %v3318 = vadd.f32 %v3254, %v3113
      %v3319 = vadd.f32 %v3255, %v3115
      %v3320 = vadd.f32 %v3256, %v3121
      %v3321 = vadd.f32 %v3257, %v3123
      %v3322 = vadd.f32 %v3258, %v3126
      %v3323 = vadd.f32 %v3259, %v3128
      %v3324 = vadd.f32 %v3260, %v3131
      %v3325 = vadd.f32 %v3261, %v3133
      %v3326 = vadd.f32 %v3262, %v3136
      %v3327 = vadd.f32 %v3263, %v3138
      %v3328 = vadd.f32 %v3264, %v3144
      %v3329 = vadd.f32 %v3265, %v3146
      %v3330 = vadd.f32 %v3266, %v3149
      %v3331 = vadd.f32 %v3267, %v3151
      %v3332 = vadd.f32 %v3268, %v3154
      %v3333 = vadd.f32 %v3269, %v3156
      %v3334 = vadd.f32 %v3270, %v3159
      %v3335 = vadd.f32 %v3271, %v3161
      %v3336 = vadd.f32 %v3272, %v3167
      %v3337 = vadd.f32 %v3273, %v3169
      %v3338 = vadd.f32 %v3274, %v3172
      %v3339 = vadd.f32 %v3275, %v3174
      %v3340 = vadd.f32 %v3276, %v3177
      %v3341 = vadd.f32 %v3277, %v3179
      %v3342 = vadd.f32 %v3278, %v3182
      %v3343 = vadd.f32 %v3279, %v3184
      %v3344 = vadd.f32 %v3280, %v3190
      %v3345 = vadd.f32 %v3281, %v3192
      %v3346 = vadd.f32 %v3282, %v3195
      %v3347 = vadd.f32 %v3283, %v3197
      %v3348 = vadd.f32 %v3284, %v3200
      %v3349 = vadd.f32 %v3285, %v3202
      %v3350 = vadd.f32 %v3286, %v3205
      %v3351 = vadd.f32 %v3287, %v3207
      %v3352 = vadd.f32 %v3288, %v3213
      %v3353 = vadd.f32 %v3289, %v3215
      %v3354 = vadd.f32 %v3290, %v3218
      %v3355 = vadd.f32 %v3291, %v3220
      %v3356 = vadd.f32 %v3292, %v3223
      %v3357 = vadd.f32 %v3293, %v3225
      %v3358 = vadd.f32 %v3294, %v3228
      %v3359 = vadd.f32 %v3295, %v3230
      %3360 = vst [vmem:[%s208] sm:$0xff] %v3296
      %3361 = vst [vmem:[%s208 + $0x8] sm:$0xff] %v3297
      %3362 = vst [vmem:[%s208 + $0x10] sm:$0xff] %v3298
      %3363 = vst [vmem:[%s208 + $0x18] sm:$0xff] %v3299
      %3364 = vst [vmem:[%s208 + $0x20] sm:$0xff] %v3300
      %3365 = vst [vmem:[%s208 + $0x28] sm:$0xff] %v3301
      %3366 = vst [vmem:[%s208 + $0x30] sm:$0xff] %v3302
      %3367 = vst [vmem:[%s208 + $0x38] sm:$0xff] %v3303
      %3368 = vst [vmem:[%s208 + $0x40] sm:$0xff] %v3304
      %3369 = vst [vmem:[%s208 + $0x48] sm:$0xff] %v3305
      %3370 = vst [vmem:[%s208 + $0x50] sm:$0xff] %v3306
      %3371 = vst [vmem:[%s208 + $0x58] sm:$0xff] %v3307
      %3372 = vst [vmem:[%s208 + $0x60] sm:$0xff] %v3308
      %3373 = vst [vmem:[%s208 + $0x68] sm:$0xff] %v3309
      %3374 = vst [vmem:[%s208 + $0x70] sm:$0xff] %v3310
      %3375 = vst [vmem:[%s208 + $0x78] sm:$0xff] %v3311
      %3376 = vst [vmem:[%s208 + $0x80] sm:$0xff] %v3312
      %3377 = vst [vmem:[%s208 + $0x88] sm:$0xff] %v3313
      %3378 = vst [vmem:[%s208 + $0x90] sm:$0xff] %v3314
      %3379 = vst [vmem:[%s208 + $0x98] sm:$0xff] %v3315
      %3380 = vst [vmem:[%s208 + $0xa0] sm:$0xff] %v3316
      %3381 = vst [vmem:[%s208 + $0xa8] sm:$0xff] %v3317
      %3382 = vst [vmem:[%s208 + $0xb0] sm:$0xff] %v3318
      %3383 = vst [vmem:[%s208 + $0xb8] sm:$0xff] %v3319
      %3384 = vst [vmem:[%s208 + $0xc0] sm:$0xff] %v3320
      %3385 = vst [vmem:[%s208 + $0xc8] sm:$0xff] %v3321
      %3386 = vst [vmem:[%s208 + $0xd0] sm:$0xff] %v3322
      %3387 = vst [vmem:[%s208 + $0xd8] sm:$0xff] %v3323
      %3388 = vst [vmem:[%s208 + $0xe0] sm:$0xff] %v3324
      %3389 = vst [vmem:[%s208 + $0xe8] sm:$0xff] %v3325
      %3390 = vst [vmem:[%s208 + $0xf0] sm:$0xff] %v3326
      %3391 = vst [vmem:[%s208 + $0xf8] sm:$0xff] %v3327
      %3392 = vst [vmem:[%s208 + $0x100] sm:$0xff] %v3328
      %3393 = vst [vmem:[%s208 + $0x108] sm:$0xff] %v3329
      %3394 = vst [vmem:[%s208 + $0x110] sm:$0xff] %v3330
      %3395 = vst [vmem:[%s208 + $0x118] sm:$0xff] %v3331
      %3396 = vst [vmem:[%s208 + $0x120] sm:$0xff] %v3332
      %3397 = vst [vmem:[%s208 + $0x128] sm:$0xff] %v3333
      %3398 = vst [vmem:[%s208 + $0x130] sm:$0xff] %v3334
      %3399 = vst [vmem:[%s208 + $0x138] sm:$0xff] %v3335
      %3400 = vst [vmem:[%s208 + $0x140] sm:$0xff] %v3336
      %3401 = vst [vmem:[%s208 + $0x148] sm:$0xff] %v3337
      %3402 = vst [vmem:[%s208 + $0x150] sm:$0xff] %v3338
      %3403 = vst [vmem:[%s208 + $0x158] sm:$0xff] %v3339
      %3404 = vst [vmem:[%s208 + $0x160] sm:$0xff] %v3340
      %3405 = vst [vmem:[%s208 + $0x168] sm:$0xff] %v3341
      %3406 = vst [vmem:[%s208 + $0x170] sm:$0xff] %v3342
      %3407 = vst [vmem:[%s208 + $0x178] sm:$0xff] %v3343
      %3408 = vst [vmem:[%s208 + $0x180] sm:$0xff] %v3344
      %3409 = vst [vmem:[%s208 + $0x188] sm:$0xff] %v3345
      %3410 = vst [vmem:[%s208 + $0x190] sm:$0xff] %v3346
      %3411 = vst [vmem:[%s208 + $0x198] sm:$0xff] %v3347
      %3412 = vst [vmem:[%s208 + $0x1a0] sm:$0xff] %v3348
      %3413 = vst [vmem:[%s208 + $0x1a8] sm:$0xff] %v3349
      %3414 = vst [vmem:[%s208 + $0x1b0] sm:$0xff] %v3350
      %3415 = vst [vmem:[%s208 + $0x1b8] sm:$0xff] %v3351
      %3416 = vst [vmem:[%s208 + $0x1c0] sm:$0xff] %v3352
      %3417 = vst [vmem:[%s208 + $0x1c8] sm:$0xff] %v3353
      %3418 = vst [vmem:[%s208 + $0x1d0] sm:$0xff] %v3354
      %3419 = vst [vmem:[%s208 + $0x1d8] sm:$0xff] %v3355
      %3420 = vst [vmem:[%s208 + $0x1e0] sm:$0xff] %v3356
      %3421 = vst [vmem:[%s208 + $0x1e8] sm:$0xff] %v3357
      %3422 = vst [vmem:[%s208 + $0x1f0] sm:$0xff] %v3358
      %3423 = vst [vmem:[%s208 + $0x1f8] sm:$0xff] %v3359
      %s3424 = scalar_lea.vmem %s203, 120
      %v3425 = vld [vmem:[%s3424] sm:$0xff]
      %v3426 = vld [vmem:[%s3424 + $0x8] sm:$0xf]
      %v3427 = vld [vmem:[%s3424 + $0xc] sm:$0xff]
      %v3428 = vld [vmem:[%s3424 + $0x14] sm:$0xf]
      %v3429 = vld [vmem:[%s3424 + $0x18] sm:$0xff]
      %v3430 = vld [vmem:[%s3424 + $0x20] sm:$0xf]
      %v3431 = vld [vmem:[%s3424 + $0x24] sm:$0xff]
      %v3432 = vld [vmem:[%s3424 + $0x2c] sm:$0xf]
      %v3433 = vld [vmem:[%s3424 + $0x30] sm:$0xff]
      %v3434 = vld [vmem:[%s3424 + $0x38] sm:$0xf]
      %v3435 = vld [vmem:[%s3424 + $0x3c] sm:$0xff]
      %v3436 = vld [vmem:[%s3424 + $0x44] sm:$0xf]
      %v3437 = vld [vmem:[%s3424 + $0x48] sm:$0xff]
      %v3438 = vld [vmem:[%s3424 + $0x50] sm:$0xf]
      %v3439 = vld [vmem:[%s3424 + $0x54] sm:$0xff]
      %v3440 = vld [vmem:[%s3424 + $0x5c] sm:$0xf]
      %v3441 = vld [vmem:[%s3424 + $0x60] sm:$0xff]
      %v3442 = vld [vmem:[%s3424 + $0x68] sm:$0xf]
      %v3443 = vld [vmem:[%s3424 + $0x6c] sm:$0xff]
      %v3444 = vld [vmem:[%s3424 + $0x74] sm:$0xf]
      %v3445 = vld [vmem:[%s3424 + $0x78] sm:$0xff]
      %v3446 = vld [vmem:[%s3424 + $0x80] sm:$0xf]
      %v3447 = vld [vmem:[%s3424 + $0x84] sm:$0xff]
      %v3448 = vld [vmem:[%s3424 + $0x8c] sm:$0xf]
      %v3449 = vld [vmem:[%s3424 + $0x90] sm:$0xff]
      %v3450 = vld [vmem:[%s3424 + $0x98] sm:$0xf]
      %v3451 = vld [vmem:[%s3424 + $0x9c] sm:$0xff]
      %v3452 = vld [vmem:[%s3424 + $0xa4] sm:$0xf]
      %v3453 = vld [vmem:[%s3424 + $0xa8] sm:$0xff]
      %v3454 = vld [vmem:[%s3424 + $0xb0] sm:$0xf]
      %v3455 = vld [vmem:[%s3424 + $0xb4] sm:$0xff]
      %v3456 = vld [vmem:[%s3424 + $0xbc] sm:$0xf]
      %v3457 = vld [vmem:[%s3424 + $0xc0] sm:$0xff]
      %v3458 = vld [vmem:[%s3424 + $0xc8] sm:$0xf]
      %v3459 = vld [vmem:[%s3424 + $0xcc] sm:$0xff]
      %v3460 = vld [vmem:[%s3424 + $0xd4] sm:$0xf]
      %v3461 = vld [vmem:[%s3424 + $0xd8] sm:$0xff]
      %v3462 = vld [vmem:[%s3424 + $0xe0] sm:$0xf]
      %v3463 = vld [vmem:[%s3424 + $0xe4] sm:$0xff]
      %v3464 = vld [vmem:[%s3424 + $0xec] sm:$0xf]
      %v3465 = vld [vmem:[%s3424 + $0xf0] sm:$0xff]
      %v3466 = vld [vmem:[%s3424 + $0xf8] sm:$0xf]
      %v3467 = vld [vmem:[%s3424 + $0xfc] sm:$0xff]
      %v3468 = vld [vmem:[%s3424 + $0x104] sm:$0xf]
      %v3469 = vld [vmem:[%s3424 + $0x108] sm:$0xff]
      %v3470 = vld [vmem:[%s3424 + $0x110] sm:$0xf]
      %v3471 = vld [vmem:[%s3424 + $0x114] sm:$0xff]
      %v3472 = vld [vmem:[%s3424 + $0x11c] sm:$0xf]
      %v3473 = vld [vmem:[%s3424 + $0x120] sm:$0xff]
      %v3474 = vld [vmem:[%s3424 + $0x128] sm:$0xf]
      %v3475 = vld [vmem:[%s3424 + $0x12c] sm:$0xff]
      %v3476 = vld [vmem:[%s3424 + $0x134] sm:$0xf]
      %v3477 = vld [vmem:[%s3424 + $0x138] sm:$0xff]
      %v3478 = vld [vmem:[%s3424 + $0x140] sm:$0xf]
      %v3479 = vld [vmem:[%s3424 + $0x144] sm:$0xff]
      %v3480 = vld [vmem:[%s3424 + $0x14c] sm:$0xf]
      %v3481 = vld [vmem:[%s3424 + $0x150] sm:$0xff]
      %v3482 = vld [vmem:[%s3424 + $0x158] sm:$0xf]
      %v3483 = vld [vmem:[%s3424 + $0x15c] sm:$0xff]
      %v3484 = vld [vmem:[%s3424 + $0x164] sm:$0xf]
      %v3485 = vld [vmem:[%s3424 + $0x168] sm:$0xff]
      %v3486 = vld [vmem:[%s3424 + $0x170] sm:$0xf]
      %v3487 = vld [vmem:[%s3424 + $0x174] sm:$0xff]
      %v3488 = vld [vmem:[%s3424 + $0x17c] sm:$0xf]
      %v3489 = vld [vmem:[%s3424 + $0x180] sm:$0xff]
      %v3490 = vld [vmem:[%s3424 + $0x188] sm:$0xf]
      %v3491 = vld [vmem:[%s3424 + $0x18c] sm:$0xff]
      %v3492 = vld [vmem:[%s3424 + $0x194] sm:$0xf]
      %v3493 = vld [vmem:[%s3424 + $0x198] sm:$0xff]
      %v3494 = vld [vmem:[%s3424 + $0x1a0] sm:$0xf]
      %v3495 = vld [vmem:[%s3424 + $0x1a4] sm:$0xff]
      %v3496 = vld [vmem:[%s3424 + $0x1ac] sm:$0xf]
      %v3497 = vld [vmem:[%s3424 + $0x1b0] sm:$0xff]
      %v3498 = vld [vmem:[%s3424 + $0x1b8] sm:$0xf]
      %v3499 = vld [vmem:[%s3424 + $0x1bc] sm:$0xff]
      %v3500 = vld [vmem:[%s3424 + $0x1c4] sm:$0xf]
      %v3501 = vld [vmem:[%s3424 + $0x1c8] sm:$0xff]
      %v3502 = vld [vmem:[%s3424 + $0x1d0] sm:$0xf]
      %v3503 = vld [vmem:[%s3424 + $0x1d4] sm:$0xff]
      %v3504 = vld [vmem:[%s3424 + $0x1dc] sm:$0xf]
      %v3505 = vld [vmem:[%s3424 + $0x1e0] sm:$0xff]
      %v3506 = vld [vmem:[%s3424 + $0x1e8] sm:$0xf]
      %v3507 = vld [vmem:[%s3424 + $0x1ec] sm:$0xff]
      %v3508 = vld [vmem:[%s3424 + $0x1f4] sm:$0xf]
      %v3509 = vld [vmem:[%s3424 + $0x1f8] sm:$0xff]
      %v3510 = vld [vmem:[%s3424 + $0x200] sm:$0xf]
      %v3511 = vld [vmem:[%s3424 + $0x204] sm:$0xff]
      %v3512 = vld [vmem:[%s3424 + $0x20c] sm:$0xf]
      %v3513 = vld [vmem:[%s3424 + $0x210] sm:$0xff]
      %v3514 = vld [vmem:[%s3424 + $0x218] sm:$0xf]
      %v3515 = vld [vmem:[%s3424 + $0x21c] sm:$0xff]
      %v3516 = vld [vmem:[%s3424 + $0x224] sm:$0xf]
      %v3517 = vld [vmem:[%s3424 + $0x228] sm:$0xff]
      %v3518 = vld [vmem:[%s3424 + $0x230] sm:$0xf]
      %v3519 = vld [vmem:[%s3424 + $0x234] sm:$0xff]
      %v3520 = vld [vmem:[%s3424 + $0x23c] sm:$0xf]
      %v3521 = vld [vmem:[%s3424 + $0x240] sm:$0xff]
      %v3522 = vld [vmem:[%s3424 + $0x248] sm:$0xf]
      %v3523 = vld [vmem:[%s3424 + $0x24c] sm:$0xff]
      %v3524 = vld [vmem:[%s3424 + $0x254] sm:$0xf]
      %v3525 = vld [vmem:[%s3424 + $0x258] sm:$0xff]
      %v3526 = vld [vmem:[%s3424 + $0x260] sm:$0xf]
      %v3527 = vld [vmem:[%s3424 + $0x264] sm:$0xff]
      %v3528 = vld [vmem:[%s3424 + $0x26c] sm:$0xf]
      %v3529 = vld [vmem:[%s3424 + $0x270] sm:$0xff]
      %v3530 = vld [vmem:[%s3424 + $0x278] sm:$0xf]
      %v3531 = vld [vmem:[%s3424 + $0x27c] sm:$0xff]
      %v3532 = vld [vmem:[%s3424 + $0x284] sm:$0xf]
      %v3533 = vld [vmem:[%s3424 + $0x288] sm:$0xff]
      %v3534 = vld [vmem:[%s3424 + $0x290] sm:$0xf]
      %v3535 = vld [vmem:[%s3424 + $0x294] sm:$0xff]
      %v3536 = vld [vmem:[%s3424 + $0x29c] sm:$0xf]
      %v3537 = vld [vmem:[%s3424 + $0x2a0] sm:$0xff]
      %v3538 = vld [vmem:[%s3424 + $0x2a8] sm:$0xf]
      %v3539 = vld [vmem:[%s3424 + $0x2ac] sm:$0xff]
      %v3540 = vld [vmem:[%s3424 + $0x2b4] sm:$0xf]
      %v3541 = vld [vmem:[%s3424 + $0x2b8] sm:$0xff]
      %v3542 = vld [vmem:[%s3424 + $0x2c0] sm:$0xf]
      %v3543 = vld [vmem:[%s3424 + $0x2c4] sm:$0xff]
      %v3544 = vld [vmem:[%s3424 + $0x2cc] sm:$0xf]
      %v3545 = vld [vmem:[%s3424 + $0x2d0] sm:$0xff]
      %v3546 = vld [vmem:[%s3424 + $0x2d8] sm:$0xf]
      %v3547 = vld [vmem:[%s3424 + $0x2dc] sm:$0xff]
      %v3548 = vld [vmem:[%s3424 + $0x2e4] sm:$0xf]
      %v3549 = vld [vmem:[%s3424 + $0x2e8] sm:$0xff]
      %v3550 = vld [vmem:[%s3424 + $0x2f0] sm:$0xf]
      %v3551 = vld [vmem:[%s3424 + $0x2f4] sm:$0xff]
      %v3552 = vld [vmem:[%s3424 + $0x2fc] sm:$0xf]
      %v3553 = vld [vmem:[%s3424 + $0x300] sm:$0xff]
      %v3554 = vld [vmem:[%s3424 + $0x308] sm:$0xf]
      %v3555 = vld [vmem:[%s3424 + $0x30c] sm:$0xff]
      %v3556 = vld [vmem:[%s3424 + $0x314] sm:$0xf]
      %v3557 = vld [vmem:[%s3424 + $0x318] sm:$0xff]
      %v3558 = vld [vmem:[%s3424 + $0x320] sm:$0xf]
      %v3559 = vld [vmem:[%s3424 + $0x324] sm:$0xff]
      %v3560 = vld [vmem:[%s3424 + $0x32c] sm:$0xf]
      %v3561 = vld [vmem:[%s3424 + $0x330] sm:$0xff]
      %v3562 = vld [vmem:[%s3424 + $0x338] sm:$0xf]
      %v3563 = vld [vmem:[%s3424 + $0x33c] sm:$0xff]
      %v3564 = vld [vmem:[%s3424 + $0x344] sm:$0xf]
      %v3565 = vld [vmem:[%s3424 + $0x348] sm:$0xff]
      %v3566 = vld [vmem:[%s3424 + $0x350] sm:$0xf]
      %v3567 = vld [vmem:[%s3424 + $0x354] sm:$0xff]
      %v3568 = vld [vmem:[%s3424 + $0x35c] sm:$0xf]
      %v3569 = vld [vmem:[%s3424 + $0x360] sm:$0xff]
      %v3570 = vld [vmem:[%s3424 + $0x368] sm:$0xf]
      %v3571 = vld [vmem:[%s3424 + $0x36c] sm:$0xff]
      %v3572 = vld [vmem:[%s3424 + $0x374] sm:$0xf]
      %v3573 = vld [vmem:[%s3424 + $0x378] sm:$0xff]
      %v3574 = vld [vmem:[%s3424 + $0x380] sm:$0xf]
      %v3575 = vld [vmem:[%s3424 + $0x384] sm:$0xff]
      %v3576 = vld [vmem:[%s3424 + $0x38c] sm:$0xf]
      %v3577 = vld [vmem:[%s3424 + $0x390] sm:$0xff]
      %v3578 = vld [vmem:[%s3424 + $0x398] sm:$0xf]
      %v3579 = vld [vmem:[%s3424 + $0x39c] sm:$0xff]
      %v3580 = vld [vmem:[%s3424 + $0x3a4] sm:$0xf]
      %v3581 = vld [vmem:[%s3424 + $0x3a8] sm:$0xff]
      %v3582 = vld [vmem:[%s3424 + $0x3b0] sm:$0xf]
      %v3583 = vld [vmem:[%s3424 + $0x3b4] sm:$0xff]
      %v3584 = vld [vmem:[%s3424 + $0x3bc] sm:$0xf]
      %s3585 = scalar_lea.vmem %s1, 576
      %v3586 = vld [vmem:[%s3585] sm:$0xff]
      %v3587 = vld [vmem:[%s3585 + $0x8] sm:$0xf]
      %v3588 = vld [vmem:[%s3585 + $0xc] sm:$0xff]
      %v3589 = vld [vmem:[%s3585 + $0x14] sm:$0xf]
      %v3590 = vld [vmem:[%s3585 + $0x18] sm:$0xff]
      %v3591 = vld [vmem:[%s3585 + $0x20] sm:$0xf]
      %v3592 = vld [vmem:[%s3585 + $0x24] sm:$0xff]
      %v3593 = vld [vmem:[%s3585 + $0x2c] sm:$0xf]
      %v3594 = vld [vmem:[%s3585 + $0x30] sm:$0xff]
      %v3595 = vld [vmem:[%s3585 + $0x38] sm:$0xf]
      %v3596 = vld [vmem:[%s3585 + $0x3c] sm:$0xff]
      %v3597 = vld [vmem:[%s3585 + $0x44] sm:$0xf]
      %v3598 = vld [vmem:[%s3585 + $0x48] sm:$0xff]
      %v3599 = vld [vmem:[%s3585 + $0x50] sm:$0xf]
      %v3600 = vld [vmem:[%s3585 + $0x54] sm:$0xff]
      %v3601 = vld [vmem:[%s3585 + $0x5c] sm:$0xf]
      %v3602 = vld [vmem:[%s3585 + $0x60] sm:$0xff]
      %v3603 = vld [vmem:[%s3585 + $0x68] sm:$0xf]
      %v3604 = vld [vmem:[%s3585 + $0x6c] sm:$0xff]
      %v3605 = vld [vmem:[%s3585 + $0x74] sm:$0xf]
      %v3606 = vld [vmem:[%s3585 + $0x78] sm:$0xff]
      %v3607 = vld [vmem:[%s3585 + $0x80] sm:$0xf]
      %v3608 = vld [vmem:[%s3585 + $0x84] sm:$0xff]
      %v3609 = vld [vmem:[%s3585 + $0x8c] sm:$0xf]
      %v3610 = vld [vmem:[%s3585 + $0x90] sm:$0xff]
      %v3611 = vld [vmem:[%s3585 + $0x98] sm:$0xf]
      %v3612 = vld [vmem:[%s3585 + $0x9c] sm:$0xff]
      %v3613 = vld [vmem:[%s3585 + $0xa4] sm:$0xf]
      %v3614 = vld [vmem:[%s3585 + $0xa8] sm:$0xff]
      %v3615 = vld [vmem:[%s3585 + $0xb0] sm:$0xf]
      %v3616 = vld [vmem:[%s3585 + $0xb4] sm:$0xff]
      %v3617 = vld [vmem:[%s3585 + $0xbc] sm:$0xf]
      %v3618 = vld [vmem:[%s3585 + $0xc0] sm:$0xff]
      %v3619 = vld [vmem:[%s3585 + $0xc8] sm:$0xf]
      %v3620 = vld [vmem:[%s3585 + $0xcc] sm:$0xff]
      %v3621 = vld [vmem:[%s3585 + $0xd4] sm:$0xf]
      %v3622 = vld [vmem:[%s3585 + $0xd8] sm:$0xff]
      %v3623 = vld [vmem:[%s3585 + $0xe0] sm:$0xf]
      %v3624 = vld [vmem:[%s3585 + $0xe4] sm:$0xff]
      %v3625 = vld [vmem:[%s3585 + $0xec] sm:$0xf]
      %v3626 = vld [vmem:[%s3585 + $0xf0] sm:$0xff]
      %v3627 = vld [vmem:[%s3585 + $0xf8] sm:$0xf]
      %v3628 = vld [vmem:[%s3585 + $0xfc] sm:$0xff]
      %v3629 = vld [vmem:[%s3585 + $0x104] sm:$0xf]
      %v3630 = vld [vmem:[%s3585 + $0x108] sm:$0xff]
      %v3631 = vld [vmem:[%s3585 + $0x110] sm:$0xf]
      %v3632 = vld [vmem:[%s3585 + $0x114] sm:$0xff]
      %v3633 = vld [vmem:[%s3585 + $0x11c] sm:$0xf]
      %v3634 = vld [vmem:[%s3585 + $0x120] sm:$0xff]
      %v3635 = vld [vmem:[%s3585 + $0x128] sm:$0xf]
      %v3636 = vld [vmem:[%s3585 + $0x12c] sm:$0xff]
      %v3637 = vld [vmem:[%s3585 + $0x134] sm:$0xf]
      %v3638 = vld [vmem:[%s3585 + $0x138] sm:$0xff]
      %v3639 = vld [vmem:[%s3585 + $0x140] sm:$0xf]
      %v3640 = vld [vmem:[%s3585 + $0x144] sm:$0xff]
      %v3641 = vld [vmem:[%s3585 + $0x14c] sm:$0xf]
      %v3642 = vld [vmem:[%s3585 + $0x150] sm:$0xff]
      %v3643 = vld [vmem:[%s3585 + $0x158] sm:$0xf]
      %v3644 = vld [vmem:[%s3585 + $0x15c] sm:$0xff]
      %v3645 = vld [vmem:[%s3585 + $0x164] sm:$0xf]
      %v3646 = vld [vmem:[%s3585 + $0x168] sm:$0xff]
      %v3647 = vld [vmem:[%s3585 + $0x170] sm:$0xf]
      %v3648 = vld [vmem:[%s3585 + $0x174] sm:$0xff]
      %v3649 = vld [vmem:[%s3585 + $0x17c] sm:$0xf]
      %v3650 = vld [vmem:[%s3585 + $0x180] sm:$0xff]
      %v3651 = vld [vmem:[%s3585 + $0x188] sm:$0xf]
      %v3652 = vld [vmem:[%s3585 + $0x18c] sm:$0xff]
      %v3653 = vld [vmem:[%s3585 + $0x194] sm:$0xf]
      %v3654 = vld [vmem:[%s3585 + $0x198] sm:$0xff]
      %v3655 = vld [vmem:[%s3585 + $0x1a0] sm:$0xf]
      %v3656 = vld [vmem:[%s3585 + $0x1a4] sm:$0xff]
      %v3657 = vld [vmem:[%s3585 + $0x1ac] sm:$0xf]
      %v3658 = vld [vmem:[%s3585 + $0x1b0] sm:$0xff]
      %v3659 = vld [vmem:[%s3585 + $0x1b8] sm:$0xf]
      %v3660 = vld [vmem:[%s3585 + $0x1bc] sm:$0xff]
      %v3661 = vld [vmem:[%s3585 + $0x1c4] sm:$0xf]
      %v3662 = vld [vmem:[%s3585 + $0x1c8] sm:$0xff]
      %v3663 = vld [vmem:[%s3585 + $0x1d0] sm:$0xf]
      %v3664 = vld [vmem:[%s3585 + $0x1d4] sm:$0xff]
      %v3665 = vld [vmem:[%s3585 + $0x1dc] sm:$0xf]
      %v3666 = vld [vmem:[%s3585 + $0x1e0] sm:$0xff]
      %v3667 = vld [vmem:[%s3585 + $0x1e8] sm:$0xf]
      %v3668 = vld [vmem:[%s3585 + $0x1ec] sm:$0xff]
      %v3669 = vld [vmem:[%s3585 + $0x1f4] sm:$0xf]
      %v3670 = vld [vmem:[%s3585 + $0x1f8] sm:$0xff]
      %v3671 = vld [vmem:[%s3585 + $0x200] sm:$0xf]
      %v3672 = vld [vmem:[%s3585 + $0x204] sm:$0xff]
      %v3673 = vld [vmem:[%s3585 + $0x20c] sm:$0xf]
      %v3674 = vld [vmem:[%s3585 + $0x210] sm:$0xff]
      %v3675 = vld [vmem:[%s3585 + $0x218] sm:$0xf]
      %v3676 = vld [vmem:[%s3585 + $0x21c] sm:$0xff]
      %v3677 = vld [vmem:[%s3585 + $0x224] sm:$0xf]
      %v3678 = vld [vmem:[%s3585 + $0x228] sm:$0xff]
      %v3679 = vld [vmem:[%s3585 + $0x230] sm:$0xf]
      %v3680 = vld [vmem:[%s3585 + $0x234] sm:$0xff]
      %v3681 = vld [vmem:[%s3585 + $0x23c] sm:$0xf]
      %v3842 = vunpack.c.l.b16 %v3425
      %v3843 = vunpack.c.h.b16 %v3425
      %v3844 = vunpack.c.l.b16 %v3426
      %v3845 = vunpack.c.l.b16 %v3427
      %v3846 = vunpack.c.h.b16 %v3427
      %v3847 = vunpack.c.l.b16 %v3428
      %v3848 = vunpack.c.l.b16 %v3429
      %v3849 = vunpack.c.h.b16 %v3429
      %v3850 = vunpack.c.l.b16 %v3430
      %v3851 = vunpack.c.l.b16 %v3431
      %v3852 = vunpack.c.h.b16 %v3431
      %v3853 = vunpack.c.l.b16 %v3432
      %v3854 = vunpack.c.l.b16 %v3433
      %v3855 = vunpack.c.h.b16 %v3433
      %v3856 = vunpack.c.l.b16 %v3434
      %v3857 = vunpack.c.l.b16 %v3435
      %v3858 = vunpack.c.h.b16 %v3435
      %v3859 = vunpack.c.l.b16 %v3436
      %v3860 = vunpack.c.l.b16 %v3437
      %v3861 = vunpack.c.h.b16 %v3437
      %v3862 = vunpack.c.l.b16 %v3438
      %v3863 = vunpack.c.l.b16 %v3439
      %v3864 = vunpack.c.h.b16 %v3439
      %v3865 = vunpack.c.l.b16 %v3440
      %v3866 = vunpack.c.l.b16 %v3441
      %v3867 = vunpack.c.h.b16 %v3441
      %v3868 = vunpack.c.l.b16 %v3442
      %v3869 = vunpack.c.l.b16 %v3443
      %v3870 = vunpack.c.h.b16 %v3443
      %v3871 = vunpack.c.l.b16 %v3444
      %v3872 = vunpack.c.l.b16 %v3445
      %v3873 = vunpack.c.h.b16 %v3445
      %v3874 = vunpack.c.l.b16 %v3446
      %v3875 = vunpack.c.l.b16 %v3447
      %v3876 = vunpack.c.h.b16 %v3447
      %v3877 = vunpack.c.l.b16 %v3448
      %v3878 = vunpack.c.l.b16 %v3449
      %v3879 = vunpack.c.h.b16 %v3449
      %v3880 = vunpack.c.l.b16 %v3450
      %v3881 = vunpack.c.l.b16 %v3451
      %v3882 = vunpack.c.h.b16 %v3451
      %v3883 = vunpack.c.l.b16 %v3452
      %v3884 = vunpack.c.l.b16 %v3453
      %v3885 = vunpack.c.h.b16 %v3453
      %v3886 = vunpack.c.l.b16 %v3454
      %v3887 = vunpack.c.l.b16 %v3455
      %v3888 = vunpack.c.h.b16 %v3455
      %v3889 = vunpack.c.l.b16 %v3456
      %v3890 = vunpack.c.l.b16 %v3457
      %v3891 = vunpack.c.h.b16 %v3457
      %v3892 = vunpack.c.l.b16 %v3458
      %v3893 = vunpack.c.l.b16 %v3459
      %v3894 = vunpack.c.h.b16 %v3459
      %v3895 = vunpack.c.l.b16 %v3460
      %v3896 = vunpack.c.l.b16 %v3461
      %v3897 = vunpack.c.h.b16 %v3461
      %v3898 = vunpack.c.l.b16 %v3462
      %v3899 = vunpack.c.l.b16 %v3463
      %v3900 = vunpack.c.h.b16 %v3463
      %v3901 = vunpack.c.l.b16 %v3464
      %v3902 = vunpack.c.l.b16 %v3465
      %v3903 = vunpack.c.h.b16 %v3465
      %v3904 = vunpack.c.l.b16 %v3466
      %v3905 = vunpack.c.l.b16 %v3467
      %v3906 = vunpack.c.h.b16 %v3467
      %v3907 = vunpack.c.l.b16 %v3468
      %v3908 = vunpack.c.l.b16 %v3469
      %v3909 = vunpack.c.h.b16 %v3469
      %v3910 = vunpack.c.l.b16 %v3470
      %v3911 = vunpack.c.l.b16 %v3471
      %v3912 = vunpack.c.h.b16 %v3471
      %v3913 = vunpack.c.l.b16 %v3472
      %v3914 = vunpack.c.l.b16 %v3473
      %v3915 = vunpack.c.h.b16 %v3473
      %v3916 = vunpack.c.l.b16 %v3474
      %v3917 = vunpack.c.l.b16 %v3475
      %v3918 = vunpack.c.h.b16 %v3475
      %v3919 = vunpack.c.l.b16 %v3476
      %v3920 = vunpack.c.l.b16 %v3477
      %v3921 = vunpack.c.h.b16 %v3477
      %v3922 = vunpack.c.l.b16 %v3478
      %v3923 = vunpack.c.l.b16 %v3479
      %v3924 = vunpack.c.h.b16 %v3479
      %v3925 = vunpack.c.l.b16 %v3480
      %v3926 = vunpack.c.l.b16 %v3481
      %v3927 = vunpack.c.h.b16 %v3481
      %v3928 = vunpack.c.l.b16 %v3482
      %v3929 = vunpack.c.l.b16 %v3483
      %v3930 = vunpack.c.h.b16 %v3483
      %v3931 = vunpack.c.l.b16 %v3484
      %v3932 = vunpack.c.l.b16 %v3485
      %v3933 = vunpack.c.h.b16 %v3485
      %v3934 = vunpack.c.l.b16 %v3486
      %v3935 = vunpack.c.l.b16 %v3487
      %v3936 = vunpack.c.h.b16 %v3487
      %v3937 = vunpack.c.l.b16 %v3488
      %v3938 = vunpack.c.l.b16 %v3489
      %v3939 = vunpack.c.h.b16 %v3489
      %v3940 = vunpack.c.l.b16 %v3490
      %v3941 = vunpack.c.l.b16 %v3491
      %v3942 = vunpack.c.h.b16 %v3491
      %v3943 = vunpack.c.l.b16 %v3492
      %v3944 = vunpack.c.l.b16 %v3493
      %v3945 = vunpack.c.h.b16 %v3493
      %v3946 = vunpack.c.l.b16 %v3494
      %v3947 = vunpack.c.l.b16 %v3495
      %v3948 = vunpack.c.h.b16 %v3495
      %v3949 = vunpack.c.l.b16 %v3496
      %v3950 = vunpack.c.l.b16 %v3497
      %v3951 = vunpack.c.h.b16 %v3497
      %v3952 = vunpack.c.l.b16 %v3498
      %v3953 = vunpack.c.l.b16 %v3499
      %v3954 = vunpack.c.h.b16 %v3499
      %v3955 = vunpack.c.l.b16 %v3500
      %v3956 = vunpack.c.l.b16 %v3501
      %v3957 = vunpack.c.h.b16 %v3501
      %v3958 = vunpack.c.l.b16 %v3502
      %v3959 = vunpack.c.l.b16 %v3503
      %v3960 = vunpack.c.h.b16 %v3503
      %v3961 = vunpack.c.l.b16 %v3504
      %v3962 = vunpack.c.l.b16 %v3505
      %v3963 = vunpack.c.h.b16 %v3505
      %v3964 = vunpack.c.l.b16 %v3506
      %v3965 = vunpack.c.l.b16 %v3507
      %v3966 = vunpack.c.h.b16 %v3507
      %v3967 = vunpack.c.l.b16 %v3508
      %v3968 = vunpack.c.l.b16 %v3509
      %v3969 = vunpack.c.h.b16 %v3509
      %v3970 = vunpack.c.l.b16 %v3510
      %v3971 = vunpack.c.l.b16 %v3511
      %v3972 = vunpack.c.h.b16 %v3511
      %v3973 = vunpack.c.l.b16 %v3512
      %v3974 = vunpack.c.l.b16 %v3513
      %v3975 = vunpack.c.h.b16 %v3513
      %v3976 = vunpack.c.l.b16 %v3514
      %v3977 = vunpack.c.l.b16 %v3515
      %v3978 = vunpack.c.h.b16 %v3515
      %v3979 = vunpack.c.l.b16 %v3516
      %v3980 = vunpack.c.l.b16 %v3517
      %v3981 = vunpack.c.h.b16 %v3517
      %v3982 = vunpack.c.l.b16 %v3518
      %v3983 = vunpack.c.l.b16 %v3519
      %v3984 = vunpack.c.h.b16 %v3519
      %v3985 = vunpack.c.l.b16 %v3520
      %v3986 = vunpack.c.l.b16 %v3521
      %v3987 = vunpack.c.h.b16 %v3521
      %v3988 = vunpack.c.l.b16 %v3522
      %v3989 = vunpack.c.l.b16 %v3523
      %v3990 = vunpack.c.h.b16 %v3523
      %v3991 = vunpack.c.l.b16 %v3524
      %v3992 = vunpack.c.l.b16 %v3525
      %v3993 = vunpack.c.h.b16 %v3525
      %v3994 = vunpack.c.l.b16 %v3526
      %v3995 = vunpack.c.l.b16 %v3527
      %v3996 = vunpack.c.h.b16 %v3527
      %v3997 = vunpack.c.l.b16 %v3528
      %v3998 = vunpack.c.l.b16 %v3529
      %v3999 = vunpack.c.h.b16 %v3529
      %v4000 = vunpack.c.l.b16 %v3530
      %v4001 = vunpack.c.l.b16 %v3531
      %v4002 = vunpack.c.h.b16 %v3531
      %v4003 = vunpack.c.l.b16 %v3532
      %v4004 = vunpack.c.l.b16 %v3533
      %v4005 = vunpack.c.h.b16 %v3533
      %v4006 = vunpack.c.l.b16 %v3534
      %v4007 = vunpack.c.l.b16 %v3535
      %v4008 = vunpack.c.h.b16 %v3535
      %v4009 = vunpack.c.l.b16 %v3536
      %v4010 = vunpack.c.l.b16 %v3537
      %v4011 = vunpack.c.h.b16 %v3537
      %v4012 = vunpack.c.l.b16 %v3538
      %v4013 = vunpack.c.l.b16 %v3539
      %v4014 = vunpack.c.h.b16 %v3539
      %v4015 = vunpack.c.l.b16 %v3540
      %v4016 = vunpack.c.l.b16 %v3541
      %v4017 = vunpack.c.h.b16 %v3541
      %v4018 = vunpack.c.l.b16 %v3542
      %v4019 = vunpack.c.l.b16 %v3543
      %v4020 = vunpack.c.h.b16 %v3543
      %v4021 = vunpack.c.l.b16 %v3544
      %v4022 = vunpack.c.l.b16 %v3545
      %v4023 = vunpack.c.h.b16 %v3545
      %v4024 = vunpack.c.l.b16 %v3546
      %v4025 = vunpack.c.l.b16 %v3547
      %v4026 = vunpack.c.h.b16 %v3547
      %v4027 = vunpack.c.l.b16 %v3548
      %v4028 = vunpack.c.l.b16 %v3549
      %v4029 = vunpack.c.h.b16 %v3549
      %v4030 = vunpack.c.l.b16 %v3550
      %v4031 = vunpack.c.l.b16 %v3551
      %v4032 = vunpack.c.h.b16 %v3551
      %v4033 = vunpack.c.l.b16 %v3552
      %v4034 = vunpack.c.l.b16 %v3553
      %v4035 = vunpack.c.h.b16 %v3553
      %v4036 = vunpack.c.l.b16 %v3554
      %v4037 = vunpack.c.l.b16 %v3555
      %v4038 = vunpack.c.h.b16 %v3555
      %v4039 = vunpack.c.l.b16 %v3556
      %v4040 = vunpack.c.l.b16 %v3557
      %v4041 = vunpack.c.h.b16 %v3557
      %v4042 = vunpack.c.l.b16 %v3558
      %v4043 = vunpack.c.l.b16 %v3559
      %v4044 = vunpack.c.h.b16 %v3559
      %v4045 = vunpack.c.l.b16 %v3560
      %v4046 = vunpack.c.l.b16 %v3561
      %v4047 = vunpack.c.h.b16 %v3561
      %v4048 = vunpack.c.l.b16 %v3562
      %v4049 = vunpack.c.l.b16 %v3563
      %v4050 = vunpack.c.h.b16 %v3563
      %v4051 = vunpack.c.l.b16 %v3564
      %v4052 = vunpack.c.l.b16 %v3565
      %v4053 = vunpack.c.h.b16 %v3565
      %v4054 = vunpack.c.l.b16 %v3566
      %v4055 = vunpack.c.l.b16 %v3567
      %v4056 = vunpack.c.h.b16 %v3567
      %v4057 = vunpack.c.l.b16 %v3568
      %v4058 = vunpack.c.l.b16 %v3569
      %v4059 = vunpack.c.h.b16 %v3569
      %v4060 = vunpack.c.l.b16 %v3570
      %v4061 = vunpack.c.l.b16 %v3571
      %v4062 = vunpack.c.h.b16 %v3571
      %v4063 = vunpack.c.l.b16 %v3572
      %v4064 = vunpack.c.l.b16 %v3573
      %v4065 = vunpack.c.h.b16 %v3573
      %v4066 = vunpack.c.l.b16 %v3574
      %v4067 = vunpack.c.l.b16 %v3575
      %v4068 = vunpack.c.h.b16 %v3575
      %v4069 = vunpack.c.l.b16 %v3576
      %v4070 = vunpack.c.l.b16 %v3577
      %v4071 = vunpack.c.h.b16 %v3577
      %v4072 = vunpack.c.l.b16 %v3578
      %v4073 = vunpack.c.l.b16 %v3579
      %v4074 = vunpack.c.h.b16 %v3579
      %v4075 = vunpack.c.l.b16 %v3580
      %v4076 = vunpack.c.l.b16 %v3581
      %v4077 = vunpack.c.h.b16 %v3581
      %v4078 = vunpack.c.l.b16 %v3582
      %v4079 = vunpack.c.l.b16 %v3583
      %v4080 = vunpack.c.h.b16 %v3583
      %v4081 = vunpack.c.l.b16 %v3584
      %v4082 = vpack.c.b16 %v3845, %v3842
      %v4083 = vpack.c.b16 %v3846, %v3843
      %v4084 = vpack.c.b16 %v3847, %v3844
      %v4085 = vpack.c.b16 %v3851, %v3848
      %v4086 = vpack.c.b16 %v3852, %v3849
      %v4087 = vpack.c.b16 %v3853, %v3850
      %v4088 = vpack.c.b16 %v3857, %v3854
      %v4089 = vpack.c.b16 %v3858, %v3855
      %v4090 = vpack.c.b16 %v3859, %v3856
      %v4091 = vpack.c.b16 %v3863, %v3860
      %v4092 = vpack.c.b16 %v3864, %v3861
      %v4093 = vpack.c.b16 %v3865, %v3862
      %v4094 = vpack.c.b16 %v3869, %v3866
      %v4095 = vpack.c.b16 %v3870, %v3867
      %v4096 = vpack.c.b16 %v3871, %v3868
      %v4097 = vpack.c.b16 %v3875, %v3872
      %v4098 = vpack.c.b16 %v3876, %v3873
      %v4099 = vpack.c.b16 %v3877, %v3874
      %v4100 = vpack.c.b16 %v3881, %v3878
      %v4101 = vpack.c.b16 %v3882, %v3879
      %v4102 = vpack.c.b16 %v3883, %v3880
      %v4103 = vpack.c.b16 %v3887, %v3884
      %v4104 = vpack.c.b16 %v3888, %v3885
      %v4105 = vpack.c.b16 %v3889, %v3886
      %v4106 = vpack.c.b16 %v3893, %v3890
      %v4107 = vpack.c.b16 %v3894, %v3891
      %v4108 = vpack.c.b16 %v3895, %v3892
      %v4109 = vpack.c.b16 %v3899, %v3896
      %v4110 = vpack.c.b16 %v3900, %v3897
      %v4111 = vpack.c.b16 %v3901, %v3898
      %v4112 = vpack.c.b16 %v3905, %v3902
      %v4113 = vpack.c.b16 %v3906, %v3903
      %v4114 = vpack.c.b16 %v3907, %v3904
      %v4115 = vpack.c.b16 %v3911, %v3908
      %v4116 = vpack.c.b16 %v3912, %v3909
      %v4117 = vpack.c.b16 %v3913, %v3910
      %v4118 = vpack.c.b16 %v3917, %v3914
      %v4119 = vpack.c.b16 %v3918, %v3915
      %v4120 = vpack.c.b16 %v3919, %v3916
      %v4121 = vpack.c.b16 %v3923, %v3920
      %v4122 = vpack.c.b16 %v3924, %v3921
      %v4123 = vpack.c.b16 %v3925, %v3922
      %v4124 = vpack.c.b16 %v3929, %v3926
      %v4125 = vpack.c.b16 %v3930, %v3927
      %v4126 = vpack.c.b16 %v3931, %v3928
      %v4127 = vpack.c.b16 %v3935, %v3932
      %v4128 = vpack.c.b16 %v3936, %v3933
      %v4129 = vpack.c.b16 %v3937, %v3934
      %v4130 = vpack.c.b16 %v3941, %v3938
      %v4131 = vpack.c.b16 %v3942, %v3939
      %v4132 = vpack.c.b16 %v3943, %v3940
      %v4133 = vpack.c.b16 %v3947, %v3944
      %v4134 = vpack.c.b16 %v3948, %v3945
      %v4135 = vpack.c.b16 %v3949, %v3946
      %v4136 = vpack.c.b16 %v3953, %v3950
      %v4137 = vpack.c.b16 %v3954, %v3951
      %v4138 = vpack.c.b16 %v3955, %v3952
      %v4139 = vpack.c.b16 %v3959, %v3956
      %v4140 = vpack.c.b16 %v3960, %v3957
      %v4141 = vpack.c.b16 %v3961, %v3958
      %v4142 = vpack.c.b16 %v3965, %v3962
      %v4143 = vpack.c.b16 %v3966, %v3963
      %v4144 = vpack.c.b16 %v3967, %v3964
      %v4145 = vpack.c.b16 %v3971, %v3968
      %v4146 = vpack.c.b16 %v3972, %v3969
      %v4147 = vpack.c.b16 %v3973, %v3970
      %v4148 = vpack.c.b16 %v3977, %v3974
      %v4149 = vpack.c.b16 %v3978, %v3975
      %v4150 = vpack.c.b16 %v3979, %v3976
      %v4151 = vpack.c.b16 %v3983, %v3980
      %v4152 = vpack.c.b16 %v3984, %v3981
      %v4153 = vpack.c.b16 %v3985, %v3982
      %v4154 = vpack.c.b16 %v3989, %v3986
      %v4155 = vpack.c.b16 %v3990, %v3987
      %v4156 = vpack.c.b16 %v3991, %v3988
      %v4157 = vpack.c.b16 %v3995, %v3992
      %v4158 = vpack.c.b16 %v3996, %v3993
      %v4159 = vpack.c.b16 %v3997, %v3994
      %v4160 = vpack.c.b16 %v4001, %v3998
      %v4161 = vpack.c.b16 %v4002, %v3999
      %v4162 = vpack.c.b16 %v4003, %v4000
      %v4163 = vpack.c.b16 %v4007, %v4004
      %v4164 = vpack.c.b16 %v4008, %v4005
      %v4165 = vpack.c.b16 %v4009, %v4006
      %v4166 = vpack.c.b16 %v4013, %v4010
      %v4167 = vpack.c.b16 %v4014, %v4011
      %v4168 = vpack.c.b16 %v4015, %v4012
      %v4169 = vpack.c.b16 %v4019, %v4016
      %v4170 = vpack.c.b16 %v4020, %v4017
      %v4171 = vpack.c.b16 %v4021, %v4018
      %v4172 = vpack.c.b16 %v4025, %v4022
      %v4173 = vpack.c.b16 %v4026, %v4023
      %v4174 = vpack.c.b16 %v4027, %v4024
      %v4175 = vpack.c.b16 %v4031, %v4028
      %v4176 = vpack.c.b16 %v4032, %v4029
      %v4177 = vpack.c.b16 %v4033, %v4030
      %v4178 = vpack.c.b16 %v4037, %v4034
      %v4179 = vpack.c.b16 %v4038, %v4035
      %v4180 = vpack.c.b16 %v4039, %v4036
      %v4181 = vpack.c.b16 %v4043, %v4040
      %v4182 = vpack.c.b16 %v4044, %v4041
      %v4183 = vpack.c.b16 %v4045, %v4042
      %v4184 = vpack.c.b16 %v4049, %v4046
      %v4185 = vpack.c.b16 %v4050, %v4047
      %v4186 = vpack.c.b16 %v4051, %v4048
      %v4187 = vpack.c.b16 %v4055, %v4052
      %v4188 = vpack.c.b16 %v4056, %v4053
      %v4189 = vpack.c.b16 %v4057, %v4054
      %v4190 = vpack.c.b16 %v4061, %v4058
      %v4191 = vpack.c.b16 %v4062, %v4059
      %v4192 = vpack.c.b16 %v4063, %v4060
      %v4193 = vpack.c.b16 %v4067, %v4064
      %v4194 = vpack.c.b16 %v4068, %v4065
      %v4195 = vpack.c.b16 %v4069, %v4066
      %v4196 = vpack.c.b16 %v4073, %v4070
      %v4197 = vpack.c.b16 %v4074, %v4071
      %v4198 = vpack.c.b16 %v4075, %v4072
      %v4199 = vpack.c.b16 %v4079, %v4076
      %v4200 = vpack.c.b16 %v4080, %v4077
      %v4201 = vpack.c.b16 %v4081, %v4078
      %v4418 = vunpack.c.l.b16 %v3586
      %v4419 = vunpack.c.h.b16 %v3586
      %v4420 = vunpack.c.l.b16 %v3587
      %v4421 = vunpack.c.l.b16 %v3588
      %v4422 = vunpack.c.h.b16 %v3588
      %v4423 = vunpack.c.l.b16 %v3589
      %v4424 = vunpack.c.l.b16 %v3590
      %v4425 = vunpack.c.h.b16 %v3590
      %v4426 = vunpack.c.l.b16 %v3591
      %v4427 = vunpack.c.l.b16 %v3592
      %v4428 = vunpack.c.h.b16 %v3592
      %v4429 = vunpack.c.l.b16 %v3593
      %v4430 = vunpack.c.l.b16 %v3594
      %v4431 = vunpack.c.h.b16 %v3594
      %v4432 = vunpack.c.l.b16 %v3595
      %v4433 = vunpack.c.l.b16 %v3596
      %v4434 = vunpack.c.h.b16 %v3596
      %v4435 = vunpack.c.l.b16 %v3597
      %v4436 = vunpack.c.l.b16 %v3598
      %v4437 = vunpack.c.h.b16 %v3598
      %v4438 = vunpack.c.l.b16 %v3599
      %v4439 = vunpack.c.l.b16 %v3600
      %v4440 = vunpack.c.h.b16 %v3600
      %v4441 = vunpack.c.l.b16 %v3601
      %v4442 = vunpack.c.l.b16 %v3602
      %v4443 = vunpack.c.h.b16 %v3602
      %v4444 = vunpack.c.l.b16 %v3603
      %v4445 = vunpack.c.l.b16 %v3604
      %v4446 = vunpack.c.h.b16 %v3604
      %v4447 = vunpack.c.l.b16 %v3605
      %v4448 = vunpack.c.l.b16 %v3606
      %v4449 = vunpack.c.h.b16 %v3606
      %v4450 = vunpack.c.l.b16 %v3607
      %v4451 = vunpack.c.l.b16 %v3608
      %v4452 = vunpack.c.h.b16 %v3608
      %v4453 = vunpack.c.l.b16 %v3609
      %v4454 = vunpack.c.l.b16 %v3610
      %v4455 = vunpack.c.h.b16 %v3610
      %v4456 = vunpack.c.l.b16 %v3611
      %v4457 = vunpack.c.l.b16 %v3612
      %v4458 = vunpack.c.h.b16 %v3612
      %v4459 = vunpack.c.l.b16 %v3613
      %v4460 = vunpack.c.l.b16 %v3614
      %v4461 = vunpack.c.h.b16 %v3614
      %v4462 = vunpack.c.l.b16 %v3615
      %v4463 = vunpack.c.l.b16 %v3616
      %v4464 = vunpack.c.h.b16 %v3616
      %v4465 = vunpack.c.l.b16 %v3617
      %v4466 = vunpack.c.l.b16 %v3618
      %v4467 = vunpack.c.h.b16 %v3618
      %v4468 = vunpack.c.l.b16 %v3619
      %v4469 = vunpack.c.l.b16 %v3620
      %v4470 = vunpack.c.h.b16 %v3620
      %v4471 = vunpack.c.l.b16 %v3621
      %v4472 = vunpack.c.l.b16 %v3622
      %v4473 = vunpack.c.h.b16 %v3622
      %v4474 = vunpack.c.l.b16 %v3623
      %v4475 = vunpack.c.l.b16 %v3624
      %v4476 = vunpack.c.h.b16 %v3624
      %v4477 = vunpack.c.l.b16 %v3625
      %v4478 = vunpack.c.l.b16 %v3626
      %v4479 = vunpack.c.h.b16 %v3626
      %v4480 = vunpack.c.l.b16 %v3627
      %v4481 = vunpack.c.l.b16 %v3628
      %v4482 = vunpack.c.h.b16 %v3628
      %v4483 = vunpack.c.l.b16 %v3629
      %v4484 = vunpack.c.l.b16 %v3630
      %v4485 = vunpack.c.h.b16 %v3630
      %v4486 = vunpack.c.l.b16 %v3631
      %v4487 = vunpack.c.l.b16 %v3632
      %v4488 = vunpack.c.h.b16 %v3632
      %v4489 = vunpack.c.l.b16 %v3633
      %v4490 = vunpack.c.l.b16 %v3634
      %v4491 = vunpack.c.h.b16 %v3634
      %v4492 = vunpack.c.l.b16 %v3635
      %v4493 = vunpack.c.l.b16 %v3636
      %v4494 = vunpack.c.h.b16 %v3636
      %v4495 = vunpack.c.l.b16 %v3637
      %v4496 = vunpack.c.l.b16 %v3638
      %v4497 = vunpack.c.h.b16 %v3638
      %v4498 = vunpack.c.l.b16 %v3639
      %v4499 = vunpack.c.l.b16 %v3640
      %v4500 = vunpack.c.h.b16 %v3640
      %v4501 = vunpack.c.l.b16 %v3641
      %v4502 = vunpack.c.l.b16 %v3642
      %v4503 = vunpack.c.h.b16 %v3642
      %v4504 = vunpack.c.l.b16 %v3643
      %v4505 = vunpack.c.l.b16 %v3644
      %v4506 = vunpack.c.h.b16 %v3644
      %v4507 = vunpack.c.l.b16 %v3645
      %v4508 = vunpack.c.l.b16 %v3646
      %v4509 = vunpack.c.h.b16 %v3646
      %v4510 = vunpack.c.l.b16 %v3647
      %v4511 = vunpack.c.l.b16 %v3648
      %v4512 = vunpack.c.h.b16 %v3648
      %v4513 = vunpack.c.l.b16 %v3649
      %v4514 = vunpack.c.l.b16 %v3650
      %v4515 = vunpack.c.h.b16 %v3650
      %v4516 = vunpack.c.l.b16 %v3651
      %v4517 = vunpack.c.l.b16 %v3652
      %v4518 = vunpack.c.h.b16 %v3652
      %v4519 = vunpack.c.l.b16 %v3653
      %v4520 = vunpack.c.l.b16 %v3654
      %v4521 = vunpack.c.h.b16 %v3654
      %v4522 = vunpack.c.l.b16 %v3655
      %v4523 = vunpack.c.l.b16 %v3656
      %v4524 = vunpack.c.h.b16 %v3656
      %v4525 = vunpack.c.l.b16 %v3657
      %v4526 = vunpack.c.l.b16 %v3658
      %v4527 = vunpack.c.h.b16 %v3658
      %v4528 = vunpack.c.l.b16 %v3659
      %v4529 = vunpack.c.l.b16 %v3660
      %v4530 = vunpack.c.h.b16 %v3660
      %v4531 = vunpack.c.l.b16 %v3661
      %v4532 = vunpack.c.l.b16 %v3662
      %v4533 = vunpack.c.h.b16 %v3662
      %v4534 = vunpack.c.l.b16 %v3663
      %v4535 = vunpack.c.l.b16 %v3664
      %v4536 = vunpack.c.h.b16 %v3664
      %v4537 = vunpack.c.l.b16 %v3665
      %v4538 = vunpack.c.l.b16 %v3666
      %v4539 = vunpack.c.h.b16 %v3666
      %v4540 = vunpack.c.l.b16 %v3667
      %v4541 = vunpack.c.l.b16 %v3668
      %v4542 = vunpack.c.h.b16 %v3668
      %v4543 = vunpack.c.l.b16 %v3669
      %v4544 = vunpack.c.l.b16 %v3670
      %v4545 = vunpack.c.h.b16 %v3670
      %v4546 = vunpack.c.l.b16 %v3671
      %v4547 = vunpack.c.l.b16 %v3672
      %v4548 = vunpack.c.h.b16 %v3672
      %v4549 = vunpack.c.l.b16 %v3673
      %v4550 = vunpack.c.l.b16 %v3674
      %v4551 = vunpack.c.h.b16 %v3674
      %v4552 = vunpack.c.l.b16 %v3675
      %v4553 = vunpack.c.l.b16 %v3676
      %v4554 = vunpack.c.h.b16 %v3676
      %v4555 = vunpack.c.l.b16 %v3677
      %v4556 = vunpack.c.l.b16 %v3678
      %v4557 = vunpack.c.h.b16 %v3678
      %v4558 = vunpack.c.l.b16 %v3679
      %v4559 = vunpack.c.l.b16 %v3680
      %v4560 = vunpack.c.h.b16 %v3680
      %v4561 = vunpack.c.l.b16 %v3681
      %v4562 = vpack.c.b16 %v4421, %v4418
      %v4563 = vpack.c.b16 %v4422, %v4419
      %v4564 = vpack.c.b16 %v4423, %v4420
      %v4565 = vpack.c.b16 %v4427, %v4424
      %v4566 = vpack.c.b16 %v4428, %v4425
      %v4567 = vpack.c.b16 %v4429, %v4426
      %v4568 = vpack.c.b16 %v4433, %v4430
      %v4569 = vpack.c.b16 %v4434, %v4431
      %v4570 = vpack.c.b16 %v4435, %v4432
      %v4571 = vpack.c.b16 %v4439, %v4436
      %v4572 = vpack.c.b16 %v4440, %v4437
      %v4573 = vpack.c.b16 %v4441, %v4438
      %v4574 = vpack.c.b16 %v4445, %v4442
      %v4575 = vpack.c.b16 %v4446, %v4443
      %v4576 = vpack.c.b16 %v4447, %v4444
      %v4577 = vpack.c.b16 %v4451, %v4448
      %v4578 = vpack.c.b16 %v4452, %v4449
      %v4579 = vpack.c.b16 %v4453, %v4450
      %v4580 = vpack.c.b16 %v4457, %v4454
      %v4581 = vpack.c.b16 %v4458, %v4455
      %v4582 = vpack.c.b16 %v4459, %v4456
      %v4583 = vpack.c.b16 %v4463, %v4460
      %v4584 = vpack.c.b16 %v4464, %v4461
      %v4585 = vpack.c.b16 %v4465, %v4462
      %v4586 = vpack.c.b16 %v4469, %v4466
      %v4587 = vpack.c.b16 %v4470, %v4467
      %v4588 = vpack.c.b16 %v4471, %v4468
      %v4589 = vpack.c.b16 %v4475, %v4472
      %v4590 = vpack.c.b16 %v4476, %v4473
      %v4591 = vpack.c.b16 %v4477, %v4474
      %v4592 = vpack.c.b16 %v4481, %v4478
      %v4593 = vpack.c.b16 %v4482, %v4479
      %v4594 = vpack.c.b16 %v4483, %v4480
      %v4595 = vpack.c.b16 %v4487, %v4484
      %v4596 = vpack.c.b16 %v4488, %v4485
      %v4597 = vpack.c.b16 %v4489, %v4486
      %v4598 = vpack.c.b16 %v4493, %v4490
      %v4599 = vpack.c.b16 %v4494, %v4491
      %v4600 = vpack.c.b16 %v4495, %v4492
      %v4601 = vpack.c.b16 %v4499, %v4496
      %v4602 = vpack.c.b16 %v4500, %v4497
      %v4603 = vpack.c.b16 %v4501, %v4498
      %v4604 = vpack.c.b16 %v4505, %v4502
      %v4605 = vpack.c.b16 %v4506, %v4503
      %v4606 = vpack.c.b16 %v4507, %v4504
      %v4607 = vpack.c.b16 %v4511, %v4508
      %v4608 = vpack.c.b16 %v4512, %v4509
      %v4609 = vpack.c.b16 %v4513, %v4510
      %v4610 = vpack.c.b16 %v4517, %v4514
      %v4611 = vpack.c.b16 %v4518, %v4515
      %v4612 = vpack.c.b16 %v4519, %v4516
      %v4613 = vpack.c.b16 %v4523, %v4520
      %v4614 = vpack.c.b16 %v4524, %v4521
      %v4615 = vpack.c.b16 %v4525, %v4522
      %v4616 = vpack.c.b16 %v4529, %v4526
      %v4617 = vpack.c.b16 %v4530, %v4527
      %v4618 = vpack.c.b16 %v4531, %v4528
      %v4619 = vpack.c.b16 %v4535, %v4532
      %v4620 = vpack.c.b16 %v4536, %v4533
      %v4621 = vpack.c.b16 %v4537, %v4534
      %v4622 = vpack.c.b16 %v4541, %v4538
      %v4623 = vpack.c.b16 %v4542, %v4539
      %v4624 = vpack.c.b16 %v4543, %v4540
      %v4625 = vpack.c.b16 %v4547, %v4544
      %v4626 = vpack.c.b16 %v4548, %v4545
      %v4627 = vpack.c.b16 %v4549, %v4546
      %v4628 = vpack.c.b16 %v4553, %v4550
      %v4629 = vpack.c.b16 %v4554, %v4551
      %v4630 = vpack.c.b16 %v4555, %v4552
      %v4631 = vpack.c.b16 %v4559, %v4556
      %v4632 = vpack.c.b16 %v4560, %v4557
      %v4633 = vpack.c.b16 %v4561, %v4558
      %4706 = vmatpush.bf16.msra.mxu0 %v4583
      %4707 = vmatpush.bf16.msra.mxu0 %v4580
      %4708 = vmatpush.bf16.msra.mxu0 %v4577
      %4709 = vmatpush.bf16.msra.mxu0 %v4574
      %4710 = vmatpush.bf16.msra.mxu0 %v4571
      %4711 = vmatpush.bf16.msra.mxu0 %v4568
      %4712 = vmatpush.bf16.msra.mxu0 %v4565
      %4713 = vmatpush.bf16.msra.mxu0 %v4562
      %4714 = vmatmul.bf16.gmra.mxu0 %v4082
      %v4715 = vpop.f32.mrf.mxu0
      %v4716 = vadd.f32 0.0, %v4715
      %v4717 = vpop.f32.mrf.mxu0
      %v4718 = vadd.f32 0.0, %v4717
      %4719 = vmatmul.bf16.gmra.mxu0 %v4085
      %v4720 = vpop.f32.mrf.mxu0
      %v4721 = vadd.f32 0.0, %v4720
      %v4722 = vpop.f32.mrf.mxu0
      %v4723 = vadd.f32 0.0, %v4722
      %4724 = vmatmul.bf16.gmra.mxu0 %v4088
      %v4725 = vpop.f32.mrf.mxu0
      %v4726 = vadd.f32 0.0, %v4725
      %v4727 = vpop.f32.mrf.mxu0
      %v4728 = vadd.f32 0.0, %v4727
      %4729 = vmatmul.bf16.gmra.mxu0 %v4091
      %v4730 = vpop.f32.mrf.mxu0
      %v4731 = vadd.f32 0.0, %v4730
      %v4732 = vpop.f32.mrf.mxu0
      %v4733 = vadd.f32 0.0, %v4732
      %4734 = vmatmul.bf16.gmra.mxu0 %v4094
      %v4735 = vpop.f32.mrf.mxu0
      %v4736 = vpop.f32.mrf.mxu0
      %4737 = vmatmul.bf16.gmra.mxu0 %v4097
      %v4738 = vpop.f32.mrf.mxu0
      %v4739 = vadd.f32 0.0, %v4738
      %v4740 = vpop.f32.mrf.mxu0
      %v4741 = vadd.f32 0.0, %v4740
      %4742 = vmatmul.bf16.gmra.mxu0 %v4100
      %v4743 = vpop.f32.mrf.mxu0
      %v4744 = vadd.f32 0.0, %v4743
      %v4745 = vpop.f32.mrf.mxu0
      %v4746 = vadd.f32 0.0, %v4745
      %4747 = vmatmul.bf16.gmra.mxu0 %v4103
      %v4748 = vpop.f32.mrf.mxu0
      %v4749 = vadd.f32 0.0, %v4748
      %v4750 = vpop.f32.mrf.mxu0
      %v4751 = vadd.f32 0.0, %v4750
      %4752 = vmatmul.bf16.gmra.mxu0 %v4106
      %v4753 = vpop.f32.mrf.mxu0
      %v4754 = vadd.f32 0.0, %v4753
      %v4755 = vpop.f32.mrf.mxu0
      %v4756 = vadd.f32 0.0, %v4755
      %4757 = vmatmul.bf16.gmra.mxu0 %v4109
      %v4758 = vpop.f32.mrf.mxu0
      %v4759 = vpop.f32.mrf.mxu0
      %4760 = vmatmul.bf16.gmra.mxu0 %v4112
      %v4761 = vpop.f32.mrf.mxu0
      %v4762 = vadd.f32 0.0, %v4761
      %v4763 = vpop.f32.mrf.mxu0
      %v4764 = vadd.f32 0.0, %v4763
      %4765 = vmatmul.bf16.gmra.mxu0 %v4115
      %v4766 = vpop.f32.mrf.mxu0
      %v4767 = vadd.f32 0.0, %v4766
      %v4768 = vpop.f32.mrf.mxu0
      %v4769 = vadd.f32 0.0, %v4768
      %4770 = vmatmul.bf16.gmra.mxu0 %v4118
      %v4771 = vpop.f32.mrf.mxu0
      %v4772 = vadd.f32 0.0, %v4771
      %v4773 = vpop.f32.mrf.mxu0
      %v4774 = vadd.f32 0.0, %v4773
      %4775 = vmatmul.bf16.gmra.mxu0 %v4121
      %v4776 = vpop.f32.mrf.mxu0
      %v4777 = vadd.f32 0.0, %v4776
      %v4778 = vpop.f32.mrf.mxu0
      %v4779 = vadd.f32 0.0, %v4778
      %4780 = vmatmul.bf16.gmra.mxu0 %v4124
      %v4781 = vpop.f32.mrf.mxu0
      %v4782 = vpop.f32.mrf.mxu0
      %4783 = vmatmul.bf16.gmra.mxu0 %v4127
      %v4784 = vpop.f32.mrf.mxu0
      %v4785 = vadd.f32 0.0, %v4784
      %v4786 = vpop.f32.mrf.mxu0
      %v4787 = vadd.f32 0.0, %v4786
      %4788 = vmatmul.bf16.gmra.mxu0 %v4130
      %v4789 = vpop.f32.mrf.mxu0
      %v4790 = vadd.f32 0.0, %v4789
      %v4791 = vpop.f32.mrf.mxu0
      %v4792 = vadd.f32 0.0, %v4791
      %4793 = vmatmul.bf16.gmra.mxu0 %v4133
      %v4794 = vpop.f32.mrf.mxu0
      %v4795 = vadd.f32 0.0, %v4794
      %v4796 = vpop.f32.mrf.mxu0
      %v4797 = vadd.f32 0.0, %v4796
      %4798 = vmatmul.bf16.gmra.mxu0 %v4136
      %v4799 = vpop.f32.mrf.mxu0
      %v4800 = vadd.f32 0.0, %v4799
      %v4801 = vpop.f32.mrf.mxu0
      %v4802 = vadd.f32 0.0, %v4801
      %4803 = vmatmul.bf16.gmra.mxu0 %v4139
      %v4804 = vpop.f32.mrf.mxu0
      %v4805 = vpop.f32.mrf.mxu0
      %4806 = vmatmul.bf16.gmra.mxu0 %v4142
      %v4807 = vpop.f32.mrf.mxu0
      %v4808 = vadd.f32 0.0, %v4807
      %v4809 = vpop.f32.mrf.mxu0
      %v4810 = vadd.f32 0.0, %v4809
      %4811 = vmatmul.bf16.gmra.mxu0 %v4145
      %v4812 = vpop.f32.mrf.mxu0
      %v4813 = vadd.f32 0.0, %v4812
      %v4814 = vpop.f32.mrf.mxu0
      %v4815 = vadd.f32 0.0, %v4814
      %4816 = vmatmul.bf16.gmra.mxu0 %v4148
      %v4817 = vpop.f32.mrf.mxu0
      %v4818 = vadd.f32 0.0, %v4817
      %v4819 = vpop.f32.mrf.mxu0
      %v4820 = vadd.f32 0.0, %v4819
      %4821 = vmatmul.bf16.gmra.mxu0 %v4151
      %v4822 = vpop.f32.mrf.mxu0
      %v4823 = vadd.f32 0.0, %v4822
      %v4824 = vpop.f32.mrf.mxu0
      %v4825 = vadd.f32 0.0, %v4824
      %4826 = vmatmul.bf16.gmra.mxu0 %v4154
      %v4827 = vpop.f32.mrf.mxu0
      %v4828 = vpop.f32.mrf.mxu0
      %4829 = vmatmul.bf16.gmra.mxu0 %v4157
      %v4830 = vpop.f32.mrf.mxu0
      %v4831 = vadd.f32 0.0, %v4830
      %v4832 = vpop.f32.mrf.mxu0
      %v4833 = vadd.f32 0.0, %v4832
      %4834 = vmatmul.bf16.gmra.mxu0 %v4160
      %v4835 = vpop.f32.mrf.mxu0
      %v4836 = vadd.f32 0.0, %v4835
      %v4837 = vpop.f32.mrf.mxu0
      %v4838 = vadd.f32 0.0, %v4837
      %4839 = vmatmul.bf16.gmra.mxu0 %v4163
      %v4840 = vpop.f32.mrf.mxu0
      %v4841 = vadd.f32 0.0, %v4840
      %v4842 = vpop.f32.mrf.mxu0
      %v4843 = vadd.f32 0.0, %v4842
      %4844 = vmatmul.bf16.gmra.mxu0 %v4166
      %v4845 = vpop.f32.mrf.mxu0
      %v4846 = vadd.f32 0.0, %v4845
      %v4847 = vpop.f32.mrf.mxu0
      %v4848 = vadd.f32 0.0, %v4847
      %4849 = vmatmul.bf16.gmra.mxu0 %v4169
      %v4850 = vpop.f32.mrf.mxu0
      %v4851 = vpop.f32.mrf.mxu0
      %4852 = vmatmul.bf16.gmra.mxu0 %v4172
      %v4853 = vpop.f32.mrf.mxu0
      %v4854 = vadd.f32 0.0, %v4853
      %v4855 = vpop.f32.mrf.mxu0
      %v4856 = vadd.f32 0.0, %v4855
      %4857 = vmatmul.bf16.gmra.mxu0 %v4175
      %v4858 = vpop.f32.mrf.mxu0
      %v4859 = vadd.f32 0.0, %v4858
      %v4860 = vpop.f32.mrf.mxu0
      %v4861 = vadd.f32 0.0, %v4860
      %4862 = vmatmul.bf16.gmra.mxu0 %v4178
      %v4863 = vpop.f32.mrf.mxu0
      %v4864 = vadd.f32 0.0, %v4863
      %v4865 = vpop.f32.mrf.mxu0
      %v4866 = vadd.f32 0.0, %v4865
      %4867 = vmatmul.bf16.gmra.mxu0 %v4181
      %v4868 = vpop.f32.mrf.mxu0
      %v4869 = vadd.f32 0.0, %v4868
      %v4870 = vpop.f32.mrf.mxu0
      %v4871 = vadd.f32 0.0, %v4870
      %4872 = vmatmul.bf16.gmra.mxu0 %v4184
      %v4873 = vpop.f32.mrf.mxu0
      %v4874 = vpop.f32.mrf.mxu0
      %4875 = vmatmul.bf16.gmra.mxu0 %v4187
      %v4876 = vpop.f32.mrf.mxu0
      %v4877 = vadd.f32 0.0, %v4876
      %v4878 = vpop.f32.mrf.mxu0
      %v4879 = vadd.f32 0.0, %v4878
      %4880 = vmatmul.bf16.gmra.mxu0 %v4190
      %v4881 = vpop.f32.mrf.mxu0
      %v4882 = vadd.f32 0.0, %v4881
      %v4883 = vpop.f32.mrf.mxu0
      %v4884 = vadd.f32 0.0, %v4883
      %4885 = vmatmul.bf16.gmra.mxu0 %v4193
      %v4886 = vpop.f32.mrf.mxu0
      %v4887 = vadd.f32 0.0, %v4886
      %v4888 = vpop.f32.mrf.mxu0
      %v4889 = vadd.f32 0.0, %v4888
      %4890 = vmatmul.bf16.gmra.mxu0 %v4196
      %v4891 = vpop.f32.mrf.mxu0
      %v4892 = vadd.f32 0.0, %v4891
      %v4893 = vpop.f32.mrf.mxu0
      %v4894 = vadd.f32 0.0, %v4893
      %4895 = vmatmul.bf16.gmra.mxu0 %v4199
      %v4896 = vpop.f32.mrf.mxu0
      %v4897 = vpop.f32.mrf.mxu0
      %4898 = vdwg.mxu0
      %4899 = vmatpush.bf16.msra.mxu0 %v4607
      %4900 = vmatpush.bf16.msra.mxu0 %v4604
      %4901 = vmatpush.bf16.msra.mxu0 %v4601
      %4902 = vmatpush.bf16.msra.mxu0 %v4598
      %4903 = vmatpush.bf16.msra.mxu0 %v4595
      %4904 = vmatpush.bf16.msra.mxu0 %v4592
      %4905 = vmatpush.bf16.msra.mxu0 %v4589
      %4906 = vmatpush.bf16.msra.mxu0 %v4586
      %4907 = vmatmul.bf16.gmra.mxu0 %v4083
      %v4908 = vpop.f32.mrf.mxu0
      %v4909 = vadd.f32 %v4716, %v4908
      %v4910 = vpop.f32.mrf.mxu0
      %v4911 = vadd.f32 %v4718, %v4910
      %4912 = vmatmul.bf16.gmra.mxu0 %v4086
      %v4913 = vpop.f32.mrf.mxu0
      %v4914 = vadd.f32 %v4721, %v4913
      %v4915 = vpop.f32.mrf.mxu0
      %v4916 = vadd.f32 %v4723, %v4915
      %4917 = vmatmul.bf16.gmra.mxu0 %v4089
      %v4918 = vpop.f32.mrf.mxu0
      %v4919 = vadd.f32 %v4726, %v4918
      %v4920 = vpop.f32.mrf.mxu0
      %v4921 = vadd.f32 %v4728, %v4920
      %4922 = vmatmul.bf16.gmra.mxu0 %v4092
      %v4923 = vpop.f32.mrf.mxu0
      %v4924 = vadd.f32 %v4731, %v4923
      %v4925 = vpop.f32.mrf.mxu0
      %v4926 = vadd.f32 %v4733, %v4925
      %4927 = vmatmul.bf16.gmra.mxu0 %v4095
      %v4928 = vpop.f32.mrf.mxu0
      %v4929 = vpop.f32.mrf.mxu0
      %4930 = vmatmul.bf16.gmra.mxu0 %v4098
      %v4931 = vpop.f32.mrf.mxu0
      %v4932 = vadd.f32 %v4739, %v4931
      %v4933 = vpop.f32.mrf.mxu0
      %v4934 = vadd.f32 %v4741, %v4933
      %4935 = vmatmul.bf16.gmra.mxu0 %v4101
      %v4936 = vpop.f32.mrf.mxu0
      %v4937 = vadd.f32 %v4744, %v4936
      %v4938 = vpop.f32.mrf.mxu0
      %v4939 = vadd.f32 %v4746, %v4938
      %4940 = vmatmul.bf16.gmra.mxu0 %v4104
      %v4941 = vpop.f32.mrf.mxu0
      %v4942 = vadd.f32 %v4749, %v4941
      %v4943 = vpop.f32.mrf.mxu0
      %v4944 = vadd.f32 %v4751, %v4943
      %4945 = vmatmul.bf16.gmra.mxu0 %v4107
      %v4946 = vpop.f32.mrf.mxu0
      %v4947 = vadd.f32 %v4754, %v4946
      %v4948 = vpop.f32.mrf.mxu0
      %v4949 = vadd.f32 %v4756, %v4948
      %4950 = vmatmul.bf16.gmra.mxu0 %v4110
      %v4951 = vpop.f32.mrf.mxu0
      %v4952 = vpop.f32.mrf.mxu0
      %4953 = vmatmul.bf16.gmra.mxu0 %v4113
      %v4954 = vpop.f32.mrf.mxu0
      %v4955 = vadd.f32 %v4762, %v4954
      %v4956 = vpop.f32.mrf.mxu0
      %v4957 = vadd.f32 %v4764, %v4956
      %4958 = vmatmul.bf16.gmra.mxu0 %v4116
      %v4959 = vpop.f32.mrf.mxu0
      %v4960 = vadd.f32 %v4767, %v4959
      %v4961 = vpop.f32.mrf.mxu0
      %v4962 = vadd.f32 %v4769, %v4961
      %4963 = vmatmul.bf16.gmra.mxu0 %v4119
      %v4964 = vpop.f32.mrf.mxu0
      %v4965 = vadd.f32 %v4772, %v4964
      %v4966 = vpop.f32.mrf.mxu0
      %v4967 = vadd.f32 %v4774, %v4966
      %4968 = vmatmul.bf16.gmra.mxu0 %v4122
      %v4969 = vpop.f32.mrf.mxu0
      %v4970 = vadd.f32 %v4777, %v4969
      %v4971 = vpop.f32.mrf.mxu0
      %v4972 = vadd.f32 %v4779, %v4971
      %4973 = vmatmul.bf16.gmra.mxu0 %v4125
      %v4974 = vpop.f32.mrf.mxu0
      %v4975 = vpop.f32.mrf.mxu0
      %4976 = vmatmul.bf16.gmra.mxu0 %v4128
      %v4977 = vpop.f32.mrf.mxu0
      %v4978 = vadd.f32 %v4785, %v4977
      %v4979 = vpop.f32.mrf.mxu0
      %v4980 = vadd.f32 %v4787, %v4979
      %4981 = vmatmul.bf16.gmra.mxu0 %v4131
      %v4982 = vpop.f32.mrf.mxu0
      %v4983 = vadd.f32 %v4790, %v4982
      %v4984 = vpop.f32.mrf.mxu0
      %v4985 = vadd.f32 %v4792, %v4984
      %4986 = vmatmul.bf16.gmra.mxu0 %v4134
      %v4987 = vpop.f32.mrf.mxu0
      %v4988 = vadd.f32 %v4795, %v4987
      %v4989 = vpop.f32.mrf.mxu0
      %v4990 = vadd.f32 %v4797, %v4989
      %4991 = vmatmul.bf16.gmra.mxu0 %v4137
      %v4992 = vpop.f32.mrf.mxu0
      %v4993 = vadd.f32 %v4800, %v4992
      %v4994 = vpop.f32.mrf.mxu0
      %v4995 = vadd.f32 %v4802, %v4994
      %4996 = vmatmul.bf16.gmra.mxu0 %v4140
      %v4997 = vpop.f32.mrf.mxu0
      %v4998 = vpop.f32.mrf.mxu0
      %4999 = vmatmul.bf16.gmra.mxu0 %v4143
      %v5000 = vpop.f32.mrf.mxu0
      %v5001 = vadd.f32 %v4808, %v5000
      %v5002 = vpop.f32.mrf.mxu0
      %v5003 = vadd.f32 %v4810, %v5002
      %5004 = vmatmul.bf16.gmra.mxu0 %v4146
      %v5005 = vpop.f32.mrf.mxu0
      %v5006 = vadd.f32 %v4813, %v5005
      %v5007 = vpop.f32.mrf.mxu0
      %v5008 = vadd.f32 %v4815, %v5007
      %5009 = vmatmul.bf16.gmra.mxu0 %v4149
      %v5010 = vpop.f32.mrf.mxu0
      %v5011 = vadd.f32 %v4818, %v5010
      %v5012 = vpop.f32.mrf.mxu0
      %v5013 = vadd.f32 %v4820, %v5012
      %5014 = vmatmul.bf16.gmra.mxu0 %v4152
      %v5015 = vpop.f32.mrf.mxu0
      %v5016 = vadd.f32 %v4823, %v5015
      %v5017 = vpop.f32.mrf.mxu0
      %v5018 = vadd.f32 %v4825, %v5017
      %5019 = vmatmul.bf16.gmra.mxu0 %v4155
      %v5020 = vpop.f32.mrf.mxu0
      %v5021 = vpop.f32.mrf.mxu0
      %5022 = vmatmul.bf16.gmra.mxu0 %v4158
      %v5023 = vpop.f32.mrf.mxu0
      %v5024 = vadd.f32 %v4831, %v5023
      %v5025 = vpop.f32.mrf.mxu0
      %v5026 = vadd.f32 %v4833, %v5025
      %5027 = vmatmul.bf16.gmra.mxu0 %v4161
      %v5028 = vpop.f32.mrf.mxu0
      %v5029 = vadd.f32 %v4836, %v5028
      %v5030 = vpop.f32.mrf.mxu0
      %v5031 = vadd.f32 %v4838, %v5030
      %5032 = vmatmul.bf16.gmra.mxu0 %v4164
      %v5033 = vpop.f32.mrf.mxu0
      %v5034 = vadd.f32 %v4841, %v5033
      %v5035 = vpop.f32.mrf.mxu0
      %v5036 = vadd.f32 %v4843, %v5035
      %5037 = vmatmul.bf16.gmra.mxu0 %v4167
      %v5038 = vpop.f32.mrf.mxu0
      %v5039 = vadd.f32 %v4846, %v5038
      %v5040 = vpop.f32.mrf.mxu0
      %v5041 = vadd.f32 %v4848, %v5040
      %5042 = vmatmul.bf16.gmra.mxu0 %v4170
      %v5043 = vpop.f32.mrf.mxu0
      %v5044 = vpop.f32.mrf.mxu0
      %5045 = vmatmul.bf16.gmra.mxu0 %v4173
      %v5046 = vpop.f32.mrf.mxu0
      %v5047 = vadd.f32 %v4854, %v5046
      %v5048 = vpop.f32.mrf.mxu0
      %v5049 = vadd.f32 %v4856, %v5048
      %5050 = vmatmul.bf16.gmra.mxu0 %v4176
      %v5051 = vpop.f32.mrf.mxu0
      %v5052 = vadd.f32 %v4859, %v5051
      %v5053 = vpop.f32.mrf.mxu0
      %v5054 = vadd.f32 %v4861, %v5053
      %5055 = vmatmul.bf16.gmra.mxu0 %v4179
      %v5056 = vpop.f32.mrf.mxu0
      %v5057 = vadd.f32 %v4864, %v5056
      %v5058 = vpop.f32.mrf.mxu0
      %v5059 = vadd.f32 %v4866, %v5058
      %5060 = vmatmul.bf16.gmra.mxu0 %v4182
      %v5061 = vpop.f32.mrf.mxu0
      %v5062 = vadd.f32 %v4869, %v5061
      %v5063 = vpop.f32.mrf.mxu0
      %v5064 = vadd.f32 %v4871, %v5063
      %5065 = vmatmul.bf16.gmra.mxu0 %v4185
      %v5066 = vpop.f32.mrf.mxu0
      %v5067 = vpop.f32.mrf.mxu0
      %5068 = vmatmul.bf16.gmra.mxu0 %v4188
      %v5069 = vpop.f32.mrf.mxu0
      %v5070 = vadd.f32 %v4877, %v5069
      %v5071 = vpop.f32.mrf.mxu0
      %v5072 = vadd.f32 %v4879, %v5071
      %5073 = vmatmul.bf16.gmra.mxu0 %v4191
      %v5074 = vpop.f32.mrf.mxu0
      %v5075 = vadd.f32 %v4882, %v5074
      %v5076 = vpop.f32.mrf.mxu0
      %v5077 = vadd.f32 %v4884, %v5076
      %5078 = vmatmul.bf16.gmra.mxu0 %v4194
      %v5079 = vpop.f32.mrf.mxu0
      %v5080 = vadd.f32 %v4887, %v5079
      %v5081 = vpop.f32.mrf.mxu0
      %v5082 = vadd.f32 %v4889, %v5081
      %5083 = vmatmul.bf16.gmra.mxu0 %v4197
      %v5084 = vpop.f32.mrf.mxu0
      %v5085 = vadd.f32 %v4892, %v5084
      %v5086 = vpop.f32.mrf.mxu0
      %v5087 = vadd.f32 %v4894, %v5086
      %5088 = vmatmul.bf16.gmra.mxu0 %v4200
      %v5089 = vpop.f32.mrf.mxu0
      %v5090 = vpop.f32.mrf.mxu0
      %5091 = vdwg.mxu0
      %5092 = vmatpush.bf16.msra.mxu0 %v4631
      %5093 = vmatpush.bf16.msra.mxu0 %v4628
      %5094 = vmatpush.bf16.msra.mxu0 %v4625
      %5095 = vmatpush.bf16.msra.mxu0 %v4622
      %5096 = vmatpush.bf16.msra.mxu0 %v4619
      %5097 = vmatpush.bf16.msra.mxu0 %v4616
      %5098 = vmatpush.bf16.msra.mxu0 %v4613
      %5099 = vmatpush.bf16.msra.mxu0 %v4610
      %5100 = vmatmul.bf16.gmra.mxu0 %v4084
      %v5101 = vpop.f32.mrf.mxu0
      %v5102 = vadd.f32 %v4909, %v5101
      %v5103 = vpop.f32.mrf.mxu0
      %v5104 = vadd.f32 %v4911, %v5103
      %5105 = vmatmul.bf16.gmra.mxu0 %v4087
      %v5106 = vpop.f32.mrf.mxu0
      %v5107 = vadd.f32 %v4914, %v5106
      %v5108 = vpop.f32.mrf.mxu0
      %v5109 = vadd.f32 %v4916, %v5108
      %5110 = vmatmul.bf16.gmra.mxu0 %v4090
      %v5111 = vpop.f32.mrf.mxu0
      %v5112 = vadd.f32 %v4919, %v5111
      %v5113 = vpop.f32.mrf.mxu0
      %v5114 = vadd.f32 %v4921, %v5113
      %5115 = vmatmul.bf16.gmra.mxu0 %v4093
      %v5116 = vpop.f32.mrf.mxu0
      %v5117 = vadd.f32 %v4924, %v5116
      %v5118 = vpop.f32.mrf.mxu0
      %v5119 = vadd.f32 %v4926, %v5118
      %5120 = vmatmul.bf16.gmra.mxu0 %v4096
      %v5121 = vpop.f32.mrf.mxu0
      %v5122 = vpop.f32.mrf.mxu0
      %5123 = vmatmul.bf16.gmra.mxu0 %v4099
      %v5124 = vpop.f32.mrf.mxu0
      %v5125 = vadd.f32 %v4932, %v5124
      %v5126 = vpop.f32.mrf.mxu0
      %v5127 = vadd.f32 %v4934, %v5126
      %5128 = vmatmul.bf16.gmra.mxu0 %v4102
      %v5129 = vpop.f32.mrf.mxu0
      %v5130 = vadd.f32 %v4937, %v5129
      %v5131 = vpop.f32.mrf.mxu0
      %v5132 = vadd.f32 %v4939, %v5131
      %5133 = vmatmul.bf16.gmra.mxu0 %v4105
      %v5134 = vpop.f32.mrf.mxu0
      %v5135 = vadd.f32 %v4942, %v5134
      %v5136 = vpop.f32.mrf.mxu0
      %v5137 = vadd.f32 %v4944, %v5136
      %5138 = vmatmul.bf16.gmra.mxu0 %v4108
      %v5139 = vpop.f32.mrf.mxu0
      %v5140 = vadd.f32 %v4947, %v5139
      %v5141 = vpop.f32.mrf.mxu0
      %v5142 = vadd.f32 %v4949, %v5141
      %5143 = vmatmul.bf16.gmra.mxu0 %v4111
      %v5144 = vpop.f32.mrf.mxu0
      %v5145 = vpop.f32.mrf.mxu0
      %5146 = vmatmul.bf16.gmra.mxu0 %v4114
      %v5147 = vpop.f32.mrf.mxu0
      %v5148 = vadd.f32 %v4955, %v5147
      %v5149 = vpop.f32.mrf.mxu0
      %v5150 = vadd.f32 %v4957, %v5149
      %5151 = vmatmul.bf16.gmra.mxu0 %v4117
      %v5152 = vpop.f32.mrf.mxu0
      %v5153 = vadd.f32 %v4960, %v5152
      %v5154 = vpop.f32.mrf.mxu0
      %v5155 = vadd.f32 %v4962, %v5154
      %5156 = vmatmul.bf16.gmra.mxu0 %v4120
      %v5157 = vpop.f32.mrf.mxu0
      %v5158 = vadd.f32 %v4965, %v5157
      %v5159 = vpop.f32.mrf.mxu0
      %v5160 = vadd.f32 %v4967, %v5159
      %5161 = vmatmul.bf16.gmra.mxu0 %v4123
      %v5162 = vpop.f32.mrf.mxu0
      %v5163 = vadd.f32 %v4970, %v5162
      %v5164 = vpop.f32.mrf.mxu0
      %v5165 = vadd.f32 %v4972, %v5164
      %5166 = vmatmul.bf16.gmra.mxu0 %v4126
      %v5167 = vpop.f32.mrf.mxu0
      %v5168 = vpop.f32.mrf.mxu0
      %5169 = vmatmul.bf16.gmra.mxu0 %v4129
      %v5170 = vpop.f32.mrf.mxu0
      %v5171 = vadd.f32 %v4978, %v5170
      %v5172 = vpop.f32.mrf.mxu0
      %v5173 = vadd.f32 %v4980, %v5172
      %5174 = vmatmul.bf16.gmra.mxu0 %v4132
      %v5175 = vpop.f32.mrf.mxu0
      %v5176 = vadd.f32 %v4983, %v5175
      %v5177 = vpop.f32.mrf.mxu0
      %v5178 = vadd.f32 %v4985, %v5177
      %5179 = vmatmul.bf16.gmra.mxu0 %v4135
      %v5180 = vpop.f32.mrf.mxu0
      %v5181 = vadd.f32 %v4988, %v5180
      %v5182 = vpop.f32.mrf.mxu0
      %v5183 = vadd.f32 %v4990, %v5182
      %5184 = vmatmul.bf16.gmra.mxu0 %v4138
      %v5185 = vpop.f32.mrf.mxu0
      %v5186 = vadd.f32 %v4993, %v5185
      %v5187 = vpop.f32.mrf.mxu0
      %v5188 = vadd.f32 %v4995, %v5187
      %5189 = vmatmul.bf16.gmra.mxu0 %v4141
      %v5190 = vpop.f32.mrf.mxu0
      %v5191 = vpop.f32.mrf.mxu0
      %5192 = vmatmul.bf16.gmra.mxu0 %v4144
      %v5193 = vpop.f32.mrf.mxu0
      %v5194 = vadd.f32 %v5001, %v5193
      %v5195 = vpop.f32.mrf.mxu0
      %v5196 = vadd.f32 %v5003, %v5195
      %5197 = vmatmul.bf16.gmra.mxu0 %v4147
      %v5198 = vpop.f32.mrf.mxu0
      %v5199 = vadd.f32 %v5006, %v5198
      %v5200 = vpop.f32.mrf.mxu0
      %v5201 = vadd.f32 %v5008, %v5200
      %5202 = vmatmul.bf16.gmra.mxu0 %v4150
      %v5203 = vpop.f32.mrf.mxu0
      %v5204 = vadd.f32 %v5011, %v5203
      %v5205 = vpop.f32.mrf.mxu0
      %v5206 = vadd.f32 %v5013, %v5205
      %5207 = vmatmul.bf16.gmra.mxu0 %v4153
      %v5208 = vpop.f32.mrf.mxu0
      %v5209 = vadd.f32 %v5016, %v5208
      %v5210 = vpop.f32.mrf.mxu0
      %v5211 = vadd.f32 %v5018, %v5210
      %5212 = vmatmul.bf16.gmra.mxu0 %v4156
      %v5213 = vpop.f32.mrf.mxu0
      %v5214 = vpop.f32.mrf.mxu0
      %5215 = vmatmul.bf16.gmra.mxu0 %v4159
      %v5216 = vpop.f32.mrf.mxu0
      %v5217 = vadd.f32 %v5024, %v5216
      %v5218 = vpop.f32.mrf.mxu0
      %v5219 = vadd.f32 %v5026, %v5218
      %5220 = vmatmul.bf16.gmra.mxu0 %v4162
      %v5221 = vpop.f32.mrf.mxu0
      %v5222 = vadd.f32 %v5029, %v5221
      %v5223 = vpop.f32.mrf.mxu0
      %v5224 = vadd.f32 %v5031, %v5223
      %5225 = vmatmul.bf16.gmra.mxu0 %v4165
      %v5226 = vpop.f32.mrf.mxu0
      %v5227 = vadd.f32 %v5034, %v5226
      %v5228 = vpop.f32.mrf.mxu0
      %v5229 = vadd.f32 %v5036, %v5228
      %5230 = vmatmul.bf16.gmra.mxu0 %v4168
      %v5231 = vpop.f32.mrf.mxu0
      %v5232 = vadd.f32 %v5039, %v5231
      %v5233 = vpop.f32.mrf.mxu0
      %v5234 = vadd.f32 %v5041, %v5233
      %5235 = vmatmul.bf16.gmra.mxu0 %v4171
      %v5236 = vpop.f32.mrf.mxu0
      %v5237 = vpop.f32.mrf.mxu0
      %5238 = vmatmul.bf16.gmra.mxu0 %v4174
      %v5239 = vpop.f32.mrf.mxu0
      %v5240 = vadd.f32 %v5047, %v5239
      %v5241 = vpop.f32.mrf.mxu0
      %v5242 = vadd.f32 %v5049, %v5241
      %5243 = vmatmul.bf16.gmra.mxu0 %v4177
      %v5244 = vpop.f32.mrf.mxu0
      %v5245 = vadd.f32 %v5052, %v5244
      %v5246 = vpop.f32.mrf.mxu0
      %v5247 = vadd.f32 %v5054, %v5246
      %5248 = vmatmul.bf16.gmra.mxu0 %v4180
      %v5249 = vpop.f32.mrf.mxu0
      %v5250 = vadd.f32 %v5057, %v5249
      %v5251 = vpop.f32.mrf.mxu0
      %v5252 = vadd.f32 %v5059, %v5251
      %5253 = vmatmul.bf16.gmra.mxu0 %v4183
      %v5254 = vpop.f32.mrf.mxu0
      %v5255 = vadd.f32 %v5062, %v5254
      %v5256 = vpop.f32.mrf.mxu0
      %v5257 = vadd.f32 %v5064, %v5256
      %5258 = vmatmul.bf16.gmra.mxu0 %v4186
      %v5259 = vpop.f32.mrf.mxu0
      %v5260 = vpop.f32.mrf.mxu0
      %5261 = vmatmul.bf16.gmra.mxu0 %v4189
      %v5262 = vpop.f32.mrf.mxu0
      %v5263 = vadd.f32 %v5070, %v5262
      %v5264 = vpop.f32.mrf.mxu0
      %v5265 = vadd.f32 %v5072, %v5264
      %5266 = vmatmul.bf16.gmra.mxu0 %v4192
      %v5267 = vpop.f32.mrf.mxu0
      %v5268 = vadd.f32 %v5075, %v5267
      %v5269 = vpop.f32.mrf.mxu0
      %v5270 = vadd.f32 %v5077, %v5269
      %5271 = vmatmul.bf16.gmra.mxu0 %v4195
      %v5272 = vpop.f32.mrf.mxu0
      %v5273 = vadd.f32 %v5080, %v5272
      %v5274 = vpop.f32.mrf.mxu0
      %v5275 = vadd.f32 %v5082, %v5274
      %5276 = vmatmul.bf16.gmra.mxu0 %v4198
      %v5277 = vpop.f32.mrf.mxu0
      %v5278 = vadd.f32 %v5085, %v5277
      %v5279 = vpop.f32.mrf.mxu0
      %v5280 = vadd.f32 %v5087, %v5279
      %5281 = vmatmul.bf16.gmra.mxu0 %v4201
      %v5282 = vpop.f32.mrf.mxu0
      %v5283 = vpop.f32.mrf.mxu0
      %5284 = vdwg.mxu0
      %5285 = vmatpush.bf16.msra.mxu0 %v4584
      %5286 = vmatpush.bf16.msra.mxu0 %v4581
      %5287 = vmatpush.bf16.msra.mxu0 %v4578
      %5288 = vmatpush.bf16.msra.mxu0 %v4575
      %5289 = vmatpush.bf16.msra.mxu0 %v4572
      %5290 = vmatpush.bf16.msra.mxu0 %v4569
      %5291 = vmatpush.bf16.msra.mxu0 %v4566
      %5292 = vmatpush.bf16.msra.mxu0 %v4563
      %5293 = vmatmul.bf16.gmra.mxu0 %v4082
      %v5294 = vpop.f32.mrf.mxu0
      %v5295 = vpop.f32.mrf.mxu0
      %v5296 = vadd.f32 0.0, %v5295
      %5297 = vmatmul.bf16.gmra.mxu0 %v4085
      %v5298 = vpop.f32.mrf.mxu0
      %v5299 = vadd.f32 0.0, %v5298
      %v5300 = vpop.f32.mrf.mxu0
      %v5301 = vadd.f32 0.0, %v5300
      %5302 = vmatmul.bf16.gmra.mxu0 %v4088
      %v5303 = vpop.f32.mrf.mxu0
      %v5304 = vadd.f32 0.0, %v5303
      %v5305 = vpop.f32.mrf.mxu0
      %v5306 = vadd.f32 0.0, %v5305
      %5307 = vmatmul.bf16.gmra.mxu0 %v4091
      %v5308 = vpop.f32.mrf.mxu0
      %v5309 = vadd.f32 0.0, %v5308
      %v5310 = vpop.f32.mrf.mxu0
      %v5311 = vadd.f32 0.0, %v5310
      %5312 = vmatmul.bf16.gmra.mxu0 %v4094
      %v5313 = vpop.f32.mrf.mxu0
      %v5314 = vadd.f32 0.0, %v5313
      %v5315 = vpop.f32.mrf.mxu0
      %5316 = vmatmul.bf16.gmra.mxu0 %v4097
      %v5317 = vpop.f32.mrf.mxu0
      %v5318 = vpop.f32.mrf.mxu0
      %v5319 = vadd.f32 0.0, %v5318
      %5320 = vmatmul.bf16.gmra.mxu0 %v4100
      %v5321 = vpop.f32.mrf.mxu0
      %v5322 = vadd.f32 0.0, %v5321
      %v5323 = vpop.f32.mrf.mxu0
      %v5324 = vadd.f32 0.0, %v5323
      %5325 = vmatmul.bf16.gmra.mxu0 %v4103
      %v5326 = vpop.f32.mrf.mxu0
      %v5327 = vadd.f32 0.0, %v5326
      %v5328 = vpop.f32.mrf.mxu0
      %v5329 = vadd.f32 0.0, %v5328
      %5330 = vmatmul.bf16.gmra.mxu0 %v4106
      %v5331 = vpop.f32.mrf.mxu0
      %v5332 = vadd.f32 0.0, %v5331
      %v5333 = vpop.f32.mrf.mxu0
      %v5334 = vadd.f32 0.0, %v5333
      %5335 = vmatmul.bf16.gmra.mxu0 %v4109
      %v5336 = vpop.f32.mrf.mxu0
      %v5337 = vadd.f32 0.0, %v5336
      %v5338 = vpop.f32.mrf.mxu0
      %5339 = vmatmul.bf16.gmra.mxu0 %v4112
      %v5340 = vpop.f32.mrf.mxu0
      %v5341 = vpop.f32.mrf.mxu0
      %v5342 = vadd.f32 0.0, %v5341
      %5343 = vmatmul.bf16.gmra.mxu0 %v4115
      %v5344 = vpop.f32.mrf.mxu0
      %v5345 = vadd.f32 0.0, %v5344
      %v5346 = vpop.f32.mrf.mxu0
      %v5347 = vadd.f32 0.0, %v5346
      %5348 = vmatmul.bf16.gmra.mxu0 %v4118
      %v5349 = vpop.f32.mrf.mxu0
      %v5350 = vadd.f32 0.0, %v5349
      %v5351 = vpop.f32.mrf.mxu0
      %v5352 = vadd.f32 0.0, %v5351
      %5353 = vmatmul.bf16.gmra.mxu0 %v4121
      %v5354 = vpop.f32.mrf.mxu0
      %v5355 = vadd.f32 0.0, %v5354
      %v5356 = vpop.f32.mrf.mxu0
      %v5357 = vadd.f32 0.0, %v5356
      %5358 = vmatmul.bf16.gmra.mxu0 %v4124
      %v5359 = vpop.f32.mrf.mxu0
      %v5360 = vadd.f32 0.0, %v5359
      %v5361 = vpop.f32.mrf.mxu0
      %5362 = vmatmul.bf16.gmra.mxu0 %v4127
      %v5363 = vpop.f32.mrf.mxu0
      %v5364 = vpop.f32.mrf.mxu0
      %v5365 = vadd.f32 0.0, %v5364
      %5366 = vmatmul.bf16.gmra.mxu0 %v4130
      %v5367 = vpop.f32.mrf.mxu0
      %v5368 = vadd.f32 0.0, %v5367
      %v5369 = vpop.f32.mrf.mxu0
      %v5370 = vadd.f32 0.0, %v5369
      %5371 = vmatmul.bf16.gmra.mxu0 %v4133
      %v5372 = vpop.f32.mrf.mxu0
      %v5373 = vadd.f32 0.0, %v5372
      %v5374 = vpop.f32.mrf.mxu0
      %v5375 = vadd.f32 0.0, %v5374
      %5376 = vmatmul.bf16.gmra.mxu0 %v4136
      %v5377 = vpop.f32.mrf.mxu0
      %v5378 = vadd.f32 0.0, %v5377
      %v5379 = vpop.f32.mrf.mxu0
      %v5380 = vadd.f32 0.0, %v5379
      %5381 = vmatmul.bf16.gmra.mxu0 %v4139
      %v5382 = vpop.f32.mrf.mxu0
      %v5383 = vadd.f32 0.0, %v5382
      %v5384 = vpop.f32.mrf.mxu0
      %5385 = vmatmul.bf16.gmra.mxu0 %v4142
      %v5386 = vpop.f32.mrf.mxu0
      %v5387 = vpop.f32.mrf.mxu0
      %v5388 = vadd.f32 0.0, %v5387
      %5389 = vmatmul.bf16.gmra.mxu0 %v4145
      %v5390 = vpop.f32.mrf.mxu0
      %v5391 = vadd.f32 0.0, %v5390
      %v5392 = vpop.f32.mrf.mxu0
      %v5393 = vadd.f32 0.0, %v5392
      %5394 = vmatmul.bf16.gmra.mxu0 %v4148
      %v5395 = vpop.f32.mrf.mxu0
      %v5396 = vadd.f32 0.0, %v5395
      %v5397 = vpop.f32.mrf.mxu0
      %v5398 = vadd.f32 0.0, %v5397
      %5399 = vmatmul.bf16.gmra.mxu0 %v4151
      %v5400 = vpop.f32.mrf.mxu0
      %v5401 = vadd.f32 0.0, %v5400
      %v5402 = vpop.f32.mrf.mxu0
      %v5403 = vadd.f32 0.0, %v5402
      %5404 = vmatmul.bf16.gmra.mxu0 %v4154
      %v5405 = vpop.f32.mrf.mxu0
      %v5406 = vadd.f32 0.0, %v5405
      %v5407 = vpop.f32.mrf.mxu0
      %5408 = vmatmul.bf16.gmra.mxu0 %v4157
      %v5409 = vpop.f32.mrf.mxu0
      %v5410 = vpop.f32.mrf.mxu0
      %v5411 = vadd.f32 0.0, %v5410
      %5412 = vmatmul.bf16.gmra.mxu0 %v4160
      %v5413 = vpop.f32.mrf.mxu0
      %v5414 = vadd.f32 0.0, %v5413
      %v5415 = vpop.f32.mrf.mxu0
      %v5416 = vadd.f32 0.0, %v5415
      %5417 = vmatmul.bf16.gmra.mxu0 %v4163
      %v5418 = vpop.f32.mrf.mxu0
      %v5419 = vadd.f32 0.0, %v5418
      %v5420 = vpop.f32.mrf.mxu0
      %v5421 = vadd.f32 0.0, %v5420
      %5422 = vmatmul.bf16.gmra.mxu0 %v4166
      %v5423 = vpop.f32.mrf.mxu0
      %v5424 = vadd.f32 0.0, %v5423
      %v5425 = vpop.f32.mrf.mxu0
      %v5426 = vadd.f32 0.0, %v5425
      %5427 = vmatmul.bf16.gmra.mxu0 %v4169
      %v5428 = vpop.f32.mrf.mxu0
      %v5429 = vadd.f32 0.0, %v5428
      %v5430 = vpop.f32.mrf.mxu0
      %5431 = vmatmul.bf16.gmra.mxu0 %v4172
      %v5432 = vpop.f32.mrf.mxu0
      %v5433 = vpop.f32.mrf.mxu0
      %v5434 = vadd.f32 0.0, %v5433
      %5435 = vmatmul.bf16.gmra.mxu0 %v4175
      %v5436 = vpop.f32.mrf.mxu0
      %v5437 = vadd.f32 0.0, %v5436
      %v5438 = vpop.f32.mrf.mxu0
      %v5439 = vadd.f32 0.0, %v5438
      %5440 = vmatmul.bf16.gmra.mxu0 %v4178
      %v5441 = vpop.f32.mrf.mxu0
      %v5442 = vadd.f32 0.0, %v5441
      %v5443 = vpop.f32.mrf.mxu0
      %v5444 = vadd.f32 0.0, %v5443
      %5445 = vmatmul.bf16.gmra.mxu0 %v4181
      %v5446 = vpop.f32.mrf.mxu0
      %v5447 = vadd.f32 0.0, %v5446
      %v5448 = vpop.f32.mrf.mxu0
      %v5449 = vadd.f32 0.0, %v5448
      %5450 = vmatmul.bf16.gmra.mxu0 %v4184
      %v5451 = vpop.f32.mrf.mxu0
      %v5452 = vadd.f32 0.0, %v5451
      %v5453 = vpop.f32.mrf.mxu0
      %5454 = vmatmul.bf16.gmra.mxu0 %v4187
      %v5455 = vpop.f32.mrf.mxu0
      %v5456 = vpop.f32.mrf.mxu0
      %v5457 = vadd.f32 0.0, %v5456
      %5458 = vmatmul.bf16.gmra.mxu0 %v4190
      %v5459 = vpop.f32.mrf.mxu0
      %v5460 = vadd.f32 0.0, %v5459
      %v5461 = vpop.f32.mrf.mxu0
      %v5462 = vadd.f32 0.0, %v5461
      %5463 = vmatmul.bf16.gmra.mxu0 %v4193
      %v5464 = vpop.f32.mrf.mxu0
      %v5465 = vadd.f32 0.0, %v5464
      %v5466 = vpop.f32.mrf.mxu0
      %v5467 = vadd.f32 0.0, %v5466
      %5468 = vmatmul.bf16.gmra.mxu0 %v4196
      %v5469 = vpop.f32.mrf.mxu0
      %v5470 = vadd.f32 0.0, %v5469
      %v5471 = vpop.f32.mrf.mxu0
      %v5472 = vadd.f32 0.0, %v5471
      %5473 = vmatmul.bf16.gmra.mxu0 %v4199
      %v5474 = vpop.f32.mrf.mxu0
      %v5475 = vadd.f32 0.0, %v5474
      %v5476 = vpop.f32.mrf.mxu0
      %5477 = vdwg.mxu0
      %5478 = vmatpush.bf16.msra.mxu0 %v4608
      %5479 = vmatpush.bf16.msra.mxu0 %v4605
      %5480 = vmatpush.bf16.msra.mxu0 %v4602
      %5481 = vmatpush.bf16.msra.mxu0 %v4599
      %5482 = vmatpush.bf16.msra.mxu0 %v4596
      %5483 = vmatpush.bf16.msra.mxu0 %v4593
      %5484 = vmatpush.bf16.msra.mxu0 %v4590
      %5485 = vmatpush.bf16.msra.mxu0 %v4587
      %5486 = vmatmul.bf16.gmra.mxu0 %v4083
      %v5487 = vpop.f32.mrf.mxu0
      %v5488 = vpop.f32.mrf.mxu0
      %v5489 = vadd.f32 %v5296, %v5488
      %5490 = vmatmul.bf16.gmra.mxu0 %v4086
      %v5491 = vpop.f32.mrf.mxu0
      %v5492 = vadd.f32 %v5299, %v5491
      %v5493 = vpop.f32.mrf.mxu0
      %v5494 = vadd.f32 %v5301, %v5493
      %5495 = vmatmul.bf16.gmra.mxu0 %v4089
      %v5496 = vpop.f32.mrf.mxu0
      %v5497 = vadd.f32 %v5304, %v5496
      %v5498 = vpop.f32.mrf.mxu0
      %v5499 = vadd.f32 %v5306, %v5498
      %5500 = vmatmul.bf16.gmra.mxu0 %v4092
      %v5501 = vpop.f32.mrf.mxu0
      %v5502 = vadd.f32 %v5309, %v5501
      %v5503 = vpop.f32.mrf.mxu0
      %v5504 = vadd.f32 %v5311, %v5503
      %5505 = vmatmul.bf16.gmra.mxu0 %v4095
      %v5506 = vpop.f32.mrf.mxu0
      %v5507 = vadd.f32 %v5314, %v5506
      %v5508 = vpop.f32.mrf.mxu0
      %5509 = vmatmul.bf16.gmra.mxu0 %v4098
      %v5510 = vpop.f32.mrf.mxu0
      %v5511 = vpop.f32.mrf.mxu0
      %v5512 = vadd.f32 %v5319, %v5511
      %5513 = vmatmul.bf16.gmra.mxu0 %v4101
      %v5514 = vpop.f32.mrf.mxu0
      %v5515 = vadd.f32 %v5322, %v5514
      %v5516 = vpop.f32.mrf.mxu0
      %v5517 = vadd.f32 %v5324, %v5516
      %5518 = vmatmul.bf16.gmra.mxu0 %v4104
      %v5519 = vpop.f32.mrf.mxu0
      %v5520 = vadd.f32 %v5327, %v5519
      %v5521 = vpop.f32.mrf.mxu0
      %v5522 = vadd.f32 %v5329, %v5521
      %5523 = vmatmul.bf16.gmra.mxu0 %v4107
      %v5524 = vpop.f32.mrf.mxu0
      %v5525 = vadd.f32 %v5332, %v5524
      %v5526 = vpop.f32.mrf.mxu0
      %v5527 = vadd.f32 %v5334, %v5526
      %5528 = vmatmul.bf16.gmra.mxu0 %v4110
      %v5529 = vpop.f32.mrf.mxu0
      %v5530 = vadd.f32 %v5337, %v5529
      %v5531 = vpop.f32.mrf.mxu0
      %5532 = vmatmul.bf16.gmra.mxu0 %v4113
      %v5533 = vpop.f32.mrf.mxu0
      %v5534 = vpop.f32.mrf.mxu0
      %v5535 = vadd.f32 %v5342, %v5534
      %5536 = vmatmul.bf16.gmra.mxu0 %v4116
      %v5537 = vpop.f32.mrf.mxu0
      %v5538 = vadd.f32 %v5345, %v5537
      %v5539 = vpop.f32.mrf.mxu0
      %v5540 = vadd.f32 %v5347, %v5539
      %5541 = vmatmul.bf16.gmra.mxu0 %v4119
      %v5542 = vpop.f32.mrf.mxu0
      %v5543 = vadd.f32 %v5350, %v5542
      %v5544 = vpop.f32.mrf.mxu0
      %v5545 = vadd.f32 %v5352, %v5544
      %5546 = vmatmul.bf16.gmra.mxu0 %v4122
      %v5547 = vpop.f32.mrf.mxu0
      %v5548 = vadd.f32 %v5355, %v5547
      %v5549 = vpop.f32.mrf.mxu0
      %v5550 = vadd.f32 %v5357, %v5549
      %5551 = vmatmul.bf16.gmra.mxu0 %v4125
      %v5552 = vpop.f32.mrf.mxu0
      %v5553 = vadd.f32 %v5360, %v5552
      %v5554 = vpop.f32.mrf.mxu0
      %5555 = vmatmul.bf16.gmra.mxu0 %v4128
      %v5556 = vpop.f32.mrf.mxu0
      %v5557 = vpop.f32.mrf.mxu0
      %v5558 = vadd.f32 %v5365, %v5557
      %5559 = vmatmul.bf16.gmra.mxu0 %v4131
      %v5560 = vpop.f32.mrf.mxu0
      %v5561 = vadd.f32 %v5368, %v5560
      %v5562 = vpop.f32.mrf.mxu0
      %v5563 = vadd.f32 %v5370, %v5562
      %5564 = vmatmul.bf16.gmra.mxu0 %v4134
      %v5565 = vpop.f32.mrf.mxu0
      %v5566 = vadd.f32 %v5373, %v5565
      %v5567 = vpop.f32.mrf.mxu0
      %v5568 = vadd.f32 %v5375, %v5567
      %5569 = vmatmul.bf16.gmra.mxu0 %v4137
      %v5570 = vpop.f32.mrf.mxu0
      %v5571 = vadd.f32 %v5378, %v5570
      %v5572 = vpop.f32.mrf.mxu0
      %v5573 = vadd.f32 %v5380, %v5572
      %5574 = vmatmul.bf16.gmra.mxu0 %v4140
      %v5575 = vpop.f32.mrf.mxu0
      %v5576 = vadd.f32 %v5383, %v5575
      %v5577 = vpop.f32.mrf.mxu0
      %5578 = vmatmul.bf16.gmra.mxu0 %v4143
      %v5579 = vpop.f32.mrf.mxu0
      %v5580 = vpop.f32.mrf.mxu0
      %v5581 = vadd.f32 %v5388, %v5580
      %5582 = vmatmul.bf16.gmra.mxu0 %v4146
      %v5583 = vpop.f32.mrf.mxu0
      %v5584 = vadd.f32 %v5391, %v5583
      %v5585 = vpop.f32.mrf.mxu0
      %v5586 = vadd.f32 %v5393, %v5585
      %5587 = vmatmul.bf16.gmra.mxu0 %v4149
      %v5588 = vpop.f32.mrf.mxu0
      %v5589 = vadd.f32 %v5396, %v5588
      %v5590 = vpop.f32.mrf.mxu0
      %v5591 = vadd.f32 %v5398, %v5590
      %5592 = vmatmul.bf16.gmra.mxu0 %v4152
      %v5593 = vpop.f32.mrf.mxu0
      %v5594 = vadd.f32 %v5401, %v5593
      %v5595 = vpop.f32.mrf.mxu0
      %v5596 = vadd.f32 %v5403, %v5595
      %5597 = vmatmul.bf16.gmra.mxu0 %v4155
      %v5598 = vpop.f32.mrf.mxu0
      %v5599 = vadd.f32 %v5406, %v5598
      %v5600 = vpop.f32.mrf.mxu0
      %5601 = vmatmul.bf16.gmra.mxu0 %v4158
      %v5602 = vpop.f32.mrf.mxu0
      %v5603 = vpop.f32.mrf.mxu0
      %v5604 = vadd.f32 %v5411, %v5603
      %5605 = vmatmul.bf16.gmra.mxu0 %v4161
      %v5606 = vpop.f32.mrf.mxu0
      %v5607 = vadd.f32 %v5414, %v5606
      %v5608 = vpop.f32.mrf.mxu0
      %v5609 = vadd.f32 %v5416, %v5608
      %5610 = vmatmul.bf16.gmra.mxu0 %v4164
      %v5611 = vpop.f32.mrf.mxu0
      %v5612 = vadd.f32 %v5419, %v5611
      %v5613 = vpop.f32.mrf.mxu0
      %v5614 = vadd.f32 %v5421, %v5613
      %5615 = vmatmul.bf16.gmra.mxu0 %v4167
      %v5616 = vpop.f32.mrf.mxu0
      %v5617 = vadd.f32 %v5424, %v5616
      %v5618 = vpop.f32.mrf.mxu0
      %v5619 = vadd.f32 %v5426, %v5618
      %5620 = vmatmul.bf16.gmra.mxu0 %v4170
      %v5621 = vpop.f32.mrf.mxu0
      %v5622 = vadd.f32 %v5429, %v5621
      %v5623 = vpop.f32.mrf.mxu0
      %5624 = vmatmul.bf16.gmra.mxu0 %v4173
      %v5625 = vpop.f32.mrf.mxu0
      %v5626 = vpop.f32.mrf.mxu0
      %v5627 = vadd.f32 %v5434, %v5626
      %5628 = vmatmul.bf16.gmra.mxu0 %v4176
      %v5629 = vpop.f32.mrf.mxu0
      %v5630 = vadd.f32 %v5437, %v5629
      %v5631 = vpop.f32.mrf.mxu0
      %v5632 = vadd.f32 %v5439, %v5631
      %5633 = vmatmul.bf16.gmra.mxu0 %v4179
      %v5634 = vpop.f32.mrf.mxu0
      %v5635 = vadd.f32 %v5442, %v5634
      %v5636 = vpop.f32.mrf.mxu0
      %v5637 = vadd.f32 %v5444, %v5636
      %5638 = vmatmul.bf16.gmra.mxu0 %v4182
      %v5639 = vpop.f32.mrf.mxu0
      %v5640 = vadd.f32 %v5447, %v5639
      %v5641 = vpop.f32.mrf.mxu0
      %v5642 = vadd.f32 %v5449, %v5641
      %5643 = vmatmul.bf16.gmra.mxu0 %v4185
      %v5644 = vpop.f32.mrf.mxu0
      %v5645 = vadd.f32 %v5452, %v5644
      %v5646 = vpop.f32.mrf.mxu0
      %5647 = vmatmul.bf16.gmra.mxu0 %v4188
      %v5648 = vpop.f32.mrf.mxu0
      %v5649 = vpop.f32.mrf.mxu0
      %v5650 = vadd.f32 %v5457, %v5649
      %5651 = vmatmul.bf16.gmra.mxu0 %v4191
      %v5652 = vpop.f32.mrf.mxu0
      %v5653 = vadd.f32 %v5460, %v5652
      %v5654 = vpop.f32.mrf.mxu0
      %v5655 = vadd.f32 %v5462, %v5654
      %5656 = vmatmul.bf16.gmra.mxu0 %v4194
      %v5657 = vpop.f32.mrf.mxu0
      %v5658 = vadd.f32 %v5465, %v5657
      %v5659 = vpop.f32.mrf.mxu0
      %v5660 = vadd.f32 %v5467, %v5659
      %5661 = vmatmul.bf16.gmra.mxu0 %v4197
      %v5662 = vpop.f32.mrf.mxu0
      %v5663 = vadd.f32 %v5470, %v5662
      %v5664 = vpop.f32.mrf.mxu0
      %v5665 = vadd.f32 %v5472, %v5664
      %5666 = vmatmul.bf16.gmra.mxu0 %v4200
      %v5667 = vpop.f32.mrf.mxu0
      %v5668 = vadd.f32 %v5475, %v5667
      %v5669 = vpop.f32.mrf.mxu0
      %5670 = vdwg.mxu0
      %5671 = vmatpush.bf16.msra.mxu0 %v4632
      %5672 = vmatpush.bf16.msra.mxu0 %v4629
      %5673 = vmatpush.bf16.msra.mxu0 %v4626
      %5674 = vmatpush.bf16.msra.mxu0 %v4623
      %5675 = vmatpush.bf16.msra.mxu0 %v4620
      %5676 = vmatpush.bf16.msra.mxu0 %v4617
      %5677 = vmatpush.bf16.msra.mxu0 %v4614
      %5678 = vmatpush.bf16.msra.mxu0 %v4611
      %5679 = vmatmul.bf16.gmra.mxu0 %v4084
      %v5680 = vpop.f32.mrf.mxu0
      %v5681 = vpop.f32.mrf.mxu0
      %v5682 = vadd.f32 %v5489, %v5681
      %5683 = vmatmul.bf16.gmra.mxu0 %v4087
      %v5684 = vpop.f32.mrf.mxu0
      %v5685 = vadd.f32 %v5492, %v5684
      %v5686 = vpop.f32.mrf.mxu0
      %v5687 = vadd.f32 %v5494, %v5686
      %5688 = vmatmul.bf16.gmra.mxu0 %v4090
      %v5689 = vpop.f32.mrf.mxu0
      %v5690 = vadd.f32 %v5497, %v5689
      %v5691 = vpop.f32.mrf.mxu0
      %v5692 = vadd.f32 %v5499, %v5691
      %5693 = vmatmul.bf16.gmra.mxu0 %v4093
      %v5694 = vpop.f32.mrf.mxu0
      %v5695 = vadd.f32 %v5502, %v5694
      %v5696 = vpop.f32.mrf.mxu0
      %v5697 = vadd.f32 %v5504, %v5696
      %5698 = vmatmul.bf16.gmra.mxu0 %v4096
      %v5699 = vpop.f32.mrf.mxu0
      %v5700 = vadd.f32 %v5507, %v5699
      %v5701 = vpop.f32.mrf.mxu0
      %5702 = vmatmul.bf16.gmra.mxu0 %v4099
      %v5703 = vpop.f32.mrf.mxu0
      %v5704 = vpop.f32.mrf.mxu0
      %v5705 = vadd.f32 %v5512, %v5704
      %5706 = vmatmul.bf16.gmra.mxu0 %v4102
      %v5707 = vpop.f32.mrf.mxu0
      %v5708 = vadd.f32 %v5515, %v5707
      %v5709 = vpop.f32.mrf.mxu0
      %v5710 = vadd.f32 %v5517, %v5709
      %5711 = vmatmul.bf16.gmra.mxu0 %v4105
      %v5712 = vpop.f32.mrf.mxu0
      %v5713 = vadd.f32 %v5520, %v5712
      %v5714 = vpop.f32.mrf.mxu0
      %v5715 = vadd.f32 %v5522, %v5714
      %5716 = vmatmul.bf16.gmra.mxu0 %v4108
      %v5717 = vpop.f32.mrf.mxu0
      %v5718 = vadd.f32 %v5525, %v5717
      %v5719 = vpop.f32.mrf.mxu0
      %v5720 = vadd.f32 %v5527, %v5719
      %5721 = vmatmul.bf16.gmra.mxu0 %v4111
      %v5722 = vpop.f32.mrf.mxu0
      %v5723 = vadd.f32 %v5530, %v5722
      %v5724 = vpop.f32.mrf.mxu0
      %5725 = vmatmul.bf16.gmra.mxu0 %v4114
      %v5726 = vpop.f32.mrf.mxu0
      %v5727 = vpop.f32.mrf.mxu0
      %v5728 = vadd.f32 %v5535, %v5727
      %5729 = vmatmul.bf16.gmra.mxu0 %v4117
      %v5730 = vpop.f32.mrf.mxu0
      %v5731 = vadd.f32 %v5538, %v5730
      %v5732 = vpop.f32.mrf.mxu0
      %v5733 = vadd.f32 %v5540, %v5732
      %5734 = vmatmul.bf16.gmra.mxu0 %v4120
      %v5735 = vpop.f32.mrf.mxu0
      %v5736 = vadd.f32 %v5543, %v5735
      %v5737 = vpop.f32.mrf.mxu0
      %v5738 = vadd.f32 %v5545, %v5737
      %5739 = vmatmul.bf16.gmra.mxu0 %v4123
      %v5740 = vpop.f32.mrf.mxu0
      %v5741 = vadd.f32 %v5548, %v5740
      %v5742 = vpop.f32.mrf.mxu0
      %v5743 = vadd.f32 %v5550, %v5742
      %5744 = vmatmul.bf16.gmra.mxu0 %v4126
      %v5745 = vpop.f32.mrf.mxu0
      %v5746 = vadd.f32 %v5553, %v5745
      %v5747 = vpop.f32.mrf.mxu0
      %5748 = vmatmul.bf16.gmra.mxu0 %v4129
      %v5749 = vpop.f32.mrf.mxu0
      %v5750 = vpop.f32.mrf.mxu0
      %v5751 = vadd.f32 %v5558, %v5750
      %5752 = vmatmul.bf16.gmra.mxu0 %v4132
      %v5753 = vpop.f32.mrf.mxu0
      %v5754 = vadd.f32 %v5561, %v5753
      %v5755 = vpop.f32.mrf.mxu0
      %v5756 = vadd.f32 %v5563, %v5755
      %5757 = vmatmul.bf16.gmra.mxu0 %v4135
      %v5758 = vpop.f32.mrf.mxu0
      %v5759 = vadd.f32 %v5566, %v5758
      %v5760 = vpop.f32.mrf.mxu0
      %v5761 = vadd.f32 %v5568, %v5760
      %5762 = vmatmul.bf16.gmra.mxu0 %v4138
      %v5763 = vpop.f32.mrf.mxu0
      %v5764 = vadd.f32 %v5571, %v5763
      %v5765 = vpop.f32.mrf.mxu0
      %v5766 = vadd.f32 %v5573, %v5765
      %5767 = vmatmul.bf16.gmra.mxu0 %v4141
      %v5768 = vpop.f32.mrf.mxu0
      %v5769 = vadd.f32 %v5576, %v5768
      %v5770 = vpop.f32.mrf.mxu0
      %5771 = vmatmul.bf16.gmra.mxu0 %v4144
      %v5772 = vpop.f32.mrf.mxu0
      %v5773 = vpop.f32.mrf.mxu0
      %v5774 = vadd.f32 %v5581, %v5773
      %5775 = vmatmul.bf16.gmra.mxu0 %v4147
      %v5776 = vpop.f32.mrf.mxu0
      %v5777 = vadd.f32 %v5584, %v5776
      %v5778 = vpop.f32.mrf.mxu0
      %v5779 = vadd.f32 %v5586, %v5778
      %5780 = vmatmul.bf16.gmra.mxu0 %v4150
      %v5781 = vpop.f32.mrf.mxu0
      %v5782 = vadd.f32 %v5589, %v5781
      %v5783 = vpop.f32.mrf.mxu0
      %v5784 = vadd.f32 %v5591, %v5783
      %5785 = vmatmul.bf16.gmra.mxu0 %v4153
      %v5786 = vpop.f32.mrf.mxu0
      %v5787 = vadd.f32 %v5594, %v5786
      %v5788 = vpop.f32.mrf.mxu0
      %v5789 = vadd.f32 %v5596, %v5788
      %5790 = vmatmul.bf16.gmra.mxu0 %v4156
      %v5791 = vpop.f32.mrf.mxu0
      %v5792 = vadd.f32 %v5599, %v5791
      %v5793 = vpop.f32.mrf.mxu0
      %5794 = vmatmul.bf16.gmra.mxu0 %v4159
      %v5795 = vpop.f32.mrf.mxu0
      %v5796 = vpop.f32.mrf.mxu0
      %v5797 = vadd.f32 %v5604, %v5796
      %5798 = vmatmul.bf16.gmra.mxu0 %v4162
      %v5799 = vpop.f32.mrf.mxu0
      %v5800 = vadd.f32 %v5607, %v5799
      %v5801 = vpop.f32.mrf.mxu0
      %v5802 = vadd.f32 %v5609, %v5801
      %5803 = vmatmul.bf16.gmra.mxu0 %v4165
      %v5804 = vpop.f32.mrf.mxu0
      %v5805 = vadd.f32 %v5612, %v5804
      %v5806 = vpop.f32.mrf.mxu0
      %v5807 = vadd.f32 %v5614, %v5806
      %5808 = vmatmul.bf16.gmra.mxu0 %v4168
      %v5809 = vpop.f32.mrf.mxu0
      %v5810 = vadd.f32 %v5617, %v5809
      %v5811 = vpop.f32.mrf.mxu0
      %v5812 = vadd.f32 %v5619, %v5811
      %5813 = vmatmul.bf16.gmra.mxu0 %v4171
      %v5814 = vpop.f32.mrf.mxu0
      %v5815 = vadd.f32 %v5622, %v5814
      %v5816 = vpop.f32.mrf.mxu0
      %5817 = vmatmul.bf16.gmra.mxu0 %v4174
      %v5818 = vpop.f32.mrf.mxu0
      %v5819 = vpop.f32.mrf.mxu0
      %v5820 = vadd.f32 %v5627, %v5819
      %5821 = vmatmul.bf16.gmra.mxu0 %v4177
      %v5822 = vpop.f32.mrf.mxu0
      %v5823 = vadd.f32 %v5630, %v5822
      %v5824 = vpop.f32.mrf.mxu0
      %v5825 = vadd.f32 %v5632, %v5824
      %5826 = vmatmul.bf16.gmra.mxu0 %v4180
      %v5827 = vpop.f32.mrf.mxu0
      %v5828 = vadd.f32 %v5635, %v5827
      %v5829 = vpop.f32.mrf.mxu0
      %v5830 = vadd.f32 %v5637, %v5829
      %5831 = vmatmul.bf16.gmra.mxu0 %v4183
      %v5832 = vpop.f32.mrf.mxu0
      %v5833 = vadd.f32 %v5640, %v5832
      %v5834 = vpop.f32.mrf.mxu0
      %v5835 = vadd.f32 %v5642, %v5834
      %5836 = vmatmul.bf16.gmra.mxu0 %v4186
      %v5837 = vpop.f32.mrf.mxu0
      %v5838 = vadd.f32 %v5645, %v5837
      %v5839 = vpop.f32.mrf.mxu0
      %5840 = vmatmul.bf16.gmra.mxu0 %v4189
      %v5841 = vpop.f32.mrf.mxu0
      %v5842 = vpop.f32.mrf.mxu0
      %v5843 = vadd.f32 %v5650, %v5842
      %5844 = vmatmul.bf16.gmra.mxu0 %v4192
      %v5845 = vpop.f32.mrf.mxu0
      %v5846 = vadd.f32 %v5653, %v5845
      %v5847 = vpop.f32.mrf.mxu0
      %v5848 = vadd.f32 %v5655, %v5847
      %5849 = vmatmul.bf16.gmra.mxu0 %v4195
      %v5850 = vpop.f32.mrf.mxu0
      %v5851 = vadd.f32 %v5658, %v5850
      %v5852 = vpop.f32.mrf.mxu0
      %v5853 = vadd.f32 %v5660, %v5852
      %5854 = vmatmul.bf16.gmra.mxu0 %v4198
      %v5855 = vpop.f32.mrf.mxu0
      %v5856 = vadd.f32 %v5663, %v5855
      %v5857 = vpop.f32.mrf.mxu0
      %v5858 = vadd.f32 %v5665, %v5857
      %5859 = vmatmul.bf16.gmra.mxu0 %v4201
      %v5860 = vpop.f32.mrf.mxu0
      %v5861 = vadd.f32 %v5668, %v5860
      %v5862 = vpop.f32.mrf.mxu0
      %5863 = vdwg.mxu0
      %5864 = vmatpush.bf16.msra.mxu0 %v4585
      %5865 = vmatpush.bf16.msra.mxu0 %v4582
      %5866 = vmatpush.bf16.msra.mxu0 %v4579
      %5867 = vmatpush.bf16.msra.mxu0 %v4576
      %5868 = vmatpush.bf16.msra.mxu0 %v4573
      %5869 = vmatpush.bf16.msra.mxu0 %v4570
      %5870 = vmatpush.bf16.msra.mxu0 %v4567
      %5871 = vmatpush.bf16.msra.mxu0 %v4564
      %5872 = vmatmul.bf16.gmra.mxu0 %v4082
      %v5873 = vpop.f32.mrf.mxu0
      %v5874 = vpop.f32.mrf.mxu0
      %5875 = vmatmul.bf16.gmra.mxu0 %v4085
      %v5876 = vpop.f32.mrf.mxu0
      %v5877 = vadd.f32 0.0, %v5876
      %v5878 = vpop.f32.mrf.mxu0
      %v5879 = vadd.f32 0.0, %v5878
      %5880 = vmatmul.bf16.gmra.mxu0 %v4088
      %v5881 = vpop.f32.mrf.mxu0
      %v5882 = vadd.f32 0.0, %v5881
      %v5883 = vpop.f32.mrf.mxu0
      %v5884 = vadd.f32 0.0, %v5883
      %5885 = vmatmul.bf16.gmra.mxu0 %v4091
      %v5886 = vpop.f32.mrf.mxu0
      %v5887 = vadd.f32 0.0, %v5886
      %v5888 = vpop.f32.mrf.mxu0
      %v5889 = vadd.f32 0.0, %v5888
      %5890 = vmatmul.bf16.gmra.mxu0 %v4094
      %v5891 = vpop.f32.mrf.mxu0
      %v5892 = vadd.f32 0.0, %v5891
      %v5893 = vpop.f32.mrf.mxu0
      %v5894 = vadd.f32 0.0, %v5893
      %5895 = vmatmul.bf16.gmra.mxu0 %v4097
      %v5896 = vpop.f32.mrf.mxu0
      %v5897 = vpop.f32.mrf.mxu0
      %5898 = vmatmul.bf16.gmra.mxu0 %v4100
      %v5899 = vpop.f32.mrf.mxu0
      %v5900 = vadd.f32 0.0, %v5899
      %v5901 = vpop.f32.mrf.mxu0
      %v5902 = vadd.f32 0.0, %v5901
      %5903 = vmatmul.bf16.gmra.mxu0 %v4103
      %v5904 = vpop.f32.mrf.mxu0
      %v5905 = vadd.f32 0.0, %v5904
      %v5906 = vpop.f32.mrf.mxu0
      %v5907 = vadd.f32 0.0, %v5906
      %5908 = vmatmul.bf16.gmra.mxu0 %v4106
      %v5909 = vpop.f32.mrf.mxu0
      %v5910 = vadd.f32 0.0, %v5909
      %v5911 = vpop.f32.mrf.mxu0
      %v5912 = vadd.f32 0.0, %v5911
      %5913 = vmatmul.bf16.gmra.mxu0 %v4109
      %v5914 = vpop.f32.mrf.mxu0
      %v5915 = vadd.f32 0.0, %v5914
      %v5916 = vpop.f32.mrf.mxu0
      %v5917 = vadd.f32 0.0, %v5916
      %5918 = vmatmul.bf16.gmra.mxu0 %v4112
      %v5919 = vpop.f32.mrf.mxu0
      %v5920 = vpop.f32.mrf.mxu0
      %5921 = vmatmul.bf16.gmra.mxu0 %v4115
      %v5922 = vpop.f32.mrf.mxu0
      %v5923 = vadd.f32 0.0, %v5922
      %v5924 = vpop.f32.mrf.mxu0
      %v5925 = vadd.f32 0.0, %v5924
      %5926 = vmatmul.bf16.gmra.mxu0 %v4118
      %v5927 = vpop.f32.mrf.mxu0
      %v5928 = vadd.f32 0.0, %v5927
      %v5929 = vpop.f32.mrf.mxu0
      %v5930 = vadd.f32 0.0, %v5929
      %5931 = vmatmul.bf16.gmra.mxu0 %v4121
      %v5932 = vpop.f32.mrf.mxu0
      %v5933 = vadd.f32 0.0, %v5932
      %v5934 = vpop.f32.mrf.mxu0
      %v5935 = vadd.f32 0.0, %v5934
      %5936 = vmatmul.bf16.gmra.mxu0 %v4124
      %v5937 = vpop.f32.mrf.mxu0
      %v5938 = vadd.f32 0.0, %v5937
      %v5939 = vpop.f32.mrf.mxu0
      %v5940 = vadd.f32 0.0, %v5939
      %5941 = vmatmul.bf16.gmra.mxu0 %v4127
      %v5942 = vpop.f32.mrf.mxu0
      %v5943 = vpop.f32.mrf.mxu0
      %5944 = vmatmul.bf16.gmra.mxu0 %v4130
      %v5945 = vpop.f32.mrf.mxu0
      %v5946 = vadd.f32 0.0, %v5945
      %v5947 = vpop.f32.mrf.mxu0
      %v5948 = vadd.f32 0.0, %v5947
      %5949 = vmatmul.bf16.gmra.mxu0 %v4133
      %v5950 = vpop.f32.mrf.mxu0
      %v5951 = vadd.f32 0.0, %v5950
      %v5952 = vpop.f32.mrf.mxu0
      %v5953 = vadd.f32 0.0, %v5952
      %5954 = vmatmul.bf16.gmra.mxu0 %v4136
      %v5955 = vpop.f32.mrf.mxu0
      %v5956 = vadd.f32 0.0, %v5955
      %v5957 = vpop.f32.mrf.mxu0
      %v5958 = vadd.f32 0.0, %v5957
      %5959 = vmatmul.bf16.gmra.mxu0 %v4139
      %v5960 = vpop.f32.mrf.mxu0
      %v5961 = vadd.f32 0.0, %v5960
      %v5962 = vpop.f32.mrf.mxu0
      %v5963 = vadd.f32 0.0, %v5962
      %5964 = vmatmul.bf16.gmra.mxu0 %v4142
      %v5965 = vpop.f32.mrf.mxu0
      %v5966 = vpop.f32.mrf.mxu0
      %5967 = vmatmul.bf16.gmra.mxu0 %v4145
      %v5968 = vpop.f32.mrf.mxu0
      %v5969 = vadd.f32 0.0, %v5968
      %v5970 = vpop.f32.mrf.mxu0
      %v5971 = vadd.f32 0.0, %v5970
      %5972 = vmatmul.bf16.gmra.mxu0 %v4148
      %v5973 = vpop.f32.mrf.mxu0
      %v5974 = vadd.f32 0.0, %v5973
      %v5975 = vpop.f32.mrf.mxu0
      %v5976 = vadd.f32 0.0, %v5975
      %5977 = vmatmul.bf16.gmra.mxu0 %v4151
      %v5978 = vpop.f32.mrf.mxu0
      %v5979 = vadd.f32 0.0, %v5978
      %v5980 = vpop.f32.mrf.mxu0
      %v5981 = vadd.f32 0.0, %v5980
      %5982 = vmatmul.bf16.gmra.mxu0 %v4154
      %v5983 = vpop.f32.mrf.mxu0
      %v5984 = vadd.f32 0.0, %v5983
      %v5985 = vpop.f32.mrf.mxu0
      %v5986 = vadd.f32 0.0, %v5985
      %5987 = vmatmul.bf16.gmra.mxu0 %v4157
      %v5988 = vpop.f32.mrf.mxu0
      %v5989 = vpop.f32.mrf.mxu0
      %5990 = vmatmul.bf16.gmra.mxu0 %v4160
      %v5991 = vpop.f32.mrf.mxu0
      %v5992 = vadd.f32 0.0, %v5991
      %v5993 = vpop.f32.mrf.mxu0
      %v5994 = vadd.f32 0.0, %v5993
      %5995 = vmatmul.bf16.gmra.mxu0 %v4163
      %v5996 = vpop.f32.mrf.mxu0
      %v5997 = vadd.f32 0.0, %v5996
      %v5998 = vpop.f32.mrf.mxu0
      %v5999 = vadd.f32 0.0, %v5998
      %6000 = vmatmul.bf16.gmra.mxu0 %v4166
      %v6001 = vpop.f32.mrf.mxu0
      %v6002 = vadd.f32 0.0, %v6001
      %v6003 = vpop.f32.mrf.mxu0
      %v6004 = vadd.f32 0.0, %v6003
      %6005 = vmatmul.bf16.gmra.mxu0 %v4169
      %v6006 = vpop.f32.mrf.mxu0
      %v6007 = vadd.f32 0.0, %v6006
      %v6008 = vpop.f32.mrf.mxu0
      %v6009 = vadd.f32 0.0, %v6008
      %6010 = vmatmul.bf16.gmra.mxu0 %v4172
      %v6011 = vpop.f32.mrf.mxu0
      %v6012 = vpop.f32.mrf.mxu0
      %6013 = vmatmul.bf16.gmra.mxu0 %v4175
      %v6014 = vpop.f32.mrf.mxu0
      %v6015 = vadd.f32 0.0, %v6014
      %v6016 = vpop.f32.mrf.mxu0
      %v6017 = vadd.f32 0.0, %v6016
      %6018 = vmatmul.bf16.gmra.mxu0 %v4178
      %v6019 = vpop.f32.mrf.mxu0
      %v6020 = vadd.f32 0.0, %v6019
      %v6021 = vpop.f32.mrf.mxu0
      %v6022 = vadd.f32 0.0, %v6021
      %6023 = vmatmul.bf16.gmra.mxu0 %v4181
      %v6024 = vpop.f32.mrf.mxu0
      %v6025 = vadd.f32 0.0, %v6024
      %v6026 = vpop.f32.mrf.mxu0
      %v6027 = vadd.f32 0.0, %v6026
      %6028 = vmatmul.bf16.gmra.mxu0 %v4184
      %v6029 = vpop.f32.mrf.mxu0
      %v6030 = vadd.f32 0.0, %v6029
      %v6031 = vpop.f32.mrf.mxu0
      %v6032 = vadd.f32 0.0, %v6031
      %6033 = vmatmul.bf16.gmra.mxu0 %v4187
      %v6034 = vpop.f32.mrf.mxu0
      %v6035 = vpop.f32.mrf.mxu0
      %6036 = vmatmul.bf16.gmra.mxu0 %v4190
      %v6037 = vpop.f32.mrf.mxu0
      %v6038 = vadd.f32 0.0, %v6037
      %v6039 = vpop.f32.mrf.mxu0
      %v6040 = vadd.f32 0.0, %v6039
      %6041 = vmatmul.bf16.gmra.mxu0 %v4193
      %v6042 = vpop.f32.mrf.mxu0
      %v6043 = vadd.f32 0.0, %v6042
      %v6044 = vpop.f32.mrf.mxu0
      %v6045 = vadd.f32 0.0, %v6044
      %6046 = vmatmul.bf16.gmra.mxu0 %v4196
      %v6047 = vpop.f32.mrf.mxu0
      %v6048 = vadd.f32 0.0, %v6047
      %v6049 = vpop.f32.mrf.mxu0
      %v6050 = vadd.f32 0.0, %v6049
      %6051 = vmatmul.bf16.gmra.mxu0 %v4199
      %v6052 = vpop.f32.mrf.mxu0
      %v6053 = vadd.f32 0.0, %v6052
      %v6054 = vpop.f32.mrf.mxu0
      %v6055 = vadd.f32 0.0, %v6054
      %6056 = vdwg.mxu0
      %6057 = vmatpush.bf16.msra.mxu0 %v4609
      %6058 = vmatpush.bf16.msra.mxu0 %v4606
      %6059 = vmatpush.bf16.msra.mxu0 %v4603
      %6060 = vmatpush.bf16.msra.mxu0 %v4600
      %6061 = vmatpush.bf16.msra.mxu0 %v4597
      %6062 = vmatpush.bf16.msra.mxu0 %v4594
      %6063 = vmatpush.bf16.msra.mxu0 %v4591
      %6064 = vmatpush.bf16.msra.mxu0 %v4588
      %6065 = vmatmul.bf16.gmra.mxu0 %v4083
      %v6066 = vpop.f32.mrf.mxu0
      %v6067 = vpop.f32.mrf.mxu0
      %6068 = vmatmul.bf16.gmra.mxu0 %v4086
      %v6069 = vpop.f32.mrf.mxu0
      %v6070 = vadd.f32 %v5877, %v6069
      %v6071 = vpop.f32.mrf.mxu0
      %v6072 = vadd.f32 %v5879, %v6071
      %6073 = vmatmul.bf16.gmra.mxu0 %v4089
      %v6074 = vpop.f32.mrf.mxu0
      %v6075 = vadd.f32 %v5882, %v6074
      %v6076 = vpop.f32.mrf.mxu0
      %v6077 = vadd.f32 %v5884, %v6076
      %6078 = vmatmul.bf16.gmra.mxu0 %v4092
      %v6079 = vpop.f32.mrf.mxu0
      %v6080 = vadd.f32 %v5887, %v6079
      %v6081 = vpop.f32.mrf.mxu0
      %v6082 = vadd.f32 %v5889, %v6081
      %6083 = vmatmul.bf16.gmra.mxu0 %v4095
      %v6084 = vpop.f32.mrf.mxu0
      %v6085 = vadd.f32 %v5892, %v6084
      %v6086 = vpop.f32.mrf.mxu0
      %v6087 = vadd.f32 %v5894, %v6086
      %6088 = vmatmul.bf16.gmra.mxu0 %v4098
      %v6089 = vpop.f32.mrf.mxu0
      %v6090 = vpop.f32.mrf.mxu0
      %6091 = vmatmul.bf16.gmra.mxu0 %v4101
      %v6092 = vpop.f32.mrf.mxu0
      %v6093 = vadd.f32 %v5900, %v6092
      %v6094 = vpop.f32.mrf.mxu0
      %v6095 = vadd.f32 %v5902, %v6094
      %6096 = vmatmul.bf16.gmra.mxu0 %v4104
      %v6097 = vpop.f32.mrf.mxu0
      %v6098 = vadd.f32 %v5905, %v6097
      %v6099 = vpop.f32.mrf.mxu0
      %v6100 = vadd.f32 %v5907, %v6099
      %6101 = vmatmul.bf16.gmra.mxu0 %v4107
      %v6102 = vpop.f32.mrf.mxu0
      %v6103 = vadd.f32 %v5910, %v6102
      %v6104 = vpop.f32.mrf.mxu0
      %v6105 = vadd.f32 %v5912, %v6104
      %6106 = vmatmul.bf16.gmra.mxu0 %v4110
      %v6107 = vpop.f32.mrf.mxu0
      %v6108 = vadd.f32 %v5915, %v6107
      %v6109 = vpop.f32.mrf.mxu0
      %v6110 = vadd.f32 %v5917, %v6109
      %6111 = vmatmul.bf16.gmra.mxu0 %v4113
      %v6112 = vpop.f32.mrf.mxu0
      %v6113 = vpop.f32.mrf.mxu0
      %6114 = vmatmul.bf16.gmra.mxu0 %v4116
      %v6115 = vpop.f32.mrf.mxu0
      %v6116 = vadd.f32 %v5923, %v6115
      %v6117 = vpop.f32.mrf.mxu0
      %v6118 = vadd.f32 %v5925, %v6117
      %6119 = vmatmul.bf16.gmra.mxu0 %v4119
      %v6120 = vpop.f32.mrf.mxu0
      %v6121 = vadd.f32 %v5928, %v6120
      %v6122 = vpop.f32.mrf.mxu0
      %v6123 = vadd.f32 %v5930, %v6122
      %6124 = vmatmul.bf16.gmra.mxu0 %v4122
      %v6125 = vpop.f32.mrf.mxu0
      %v6126 = vadd.f32 %v5933, %v6125
      %v6127 = vpop.f32.mrf.mxu0
      %v6128 = vadd.f32 %v5935, %v6127
      %6129 = vmatmul.bf16.gmra.mxu0 %v4125
      %v6130 = vpop.f32.mrf.mxu0
      %v6131 = vadd.f32 %v5938, %v6130
      %v6132 = vpop.f32.mrf.mxu0
      %v6133 = vadd.f32 %v5940, %v6132
      %6134 = vmatmul.bf16.gmra.mxu0 %v4128
      %v6135 = vpop.f32.mrf.mxu0
      %v6136 = vpop.f32.mrf.mxu0
      %6137 = vmatmul.bf16.gmra.mxu0 %v4131
      %v6138 = vpop.f32.mrf.mxu0
      %v6139 = vadd.f32 %v5946, %v6138
      %v6140 = vpop.f32.mrf.mxu0
      %v6141 = vadd.f32 %v5948, %v6140
      %6142 = vmatmul.bf16.gmra.mxu0 %v4134
      %v6143 = vpop.f32.mrf.mxu0
      %v6144 = vadd.f32 %v5951, %v6143
      %v6145 = vpop.f32.mrf.mxu0
      %v6146 = vadd.f32 %v5953, %v6145
      %6147 = vmatmul.bf16.gmra.mxu0 %v4137
      %v6148 = vpop.f32.mrf.mxu0
      %v6149 = vadd.f32 %v5956, %v6148
      %v6150 = vpop.f32.mrf.mxu0
      %v6151 = vadd.f32 %v5958, %v6150
      %6152 = vmatmul.bf16.gmra.mxu0 %v4140
      %v6153 = vpop.f32.mrf.mxu0
      %v6154 = vadd.f32 %v5961, %v6153
      %v6155 = vpop.f32.mrf.mxu0
      %v6156 = vadd.f32 %v5963, %v6155
      %6157 = vmatmul.bf16.gmra.mxu0 %v4143
      %v6158 = vpop.f32.mrf.mxu0
      %v6159 = vpop.f32.mrf.mxu0
      %6160 = vmatmul.bf16.gmra.mxu0 %v4146
      %v6161 = vpop.f32.mrf.mxu0
      %v6162 = vadd.f32 %v5969, %v6161
      %v6163 = vpop.f32.mrf.mxu0
      %v6164 = vadd.f32 %v5971, %v6163
      %6165 = vmatmul.bf16.gmra.mxu0 %v4149
      %v6166 = vpop.f32.mrf.mxu0
      %v6167 = vadd.f32 %v5974, %v6166
      %v6168 = vpop.f32.mrf.mxu0
      %v6169 = vadd.f32 %v5976, %v6168
      %6170 = vmatmul.bf16.gmra.mxu0 %v4152
      %v6171 = vpop.f32.mrf.mxu0
      %v6172 = vadd.f32 %v5979, %v6171
      %v6173 = vpop.f32.mrf.mxu0
      %v6174 = vadd.f32 %v5981, %v6173
      %6175 = vmatmul.bf16.gmra.mxu0 %v4155
      %v6176 = vpop.f32.mrf.mxu0
      %v6177 = vadd.f32 %v5984, %v6176
      %v6178 = vpop.f32.mrf.mxu0
      %v6179 = vadd.f32 %v5986, %v6178
      %6180 = vmatmul.bf16.gmra.mxu0 %v4158
      %v6181 = vpop.f32.mrf.mxu0
      %v6182 = vpop.f32.mrf.mxu0
      %6183 = vmatmul.bf16.gmra.mxu0 %v4161
      %v6184 = vpop.f32.mrf.mxu0
      %v6185 = vadd.f32 %v5992, %v6184
      %v6186 = vpop.f32.mrf.mxu0
      %v6187 = vadd.f32 %v5994, %v6186
      %6188 = vmatmul.bf16.gmra.mxu0 %v4164
      %v6189 = vpop.f32.mrf.mxu0
      %v6190 = vadd.f32 %v5997, %v6189
      %v6191 = vpop.f32.mrf.mxu0
      %v6192 = vadd.f32 %v5999, %v6191
      %6193 = vmatmul.bf16.gmra.mxu0 %v4167
      %v6194 = vpop.f32.mrf.mxu0
      %v6195 = vadd.f32 %v6002, %v6194
      %v6196 = vpop.f32.mrf.mxu0
      %v6197 = vadd.f32 %v6004, %v6196
      %6198 = vmatmul.bf16.gmra.mxu0 %v4170
      %v6199 = vpop.f32.mrf.mxu0
      %v6200 = vadd.f32 %v6007, %v6199
      %v6201 = vpop.f32.mrf.mxu0
      %v6202 = vadd.f32 %v6009, %v6201
      %6203 = vmatmul.bf16.gmra.mxu0 %v4173
      %v6204 = vpop.f32.mrf.mxu0
      %v6205 = vpop.f32.mrf.mxu0
      %6206 = vmatmul.bf16.gmra.mxu0 %v4176
      %v6207 = vpop.f32.mrf.mxu0
      %v6208 = vadd.f32 %v6015, %v6207
      %v6209 = vpop.f32.mrf.mxu0
      %v6210 = vadd.f32 %v6017, %v6209
      %6211 = vmatmul.bf16.gmra.mxu0 %v4179
      %v6212 = vpop.f32.mrf.mxu0
      %v6213 = vadd.f32 %v6020, %v6212
      %v6214 = vpop.f32.mrf.mxu0
      %v6215 = vadd.f32 %v6022, %v6214
      %6216 = vmatmul.bf16.gmra.mxu0 %v4182
      %v6217 = vpop.f32.mrf.mxu0
      %v6218 = vadd.f32 %v6025, %v6217
      %v6219 = vpop.f32.mrf.mxu0
      %v6220 = vadd.f32 %v6027, %v6219
      %6221 = vmatmul.bf16.gmra.mxu0 %v4185
      %v6222 = vpop.f32.mrf.mxu0
      %v6223 = vadd.f32 %v6030, %v6222
      %v6224 = vpop.f32.mrf.mxu0
      %v6225 = vadd.f32 %v6032, %v6224
      %6226 = vmatmul.bf16.gmra.mxu0 %v4188
      %v6227 = vpop.f32.mrf.mxu0
      %v6228 = vpop.f32.mrf.mxu0
      %6229 = vmatmul.bf16.gmra.mxu0 %v4191
      %v6230 = vpop.f32.mrf.mxu0
      %v6231 = vadd.f32 %v6038, %v6230
      %v6232 = vpop.f32.mrf.mxu0
      %v6233 = vadd.f32 %v6040, %v6232
      %6234 = vmatmul.bf16.gmra.mxu0 %v4194
      %v6235 = vpop.f32.mrf.mxu0
      %v6236 = vadd.f32 %v6043, %v6235
      %v6237 = vpop.f32.mrf.mxu0
      %v6238 = vadd.f32 %v6045, %v6237
      %6239 = vmatmul.bf16.gmra.mxu0 %v4197
      %v6240 = vpop.f32.mrf.mxu0
      %v6241 = vadd.f32 %v6048, %v6240
      %v6242 = vpop.f32.mrf.mxu0
      %v6243 = vadd.f32 %v6050, %v6242
      %6244 = vmatmul.bf16.gmra.mxu0 %v4200
      %v6245 = vpop.f32.mrf.mxu0
      %v6246 = vadd.f32 %v6053, %v6245
      %v6247 = vpop.f32.mrf.mxu0
      %v6248 = vadd.f32 %v6055, %v6247
      %6249 = vdwg.mxu0
      %6250 = vmatpush.bf16.msra.mxu0 %v4633
      %6251 = vmatpush.bf16.msra.mxu0 %v4630
      %6252 = vmatpush.bf16.msra.mxu0 %v4627
      %6253 = vmatpush.bf16.msra.mxu0 %v4624
      %6254 = vmatpush.bf16.msra.mxu0 %v4621
      %6255 = vmatpush.bf16.msra.mxu0 %v4618
      %6256 = vmatpush.bf16.msra.mxu0 %v4615
      %6257 = vmatpush.bf16.msra.mxu0 %v4612
      %6258 = vmatmul.bf16.gmra.mxu0 %v4084
      %v6259 = vpop.f32.mrf.mxu0
      %v6260 = vpop.f32.mrf.mxu0
      %6261 = vmatmul.bf16.gmra.mxu0 %v4087
      %v6262 = vpop.f32.mrf.mxu0
      %v6263 = vadd.f32 %v6070, %v6262
      %v6264 = vpop.f32.mrf.mxu0
      %v6265 = vadd.f32 %v6072, %v6264
      %6266 = vmatmul.bf16.gmra.mxu0 %v4090
      %v6267 = vpop.f32.mrf.mxu0
      %v6268 = vadd.f32 %v6075, %v6267
      %v6269 = vpop.f32.mrf.mxu0
      %v6270 = vadd.f32 %v6077, %v6269
      %6271 = vmatmul.bf16.gmra.mxu0 %v4093
      %v6272 = vpop.f32.mrf.mxu0
      %v6273 = vadd.f32 %v6080, %v6272
      %v6274 = vpop.f32.mrf.mxu0
      %v6275 = vadd.f32 %v6082, %v6274
      %6276 = vmatmul.bf16.gmra.mxu0 %v4096
      %v6277 = vpop.f32.mrf.mxu0
      %v6278 = vadd.f32 %v6085, %v6277
      %v6279 = vpop.f32.mrf.mxu0
      %v6280 = vadd.f32 %v6087, %v6279
      %6281 = vmatmul.bf16.gmra.mxu0 %v4099
      %v6282 = vpop.f32.mrf.mxu0
      %v6283 = vpop.f32.mrf.mxu0
      %6284 = vmatmul.bf16.gmra.mxu0 %v4102
      %v6285 = vpop.f32.mrf.mxu0
      %v6286 = vadd.f32 %v6093, %v6285
      %v6287 = vpop.f32.mrf.mxu0
      %v6288 = vadd.f32 %v6095, %v6287
      %6289 = vmatmul.bf16.gmra.mxu0 %v4105
      %v6290 = vpop.f32.mrf.mxu0
      %v6291 = vadd.f32 %v6098, %v6290
      %v6292 = vpop.f32.mrf.mxu0
      %v6293 = vadd.f32 %v6100, %v6292
      %6294 = vmatmul.bf16.gmra.mxu0 %v4108
      %v6295 = vpop.f32.mrf.mxu0
      %v6296 = vadd.f32 %v6103, %v6295
      %v6297 = vpop.f32.mrf.mxu0
      %v6298 = vadd.f32 %v6105, %v6297
      %6299 = vmatmul.bf16.gmra.mxu0 %v4111
      %v6300 = vpop.f32.mrf.mxu0
      %v6301 = vadd.f32 %v6108, %v6300
      %v6302 = vpop.f32.mrf.mxu0
      %v6303 = vadd.f32 %v6110, %v6302
      %6304 = vmatmul.bf16.gmra.mxu0 %v4114
      %v6305 = vpop.f32.mrf.mxu0
      %v6306 = vpop.f32.mrf.mxu0
      %6307 = vmatmul.bf16.gmra.mxu0 %v4117
      %v6308 = vpop.f32.mrf.mxu0
      %v6309 = vadd.f32 %v6116, %v6308
      %v6310 = vpop.f32.mrf.mxu0
      %v6311 = vadd.f32 %v6118, %v6310
      %6312 = vmatmul.bf16.gmra.mxu0 %v4120
      %v6313 = vpop.f32.mrf.mxu0
      %v6314 = vadd.f32 %v6121, %v6313
      %v6315 = vpop.f32.mrf.mxu0
      %v6316 = vadd.f32 %v6123, %v6315
      %6317 = vmatmul.bf16.gmra.mxu0 %v4123
      %v6318 = vpop.f32.mrf.mxu0
      %v6319 = vadd.f32 %v6126, %v6318
      %v6320 = vpop.f32.mrf.mxu0
      %v6321 = vadd.f32 %v6128, %v6320
      %6322 = vmatmul.bf16.gmra.mxu0 %v4126
      %v6323 = vpop.f32.mrf.mxu0
      %v6324 = vadd.f32 %v6131, %v6323
      %v6325 = vpop.f32.mrf.mxu0
      %v6326 = vadd.f32 %v6133, %v6325
      %6327 = vmatmul.bf16.gmra.mxu0 %v4129
      %v6328 = vpop.f32.mrf.mxu0
      %v6329 = vpop.f32.mrf.mxu0
      %6330 = vmatmul.bf16.gmra.mxu0 %v4132
      %v6331 = vpop.f32.mrf.mxu0
      %v6332 = vadd.f32 %v6139, %v6331
      %v6333 = vpop.f32.mrf.mxu0
      %v6334 = vadd.f32 %v6141, %v6333
      %6335 = vmatmul.bf16.gmra.mxu0 %v4135
      %v6336 = vpop.f32.mrf.mxu0
      %v6337 = vadd.f32 %v6144, %v6336
      %v6338 = vpop.f32.mrf.mxu0
      %v6339 = vadd.f32 %v6146, %v6338
      %6340 = vmatmul.bf16.gmra.mxu0 %v4138
      %v6341 = vpop.f32.mrf.mxu0
      %v6342 = vadd.f32 %v6149, %v6341
      %v6343 = vpop.f32.mrf.mxu0
      %v6344 = vadd.f32 %v6151, %v6343
      %6345 = vmatmul.bf16.gmra.mxu0 %v4141
      %v6346 = vpop.f32.mrf.mxu0
      %v6347 = vadd.f32 %v6154, %v6346
      %v6348 = vpop.f32.mrf.mxu0
      %v6349 = vadd.f32 %v6156, %v6348
      %6350 = vmatmul.bf16.gmra.mxu0 %v4144
      %v6351 = vpop.f32.mrf.mxu0
      %v6352 = vpop.f32.mrf.mxu0
      %6353 = vmatmul.bf16.gmra.mxu0 %v4147
      %v6354 = vpop.f32.mrf.mxu0
      %v6355 = vadd.f32 %v6162, %v6354
      %v6356 = vpop.f32.mrf.mxu0
      %v6357 = vadd.f32 %v6164, %v6356
      %6358 = vmatmul.bf16.gmra.mxu0 %v4150
      %v6359 = vpop.f32.mrf.mxu0
      %v6360 = vadd.f32 %v6167, %v6359
      %v6361 = vpop.f32.mrf.mxu0
      %v6362 = vadd.f32 %v6169, %v6361
      %6363 = vmatmul.bf16.gmra.mxu0 %v4153
      %v6364 = vpop.f32.mrf.mxu0
      %v6365 = vadd.f32 %v6172, %v6364
      %v6366 = vpop.f32.mrf.mxu0
      %v6367 = vadd.f32 %v6174, %v6366
      %6368 = vmatmul.bf16.gmra.mxu0 %v4156
      %v6369 = vpop.f32.mrf.mxu0
      %v6370 = vadd.f32 %v6177, %v6369
      %v6371 = vpop.f32.mrf.mxu0
      %v6372 = vadd.f32 %v6179, %v6371
      %6373 = vmatmul.bf16.gmra.mxu0 %v4159
      %v6374 = vpop.f32.mrf.mxu0
      %v6375 = vpop.f32.mrf.mxu0
      %6376 = vmatmul.bf16.gmra.mxu0 %v4162
      %v6377 = vpop.f32.mrf.mxu0
      %v6378 = vadd.f32 %v6185, %v6377
      %v6379 = vpop.f32.mrf.mxu0
      %v6380 = vadd.f32 %v6187, %v6379
      %6381 = vmatmul.bf16.gmra.mxu0 %v4165
      %v6382 = vpop.f32.mrf.mxu0
      %v6383 = vadd.f32 %v6190, %v6382
      %v6384 = vpop.f32.mrf.mxu0
      %v6385 = vadd.f32 %v6192, %v6384
      %6386 = vmatmul.bf16.gmra.mxu0 %v4168
      %v6387 = vpop.f32.mrf.mxu0
      %v6388 = vadd.f32 %v6195, %v6387
      %v6389 = vpop.f32.mrf.mxu0
      %v6390 = vadd.f32 %v6197, %v6389
      %6391 = vmatmul.bf16.gmra.mxu0 %v4171
      %v6392 = vpop.f32.mrf.mxu0
      %v6393 = vadd.f32 %v6200, %v6392
      %v6394 = vpop.f32.mrf.mxu0
      %v6395 = vadd.f32 %v6202, %v6394
      %6396 = vmatmul.bf16.gmra.mxu0 %v4174
      %v6397 = vpop.f32.mrf.mxu0
      %v6398 = vpop.f32.mrf.mxu0
      %6399 = vmatmul.bf16.gmra.mxu0 %v4177
      %v6400 = vpop.f32.mrf.mxu0
      %v6401 = vadd.f32 %v6208, %v6400
      %v6402 = vpop.f32.mrf.mxu0
      %v6403 = vadd.f32 %v6210, %v6402
      %6404 = vmatmul.bf16.gmra.mxu0 %v4180
      %v6405 = vpop.f32.mrf.mxu0
      %v6406 = vadd.f32 %v6213, %v6405
      %v6407 = vpop.f32.mrf.mxu0
      %v6408 = vadd.f32 %v6215, %v6407
      %6409 = vmatmul.bf16.gmra.mxu0 %v4183
      %v6410 = vpop.f32.mrf.mxu0
      %v6411 = vadd.f32 %v6218, %v6410
      %v6412 = vpop.f32.mrf.mxu0
      %v6413 = vadd.f32 %v6220, %v6412
      %6414 = vmatmul.bf16.gmra.mxu0 %v4186
      %v6415 = vpop.f32.mrf.mxu0
      %v6416 = vadd.f32 %v6223, %v6415
      %v6417 = vpop.f32.mrf.mxu0
      %v6418 = vadd.f32 %v6225, %v6417
      %6419 = vmatmul.bf16.gmra.mxu0 %v4189
      %v6420 = vpop.f32.mrf.mxu0
      %v6421 = vpop.f32.mrf.mxu0
      %6422 = vmatmul.bf16.gmra.mxu0 %v4192
      %v6423 = vpop.f32.mrf.mxu0
      %v6424 = vadd.f32 %v6231, %v6423
      %v6425 = vpop.f32.mrf.mxu0
      %v6426 = vadd.f32 %v6233, %v6425
      %6427 = vmatmul.bf16.gmra.mxu0 %v4195
      %v6428 = vpop.f32.mrf.mxu0
      %v6429 = vadd.f32 %v6236, %v6428
      %v6430 = vpop.f32.mrf.mxu0
      %v6431 = vadd.f32 %v6238, %v6430
      %6432 = vmatmul.bf16.gmra.mxu0 %v4198
      %v6433 = vpop.f32.mrf.mxu0
      %v6434 = vadd.f32 %v6241, %v6433
      %v6435 = vpop.f32.mrf.mxu0
      %v6436 = vadd.f32 %v6243, %v6435
      %6437 = vmatmul.bf16.gmra.mxu0 %v4201
      %v6438 = vpop.f32.mrf.mxu0
      %v6439 = vadd.f32 %v6246, %v6438
      %v6440 = vpop.f32.mrf.mxu0
      %v6441 = vadd.f32 %v6248, %v6440
      %6442 = vdwg.mxu0
      %v6443 = vadd.f32 %v5102, %v5682
      %v6444 = vadd.f32 %v5104, %v5685
      %v6445 = vadd.f32 %v5107, %v5687
      %v6446 = vadd.f32 %v5109, %v5690
      %v6447 = vadd.f32 %v5112, %v5692
      %v6448 = vadd.f32 %v5114, %v5695
      %v6449 = vadd.f32 %v5117, %v5697
      %v6450 = vadd.f32 %v5119, %v5700
      %v6451 = vadd.f32 %v5125, %v5705
      %v6452 = vadd.f32 %v5127, %v5708
      %v6453 = vadd.f32 %v5130, %v5710
      %v6454 = vadd.f32 %v5132, %v5713
      %v6455 = vadd.f32 %v5135, %v5715
      %v6456 = vadd.f32 %v5137, %v5718
      %v6457 = vadd.f32 %v5140, %v5720
      %v6458 = vadd.f32 %v5142, %v5723
      %v6459 = vadd.f32 %v5148, %v5728
      %v6460 = vadd.f32 %v5150, %v5731
      %v6461 = vadd.f32 %v5153, %v5733
      %v6462 = vadd.f32 %v5155, %v5736
      %v6463 = vadd.f32 %v5158, %v5738
      %v6464 = vadd.f32 %v5160, %v5741
      %v6465 = vadd.f32 %v5163, %v5743
      %v6466 = vadd.f32 %v5165, %v5746
      %v6467 = vadd.f32 %v5171, %v5751
      %v6468 = vadd.f32 %v5173, %v5754
      %v6469 = vadd.f32 %v5176, %v5756
      %v6470 = vadd.f32 %v5178, %v5759
      %v6471 = vadd.f32 %v5181, %v5761
      %v6472 = vadd.f32 %v5183, %v5764
      %v6473 = vadd.f32 %v5186, %v5766
      %v6474 = vadd.f32 %v5188, %v5769
      %v6475 = vadd.f32 %v5194, %v5774
      %v6476 = vadd.f32 %v5196, %v5777
      %v6477 = vadd.f32 %v5199, %v5779
      %v6478 = vadd.f32 %v5201, %v5782
      %v6479 = vadd.f32 %v5204, %v5784
      %v6480 = vadd.f32 %v5206, %v5787
      %v6481 = vadd.f32 %v5209, %v5789
      %v6482 = vadd.f32 %v5211, %v5792
      %v6483 = vadd.f32 %v5217, %v5797
      %v6484 = vadd.f32 %v5219, %v5800
      %v6485 = vadd.f32 %v5222, %v5802
      %v6486 = vadd.f32 %v5224, %v5805
      %v6487 = vadd.f32 %v5227, %v5807
      %v6488 = vadd.f32 %v5229, %v5810
      %v6489 = vadd.f32 %v5232, %v5812
      %v6490 = vadd.f32 %v5234, %v5815
      %v6491 = vadd.f32 %v5240, %v5820
      %v6492 = vadd.f32 %v5242, %v5823
      %v6493 = vadd.f32 %v5245, %v5825
      %v6494 = vadd.f32 %v5247, %v5828
      %v6495 = vadd.f32 %v5250, %v5830
      %v6496 = vadd.f32 %v5252, %v5833
      %v6497 = vadd.f32 %v5255, %v5835
      %v6498 = vadd.f32 %v5257, %v5838
      %v6499 = vadd.f32 %v5263, %v5843
      %v6500 = vadd.f32 %v5265, %v5846
      %v6501 = vadd.f32 %v5268, %v5848
      %v6502 = vadd.f32 %v5270, %v5851
      %v6503 = vadd.f32 %v5273, %v5853
      %v6504 = vadd.f32 %v5275, %v5856
      %v6505 = vadd.f32 %v5278, %v5858
      %v6506 = vadd.f32 %v5280, %v5861
      %v6507 = vadd.f32 %v6443, %v6263
      %v6508 = vadd.f32 %v6444, %v6265
      %v6509 = vadd.f32 %v6445, %v6268
      %v6510 = vadd.f32 %v6446, %v6270
      %v6511 = vadd.f32 %v6447, %v6273
      %v6512 = vadd.f32 %v6448, %v6275
      %v6513 = vadd.f32 %v6449, %v6278
      %v6514 = vadd.f32 %v6450, %v6280
      %v6515 = vadd.f32 %v6451, %v6286
      %v6516 = vadd.f32 %v6452, %v6288
      %v6517 = vadd.f32 %v6453, %v6291
      %v6518 = vadd.f32 %v6454, %v6293
      %v6519 = vadd.f32 %v6455, %v6296
      %v6520 = vadd.f32 %v6456, %v6298
      %v6521 = vadd.f32 %v6457, %v6301
      %v6522 = vadd.f32 %v6458, %v6303
      %v6523 = vadd.f32 %v6459, %v6309
      %v6524 = vadd.f32 %v6460, %v6311
      %v6525 = vadd.f32 %v6461, %v6314
      %v6526 = vadd.f32 %v6462, %v6316
      %v6527 = vadd.f32 %v6463, %v6319
      %v6528 = vadd.f32 %v6464, %v6321
      %v6529 = vadd.f32 %v6465, %v6324
      %v6530 = vadd.f32 %v6466, %v6326
      %v6531 = vadd.f32 %v6467, %v6332
      %v6532 = vadd.f32 %v6468, %v6334
      %v6533 = vadd.f32 %v6469, %v6337
      %v6534 = vadd.f32 %v6470, %v6339
      %v6535 = vadd.f32 %v6471, %v6342
      %v6536 = vadd.f32 %v6472, %v6344
      %v6537 = vadd.f32 %v6473, %v6347
      %v6538 = vadd.f32 %v6474, %v6349
      %v6539 = vadd.f32 %v6475, %v6355
      %v6540 = vadd.f32 %v6476, %v6357
      %v6541 = vadd.f32 %v6477, %v6360
      %v6542 = vadd.f32 %v6478, %v6362
      %v6543 = vadd.f32 %v6479, %v6365
      %v6544 = vadd.f32 %v6480, %v6367
      %v6545 = vadd.f32 %v6481, %v6370
      %v6546 = vadd.f32 %v6482, %v6372
      %v6547 = vadd.f32 %v6483, %v6378
      %v6548 = vadd.f32 %v6484, %v6380
      %v6549 = vadd.f32 %v6485, %v6383
      %v6550 = vadd.f32 %v6486, %v6385
      %v6551 = vadd.f32 %v6487, %v6388
      %v6552 = vadd.f32 %v6488, %v6390
      %v6553 = vadd.f32 %v6489, %v6393
      %v6554 = vadd.f32 %v6490, %v6395
      %v6555 = vadd.f32 %v6491, %v6401
      %v6556 = vadd.f32 %v6492, %v6403
      %v6557 = vadd.f32 %v6493, %v6406
      %v6558 = vadd.f32 %v6494, %v6408
      %v6559 = vadd.f32 %v6495, %v6411
      %v6560 = vadd.f32 %v6496, %v6413
      %v6561 = vadd.f32 %v6497, %v6416
      %v6562 = vadd.f32 %v6498, %v6418
      %v6563 = vadd.f32 %v6499, %v6424
      %v6564 = vadd.f32 %v6500, %v6426
      %v6565 = vadd.f32 %v6501, %v6429
      %v6566 = vadd.f32 %v6502, %v6431
      %v6567 = vadd.f32 %v6503, %v6434
      %v6568 = vadd.f32 %v6504, %v6436
      %v6569 = vadd.f32 %v6505, %v6439
      %v6570 = vadd.f32 %v6506, %v6441
      %v6571 = vld [vmem:[%s208] sm:$0xff]
      %v6572 = vld [vmem:[%s208 + $0x8] sm:$0xff]
      %v6573 = vld [vmem:[%s208 + $0x10] sm:$0xff]
      %v6574 = vld [vmem:[%s208 + $0x18] sm:$0xff]
      %v6575 = vld [vmem:[%s208 + $0x20] sm:$0xff]
      %v6576 = vld [vmem:[%s208 + $0x28] sm:$0xff]
      %v6577 = vld [vmem:[%s208 + $0x30] sm:$0xff]
      %v6578 = vld [vmem:[%s208 + $0x38] sm:$0xff]
      %v6579 = vld [vmem:[%s208 + $0x40] sm:$0xff]
      %v6580 = vld [vmem:[%s208 + $0x48] sm:$0xff]
      %v6581 = vld [vmem:[%s208 + $0x50] sm:$0xff]
      %v6582 = vld [vmem:[%s208 + $0x58] sm:$0xff]
      %v6583 = vld [vmem:[%s208 + $0x60] sm:$0xff]
      %v6584 = vld [vmem:[%s208 + $0x68] sm:$0xff]
      %v6585 = vld [vmem:[%s208 + $0x70] sm:$0xff]
      %v6586 = vld [vmem:[%s208 + $0x78] sm:$0xff]
      %v6587 = vld [vmem:[%s208 + $0x80] sm:$0xff]
      %v6588 = vld [vmem:[%s208 + $0x88] sm:$0xff]
      %v6589 = vld [vmem:[%s208 + $0x90] sm:$0xff]
      %v6590 = vld [vmem:[%s208 + $0x98] sm:$0xff]
      %v6591 = vld [vmem:[%s208 + $0xa0] sm:$0xff]
      %v6592 = vld [vmem:[%s208 + $0xa8] sm:$0xff]
      %v6593 = vld [vmem:[%s208 + $0xb0] sm:$0xff]
      %v6594 = vld [vmem:[%s208 + $0xb8] sm:$0xff]
      %v6595 = vld [vmem:[%s208 + $0xc0] sm:$0xff]
      %v6596 = vld [vmem:[%s208 + $0xc8] sm:$0xff]
      %v6597 = vld [vmem:[%s208 + $0xd0] sm:$0xff]
      %v6598 = vld [vmem:[%s208 + $0xd8] sm:$0xff]
      %v6599 = vld [vmem:[%s208 + $0xe0] sm:$0xff]
      %v6600 = vld [vmem:[%s208 + $0xe8] sm:$0xff]
      %v6601 = vld [vmem:[%s208 + $0xf0] sm:$0xff]
      %v6602 = vld [vmem:[%s208 + $0xf8] sm:$0xff]
      %v6603 = vld [vmem:[%s208 + $0x100] sm:$0xff]
      %v6604 = vld [vmem:[%s208 + $0x108] sm:$0xff]
      %v6605 = vld [vmem:[%s208 + $0x110] sm:$0xff]
      %v6606 = vld [vmem:[%s208 + $0x118] sm:$0xff]
      %v6607 = vld [vmem:[%s208 + $0x120] sm:$0xff]
      %v6608 = vld [vmem:[%s208 + $0x128] sm:$0xff]
      %v6609 = vld [vmem:[%s208 + $0x130] sm:$0xff]
      %v6610 = vld [vmem:[%s208 + $0x138] sm:$0xff]
      %v6611 = vld [vmem:[%s208 + $0x140] sm:$0xff]
      %v6612 = vld [vmem:[%s208 + $0x148] sm:$0xff]
      %v6613 = vld [vmem:[%s208 + $0x150] sm:$0xff]
      %v6614 = vld [vmem:[%s208 + $0x158] sm:$0xff]
      %v6615 = vld [vmem:[%s208 + $0x160] sm:$0xff]
      %v6616 = vld [vmem:[%s208 + $0x168] sm:$0xff]
      %v6617 = vld [vmem:[%s208 + $0x170] sm:$0xff]
      %v6618 = vld [vmem:[%s208 + $0x178] sm:$0xff]
      %v6619 = vld [vmem:[%s208 + $0x180] sm:$0xff]
      %v6620 = vld [vmem:[%s208 + $0x188] sm:$0xff]
      %v6621 = vld [vmem:[%s208 + $0x190] sm:$0xff]
      %v6622 = vld [vmem:[%s208 + $0x198] sm:$0xff]
      %v6623 = vld [vmem:[%s208 + $0x1a0] sm:$0xff]
      %v6624 = vld [vmem:[%s208 + $0x1a8] sm:$0xff]
      %v6625 = vld [vmem:[%s208 + $0x1b0] sm:$0xff]
      %v6626 = vld [vmem:[%s208 + $0x1b8] sm:$0xff]
      %v6627 = vld [vmem:[%s208 + $0x1c0] sm:$0xff]
      %v6628 = vld [vmem:[%s208 + $0x1c8] sm:$0xff]
      %v6629 = vld [vmem:[%s208 + $0x1d0] sm:$0xff]
      %v6630 = vld [vmem:[%s208 + $0x1d8] sm:$0xff]
      %v6631 = vld [vmem:[%s208 + $0x1e0] sm:$0xff]
      %v6632 = vld [vmem:[%s208 + $0x1e8] sm:$0xff]
      %v6633 = vld [vmem:[%s208 + $0x1f0] sm:$0xff]
      %v6634 = vld [vmem:[%s208 + $0x1f8] sm:$0xff]
      %v6635 = vadd.f32 %v6571, %v6507
      %v6636 = vadd.f32 %v6572, %v6508
      %v6637 = vadd.f32 %v6573, %v6509
      %v6638 = vadd.f32 %v6574, %v6510
      %v6639 = vadd.f32 %v6575, %v6511
      %v6640 = vadd.f32 %v6576, %v6512
      %v6641 = vadd.f32 %v6577, %v6513
      %v6642 = vadd.f32 %v6578, %v6514
      %v6643 = vadd.f32 %v6579, %v6515
      %v6644 = vadd.f32 %v6580, %v6516
      %v6645 = vadd.f32 %v6581, %v6517
      %v6646 = vadd.f32 %v6582, %v6518
      %v6647 = vadd.f32 %v6583, %v6519
      %v6648 = vadd.f32 %v6584, %v6520
      %v6649 = vadd.f32 %v6585, %v6521
      %v6650 = vadd.f32 %v6586, %v6522
      %v6651 = vadd.f32 %v6587, %v6523
      %v6652 = vadd.f32 %v6588, %v6524
      %v6653 = vadd.f32 %v6589, %v6525
      %v6654 = vadd.f32 %v6590, %v6526
      %v6655 = vadd.f32 %v6591, %v6527
      %v6656 = vadd.f32 %v6592, %v6528
      %v6657 = vadd.f32 %v6593, %v6529
      %v6658 = vadd.f32 %v6594, %v6530
      %v6659 = vadd.f32 %v6595, %v6531
      %v6660 = vadd.f32 %v6596, %v6532
      %v6661 = vadd.f32 %v6597, %v6533
      %v6662 = vadd.f32 %v6598, %v6534
      %v6663 = vadd.f32 %v6599, %v6535
      %v6664 = vadd.f32 %v6600, %v6536
      %v6665 = vadd.f32 %v6601, %v6537
      %v6666 = vadd.f32 %v6602, %v6538
      %v6667 = vadd.f32 %v6603, %v6539
      %v6668 = vadd.f32 %v6604, %v6540
      %v6669 = vadd.f32 %v6605, %v6541
      %v6670 = vadd.f32 %v6606, %v6542
      %v6671 = vadd.f32 %v6607, %v6543
      %v6672 = vadd.f32 %v6608, %v6544
      %v6673 = vadd.f32 %v6609, %v6545
      %v6674 = vadd.f32 %v6610, %v6546
      %v6675 = vadd.f32 %v6611, %v6547
      %v6676 = vadd.f32 %v6612, %v6548
      %v6677 = vadd.f32 %v6613, %v6549
      %v6678 = vadd.f32 %v6614, %v6550
      %v6679 = vadd.f32 %v6615, %v6551
      %v6680 = vadd.f32 %v6616, %v6552
      %v6681 = vadd.f32 %v6617, %v6553
      %v6682 = vadd.f32 %v6618, %v6554
      %v6683 = vadd.f32 %v6619, %v6555
      %v6684 = vadd.f32 %v6620, %v6556
      %v6685 = vadd.f32 %v6621, %v6557
      %v6686 = vadd.f32 %v6622, %v6558
      %v6687 = vadd.f32 %v6623, %v6559
      %v6688 = vadd.f32 %v6624, %v6560
      %v6689 = vadd.f32 %v6625, %v6561
      %v6690 = vadd.f32 %v6626, %v6562
      %v6691 = vadd.f32 %v6627, %v6563
      %v6692 = vadd.f32 %v6628, %v6564
      %v6693 = vadd.f32 %v6629, %v6565
      %v6694 = vadd.f32 %v6630, %v6566
      %v6695 = vadd.f32 %v6631, %v6567
      %v6696 = vadd.f32 %v6632, %v6568
      %v6697 = vadd.f32 %v6633, %v6569
      %v6698 = vadd.f32 %v6634, %v6570
      %6699 = vst [vmem:[%s208] sm:$0xff] %v6635
      %6700 = vst [vmem:[%s208 + $0x8] sm:$0xff] %v6636
      %6701 = vst [vmem:[%s208 + $0x10] sm:$0xff] %v6637
      %6702 = vst [vmem:[%s208 + $0x18] sm:$0xff] %v6638
      %6703 = vst [vmem:[%s208 + $0x20] sm:$0xff] %v6639
      %6704 = vst [vmem:[%s208 + $0x28] sm:$0xff] %v6640
      %6705 = vst [vmem:[%s208 + $0x30] sm:$0xff] %v6641
      %6706 = vst [vmem:[%s208 + $0x38] sm:$0xff] %v6642
      %6707 = vst [vmem:[%s208 + $0x40] sm:$0xff] %v6643
      %6708 = vst [vmem:[%s208 + $0x48] sm:$0xff] %v6644
      %6709 = vst [vmem:[%s208 + $0x50] sm:$0xff] %v6645
      %6710 = vst [vmem:[%s208 + $0x58] sm:$0xff] %v6646
      %6711 = vst [vmem:[%s208 + $0x60] sm:$0xff] %v6647
      %6712 = vst [vmem:[%s208 + $0x68] sm:$0xff] %v6648
      %6713 = vst [vmem:[%s208 + $0x70] sm:$0xff] %v6649
      %6714 = vst [vmem:[%s208 + $0x78] sm:$0xff] %v6650
      %6715 = vst [vmem:[%s208 + $0x80] sm:$0xff] %v6651
      %6716 = vst [vmem:[%s208 + $0x88] sm:$0xff] %v6652
      %6717 = vst [vmem:[%s208 + $0x90] sm:$0xff] %v6653
      %6718 = vst [vmem:[%s208 + $0x98] sm:$0xff] %v6654
      %6719 = vst [vmem:[%s208 + $0xa0] sm:$0xff] %v6655
      %6720 = vst [vmem:[%s208 + $0xa8] sm:$0xff] %v6656
      %6721 = vst [vmem:[%s208 + $0xb0] sm:$0xff] %v6657
      %6722 = vst [vmem:[%s208 + $0xb8] sm:$0xff] %v6658
      %6723 = vst [vmem:[%s208 + $0xc0] sm:$0xff] %v6659
      %6724 = vst [vmem:[%s208 + $0xc8] sm:$0xff] %v6660
      %6725 = vst [vmem:[%s208 + $0xd0] sm:$0xff] %v6661
      %6726 = vst [vmem:[%s208 + $0xd8] sm:$0xff] %v6662
      %6727 = vst [vmem:[%s208 + $0xe0] sm:$0xff] %v6663
      %6728 = vst [vmem:[%s208 + $0xe8] sm:$0xff] %v6664
      %6729 = vst [vmem:[%s208 + $0xf0] sm:$0xff] %v6665
      %6730 = vst [vmem:[%s208 + $0xf8] sm:$0xff] %v6666
      %6731 = vst [vmem:[%s208 + $0x100] sm:$0xff] %v6667
      %6732 = vst [vmem:[%s208 + $0x108] sm:$0xff] %v6668
      %6733 = vst [vmem:[%s208 + $0x110] sm:$0xff] %v6669
      %6734 = vst [vmem:[%s208 + $0x118] sm:$0xff] %v6670
      %6735 = vst [vmem:[%s208 + $0x120] sm:$0xff] %v6671
      %6736 = vst [vmem:[%s208 + $0x128] sm:$0xff] %v6672
      %6737 = vst [vmem:[%s208 + $0x130] sm:$0xff] %v6673
      %6738 = vst [vmem:[%s208 + $0x138] sm:$0xff] %v6674
      %6739 = vst [vmem:[%s208 + $0x140] sm:$0xff] %v6675
      %6740 = vst [vmem:[%s208 + $0x148] sm:$0xff] %v6676
      %6741 = vst [vmem:[%s208 + $0x150] sm:$0xff] %v6677
      %6742 = vst [vmem:[%s208 + $0x158] sm:$0xff] %v6678
      %6743 = vst [vmem:[%s208 + $0x160] sm:$0xff] %v6679
      %6744 = vst [vmem:[%s208 + $0x168] sm:$0xff] %v6680
      %6745 = vst [vmem:[%s208 + $0x170] sm:$0xff] %v6681
      %6746 = vst [vmem:[%s208 + $0x178] sm:$0xff] %v6682
      %6747 = vst [vmem:[%s208 + $0x180] sm:$0xff] %v6683
      %6748 = vst [vmem:[%s208 + $0x188] sm:$0xff] %v6684
      %6749 = vst [vmem:[%s208 + $0x190] sm:$0xff] %v6685
      %6750 = vst [vmem:[%s208 + $0x198] sm:$0xff] %v6686
      %6751 = vst [vmem:[%s208 + $0x1a0] sm:$0xff] %v6687
      %6752 = vst [vmem:[%s208 + $0x1a8] sm:$0xff] %v6688
      %6753 = vst [vmem:[%s208 + $0x1b0] sm:$0xff] %v6689
      %6754 = vst [vmem:[%s208 + $0x1b8] sm:$0xff] %v6690
      %6755 = vst [vmem:[%s208 + $0x1c0] sm:$0xff] %v6691
      %6756 = vst [vmem:[%s208 + $0x1c8] sm:$0xff] %v6692
      %6757 = vst [vmem:[%s208 + $0x1d0] sm:$0xff] %v6693
      %6758 = vst [vmem:[%s208 + $0x1d8] sm:$0xff] %v6694
      %6759 = vst [vmem:[%s208 + $0x1e0] sm:$0xff] %v6695
      %6760 = vst [vmem:[%s208 + $0x1e8] sm:$0xff] %v6696
      %6761 = vst [vmem:[%s208 + $0x1f0] sm:$0xff] %v6697
      %6762 = vst [vmem:[%s208 + $0x1f8] sm:$0xff] %v6698
      %s6763 = scalar_lea.vmem %s203, 240
      %v6764 = vld [vmem:[%s6763] sm:$0xff]
      %v6765 = vld [vmem:[%s6763 + $0x8] sm:$0xf]
      %v6766 = vld [vmem:[%s6763 + $0xc] sm:$0xff]
      %v6767 = vld [vmem:[%s6763 + $0x14] sm:$0xf]
      %v6768 = vld [vmem:[%s6763 + $0x18] sm:$0xff]
      %v6769 = vld [vmem:[%s6763 + $0x20] sm:$0xf]
      %v6770 = vld [vmem:[%s6763 + $0x24] sm:$0xff]
      %v6771 = vld [vmem:[%s6763 + $0x2c] sm:$0xf]
      %v6772 = vld [vmem:[%s6763 + $0x30] sm:$0xff]
      %v6773 = vld [vmem:[%s6763 + $0x38] sm:$0xf]
      %v6774 = vld [vmem:[%s6763 + $0x3c] sm:$0xff]
      %v6775 = vld [vmem:[%s6763 + $0x44] sm:$0xf]
      %v6776 = vld [vmem:[%s6763 + $0x48] sm:$0xff]
      %v6777 = vld [vmem:[%s6763 + $0x50] sm:$0xf]
      %v6778 = vld [vmem:[%s6763 + $0x54] sm:$0xff]
      %v6779 = vld [vmem:[%s6763 + $0x5c] sm:$0xf]
      %v6780 = vld [vmem:[%s6763 + $0x60] sm:$0xff]
      %v6781 = vld [vmem:[%s6763 + $0x68] sm:$0xf]
      %v6782 = vld [vmem:[%s6763 + $0x6c] sm:$0xff]
      %v6783 = vld [vmem:[%s6763 + $0x74] sm:$0xf]
      %v6784 = vld [vmem:[%s6763 + $0x78] sm:$0xff]
      %v6785 = vld [vmem:[%s6763 + $0x80] sm:$0xf]
      %v6786 = vld [vmem:[%s6763 + $0x84] sm:$0xff]
      %v6787 = vld [vmem:[%s6763 + $0x8c] sm:$0xf]
      %v6788 = vld [vmem:[%s6763 + $0x90] sm:$0xff]
      %v6789 = vld [vmem:[%s6763 + $0x98] sm:$0xf]
      %v6790 = vld [vmem:[%s6763 + $0x9c] sm:$0xff]
      %v6791 = vld [vmem:[%s6763 + $0xa4] sm:$0xf]
      %v6792 = vld [vmem:[%s6763 + $0xa8] sm:$0xff]
      %v6793 = vld [vmem:[%s6763 + $0xb0] sm:$0xf]
      %v6794 = vld [vmem:[%s6763 + $0xb4] sm:$0xff]
      %v6795 = vld [vmem:[%s6763 + $0xbc] sm:$0xf]
      %v6796 = vld [vmem:[%s6763 + $0xc0] sm:$0xff]
      %v6797 = vld [vmem:[%s6763 + $0xc8] sm:$0xf]
      %v6798 = vld [vmem:[%s6763 + $0xcc] sm:$0xff]
      %v6799 = vld [vmem:[%s6763 + $0xd4] sm:$0xf]
      %v6800 = vld [vmem:[%s6763 + $0xd8] sm:$0xff]
      %v6801 = vld [vmem:[%s6763 + $0xe0] sm:$0xf]
      %v6802 = vld [vmem:[%s6763 + $0xe4] sm:$0xff]
      %v6803 = vld [vmem:[%s6763 + $0xec] sm:$0xf]
      %v6804 = vld [vmem:[%s6763 + $0xf0] sm:$0xff]
      %v6805 = vld [vmem:[%s6763 + $0xf8] sm:$0xf]
      %v6806 = vld [vmem:[%s6763 + $0xfc] sm:$0xff]
      %v6807 = vld [vmem:[%s6763 + $0x104] sm:$0xf]
      %v6808 = vld [vmem:[%s6763 + $0x108] sm:$0xff]
      %v6809 = vld [vmem:[%s6763 + $0x110] sm:$0xf]
      %v6810 = vld [vmem:[%s6763 + $0x114] sm:$0xff]
      %v6811 = vld [vmem:[%s6763 + $0x11c] sm:$0xf]
      %v6812 = vld [vmem:[%s6763 + $0x120] sm:$0xff]
      %v6813 = vld [vmem:[%s6763 + $0x128] sm:$0xf]
      %v6814 = vld [vmem:[%s6763 + $0x12c] sm:$0xff]
      %v6815 = vld [vmem:[%s6763 + $0x134] sm:$0xf]
      %v6816 = vld [vmem:[%s6763 + $0x138] sm:$0xff]
      %v6817 = vld [vmem:[%s6763 + $0x140] sm:$0xf]
      %v6818 = vld [vmem:[%s6763 + $0x144] sm:$0xff]
      %v6819 = vld [vmem:[%s6763 + $0x14c] sm:$0xf]
      %v6820 = vld [vmem:[%s6763 + $0x150] sm:$0xff]
      %v6821 = vld [vmem:[%s6763 + $0x158] sm:$0xf]
      %v6822 = vld [vmem:[%s6763 + $0x15c] sm:$0xff]
      %v6823 = vld [vmem:[%s6763 + $0x164] sm:$0xf]
      %v6824 = vld [vmem:[%s6763 + $0x168] sm:$0xff]
      %v6825 = vld [vmem:[%s6763 + $0x170] sm:$0xf]
      %v6826 = vld [vmem:[%s6763 + $0x174] sm:$0xff]
      %v6827 = vld [vmem:[%s6763 + $0x17c] sm:$0xf]
      %v6828 = vld [vmem:[%s6763 + $0x180] sm:$0xff]
      %v6829 = vld [vmem:[%s6763 + $0x188] sm:$0xf]
      %v6830 = vld [vmem:[%s6763 + $0x18c] sm:$0xff]
      %v6831 = vld [vmem:[%s6763 + $0x194] sm:$0xf]
      %v6832 = vld [vmem:[%s6763 + $0x198] sm:$0xff]
      %v6833 = vld [vmem:[%s6763 + $0x1a0] sm:$0xf]
      %v6834 = vld [vmem:[%s6763 + $0x1a4] sm:$0xff]
      %v6835 = vld [vmem:[%s6763 + $0x1ac] sm:$0xf]
      %v6836 = vld [vmem:[%s6763 + $0x1b0] sm:$0xff]
      %v6837 = vld [vmem:[%s6763 + $0x1b8] sm:$0xf]
      %v6838 = vld [vmem:[%s6763 + $0x1bc] sm:$0xff]
      %v6839 = vld [vmem:[%s6763 + $0x1c4] sm:$0xf]
      %v6840 = vld [vmem:[%s6763 + $0x1c8] sm:$0xff]
      %v6841 = vld [vmem:[%s6763 + $0x1d0] sm:$0xf]
      %v6842 = vld [vmem:[%s6763 + $0x1d4] sm:$0xff]
      %v6843 = vld [vmem:[%s6763 + $0x1dc] sm:$0xf]
      %v6844 = vld [vmem:[%s6763 + $0x1e0] sm:$0xff]
      %v6845 = vld [vmem:[%s6763 + $0x1e8] sm:$0xf]
      %v6846 = vld [vmem:[%s6763 + $0x1ec] sm:$0xff]
      %v6847 = vld [vmem:[%s6763 + $0x1f4] sm:$0xf]
      %v6848 = vld [vmem:[%s6763 + $0x1f8] sm:$0xff]
      %v6849 = vld [vmem:[%s6763 + $0x200] sm:$0xf]
      %v6850 = vld [vmem:[%s6763 + $0x204] sm:$0xff]
      %v6851 = vld [vmem:[%s6763 + $0x20c] sm:$0xf]
      %v6852 = vld [vmem:[%s6763 + $0x210] sm:$0xff]
      %v6853 = vld [vmem:[%s6763 + $0x218] sm:$0xf]
      %v6854 = vld [vmem:[%s6763 + $0x21c] sm:$0xff]
      %v6855 = vld [vmem:[%s6763 + $0x224] sm:$0xf]
      %v6856 = vld [vmem:[%s6763 + $0x228] sm:$0xff]
      %v6857 = vld [vmem:[%s6763 + $0x230] sm:$0xf]
      %v6858 = vld [vmem:[%s6763 + $0x234] sm:$0xff]
      %v6859 = vld [vmem:[%s6763 + $0x23c] sm:$0xf]
      %v6860 = vld [vmem:[%s6763 + $0x240] sm:$0xff]
      %v6861 = vld [vmem:[%s6763 + $0x248] sm:$0xf]
      %v6862 = vld [vmem:[%s6763 + $0x24c] sm:$0xff]
      %v6863 = vld [vmem:[%s6763 + $0x254] sm:$0xf]
      %v6864 = vld [vmem:[%s6763 + $0x258] sm:$0xff]
      %v6865 = vld [vmem:[%s6763 + $0x260] sm:$0xf]
      %v6866 = vld [vmem:[%s6763 + $0x264] sm:$0xff]
      %v6867 = vld [vmem:[%s6763 + $0x26c] sm:$0xf]
      %v6868 = vld [vmem:[%s6763 + $0x270] sm:$0xff]
      %v6869 = vld [vmem:[%s6763 + $0x278] sm:$0xf]
      %v6870 = vld [vmem:[%s6763 + $0x27c] sm:$0xff]
      %v6871 = vld [vmem:[%s6763 + $0x284] sm:$0xf]
      %v6872 = vld [vmem:[%s6763 + $0x288] sm:$0xff]
      %v6873 = vld [vmem:[%s6763 + $0x290] sm:$0xf]
      %v6874 = vld [vmem:[%s6763 + $0x294] sm:$0xff]
      %v6875 = vld [vmem:[%s6763 + $0x29c] sm:$0xf]
      %v6876 = vld [vmem:[%s6763 + $0x2a0] sm:$0xff]
      %v6877 = vld [vmem:[%s6763 + $0x2a8] sm:$0xf]
      %v6878 = vld [vmem:[%s6763 + $0x2ac] sm:$0xff]
      %v6879 = vld [vmem:[%s6763 + $0x2b4] sm:$0xf]
      %v6880 = vld [vmem:[%s6763 + $0x2b8] sm:$0xff]
      %v6881 = vld [vmem:[%s6763 + $0x2c0] sm:$0xf]
      %v6882 = vld [vmem:[%s6763 + $0x2c4] sm:$0xff]
      %v6883 = vld [vmem:[%s6763 + $0x2cc] sm:$0xf]
      %v6884 = vld [vmem:[%s6763 + $0x2d0] sm:$0xff]
      %v6885 = vld [vmem:[%s6763 + $0x2d8] sm:$0xf]
      %v6886 = vld [vmem:[%s6763 + $0x2dc] sm:$0xff]
      %v6887 = vld [vmem:[%s6763 + $0x2e4] sm:$0xf]
      %v6888 = vld [vmem:[%s6763 + $0x2e8] sm:$0xff]
      %v6889 = vld [vmem:[%s6763 + $0x2f0] sm:$0xf]
      %v6890 = vld [vmem:[%s6763 + $0x2f4] sm:$0xff]
      %v6891 = vld [vmem:[%s6763 + $0x2fc] sm:$0xf]
      %v6892 = vld [vmem:[%s6763 + $0x300] sm:$0xff]
      %v6893 = vld [vmem:[%s6763 + $0x308] sm:$0xf]
      %v6894 = vld [vmem:[%s6763 + $0x30c] sm:$0xff]
      %v6895 = vld [vmem:[%s6763 + $0x314] sm:$0xf]
      %v6896 = vld [vmem:[%s6763 + $0x318] sm:$0xff]
      %v6897 = vld [vmem:[%s6763 + $0x320] sm:$0xf]
      %v6898 = vld [vmem:[%s6763 + $0x324] sm:$0xff]
      %v6899 = vld [vmem:[%s6763 + $0x32c] sm:$0xf]
      %v6900 = vld [vmem:[%s6763 + $0x330] sm:$0xff]
      %v6901 = vld [vmem:[%s6763 + $0x338] sm:$0xf]
      %v6902 = vld [vmem:[%s6763 + $0x33c] sm:$0xff]
      %v6903 = vld [vmem:[%s6763 + $0x344] sm:$0xf]
      %v6904 = vld [vmem:[%s6763 + $0x348] sm:$0xff]
      %v6905 = vld [vmem:[%s6763 + $0x350] sm:$0xf]
      %v6906 = vld [vmem:[%s6763 + $0x354] sm:$0xff]
      %v6907 = vld [vmem:[%s6763 + $0x35c] sm:$0xf]
      %v6908 = vld [vmem:[%s6763 + $0x360] sm:$0xff]
      %v6909 = vld [vmem:[%s6763 + $0x368] sm:$0xf]
      %v6910 = vld [vmem:[%s6763 + $0x36c] sm:$0xff]
      %v6911 = vld [vmem:[%s6763 + $0x374] sm:$0xf]
      %v6912 = vld [vmem:[%s6763 + $0x378] sm:$0xff]
      %v6913 = vld [vmem:[%s6763 + $0x380] sm:$0xf]
      %v6914 = vld [vmem:[%s6763 + $0x384] sm:$0xff]
      %v6915 = vld [vmem:[%s6763 + $0x38c] sm:$0xf]
      %v6916 = vld [vmem:[%s6763 + $0x390] sm:$0xff]
      %v6917 = vld [vmem:[%s6763 + $0x398] sm:$0xf]
      %v6918 = vld [vmem:[%s6763 + $0x39c] sm:$0xff]
      %v6919 = vld [vmem:[%s6763 + $0x3a4] sm:$0xf]
      %v6920 = vld [vmem:[%s6763 + $0x3a8] sm:$0xff]
      %v6921 = vld [vmem:[%s6763 + $0x3b0] sm:$0xf]
      %v6922 = vld [vmem:[%s6763 + $0x3b4] sm:$0xff]
      %v6923 = vld [vmem:[%s6763 + $0x3bc] sm:$0xf]
      %s6924 = scalar_lea.vmem %s1, 1152
      %v6925 = vld [vmem:[%s6924] sm:$0xff]
      %v6926 = vld [vmem:[%s6924 + $0x8] sm:$0xf]
      %v6927 = vld [vmem:[%s6924 + $0xc] sm:$0xff]
      %v6928 = vld [vmem:[%s6924 + $0x14] sm:$0xf]
      %v6929 = vld [vmem:[%s6924 + $0x18] sm:$0xff]
      %v6930 = vld [vmem:[%s6924 + $0x20] sm:$0xf]
      %v6931 = vld [vmem:[%s6924 + $0x24] sm:$0xff]
      %v6932 = vld [vmem:[%s6924 + $0x2c] sm:$0xf]
      %v6933 = vld [vmem:[%s6924 + $0x30] sm:$0xff]
      %v6934 = vld [vmem:[%s6924 + $0x38] sm:$0xf]
      %v6935 = vld [vmem:[%s6924 + $0x3c] sm:$0xff]
      %v6936 = vld [vmem:[%s6924 + $0x44] sm:$0xf]
      %v6937 = vld [vmem:[%s6924 + $0x48] sm:$0xff]
      %v6938 = vld [vmem:[%s6924 + $0x50] sm:$0xf]
      %v6939 = vld [vmem:[%s6924 + $0x54] sm:$0xff]
      %v6940 = vld [vmem:[%s6924 + $0x5c] sm:$0xf]
      %v6941 = vld [vmem:[%s6924 + $0x60] sm:$0xff]
      %v6942 = vld [vmem:[%s6924 + $0x68] sm:$0xf]
      %v6943 = vld [vmem:[%s6924 + $0x6c] sm:$0xff]
      %v6944 = vld [vmem:[%s6924 + $0x74] sm:$0xf]
      %v6945 = vld [vmem:[%s6924 + $0x78] sm:$0xff]
      %v6946 = vld [vmem:[%s6924 + $0x80] sm:$0xf]
      %v6947 = vld [vmem:[%s6924 + $0x84] sm:$0xff]
      %v6948 = vld [vmem:[%s6924 + $0x8c] sm:$0xf]
      %v6949 = vld [vmem:[%s6924 + $0x90] sm:$0xff]
      %v6950 = vld [vmem:[%s6924 + $0x98] sm:$0xf]
      %v6951 = vld [vmem:[%s6924 + $0x9c] sm:$0xff]
      %v6952 = vld [vmem:[%s6924 + $0xa4] sm:$0xf]
      %v6953 = vld [vmem:[%s6924 + $0xa8] sm:$0xff]
      %v6954 = vld [vmem:[%s6924 + $0xb0] sm:$0xf]
      %v6955 = vld [vmem:[%s6924 + $0xb4] sm:$0xff]
      %v6956 = vld [vmem:[%s6924 + $0xbc] sm:$0xf]
      %v6957 = vld [vmem:[%s6924 + $0xc0] sm:$0xff]
      %v6958 = vld [vmem:[%s6924 + $0xc8] sm:$0xf]
      %v6959 = vld [vmem:[%s6924 + $0xcc] sm:$0xff]
      %v6960 = vld [vmem:[%s6924 + $0xd4] sm:$0xf]
      %v6961 = vld [vmem:[%s6924 + $0xd8] sm:$0xff]
      %v6962 = vld [vmem:[%s6924 + $0xe0] sm:$0xf]
      %v6963 = vld [vmem:[%s6924 + $0xe4] sm:$0xff]
      %v6964 = vld [vmem:[%s6924 + $0xec] sm:$0xf]
      %v6965 = vld [vmem:[%s6924 + $0xf0] sm:$0xff]
      %v6966 = vld [vmem:[%s6924 + $0xf8] sm:$0xf]
      %v6967 = vld [vmem:[%s6924 + $0xfc] sm:$0xff]
      %v6968 = vld [vmem:[%s6924 + $0x104] sm:$0xf]
      %v6969 = vld [vmem:[%s6924 + $0x108] sm:$0xff]
      %v6970 = vld [vmem:[%s6924 + $0x110] sm:$0xf]
      %v6971 = vld [vmem:[%s6924 + $0x114] sm:$0xff]
      %v6972 = vld [vmem:[%s6924 + $0x11c] sm:$0xf]
      %v6973 = vld [vmem:[%s6924 + $0x120] sm:$0xff]
      %v6974 = vld [vmem:[%s6924 + $0x128] sm:$0xf]
      %v6975 = vld [vmem:[%s6924 + $0x12c] sm:$0xff]
      %v6976 = vld [vmem:[%s6924 + $0x134] sm:$0xf]
      %v6977 = vld [vmem:[%s6924 + $0x138] sm:$0xff]
      %v6978 = vld [vmem:[%s6924 + $0x140] sm:$0xf]
      %v6979 = vld [vmem:[%s6924 + $0x144] sm:$0xff]
      %v6980 = vld [vmem:[%s6924 + $0x14c] sm:$0xf]
      %v6981 = vld [vmem:[%s6924 + $0x150] sm:$0xff]
      %v6982 = vld [vmem:[%s6924 + $0x158] sm:$0xf]
      %v6983 = vld [vmem:[%s6924 + $0x15c] sm:$0xff]
      %v6984 = vld [vmem:[%s6924 + $0x164] sm:$0xf]
      %v6985 = vld [vmem:[%s6924 + $0x168] sm:$0xff]
      %v6986 = vld [vmem:[%s6924 + $0x170] sm:$0xf]
      %v6987 = vld [vmem:[%s6924 + $0x174] sm:$0xff]
      %v6988 = vld [vmem:[%s6924 + $0x17c] sm:$0xf]
      %v6989 = vld [vmem:[%s6924 + $0x180] sm:$0xff]
      %v6990 = vld [vmem:[%s6924 + $0x188] sm:$0xf]
      %v6991 = vld [vmem:[%s6924 + $0x18c] sm:$0xff]
      %v6992 = vld [vmem:[%s6924 + $0x194] sm:$0xf]
      %v6993 = vld [vmem:[%s6924 + $0x198] sm:$0xff]
      %v6994 = vld [vmem:[%s6924 + $0x1a0] sm:$0xf]
      %v6995 = vld [vmem:[%s6924 + $0x1a4] sm:$0xff]
      %v6996 = vld [vmem:[%s6924 + $0x1ac] sm:$0xf]
      %v6997 = vld [vmem:[%s6924 + $0x1b0] sm:$0xff]
      %v6998 = vld [vmem:[%s6924 + $0x1b8] sm:$0xf]
      %v6999 = vld [vmem:[%s6924 + $0x1bc] sm:$0xff]
      %v7000 = vld [vmem:[%s6924 + $0x1c4] sm:$0xf]
      %v7001 = vld [vmem:[%s6924 + $0x1c8] sm:$0xff]
      %v7002 = vld [vmem:[%s6924 + $0x1d0] sm:$0xf]
      %v7003 = vld [vmem:[%s6924 + $0x1d4] sm:$0xff]
      %v7004 = vld [vmem:[%s6924 + $0x1dc] sm:$0xf]
      %v7005 = vld [vmem:[%s6924 + $0x1e0] sm:$0xff]
      %v7006 = vld [vmem:[%s6924 + $0x1e8] sm:$0xf]
      %v7007 = vld [vmem:[%s6924 + $0x1ec] sm:$0xff]
      %v7008 = vld [vmem:[%s6924 + $0x1f4] sm:$0xf]
      %v7009 = vld [vmem:[%s6924 + $0x1f8] sm:$0xff]
      %v7010 = vld [vmem:[%s6924 + $0x200] sm:$0xf]
      %v7011 = vld [vmem:[%s6924 + $0x204] sm:$0xff]
      %v7012 = vld [vmem:[%s6924 + $0x20c] sm:$0xf]
      %v7013 = vld [vmem:[%s6924 + $0x210] sm:$0xff]
      %v7014 = vld [vmem:[%s6924 + $0x218] sm:$0xf]
      %v7015 = vld [vmem:[%s6924 + $0x21c] sm:$0xff]
      %v7016 = vld [vmem:[%s6924 + $0x224] sm:$0xf]
      %v7017 = vld [vmem:[%s6924 + $0x228] sm:$0xff]
      %v7018 = vld [vmem:[%s6924 + $0x230] sm:$0xf]
      %v7019 = vld [vmem:[%s6924 + $0x234] sm:$0xff]
      %v7020 = vld [vmem:[%s6924 + $0x23c] sm:$0xf]
      %v7181 = vunpack.c.l.b16 %v6764
      %v7182 = vunpack.c.h.b16 %v6764
      %v7183 = vunpack.c.l.b16 %v6765
      %v7184 = vunpack.c.l.b16 %v6766
      %v7185 = vunpack.c.h.b16 %v6766
      %v7186 = vunpack.c.l.b16 %v6767
      %v7187 = vunpack.c.l.b16 %v6768
      %v7188 = vunpack.c.h.b16 %v6768
      %v7189 = vunpack.c.l.b16 %v6769
      %v7190 = vunpack.c.l.b16 %v6770
      %v7191 = vunpack.c.h.b16 %v6770
      %v7192 = vunpack.c.l.b16 %v6771
      %v7193 = vunpack.c.l.b16 %v6772
      %v7194 = vunpack.c.h.b16 %v6772
      %v7195 = vunpack.c.l.b16 %v6773
      %v7196 = vunpack.c.l.b16 %v6774
      %v7197 = vunpack.c.h.b16 %v6774
      %v7198 = vunpack.c.l.b16 %v6775
      %v7199 = vunpack.c.l.b16 %v6776
      %v7200 = vunpack.c.h.b16 %v6776
      %v7201 = vunpack.c.l.b16 %v6777
      %v7202 = vunpack.c.l.b16 %v6778
      %v7203 = vunpack.c.h.b16 %v6778
      %v7204 = vunpack.c.l.b16 %v6779
      %v7205 = vunpack.c.l.b16 %v6780
      %v7206 = vunpack.c.h.b16 %v6780
      %v7207 = vunpack.c.l.b16 %v6781
      %v7208 = vunpack.c.l.b16 %v6782
      %v7209 = vunpack.c.h.b16 %v6782
      %v7210 = vunpack.c.l.b16 %v6783
      %v7211 = vunpack.c.l.b16 %v6784
      %v7212 = vunpack.c.h.b16 %v6784
      %v7213 = vunpack.c.l.b16 %v6785
      %v7214 = vunpack.c.l.b16 %v6786
      %v7215 = vunpack.c.h.b16 %v6786
      %v7216 = vunpack.c.l.b16 %v6787
      %v7217 = vunpack.c.l.b16 %v6788
      %v7218 = vunpack.c.h.b16 %v6788
      %v7219 = vunpack.c.l.b16 %v6789
      %v7220 = vunpack.c.l.b16 %v6790
      %v7221 = vunpack.c.h.b16 %v6790
      %v7222 = vunpack.c.l.b16 %v6791
      %v7223 = vunpack.c.l.b16 %v6792
      %v7224 = vunpack.c.h.b16 %v6792
      %v7225 = vunpack.c.l.b16 %v6793
      %v7226 = vunpack.c.l.b16 %v6794
      %v7227 = vunpack.c.h.b16 %v6794
      %v7228 = vunpack.c.l.b16 %v6795
      %v7229 = vunpack.c.l.b16 %v6796
      %v7230 = vunpack.c.h.b16 %v6796
      %v7231 = vunpack.c.l.b16 %v6797
      %v7232 = vunpack.c.l.b16 %v6798
      %v7233 = vunpack.c.h.b16 %v6798
      %v7234 = vunpack.c.l.b16 %v6799
      %v7235 = vunpack.c.l.b16 %v6800
      %v7236 = vunpack.c.h.b16 %v6800
      %v7237 = vunpack.c.l.b16 %v6801
      %v7238 = vunpack.c.l.b16 %v6802
      %v7239 = vunpack.c.h.b16 %v6802
      %v7240 = vunpack.c.l.b16 %v6803
      %v7241 = vunpack.c.l.b16 %v6804
      %v7242 = vunpack.c.h.b16 %v6804
      %v7243 = vunpack.c.l.b16 %v6805
      %v7244 = vunpack.c.l.b16 %v6806
      %v7245 = vunpack.c.h.b16 %v6806
      %v7246 = vunpack.c.l.b16 %v6807
      %v7247 = vunpack.c.l.b16 %v6808
      %v7248 = vunpack.c.h.b16 %v6808
      %v7249 = vunpack.c.l.b16 %v6809
      %v7250 = vunpack.c.l.b16 %v6810
      %v7251 = vunpack.c.h.b16 %v6810
      %v7252 = vunpack.c.l.b16 %v6811
      %v7253 = vunpack.c.l.b16 %v6812
      %v7254 = vunpack.c.h.b16 %v6812
      %v7255 = vunpack.c.l.b16 %v6813
      %v7256 = vunpack.c.l.b16 %v6814
      %v7257 = vunpack.c.h.b16 %v6814
      %v7258 = vunpack.c.l.b16 %v6815
      %v7259 = vunpack.c.l.b16 %v6816
      %v7260 = vunpack.c.h.b16 %v6816
      %v7261 = vunpack.c.l.b16 %v6817
      %v7262 = vunpack.c.l.b16 %v6818
      %v7263 = vunpack.c.h.b16 %v6818
      %v7264 = vunpack.c.l.b16 %v6819
      %v7265 = vunpack.c.l.b16 %v6820
      %v7266 = vunpack.c.h.b16 %v6820
      %v7267 = vunpack.c.l.b16 %v6821
      %v7268 = vunpack.c.l.b16 %v6822
      %v7269 = vunpack.c.h.b16 %v6822
      %v7270 = vunpack.c.l.b16 %v6823
      %v7271 = vunpack.c.l.b16 %v6824
      %v7272 = vunpack.c.h.b16 %v6824
      %v7273 = vunpack.c.l.b16 %v6825
      %v7274 = vunpack.c.l.b16 %v6826
      %v7275 = vunpack.c.h.b16 %v6826
      %v7276 = vunpack.c.l.b16 %v6827
      %v7277 = vunpack.c.l.b16 %v6828
      %v7278 = vunpack.c.h.b16 %v6828
      %v7279 = vunpack.c.l.b16 %v6829
      %v7280 = vunpack.c.l.b16 %v6830
      %v7281 = vunpack.c.h.b16 %v6830
      %v7282 = vunpack.c.l.b16 %v6831
      %v7283 = vunpack.c.l.b16 %v6832
      %v7284 = vunpack.c.h.b16 %v6832
      %v7285 = vunpack.c.l.b16 %v6833
      %v7286 = vunpack.c.l.b16 %v6834
      %v7287 = vunpack.c.h.b16 %v6834
      %v7288 = vunpack.c.l.b16 %v6835
      %v7289 = vunpack.c.l.b16 %v6836
      %v7290 = vunpack.c.h.b16 %v6836
      %v7291 = vunpack.c.l.b16 %v6837
      %v7292 = vunpack.c.l.b16 %v6838
      %v7293 = vunpack.c.h.b16 %v6838
      %v7294 = vunpack.c.l.b16 %v6839
      %v7295 = vunpack.c.l.b16 %v6840
      %v7296 = vunpack.c.h.b16 %v6840
      %v7297 = vunpack.c.l.b16 %v6841
      %v7298 = vunpack.c.l.b16 %v6842
      %v7299 = vunpack.c.h.b16 %v6842
      %v7300 = vunpack.c.l.b16 %v6843
      %v7301 = vunpack.c.l.b16 %v6844
      %v7302 = vunpack.c.h.b16 %v6844
      %v7303 = vunpack.c.l.b16 %v6845
      %v7304 = vunpack.c.l.b16 %v6846
      %v7305 = vunpack.c.h.b16 %v6846
      %v7306 = vunpack.c.l.b16 %v6847
      %v7307 = vunpack.c.l.b16 %v6848
      %v7308 = vunpack.c.h.b16 %v6848
      %v7309 = vunpack.c.l.b16 %v6849
      %v7310 = vunpack.c.l.b16 %v6850
      %v7311 = vunpack.c.h.b16 %v6850
      %v7312 = vunpack.c.l.b16 %v6851
      %v7313 = vunpack.c.l.b16 %v6852
      %v7314 = vunpack.c.h.b16 %v6852
      %v7315 = vunpack.c.l.b16 %v6853
      %v7316 = vunpack.c.l.b16 %v6854
      %v7317 = vunpack.c.h.b16 %v6854
      %v7318 = vunpack.c.l.b16 %v6855
      %v7319 = vunpack.c.l.b16 %v6856
      %v7320 = vunpack.c.h.b16 %v6856
      %v7321 = vunpack.c.l.b16 %v6857
      %v7322 = vunpack.c.l.b16 %v6858
      %v7323 = vunpack.c.h.b16 %v6858
      %v7324 = vunpack.c.l.b16 %v6859
      %v7325 = vunpack.c.l.b16 %v6860
      %v7326 = vunpack.c.h.b16 %v6860
      %v7327 = vunpack.c.l.b16 %v6861
      %v7328 = vunpack.c.l.b16 %v6862
      %v7329 = vunpack.c.h.b16 %v6862
      %v7330 = vunpack.c.l.b16 %v6863
      %v7331 = vunpack.c.l.b16 %v6864
      %v7332 = vunpack.c.h.b16 %v6864
      %v7333 = vunpack.c.l.b16 %v6865
      %v7334 = vunpack.c.l.b16 %v6866
      %v7335 = vunpack.c.h.b16 %v6866
      %v7336 = vunpack.c.l.b16 %v6867
      %v7337 = vunpack.c.l.b16 %v6868
      %v7338 = vunpack.c.h.b16 %v6868
      %v7339 = vunpack.c.l.b16 %v6869
      %v7340 = vunpack.c.l.b16 %v6870
      %v7341 = vunpack.c.h.b16 %v6870
      %v7342 = vunpack.c.l.b16 %v6871
      %v7343 = vunpack.c.l.b16 %v6872
      %v7344 = vunpack.c.h.b16 %v6872
      %v7345 = vunpack.c.l.b16 %v6873
      %v7346 = vunpack.c.l.b16 %v6874
      %v7347 = vunpack.c.h.b16 %v6874
      %v7348 = vunpack.c.l.b16 %v6875
      %v7349 = vunpack.c.l.b16 %v6876
      %v7350 = vunpack.c.h.b16 %v6876
      %v7351 = vunpack.c.l.b16 %v6877
      %v7352 = vunpack.c.l.b16 %v6878
      %v7353 = vunpack.c.h.b16 %v6878
      %v7354 = vunpack.c.l.b16 %v6879
      %v7355 = vunpack.c.l.b16 %v6880
      %v7356 = vunpack.c.h.b16 %v6880
      %v7357 = vunpack.c.l.b16 %v6881
      %v7358 = vunpack.c.l.b16 %v6882
      %v7359 = vunpack.c.h.b16 %v6882
      %v7360 = vunpack.c.l.b16 %v6883
      %v7361 = vunpack.c.l.b16 %v6884
      %v7362 = vunpack.c.h.b16 %v6884
      %v7363 = vunpack.c.l.b16 %v6885
      %v7364 = vunpack.c.l.b16 %v6886
      %v7365 = vunpack.c.h.b16 %v6886
      %v7366 = vunpack.c.l.b16 %v6887
      %v7367 = vunpack.c.l.b16 %v6888
      %v7368 = vunpack.c.h.b16 %v6888
      %v7369 = vunpack.c.l.b16 %v6889
      %v7370 = vunpack.c.l.b16 %v6890
      %v7371 = vunpack.c.h.b16 %v6890
      %v7372 = vunpack.c.l.b16 %v6891
      %v7373 = vunpack.c.l.b16 %v6892
      %v7374 = vunpack.c.h.b16 %v6892
      %v7375 = vunpack.c.l.b16 %v6893
      %v7376 = vunpack.c.l.b16 %v6894
      %v7377 = vunpack.c.h.b16 %v6894
      %v7378 = vunpack.c.l.b16 %v6895
      %v7379 = vunpack.c.l.b16 %v6896
      %v7380 = vunpack.c.h.b16 %v6896
      %v7381 = vunpack.c.l.b16 %v6897
      %v7382 = vunpack.c.l.b16 %v6898
      %v7383 = vunpack.c.h.b16 %v6898
      %v7384 = vunpack.c.l.b16 %v6899
      %v7385 = vunpack.c.l.b16 %v6900
      %v7386 = vunpack.c.h.b16 %v6900
      %v7387 = vunpack.c.l.b16 %v6901
      %v7388 = vunpack.c.l.b16 %v6902
      %v7389 = vunpack.c.h.b16 %v6902
      %v7390 = vunpack.c.l.b16 %v6903
      %v7391 = vunpack.c.l.b16 %v6904
      %v7392 = vunpack.c.h.b16 %v6904
      %v7393 = vunpack.c.l.b16 %v6905
      %v7394 = vunpack.c.l.b16 %v6906
      %v7395 = vunpack.c.h.b16 %v6906
      %v7396 = vunpack.c.l.b16 %v6907
      %v7397 = vunpack.c.l.b16 %v6908
      %v7398 = vunpack.c.h.b16 %v6908
      %v7399 = vunpack.c.l.b16 %v6909
      %v7400 = vunpack.c.l.b16 %v6910
      %v7401 = vunpack.c.h.b16 %v6910
      %v7402 = vunpack.c.l.b16 %v6911
      %v7403 = vunpack.c.l.b16 %v6912
      %v7404 = vunpack.c.h.b16 %v6912
      %v7405 = vunpack.c.l.b16 %v6913
      %v7406 = vunpack.c.l.b16 %v6914
      %v7407 = vunpack.c.h.b16 %v6914
      %v7408 = vunpack.c.l.b16 %v6915
      %v7409 = vunpack.c.l.b16 %v6916
      %v7410 = vunpack.c.h.b16 %v6916
      %v7411 = vunpack.c.l.b16 %v6917
      %v7412 = vunpack.c.l.b16 %v6918
      %v7413 = vunpack.c.h.b16 %v6918
      %v7414 = vunpack.c.l.b16 %v6919
      %v7415 = vunpack.c.l.b16 %v6920
      %v7416 = vunpack.c.h.b16 %v6920
      %v7417 = vunpack.c.l.b16 %v6921
      %v7418 = vunpack.c.l.b16 %v6922
      %v7419 = vunpack.c.h.b16 %v6922
      %v7420 = vunpack.c.l.b16 %v6923
      %v7421 = vpack.c.b16 %v7184, %v7181
      %v7422 = vpack.c.b16 %v7185, %v7182
      %v7423 = vpack.c.b16 %v7186, %v7183
      %v7424 = vpack.c.b16 %v7190, %v7187
      %v7425 = vpack.c.b16 %v7191, %v7188
      %v7426 = vpack.c.b16 %v7192, %v7189
      %v7427 = vpack.c.b16 %v7196, %v7193
      %v7428 = vpack.c.b16 %v7197, %v7194
      %v7429 = vpack.c.b16 %v7198, %v7195
      %v7430 = vpack.c.b16 %v7202, %v7199
      %v7431 = vpack.c.b16 %v7203, %v7200
      %v7432 = vpack.c.b16 %v7204, %v7201
      %v7433 = vpack.c.b16 %v7208, %v7205
      %v7434 = vpack.c.b16 %v7209, %v7206
      %v7435 = vpack.c.b16 %v7210, %v7207
      %v7436 = vpack.c.b16 %v7214, %v7211
      %v7437 = vpack.c.b16 %v7215, %v7212
      %v7438 = vpack.c.b16 %v7216, %v7213
      %v7439 = vpack.c.b16 %v7220, %v7217
      %v7440 = vpack.c.b16 %v7221, %v7218
      %v7441 = vpack.c.b16 %v7222, %v7219
      %v7442 = vpack.c.b16 %v7226, %v7223
      %v7443 = vpack.c.b16 %v7227, %v7224
      %v7444 = vpack.c.b16 %v7228, %v7225
      %v7445 = vpack.c.b16 %v7232, %v7229
      %v7446 = vpack.c.b16 %v7233, %v7230
      %v7447 = vpack.c.b16 %v7234, %v7231
      %v7448 = vpack.c.b16 %v7238, %v7235
      %v7449 = vpack.c.b16 %v7239, %v7236
      %v7450 = vpack.c.b16 %v7240, %v7237
      %v7451 = vpack.c.b16 %v7244, %v7241
      %v7452 = vpack.c.b16 %v7245, %v7242
      %v7453 = vpack.c.b16 %v7246, %v7243
      %v7454 = vpack.c.b16 %v7250, %v7247
      %v7455 = vpack.c.b16 %v7251, %v7248
      %v7456 = vpack.c.b16 %v7252, %v7249
      %v7457 = vpack.c.b16 %v7256, %v7253
      %v7458 = vpack.c.b16 %v7257, %v7254
      %v7459 = vpack.c.b16 %v7258, %v7255
      %v7460 = vpack.c.b16 %v7262, %v7259
      %v7461 = vpack.c.b16 %v7263, %v7260
      %v7462 = vpack.c.b16 %v7264, %v7261
      %v7463 = vpack.c.b16 %v7268, %v7265
      %v7464 = vpack.c.b16 %v7269, %v7266
      %v7465 = vpack.c.b16 %v7270, %v7267
      %v7466 = vpack.c.b16 %v7274, %v7271
      %v7467 = vpack.c.b16 %v7275, %v7272
      %v7468 = vpack.c.b16 %v7276, %v7273
      %v7469 = vpack.c.b16 %v7280, %v7277
      %v7470 = vpack.c.b16 %v7281, %v7278
      %v7471 = vpack.c.b16 %v7282, %v7279
      %v7472 = vpack.c.b16 %v7286, %v7283
      %v7473 = vpack.c.b16 %v7287, %v7284
      %v7474 = vpack.c.b16 %v7288, %v7285
      %v7475 = vpack.c.b16 %v7292, %v7289
      %v7476 = vpack.c.b16 %v7293, %v7290
      %v7477 = vpack.c.b16 %v7294, %v7291
      %v7478 = vpack.c.b16 %v7298, %v7295
      %v7479 = vpack.c.b16 %v7299, %v7296
      %v7480 = vpack.c.b16 %v7300, %v7297
      %v7481 = vpack.c.b16 %v7304, %v7301
      %v7482 = vpack.c.b16 %v7305, %v7302
      %v7483 = vpack.c.b16 %v7306, %v7303
      %v7484 = vpack.c.b16 %v7310, %v7307
      %v7485 = vpack.c.b16 %v7311, %v7308
      %v7486 = vpack.c.b16 %v7312, %v7309
      %v7487 = vpack.c.b16 %v7316, %v7313
      %v7488 = vpack.c.b16 %v7317, %v7314
      %v7489 = vpack.c.b16 %v7318, %v7315
      %v7490 = vpack.c.b16 %v7322, %v7319
      %v7491 = vpack.c.b16 %v7323, %v7320
      %v7492 = vpack.c.b16 %v7324, %v7321
      %v7493 = vpack.c.b16 %v7328, %v7325
      %v7494 = vpack.c.b16 %v7329, %v7326
      %v7495 = vpack.c.b16 %v7330, %v7327
      %v7496 = vpack.c.b16 %v7334, %v7331
      %v7497 = vpack.c.b16 %v7335, %v7332
      %v7498 = vpack.c.b16 %v7336, %v7333
      %v7499 = vpack.c.b16 %v7340, %v7337
      %v7500 = vpack.c.b16 %v7341, %v7338
      %v7501 = vpack.c.b16 %v7342, %v7339
      %v7502 = vpack.c.b16 %v7346, %v7343
      %v7503 = vpack.c.b16 %v7347, %v7344
      %v7504 = vpack.c.b16 %v7348, %v7345
      %v7505 = vpack.c.b16 %v7352, %v7349
      %v7506 = vpack.c.b16 %v7353, %v7350
      %v7507 = vpack.c.b16 %v7354, %v7351
      %v7508 = vpack.c.b16 %v7358, %v7355
      %v7509 = vpack.c.b16 %v7359, %v7356
      %v7510 = vpack.c.b16 %v7360, %v7357
      %v7511 = vpack.c.b16 %v7364, %v7361
      %v7512 = vpack.c.b16 %v7365, %v7362
      %v7513 = vpack.c.b16 %v7366, %v7363
      %v7514 = vpack.c.b16 %v7370, %v7367
      %v7515 = vpack.c.b16 %v7371, %v7368
      %v7516 = vpack.c.b16 %v7372, %v7369
      %v7517 = vpack.c.b16 %v7376, %v7373
      %v7518 = vpack.c.b16 %v7377, %v7374
      %v7519 = vpack.c.b16 %v7378, %v7375
      %v7520 = vpack.c.b16 %v7382, %v7379
      %v7521 = vpack.c.b16 %v7383, %v7380
      %v7522 = vpack.c.b16 %v7384, %v7381
      %v7523 = vpack.c.b16 %v7388, %v7385
      %v7524 = vpack.c.b16 %v7389, %v7386
      %v7525 = vpack.c.b16 %v7390, %v7387
      %v7526 = vpack.c.b16 %v7394, %v7391
      %v7527 = vpack.c.b16 %v7395, %v7392
      %v7528 = vpack.c.b16 %v7396, %v7393
      %v7529 = vpack.c.b16 %v7400, %v7397
      %v7530 = vpack.c.b16 %v7401, %v7398
      %v7531 = vpack.c.b16 %v7402, %v7399
      %v7532 = vpack.c.b16 %v7406, %v7403
      %v7533 = vpack.c.b16 %v7407, %v7404
      %v7534 = vpack.c.b16 %v7408, %v7405
      %v7535 = vpack.c.b16 %v7412, %v7409
      %v7536 = vpack.c.b16 %v7413, %v7410
      %v7537 = vpack.c.b16 %v7414, %v7411
      %v7538 = vpack.c.b16 %v7418, %v7415
      %v7539 = vpack.c.b16 %v7419, %v7416
      %v7540 = vpack.c.b16 %v7420, %v7417
      %v7757 = vunpack.c.l.b16 %v6925
      %v7758 = vunpack.c.h.b16 %v6925
      %v7759 = vunpack.c.l.b16 %v6926
      %v7760 = vunpack.c.l.b16 %v6927
      %v7761 = vunpack.c.h.b16 %v6927
      %v7762 = vunpack.c.l.b16 %v6928
      %v7763 = vunpack.c.l.b16 %v6929
      %v7764 = vunpack.c.h.b16 %v6929
      %v7765 = vunpack.c.l.b16 %v6930
      %v7766 = vunpack.c.l.b16 %v6931
      %v7767 = vunpack.c.h.b16 %v6931
      %v7768 = vunpack.c.l.b16 %v6932
      %v7769 = vunpack.c.l.b16 %v6933
      %v7770 = vunpack.c.h.b16 %v6933
      %v7771 = vunpack.c.l.b16 %v6934
      %v7772 = vunpack.c.l.b16 %v6935
      %v7773 = vunpack.c.h.b16 %v6935
      %v7774 = vunpack.c.l.b16 %v6936
      %v7775 = vunpack.c.l.b16 %v6937
      %v7776 = vunpack.c.h.b16 %v6937
      %v7777 = vunpack.c.l.b16 %v6938
      %v7778 = vunpack.c.l.b16 %v6939
      %v7779 = vunpack.c.h.b16 %v6939
      %v7780 = vunpack.c.l.b16 %v6940
      %v7781 = vunpack.c.l.b16 %v6941
      %v7782 = vunpack.c.h.b16 %v6941
      %v7783 = vunpack.c.l.b16 %v6942
      %v7784 = vunpack.c.l.b16 %v6943
      %v7785 = vunpack.c.h.b16 %v6943
      %v7786 = vunpack.c.l.b16 %v6944
      %v7787 = vunpack.c.l.b16 %v6945
      %v7788 = vunpack.c.h.b16 %v6945
      %v7789 = vunpack.c.l.b16 %v6946
      %v7790 = vunpack.c.l.b16 %v6947
      %v7791 = vunpack.c.h.b16 %v6947
      %v7792 = vunpack.c.l.b16 %v6948
      %v7793 = vunpack.c.l.b16 %v6949
      %v7794 = vunpack.c.h.b16 %v6949
      %v7795 = vunpack.c.l.b16 %v6950
      %v7796 = vunpack.c.l.b16 %v6951
      %v7797 = vunpack.c.h.b16 %v6951
      %v7798 = vunpack.c.l.b16 %v6952
      %v7799 = vunpack.c.l.b16 %v6953
      %v7800 = vunpack.c.h.b16 %v6953
      %v7801 = vunpack.c.l.b16 %v6954
      %v7802 = vunpack.c.l.b16 %v6955
      %v7803 = vunpack.c.h.b16 %v6955
      %v7804 = vunpack.c.l.b16 %v6956
      %v7805 = vunpack.c.l.b16 %v6957
      %v7806 = vunpack.c.h.b16 %v6957
      %v7807 = vunpack.c.l.b16 %v6958
      %v7808 = vunpack.c.l.b16 %v6959
      %v7809 = vunpack.c.h.b16 %v6959
      %v7810 = vunpack.c.l.b16 %v6960
      %v7811 = vunpack.c.l.b16 %v6961
      %v7812 = vunpack.c.h.b16 %v6961
      %v7813 = vunpack.c.l.b16 %v6962
      %v7814 = vunpack.c.l.b16 %v6963
      %v7815 = vunpack.c.h.b16 %v6963
      %v7816 = vunpack.c.l.b16 %v6964
      %v7817 = vunpack.c.l.b16 %v6965
      %v7818 = vunpack.c.h.b16 %v6965
      %v7819 = vunpack.c.l.b16 %v6966
      %v7820 = vunpack.c.l.b16 %v6967
      %v7821 = vunpack.c.h.b16 %v6967
      %v7822 = vunpack.c.l.b16 %v6968
      %v7823 = vunpack.c.l.b16 %v6969
      %v7824 = vunpack.c.h.b16 %v6969
      %v7825 = vunpack.c.l.b16 %v6970
      %v7826 = vunpack.c.l.b16 %v6971
      %v7827 = vunpack.c.h.b16 %v6971
      %v7828 = vunpack.c.l.b16 %v6972
      %v7829 = vunpack.c.l.b16 %v6973
      %v7830 = vunpack.c.h.b16 %v6973
      %v7831 = vunpack.c.l.b16 %v6974
      %v7832 = vunpack.c.l.b16 %v6975
      %v7833 = vunpack.c.h.b16 %v6975
      %v7834 = vunpack.c.l.b16 %v6976
      %v7835 = vunpack.c.l.b16 %v6977
      %v7836 = vunpack.c.h.b16 %v6977
      %v7837 = vunpack.c.l.b16 %v6978
      %v7838 = vunpack.c.l.b16 %v6979
      %v7839 = vunpack.c.h.b16 %v6979
      %v7840 = vunpack.c.l.b16 %v6980
      %v7841 = vunpack.c.l.b16 %v6981
      %v7842 = vunpack.c.h.b16 %v6981
      %v7843 = vunpack.c.l.b16 %v6982
      %v7844 = vunpack.c.l.b16 %v6983
      %v7845 = vunpack.c.h.b16 %v6983
      %v7846 = vunpack.c.l.b16 %v6984
      %v7847 = vunpack.c.l.b16 %v6985
      %v7848 = vunpack.c.h.b16 %v6985
      %v7849 = vunpack.c.l.b16 %v6986
      %v7850 = vunpack.c.l.b16 %v6987
      %v7851 = vunpack.c.h.b16 %v6987
      %v7852 = vunpack.c.l.b16 %v6988
      %v7853 = vunpack.c.l.b16 %v6989
      %v7854 = vunpack.c.h.b16 %v6989
      %v7855 = vunpack.c.l.b16 %v6990
      %v7856 = vunpack.c.l.b16 %v6991
      %v7857 = vunpack.c.h.b16 %v6991
      %v7858 = vunpack.c.l.b16 %v6992
      %v7859 = vunpack.c.l.b16 %v6993
      %v7860 = vunpack.c.h.b16 %v6993
      %v7861 = vunpack.c.l.b16 %v6994
      %v7862 = vunpack.c.l.b16 %v6995
      %v7863 = vunpack.c.h.b16 %v6995
      %v7864 = vunpack.c.l.b16 %v6996
      %v7865 = vunpack.c.l.b16 %v6997
      %v7866 = vunpack.c.h.b16 %v6997
      %v7867 = vunpack.c.l.b16 %v6998
      %v7868 = vunpack.c.l.b16 %v6999
      %v7869 = vunpack.c.h.b16 %v6999
      %v7870 = vunpack.c.l.b16 %v7000
      %v7871 = vunpack.c.l.b16 %v7001
      %v7872 = vunpack.c.h.b16 %v7001
      %v7873 = vunpack.c.l.b16 %v7002
      %v7874 = vunpack.c.l.b16 %v7003
      %v7875 = vunpack.c.h.b16 %v7003
      %v7876 = vunpack.c.l.b16 %v7004
      %v7877 = vunpack.c.l.b16 %v7005
      %v7878 = vunpack.c.h.b16 %v7005
      %v7879 = vunpack.c.l.b16 %v7006
      %v7880 = vunpack.c.l.b16 %v7007
      %v7881 = vunpack.c.h.b16 %v7007
      %v7882 = vunpack.c.l.b16 %v7008
      %v7883 = vunpack.c.l.b16 %v7009
      %v7884 = vunpack.c.h.b16 %v7009
      %v7885 = vunpack.c.l.b16 %v7010
      %v7886 = vunpack.c.l.b16 %v7011
      %v7887 = vunpack.c.h.b16 %v7011
      %v7888 = vunpack.c.l.b16 %v7012
      %v7889 = vunpack.c.l.b16 %v7013
      %v7890 = vunpack.c.h.b16 %v7013
      %v7891 = vunpack.c.l.b16 %v7014
      %v7892 = vunpack.c.l.b16 %v7015
      %v7893 = vunpack.c.h.b16 %v7015
      %v7894 = vunpack.c.l.b16 %v7016
      %v7895 = vunpack.c.l.b16 %v7017
      %v7896 = vunpack.c.h.b16 %v7017
      %v7897 = vunpack.c.l.b16 %v7018
      %v7898 = vunpack.c.l.b16 %v7019
      %v7899 = vunpack.c.h.b16 %v7019
      %v7900 = vunpack.c.l.b16 %v7020
      %v7901 = vpack.c.b16 %v7760, %v7757
      %v7902 = vpack.c.b16 %v7761, %v7758
      %v7903 = vpack.c.b16 %v7762, %v7759
      %v7904 = vpack.c.b16 %v7766, %v7763
      %v7905 = vpack.c.b16 %v7767, %v7764
      %v7906 = vpack.c.b16 %v7768, %v7765
      %v7907 = vpack.c.b16 %v7772, %v7769
      %v7908 = vpack.c.b16 %v7773, %v7770
      %v7909 = vpack.c.b16 %v7774, %v7771
      %v7910 = vpack.c.b16 %v7778, %v7775
      %v7911 = vpack.c.b16 %v7779, %v7776
      %v7912 = vpack.c.b16 %v7780, %v7777
      %v7913 = vpack.c.b16 %v7784, %v7781
      %v7914 = vpack.c.b16 %v7785, %v7782
      %v7915 = vpack.c.b16 %v7786, %v7783
      %v7916 = vpack.c.b16 %v7790, %v7787
      %v7917 = vpack.c.b16 %v7791, %v7788
      %v7918 = vpack.c.b16 %v7792, %v7789
      %v7919 = vpack.c.b16 %v7796, %v7793
      %v7920 = vpack.c.b16 %v7797, %v7794
      %v7921 = vpack.c.b16 %v7798, %v7795
      %v7922 = vpack.c.b16 %v7802, %v7799
      %v7923 = vpack.c.b16 %v7803, %v7800
      %v7924 = vpack.c.b16 %v7804, %v7801
      %v7925 = vpack.c.b16 %v7808, %v7805
      %v7926 = vpack.c.b16 %v7809, %v7806
      %v7927 = vpack.c.b16 %v7810, %v7807
      %v7928 = vpack.c.b16 %v7814, %v7811
      %v7929 = vpack.c.b16 %v7815, %v7812
      %v7930 = vpack.c.b16 %v7816, %v7813
      %v7931 = vpack.c.b16 %v7820, %v7817
      %v7932 = vpack.c.b16 %v7821, %v7818
      %v7933 = vpack.c.b16 %v7822, %v7819
      %v7934 = vpack.c.b16 %v7826, %v7823
      %v7935 = vpack.c.b16 %v7827, %v7824
      %v7936 = vpack.c.b16 %v7828, %v7825
      %v7937 = vpack.c.b16 %v7832, %v7829
      %v7938 = vpack.c.b16 %v7833, %v7830
      %v7939 = vpack.c.b16 %v7834, %v7831
      %v7940 = vpack.c.b16 %v7838, %v7835
      %v7941 = vpack.c.b16 %v7839, %v7836
      %v7942 = vpack.c.b16 %v7840, %v7837
      %v7943 = vpack.c.b16 %v7844, %v7841
      %v7944 = vpack.c.b16 %v7845, %v7842
      %v7945 = vpack.c.b16 %v7846, %v7843
      %v7946 = vpack.c.b16 %v7850, %v7847
      %v7947 = vpack.c.b16 %v7851, %v7848
      %v7948 = vpack.c.b16 %v7852, %v7849
      %v7949 = vpack.c.b16 %v7856, %v7853
      %v7950 = vpack.c.b16 %v7857, %v7854
      %v7951 = vpack.c.b16 %v7858, %v7855
      %v7952 = vpack.c.b16 %v7862, %v7859
      %v7953 = vpack.c.b16 %v7863, %v7860
      %v7954 = vpack.c.b16 %v7864, %v7861
      %v7955 = vpack.c.b16 %v7868, %v7865
      %v7956 = vpack.c.b16 %v7869, %v7866
      %v7957 = vpack.c.b16 %v7870, %v7867
      %v7958 = vpack.c.b16 %v7874, %v7871
      %v7959 = vpack.c.b16 %v7875, %v7872
      %v7960 = vpack.c.b16 %v7876, %v7873
      %v7961 = vpack.c.b16 %v7880, %v7877
      %v7962 = vpack.c.b16 %v7881, %v7878
      %v7963 = vpack.c.b16 %v7882, %v7879
      %v7964 = vpack.c.b16 %v7886, %v7883
      %v7965 = vpack.c.b16 %v7887, %v7884
      %v7966 = vpack.c.b16 %v7888, %v7885
      %v7967 = vpack.c.b16 %v7892, %v7889
      %v7968 = vpack.c.b16 %v7893, %v7890
      %v7969 = vpack.c.b16 %v7894, %v7891
      %v7970 = vpack.c.b16 %v7898, %v7895
      %v7971 = vpack.c.b16 %v7899, %v7896
      %v7972 = vpack.c.b16 %v7900, %v7897
      %8045 = vmatpush.bf16.msra.mxu0 %v7922
      %8046 = vmatpush.bf16.msra.mxu0 %v7919
      %8047 = vmatpush.bf16.msra.mxu0 %v7916
      %8048 = vmatpush.bf16.msra.mxu0 %v7913
      %8049 = vmatpush.bf16.msra.mxu0 %v7910
      %8050 = vmatpush.bf16.msra.mxu0 %v7907
      %8051 = vmatpush.bf16.msra.mxu0 %v7904
      %8052 = vmatpush.bf16.msra.mxu0 %v7901
      %8053 = vmatmul.bf16.gmra.mxu0 %v7421
      %v8054 = vpop.f32.mrf.mxu0
      %v8055 = vadd.f32 0.0, %v8054
      %v8056 = vpop.f32.mrf.mxu0
      %v8057 = vadd.f32 0.0, %v8056
      %8058 = vmatmul.bf16.gmra.mxu0 %v7424
      %v8059 = vpop.f32.mrf.mxu0
      %v8060 = vadd.f32 0.0, %v8059
      %v8061 = vpop.f32.mrf.mxu0
      %v8062 = vadd.f32 0.0, %v8061
      %8063 = vmatmul.bf16.gmra.mxu0 %v7427
      %v8064 = vpop.f32.mrf.mxu0
      %v8065 = vadd.f32 0.0, %v8064
      %v8066 = vpop.f32.mrf.mxu0
      %v8067 = vadd.f32 0.0, %v8066
      %8068 = vmatmul.bf16.gmra.mxu0 %v7430
      %v8069 = vpop.f32.mrf.mxu0
      %v8070 = vadd.f32 0.0, %v8069
      %v8071 = vpop.f32.mrf.mxu0
      %v8072 = vadd.f32 0.0, %v8071
      %8073 = vmatmul.bf16.gmra.mxu0 %v7433
      %v8074 = vpop.f32.mrf.mxu0
      %v8075 = vpop.f32.mrf.mxu0
      %8076 = vmatmul.bf16.gmra.mxu0 %v7436
      %v8077 = vpop.f32.mrf.mxu0
      %v8078 = vadd.f32 0.0, %v8077
      %v8079 = vpop.f32.mrf.mxu0
      %v8080 = vadd.f32 0.0, %v8079
      %8081 = vmatmul.bf16.gmra.mxu0 %v7439
      %v8082 = vpop.f32.mrf.mxu0
      %v8083 = vadd.f32 0.0, %v8082
      %v8084 = vpop.f32.mrf.mxu0
      %v8085 = vadd.f32 0.0, %v8084
      %8086 = vmatmul.bf16.gmra.mxu0 %v7442
      %v8087 = vpop.f32.mrf.mxu0
      %v8088 = vadd.f32 0.0, %v8087
      %v8089 = vpop.f32.mrf.mxu0
      %v8090 = vadd.f32 0.0, %v8089
      %8091 = vmatmul.bf16.gmra.mxu0 %v7445
      %v8092 = vpop.f32.mrf.mxu0
      %v8093 = vadd.f32 0.0, %v8092
      %v8094 = vpop.f32.mrf.mxu0
      %v8095 = vadd.f32 0.0, %v8094
      %8096 = vmatmul.bf16.gmra.mxu0 %v7448
      %v8097 = vpop.f32.mrf.mxu0
      %v8098 = vpop.f32.mrf.mxu0
      %8099 = vmatmul.bf16.gmra.mxu0 %v7451
      %v8100 = vpop.f32.mrf.mxu0
      %v8101 = vadd.f32 0.0, %v8100
      %v8102 = vpop.f32.mrf.mxu0
      %v8103 = vadd.f32 0.0, %v8102
      %8104 = vmatmul.bf16.gmra.mxu0 %v7454
      %v8105 = vpop.f32.mrf.mxu0
      %v8106 = vadd.f32 0.0, %v8105
      %v8107 = vpop.f32.mrf.mxu0
      %v8108 = vadd.f32 0.0, %v8107
      %8109 = vmatmul.bf16.gmra.mxu0 %v7457
      %v8110 = vpop.f32.mrf.mxu0
      %v8111 = vadd.f32 0.0, %v8110
      %v8112 = vpop.f32.mrf.mxu0
      %v8113 = vadd.f32 0.0, %v8112
      %8114 = vmatmul.bf16.gmra.mxu0 %v7460
      %v8115 = vpop.f32.mrf.mxu0
      %v8116 = vadd.f32 0.0, %v8115
      %v8117 = vpop.f32.mrf.mxu0
      %v8118 = vadd.f32 0.0, %v8117
      %8119 = vmatmul.bf16.gmra.mxu0 %v7463
      %v8120 = vpop.f32.mrf.mxu0
      %v8121 = vpop.f32.mrf.mxu0
      %8122 = vmatmul.bf16.gmra.mxu0 %v7466
      %v8123 = vpop.f32.mrf.mxu0
      %v8124 = vadd.f32 0.0, %v8123
      %v8125 = vpop.f32.mrf.mxu0
      %v8126 = vadd.f32 0.0, %v8125
      %8127 = vmatmul.bf16.gmra.mxu0 %v7469
      %v8128 = vpop.f32.mrf.mxu0
      %v8129 = vadd.f32 0.0, %v8128
      %v8130 = vpop.f32.mrf.mxu0
      %v8131 = vadd.f32 0.0, %v8130
      %8132 = vmatmul.bf16.gmra.mxu0 %v7472
      %v8133 = vpop.f32.mrf.mxu0
      %v8134 = vadd.f32 0.0, %v8133
      %v8135 = vpop.f32.mrf.mxu0
      %v8136 = vadd.f32 0.0, %v8135
      %8137 = vmatmul.bf16.gmra.mxu0 %v7475
      %v8138 = vpop.f32.mrf.mxu0
      %v8139 = vadd.f32 0.0, %v8138
      %v8140 = vpop.f32.mrf.mxu0
      %v8141 = vadd.f32 0.0, %v8140
      %8142 = vmatmul.bf16.gmra.mxu0 %v7478
      %v8143 = vpop.f32.mrf.mxu0
      %v8144 = vpop.f32.mrf.mxu0
      %8145 = vmatmul.bf16.gmra.mxu0 %v7481
      %v8146 = vpop.f32.mrf.mxu0
      %v8147 = vadd.f32 0.0, %v8146
      %v8148 = vpop.f32.mrf.mxu0
      %v8149 = vadd.f32 0.0, %v8148
      %8150 = vmatmul.bf16.gmra.mxu0 %v7484
      %v8151 = vpop.f32.mrf.mxu0
      %v8152 = vadd.f32 0.0, %v8151
      %v8153 = vpop.f32.mrf.mxu0
      %v8154 = vadd.f32 0.0, %v8153
      %8155 = vmatmul.bf16.gmra.mxu0 %v7487
      %v8156 = vpop.f32.mrf.mxu0
      %v8157 = vadd.f32 0.0, %v8156
      %v8158 = vpop.f32.mrf.mxu0
      %v8159 = vadd.f32 0.0, %v8158
      %8160 = vmatmul.bf16.gmra.mxu0 %v7490
      %v8161 = vpop.f32.mrf.mxu0
      %v8162 = vadd.f32 0.0, %v8161
      %v8163 = vpop.f32.mrf.mxu0
      %v8164 = vadd.f32 0.0, %v8163
      %8165 = vmatmul.bf16.gmra.mxu0 %v7493
      %v8166 = vpop.f32.mrf.mxu0
      %v8167 = vpop.f32.mrf.mxu0
      %8168 = vmatmul.bf16.gmra.mxu0 %v7496
      %v8169 = vpop.f32.mrf.mxu0
      %v8170 = vadd.f32 0.0, %v8169
      %v8171 = vpop.f32.mrf.mxu0
      %v8172 = vadd.f32 0.0, %v8171
      %8173 = vmatmul.bf16.gmra.mxu0 %v7499
      %v8174 = vpop.f32.mrf.mxu0
      %v8175 = vadd.f32 0.0, %v8174
      %v8176 = vpop.f32.mrf.mxu0
      %v8177 = vadd.f32 0.0, %v8176
      %8178 = vmatmul.bf16.gmra.mxu0 %v7502
      %v8179 = vpop.f32.mrf.mxu0
      %v8180 = vadd.f32 0.0, %v8179
      %v8181 = vpop.f32.mrf.mxu0
      %v8182 = vadd.f32 0.0, %v8181
      %8183 = vmatmul.bf16.gmra.mxu0 %v7505
      %v8184 = vpop.f32.mrf.mxu0
      %v8185 = vadd.f32 0.0, %v8184
      %v8186 = vpop.f32.mrf.mxu0
      %v8187 = vadd.f32 0.0, %v8186
      %8188 = vmatmul.bf16.gmra.mxu0 %v7508
      %v8189 = vpop.f32.mrf.mxu0
      %v8190 = vpop.f32.mrf.mxu0
      %8191 = vmatmul.bf16.gmra.mxu0 %v7511
      %v8192 = vpop.f32.mrf.mxu0
      %v8193 = vadd.f32 0.0, %v8192
      %v8194 = vpop.f32.mrf.mxu0
      %v8195 = vadd.f32 0.0, %v8194
      %8196 = vmatmul.bf16.gmra.mxu0 %v7514
      %v8197 = vpop.f32.mrf.mxu0
      %v8198 = vadd.f32 0.0, %v8197
      %v8199 = vpop.f32.mrf.mxu0
      %v8200 = vadd.f32 0.0, %v8199
      %8201 = vmatmul.bf16.gmra.mxu0 %v7517
      %v8202 = vpop.f32.mrf.mxu0
      %v8203 = vadd.f32 0.0, %v8202
      %v8204 = vpop.f32.mrf.mxu0
      %v8205 = vadd.f32 0.0, %v8204
      %8206 = vmatmul.bf16.gmra.mxu0 %v7520
      %v8207 = vpop.f32.mrf.mxu0
      %v8208 = vadd.f32 0.0, %v8207
      %v8209 = vpop.f32.mrf.mxu0
      %v8210 = vadd.f32 0.0, %v8209
      %8211 = vmatmul.bf16.gmra.mxu0 %v7523
      %v8212 = vpop.f32.mrf.mxu0
      %v8213 = vpop.f32.mrf.mxu0
      %8214 = vmatmul.bf16.gmra.mxu0 %v7526
      %v8215 = vpop.f32.mrf.mxu0
      %v8216 = vadd.f32 0.0, %v8215
      %v8217 = vpop.f32.mrf.mxu0
      %v8218 = vadd.f32 0.0, %v8217
      %8219 = vmatmul.bf16.gmra.mxu0 %v7529
      %v8220 = vpop.f32.mrf.mxu0
      %v8221 = vadd.f32 0.0, %v8220
      %v8222 = vpop.f32.mrf.mxu0
      %v8223 = vadd.f32 0.0, %v8222
      %8224 = vmatmul.bf16.gmra.mxu0 %v7532
      %v8225 = vpop.f32.mrf.mxu0
      %v8226 = vadd.f32 0.0, %v8225
      %v8227 = vpop.f32.mrf.mxu0
      %v8228 = vadd.f32 0.0, %v8227
      %8229 = vmatmul.bf16.gmra.mxu0 %v7535
      %v8230 = vpop.f32.mrf.mxu0
      %v8231 = vadd.f32 0.0, %v8230
      %v8232 = vpop.f32.mrf.mxu0
      %v8233 = vadd.f32 0.0, %v8232
      %8234 = vmatmul.bf16.gmra.mxu0 %v7538
      %v8235 = vpop.f32.mrf.mxu0
      %v8236 = vpop.f32.mrf.mxu0
      %8237 = vdwg.mxu0
      %8238 = vmatpush.bf16.msra.mxu0 %v7946
      %8239 = vmatpush.bf16.msra.mxu0 %v7943
      %8240 = vmatpush.bf16.msra.mxu0 %v7940
      %8241 = vmatpush.bf16.msra.mxu0 %v7937
      %8242 = vmatpush.bf16.msra.mxu0 %v7934
      %8243 = vmatpush.bf16.msra.mxu0 %v7931
      %8244 = vmatpush.bf16.msra.mxu0 %v7928
      %8245 = vmatpush.bf16.msra.mxu0 %v7925
      %8246 = vmatmul.bf16.gmra.mxu0 %v7422
      %v8247 = vpop.f32.mrf.mxu0
      %v8248 = vadd.f32 %v8055, %v8247
      %v8249 = vpop.f32.mrf.mxu0
      %v8250 = vadd.f32 %v8057, %v8249
      %8251 = vmatmul.bf16.gmra.mxu0 %v7425
      %v8252 = vpop.f32.mrf.mxu0
      %v8253 = vadd.f32 %v8060, %v8252
      %v8254 = vpop.f32.mrf.mxu0
      %v8255 = vadd.f32 %v8062, %v8254
      %8256 = vmatmul.bf16.gmra.mxu0 %v7428
      %v8257 = vpop.f32.mrf.mxu0
      %v8258 = vadd.f32 %v8065, %v8257
      %v8259 = vpop.f32.mrf.mxu0
      %v8260 = vadd.f32 %v8067, %v8259
      %8261 = vmatmul.bf16.gmra.mxu0 %v7431
      %v8262 = vpop.f32.mrf.mxu0
      %v8263 = vadd.f32 %v8070, %v8262
      %v8264 = vpop.f32.mrf.mxu0
      %v8265 = vadd.f32 %v8072, %v8264
      %8266 = vmatmul.bf16.gmra.mxu0 %v7434
      %v8267 = vpop.f32.mrf.mxu0
      %v8268 = vpop.f32.mrf.mxu0
      %8269 = vmatmul.bf16.gmra.mxu0 %v7437
      %v8270 = vpop.f32.mrf.mxu0
      %v8271 = vadd.f32 %v8078, %v8270
      %v8272 = vpop.f32.mrf.mxu0
      %v8273 = vadd.f32 %v8080, %v8272
      %8274 = vmatmul.bf16.gmra.mxu0 %v7440
      %v8275 = vpop.f32.mrf.mxu0
      %v8276 = vadd.f32 %v8083, %v8275
      %v8277 = vpop.f32.mrf.mxu0
      %v8278 = vadd.f32 %v8085, %v8277
      %8279 = vmatmul.bf16.gmra.mxu0 %v7443
      %v8280 = vpop.f32.mrf.mxu0
      %v8281 = vadd.f32 %v8088, %v8280
      %v8282 = vpop.f32.mrf.mxu0
      %v8283 = vadd.f32 %v8090, %v8282
      %8284 = vmatmul.bf16.gmra.mxu0 %v7446
      %v8285 = vpop.f32.mrf.mxu0
      %v8286 = vadd.f32 %v8093, %v8285
      %v8287 = vpop.f32.mrf.mxu0
      %v8288 = vadd.f32 %v8095, %v8287
      %8289 = vmatmul.bf16.gmra.mxu0 %v7449
      %v8290 = vpop.f32.mrf.mxu0
      %v8291 = vpop.f32.mrf.mxu0
      %8292 = vmatmul.bf16.gmra.mxu0 %v7452
      %v8293 = vpop.f32.mrf.mxu0
      %v8294 = vadd.f32 %v8101, %v8293
      %v8295 = vpop.f32.mrf.mxu0
      %v8296 = vadd.f32 %v8103, %v8295
      %8297 = vmatmul.bf16.gmra.mxu0 %v7455
      %v8298 = vpop.f32.mrf.mxu0
      %v8299 = vadd.f32 %v8106, %v8298
      %v8300 = vpop.f32.mrf.mxu0
      %v8301 = vadd.f32 %v8108, %v8300
      %8302 = vmatmul.bf16.gmra.mxu0 %v7458
      %v8303 = vpop.f32.mrf.mxu0
      %v8304 = vadd.f32 %v8111, %v8303
      %v8305 = vpop.f32.mrf.mxu0
      %v8306 = vadd.f32 %v8113, %v8305
      %8307 = vmatmul.bf16.gmra.mxu0 %v7461
      %v8308 = vpop.f32.mrf.mxu0
      %v8309 = vadd.f32 %v8116, %v8308
      %v8310 = vpop.f32.mrf.mxu0
      %v8311 = vadd.f32 %v8118, %v8310
      %8312 = vmatmul.bf16.gmra.mxu0 %v7464
      %v8313 = vpop.f32.mrf.mxu0
      %v8314 = vpop.f32.mrf.mxu0
      %8315 = vmatmul.bf16.gmra.mxu0 %v7467
      %v8316 = vpop.f32.mrf.mxu0
      %v8317 = vadd.f32 %v8124, %v8316
      %v8318 = vpop.f32.mrf.mxu0
      %v8319 = vadd.f32 %v8126, %v8318
      %8320 = vmatmul.bf16.gmra.mxu0 %v7470
      %v8321 = vpop.f32.mrf.mxu0
      %v8322 = vadd.f32 %v8129, %v8321
      %v8323 = vpop.f32.mrf.mxu0
      %v8324 = vadd.f32 %v8131, %v8323
      %8325 = vmatmul.bf16.gmra.mxu0 %v7473
      %v8326 = vpop.f32.mrf.mxu0
      %v8327 = vadd.f32 %v8134, %v8326
      %v8328 = vpop.f32.mrf.mxu0
      %v8329 = vadd.f32 %v8136, %v8328
      %8330 = vmatmul.bf16.gmra.mxu0 %v7476
      %v8331 = vpop.f32.mrf.mxu0
      %v8332 = vadd.f32 %v8139, %v8331
      %v8333 = vpop.f32.mrf.mxu0
      %v8334 = vadd.f32 %v8141, %v8333
      %8335 = vmatmul.bf16.gmra.mxu0 %v7479
      %v8336 = vpop.f32.mrf.mxu0
      %v8337 = vpop.f32.mrf.mxu0
      %8338 = vmatmul.bf16.gmra.mxu0 %v7482
      %v8339 = vpop.f32.mrf.mxu0
      %v8340 = vadd.f32 %v8147, %v8339
      %v8341 = vpop.f32.mrf.mxu0
      %v8342 = vadd.f32 %v8149, %v8341
      %8343 = vmatmul.bf16.gmra.mxu0 %v7485
      %v8344 = vpop.f32.mrf.mxu0
      %v8345 = vadd.f32 %v8152, %v8344
      %v8346 = vpop.f32.mrf.mxu0
      %v8347 = vadd.f32 %v8154, %v8346
      %8348 = vmatmul.bf16.gmra.mxu0 %v7488
      %v8349 = vpop.f32.mrf.mxu0
      %v8350 = vadd.f32 %v8157, %v8349
      %v8351 = vpop.f32.mrf.mxu0
      %v8352 = vadd.f32 %v8159, %v8351
      %8353 = vmatmul.bf16.gmra.mxu0 %v7491
      %v8354 = vpop.f32.mrf.mxu0
      %v8355 = vadd.f32 %v8162, %v8354
      %v8356 = vpop.f32.mrf.mxu0
      %v8357 = vadd.f32 %v8164, %v8356
      %8358 = vmatmul.bf16.gmra.mxu0 %v7494
      %v8359 = vpop.f32.mrf.mxu0
      %v8360 = vpop.f32.mrf.mxu0
      %8361 = vmatmul.bf16.gmra.mxu0 %v7497
      %v8362 = vpop.f32.mrf.mxu0
      %v8363 = vadd.f32 %v8170, %v8362
      %v8364 = vpop.f32.mrf.mxu0
      %v8365 = vadd.f32 %v8172, %v8364
      %8366 = vmatmul.bf16.gmra.mxu0 %v7500
      %v8367 = vpop.f32.mrf.mxu0
      %v8368 = vadd.f32 %v8175, %v8367
      %v8369 = vpop.f32.mrf.mxu0
      %v8370 = vadd.f32 %v8177, %v8369
      %8371 = vmatmul.bf16.gmra.mxu0 %v7503
      %v8372 = vpop.f32.mrf.mxu0
      %v8373 = vadd.f32 %v8180, %v8372
      %v8374 = vpop.f32.mrf.mxu0
      %v8375 = vadd.f32 %v8182, %v8374
      %8376 = vmatmul.bf16.gmra.mxu0 %v7506
      %v8377 = vpop.f32.mrf.mxu0
      %v8378 = vadd.f32 %v8185, %v8377
      %v8379 = vpop.f32.mrf.mxu0
      %v8380 = vadd.f32 %v8187, %v8379
      %8381 = vmatmul.bf16.gmra.mxu0 %v7509
      %v8382 = vpop.f32.mrf.mxu0
      %v8383 = vpop.f32.mrf.mxu0
      %8384 = vmatmul.bf16.gmra.mxu0 %v7512
      %v8385 = vpop.f32.mrf.mxu0
      %v8386 = vadd.f32 %v8193, %v8385
      %v8387 = vpop.f32.mrf.mxu0
      %v8388 = vadd.f32 %v8195, %v8387
      %8389 = vmatmul.bf16.gmra.mxu0 %v7515
      %v8390 = vpop.f32.mrf.mxu0
      %v8391 = vadd.f32 %v8198, %v8390
      %v8392 = vpop.f32.mrf.mxu0
      %v8393 = vadd.f32 %v8200, %v8392
      %8394 = vmatmul.bf16.gmra.mxu0 %v7518
      %v8395 = vpop.f32.mrf.mxu0
      %v8396 = vadd.f32 %v8203, %v8395
      %v8397 = vpop.f32.mrf.mxu0
      %v8398 = vadd.f32 %v8205, %v8397
      %8399 = vmatmul.bf16.gmra.mxu0 %v7521
      %v8400 = vpop.f32.mrf.mxu0
      %v8401 = vadd.f32 %v8208, %v8400
      %v8402 = vpop.f32.mrf.mxu0
      %v8403 = vadd.f32 %v8210, %v8402
      %8404 = vmatmul.bf16.gmra.mxu0 %v7524
      %v8405 = vpop.f32.mrf.mxu0
      %v8406 = vpop.f32.mrf.mxu0
      %8407 = vmatmul.bf16.gmra.mxu0 %v7527
      %v8408 = vpop.f32.mrf.mxu0
      %v8409 = vadd.f32 %v8216, %v8408
      %v8410 = vpop.f32.mrf.mxu0
      %v8411 = vadd.f32 %v8218, %v8410
      %8412 = vmatmul.bf16.gmra.mxu0 %v7530
      %v8413 = vpop.f32.mrf.mxu0
      %v8414 = vadd.f32 %v8221, %v8413
      %v8415 = vpop.f32.mrf.mxu0
      %v8416 = vadd.f32 %v8223, %v8415
      %8417 = vmatmul.bf16.gmra.mxu0 %v7533
      %v8418 = vpop.f32.mrf.mxu0
      %v8419 = vadd.f32 %v8226, %v8418
      %v8420 = vpop.f32.mrf.mxu0
      %v8421 = vadd.f32 %v8228, %v8420
      %8422 = vmatmul.bf16.gmra.mxu0 %v7536
      %v8423 = vpop.f32.mrf.mxu0
      %v8424 = vadd.f32 %v8231, %v8423
      %v8425 = vpop.f32.mrf.mxu0
      %v8426 = vadd.f32 %v8233, %v8425
      %8427 = vmatmul.bf16.gmra.mxu0 %v7539
      %v8428 = vpop.f32.mrf.mxu0
      %v8429 = vpop.f32.mrf.mxu0
      %8430 = vdwg.mxu0
      %8431 = vmatpush.bf16.msra.mxu0 %v7970
      %8432 = vmatpush.bf16.msra.mxu0 %v7967
      %8433 = vmatpush.bf16.msra.mxu0 %v7964
      %8434 = vmatpush.bf16.msra.mxu0 %v7961
      %8435 = vmatpush.bf16.msra.mxu0 %v7958
      %8436 = vmatpush.bf16.msra.mxu0 %v7955
      %8437 = vmatpush.bf16.msra.mxu0 %v7952
      %8438 = vmatpush.bf16.msra.mxu0 %v7949
      %8439 = vmatmul.bf16.gmra.mxu0 %v7423
      %v8440 = vpop.f32.mrf.mxu0
      %v8441 = vadd.f32 %v8248, %v8440
      %v8442 = vpop.f32.mrf.mxu0
      %v8443 = vadd.f32 %v8250, %v8442
      %8444 = vmatmul.bf16.gmra.mxu0 %v7426
      %v8445 = vpop.f32.mrf.mxu0
      %v8446 = vadd.f32 %v8253, %v8445
      %v8447 = vpop.f32.mrf.mxu0
      %v8448 = vadd.f32 %v8255, %v8447
      %8449 = vmatmul.bf16.gmra.mxu0 %v7429
      %v8450 = vpop.f32.mrf.mxu0
      %v8451 = vadd.f32 %v8258, %v8450
      %v8452 = vpop.f32.mrf.mxu0
      %v8453 = vadd.f32 %v8260, %v8452
      %8454 = vmatmul.bf16.gmra.mxu0 %v7432
      %v8455 = vpop.f32.mrf.mxu0
      %v8456 = vadd.f32 %v8263, %v8455
      %v8457 = vpop.f32.mrf.mxu0
      %v8458 = vadd.f32 %v8265, %v8457
      %8459 = vmatmul.bf16.gmra.mxu0 %v7435
      %v8460 = vpop.f32.mrf.mxu0
      %v8461 = vpop.f32.mrf.mxu0
      %8462 = vmatmul.bf16.gmra.mxu0 %v7438
      %v8463 = vpop.f32.mrf.mxu0
      %v8464 = vadd.f32 %v8271, %v8463
      %v8465 = vpop.f32.mrf.mxu0
      %v8466 = vadd.f32 %v8273, %v8465
      %8467 = vmatmul.bf16.gmra.mxu0 %v7441
      %v8468 = vpop.f32.mrf.mxu0
      %v8469 = vadd.f32 %v8276, %v8468
      %v8470 = vpop.f32.mrf.mxu0
      %v8471 = vadd.f32 %v8278, %v8470
      %8472 = vmatmul.bf16.gmra.mxu0 %v7444
      %v8473 = vpop.f32.mrf.mxu0
      %v8474 = vadd.f32 %v8281, %v8473
      %v8475 = vpop.f32.mrf.mxu0
      %v8476 = vadd.f32 %v8283, %v8475
      %8477 = vmatmul.bf16.gmra.mxu0 %v7447
      %v8478 = vpop.f32.mrf.mxu0
      %v8479 = vadd.f32 %v8286, %v8478
      %v8480 = vpop.f32.mrf.mxu0
      %v8481 = vadd.f32 %v8288, %v8480
      %8482 = vmatmul.bf16.gmra.mxu0 %v7450
      %v8483 = vpop.f32.mrf.mxu0
      %v8484 = vpop.f32.mrf.mxu0
      %8485 = vmatmul.bf16.gmra.mxu0 %v7453
      %v8486 = vpop.f32.mrf.mxu0
      %v8487 = vadd.f32 %v8294, %v8486
      %v8488 = vpop.f32.mrf.mxu0
      %v8489 = vadd.f32 %v8296, %v8488
      %8490 = vmatmul.bf16.gmra.mxu0 %v7456
      %v8491 = vpop.f32.mrf.mxu0
      %v8492 = vadd.f32 %v8299, %v8491
      %v8493 = vpop.f32.mrf.mxu0
      %v8494 = vadd.f32 %v8301, %v8493
      %8495 = vmatmul.bf16.gmra.mxu0 %v7459
      %v8496 = vpop.f32.mrf.mxu0
      %v8497 = vadd.f32 %v8304, %v8496
      %v8498 = vpop.f32.mrf.mxu0
      %v8499 = vadd.f32 %v8306, %v8498
      %8500 = vmatmul.bf16.gmra.mxu0 %v7462
      %v8501 = vpop.f32.mrf.mxu0
      %v8502 = vadd.f32 %v8309, %v8501
      %v8503 = vpop.f32.mrf.mxu0
      %v8504 = vadd.f32 %v8311, %v8503
      %8505 = vmatmul.bf16.gmra.mxu0 %v7465
      %v8506 = vpop.f32.mrf.mxu0
      %v8507 = vpop.f32.mrf.mxu0
      %8508 = vmatmul.bf16.gmra.mxu0 %v7468
      %v8509 = vpop.f32.mrf.mxu0
      %v8510 = vadd.f32 %v8317, %v8509
      %v8511 = vpop.f32.mrf.mxu0
      %v8512 = vadd.f32 %v8319, %v8511
      %8513 = vmatmul.bf16.gmra.mxu0 %v7471
      %v8514 = vpop.f32.mrf.mxu0
      %v8515 = vadd.f32 %v8322, %v8514
      %v8516 = vpop.f32.mrf.mxu0
      %v8517 = vadd.f32 %v8324, %v8516
      %8518 = vmatmul.bf16.gmra.mxu0 %v7474
      %v8519 = vpop.f32.mrf.mxu0
      %v8520 = vadd.f32 %v8327, %v8519
      %v8521 = vpop.f32.mrf.mxu0
      %v8522 = vadd.f32 %v8329, %v8521
      %8523 = vmatmul.bf16.gmra.mxu0 %v7477
      %v8524 = vpop.f32.mrf.mxu0
      %v8525 = vadd.f32 %v8332, %v8524
      %v8526 = vpop.f32.mrf.mxu0
      %v8527 = vadd.f32 %v8334, %v8526
      %8528 = vmatmul.bf16.gmra.mxu0 %v7480
      %v8529 = vpop.f32.mrf.mxu0
      %v8530 = vpop.f32.mrf.mxu0
      %8531 = vmatmul.bf16.gmra.mxu0 %v7483
      %v8532 = vpop.f32.mrf.mxu0
      %v8533 = vadd.f32 %v8340, %v8532
      %v8534 = vpop.f32.mrf.mxu0
      %v8535 = vadd.f32 %v8342, %v8534
      %8536 = vmatmul.bf16.gmra.mxu0 %v7486
      %v8537 = vpop.f32.mrf.mxu0
      %v8538 = vadd.f32 %v8345, %v8537
      %v8539 = vpop.f32.mrf.mxu0
      %v8540 = vadd.f32 %v8347, %v8539
      %8541 = vmatmul.bf16.gmra.mxu0 %v7489
      %v8542 = vpop.f32.mrf.mxu0
      %v8543 = vadd.f32 %v8350, %v8542
      %v8544 = vpop.f32.mrf.mxu0
      %v8545 = vadd.f32 %v8352, %v8544
      %8546 = vmatmul.bf16.gmra.mxu0 %v7492
      %v8547 = vpop.f32.mrf.mxu0
      %v8548 = vadd.f32 %v8355, %v8547
      %v8549 = vpop.f32.mrf.mxu0
      %v8550 = vadd.f32 %v8357, %v8549
      %8551 = vmatmul.bf16.gmra.mxu0 %v7495
      %v8552 = vpop.f32.mrf.mxu0
      %v8553 = vpop.f32.mrf.mxu0
      %8554 = vmatmul.bf16.gmra.mxu0 %v7498
      %v8555 = vpop.f32.mrf.mxu0
      %v8556 = vadd.f32 %v8363, %v8555
      %v8557 = vpop.f32.mrf.mxu0
      %v8558 = vadd.f32 %v8365, %v8557
      %8559 = vmatmul.bf16.gmra.mxu0 %v7501
      %v8560 = vpop.f32.mrf.mxu0
      %v8561 = vadd.f32 %v8368, %v8560
      %v8562 = vpop.f32.mrf.mxu0
      %v8563 = vadd.f32 %v8370, %v8562
      %8564 = vmatmul.bf16.gmra.mxu0 %v7504
      %v8565 = vpop.f32.mrf.mxu0
      %v8566 = vadd.f32 %v8373, %v8565
      %v8567 = vpop.f32.mrf.mxu0
      %v8568 = vadd.f32 %v8375, %v8567
      %8569 = vmatmul.bf16.gmra.mxu0 %v7507
      %v8570 = vpop.f32.mrf.mxu0
      %v8571 = vadd.f32 %v8378, %v8570
      %v8572 = vpop.f32.mrf.mxu0
      %v8573 = vadd.f32 %v8380, %v8572
      %8574 = vmatmul.bf16.gmra.mxu0 %v7510
      %v8575 = vpop.f32.mrf.mxu0
      %v8576 = vpop.f32.mrf.mxu0
      %8577 = vmatmul.bf16.gmra.mxu0 %v7513
      %v8578 = vpop.f32.mrf.mxu0
      %v8579 = vadd.f32 %v8386, %v8578
      %v8580 = vpop.f32.mrf.mxu0
      %v8581 = vadd.f32 %v8388, %v8580
      %8582 = vmatmul.bf16.gmra.mxu0 %v7516
      %v8583 = vpop.f32.mrf.mxu0
      %v8584 = vadd.f32 %v8391, %v8583
      %v8585 = vpop.f32.mrf.mxu0
      %v8586 = vadd.f32 %v8393, %v8585
      %8587 = vmatmul.bf16.gmra.mxu0 %v7519
      %v8588 = vpop.f32.mrf.mxu0
      %v8589 = vadd.f32 %v8396, %v8588
      %v8590 = vpop.f32.mrf.mxu0
      %v8591 = vadd.f32 %v8398, %v8590
      %8592 = vmatmul.bf16.gmra.mxu0 %v7522
      %v8593 = vpop.f32.mrf.mxu0
      %v8594 = vadd.f32 %v8401, %v8593
      %v8595 = vpop.f32.mrf.mxu0
      %v8596 = vadd.f32 %v8403, %v8595
      %8597 = vmatmul.bf16.gmra.mxu0 %v7525
      %v8598 = vpop.f32.mrf.mxu0
      %v8599 = vpop.f32.mrf.mxu0
      %8600 = vmatmul.bf16.gmra.mxu0 %v7528
      %v8601 = vpop.f32.mrf.mxu0
      %v8602 = vadd.f32 %v8409, %v8601
      %v8603 = vpop.f32.mrf.mxu0
      %v8604 = vadd.f32 %v8411, %v8603
      %8605 = vmatmul.bf16.gmra.mxu0 %v7531
      %v8606 = vpop.f32.mrf.mxu0
      %v8607 = vadd.f32 %v8414, %v8606
      %v8608 = vpop.f32.mrf.mxu0
      %v8609 = vadd.f32 %v8416, %v8608
      %8610 = vmatmul.bf16.gmra.mxu0 %v7534
      %v8611 = vpop.f32.mrf.mxu0
      %v8612 = vadd.f32 %v8419, %v8611
      %v8613 = vpop.f32.mrf.mxu0
      %v8614 = vadd.f32 %v8421, %v8613
      %8615 = vmatmul.bf16.gmra.mxu0 %v7537
      %v8616 = vpop.f32.mrf.mxu0
      %v8617 = vadd.f32 %v8424, %v8616
      %v8618 = vpop.f32.mrf.mxu0
      %v8619 = vadd.f32 %v8426, %v8618
      %8620 = vmatmul.bf16.gmra.mxu0 %v7540
      %v8621 = vpop.f32.mrf.mxu0
      %v8622 = vpop.f32.mrf.mxu0
      %8623 = vdwg.mxu0
      %8624 = vmatpush.bf16.msra.mxu0 %v7923
      %8625 = vmatpush.bf16.msra.mxu0 %v7920
      %8626 = vmatpush.bf16.msra.mxu0 %v7917
      %8627 = vmatpush.bf16.msra.mxu0 %v7914
      %8628 = vmatpush.bf16.msra.mxu0 %v7911
      %8629 = vmatpush.bf16.msra.mxu0 %v7908
      %8630 = vmatpush.bf16.msra.mxu0 %v7905
      %8631 = vmatpush.bf16.msra.mxu0 %v7902
      %8632 = vmatmul.bf16.gmra.mxu0 %v7421
      %v8633 = vpop.f32.mrf.mxu0
      %v8634 = vpop.f32.mrf.mxu0
      %v8635 = vadd.f32 0.0, %v8634
      %8636 = vmatmul.bf16.gmra.mxu0 %v7424
      %v8637 = vpop.f32.mrf.mxu0
      %v8638 = vadd.f32 0.0, %v8637
      %v8639 = vpop.f32.mrf.mxu0
      %v8640 = vadd.f32 0.0, %v8639
      %8641 = vmatmul.bf16.gmra.mxu0 %v7427
      %v8642 = vpop.f32.mrf.mxu0
      %v8643 = vadd.f32 0.0, %v8642
      %v8644 = vpop.f32.mrf.mxu0
      %v8645 = vadd.f32 0.0, %v8644
      %8646 = vmatmul.bf16.gmra.mxu0 %v7430
      %v8647 = vpop.f32.mrf.mxu0
      %v8648 = vadd.f32 0.0, %v8647
      %v8649 = vpop.f32.mrf.mxu0
      %v8650 = vadd.f32 0.0, %v8649
      %8651 = vmatmul.bf16.gmra.mxu0 %v7433
      %v8652 = vpop.f32.mrf.mxu0
      %v8653 = vadd.f32 0.0, %v8652
      %v8654 = vpop.f32.mrf.mxu0
      %8655 = vmatmul.bf16.gmra.mxu0 %v7436
      %v8656 = vpop.f32.mrf.mxu0
      %v8657 = vpop.f32.mrf.mxu0
      %v8658 = vadd.f32 0.0, %v8657
      %8659 = vmatmul.bf16.gmra.mxu0 %v7439
      %v8660 = vpop.f32.mrf.mxu0
      %v8661 = vadd.f32 0.0, %v8660
      %v8662 = vpop.f32.mrf.mxu0
      %v8663 = vadd.f32 0.0, %v8662
      %8664 = vmatmul.bf16.gmra.mxu0 %v7442
      %v8665 = vpop.f32.mrf.mxu0
      %v8666 = vadd.f32 0.0, %v8665
      %v8667 = vpop.f32.mrf.mxu0
      %v8668 = vadd.f32 0.0, %v8667
      %8669 = vmatmul.bf16.gmra.mxu0 %v7445
      %v8670 = vpop.f32.mrf.mxu0
      %v8671 = vadd.f32 0.0, %v8670
      %v8672 = vpop.f32.mrf.mxu0
      %v8673 = vadd.f32 0.0, %v8672
      %8674 = vmatmul.bf16.gmra.mxu0 %v7448
      %v8675 = vpop.f32.mrf.mxu0
      %v8676 = vadd.f32 0.0, %v8675
      %v8677 = vpop.f32.mrf.mxu0
      %8678 = vmatmul.bf16.gmra.mxu0 %v7451
      %v8679 = vpop.f32.mrf.mxu0
      %v8680 = vpop.f32.mrf.mxu0
      %v8681 = vadd.f32 0.0, %v8680
      %8682 = vmatmul.bf16.gmra.mxu0 %v7454
      %v8683 = vpop.f32.mrf.mxu0
      %v8684 = vadd.f32 0.0, %v8683
      %v8685 = vpop.f32.mrf.mxu0
      %v8686 = vadd.f32 0.0, %v8685
      %8687 = vmatmul.bf16.gmra.mxu0 %v7457
      %v8688 = vpop.f32.mrf.mxu0
      %v8689 = vadd.f32 0.0, %v8688
      %v8690 = vpop.f32.mrf.mxu0
      %v8691 = vadd.f32 0.0, %v8690
      %8692 = vmatmul.bf16.gmra.mxu0 %v7460
      %v8693 = vpop.f32.mrf.mxu0
      %v8694 = vadd.f32 0.0, %v8693
      %v8695 = vpop.f32.mrf.mxu0
      %v8696 = vadd.f32 0.0, %v8695
      %8697 = vmatmul.bf16.gmra.mxu0 %v7463
      %v8698 = vpop.f32.mrf.mxu0
      %v8699 = vadd.f32 0.0, %v8698
      %v8700 = vpop.f32.mrf.mxu0
      %8701 = vmatmul.bf16.gmra.mxu0 %v7466
      %v8702 = vpop.f32.mrf.mxu0
      %v8703 = vpop.f32.mrf.mxu0
      %v8704 = vadd.f32 0.0, %v8703
      %8705 = vmatmul.bf16.gmra.mxu0 %v7469
      %v8706 = vpop.f32.mrf.mxu0
      %v8707 = vadd.f32 0.0, %v8706
      %v8708 = vpop.f32.mrf.mxu0
      %v8709 = vadd.f32 0.0, %v8708
      %8710 = vmatmul.bf16.gmra.mxu0 %v7472
      %v8711 = vpop.f32.mrf.mxu0
      %v8712 = vadd.f32 0.0, %v8711
      %v8713 = vpop.f32.mrf.mxu0
      %v8714 = vadd.f32 0.0, %v8713
      %8715 = vmatmul.bf16.gmra.mxu0 %v7475
      %v8716 = vpop.f32.mrf.mxu0
      %v8717 = vadd.f32 0.0, %v8716
      %v8718 = vpop.f32.mrf.mxu0
      %v8719 = vadd.f32 0.0, %v8718
      %8720 = vmatmul.bf16.gmra.mxu0 %v7478
      %v8721 = vpop.f32.mrf.mxu0
      %v8722 = vadd.f32 0.0, %v8721
      %v8723 = vpop.f32.mrf.mxu0
      %8724 = vmatmul.bf16.gmra.mxu0 %v7481
      %v8725 = vpop.f32.mrf.mxu0
      %v8726 = vpop.f32.mrf.mxu0
      %v8727 = vadd.f32 0.0, %v8726
      %8728 = vmatmul.bf16.gmra.mxu0 %v7484
      %v8729 = vpop.f32.mrf.mxu0
      %v8730 = vadd.f32 0.0, %v8729
      %v8731 = vpop.f32.mrf.mxu0
      %v8732 = vadd.f32 0.0, %v8731
      %8733 = vmatmul.bf16.gmra.mxu0 %v7487
      %v8734 = vpop.f32.mrf.mxu0
      %v8735 = vadd.f32 0.0, %v8734
      %v8736 = vpop.f32.mrf.mxu0
      %v8737 = vadd.f32 0.0, %v8736
      %8738 = vmatmul.bf16.gmra.mxu0 %v7490
      %v8739 = vpop.f32.mrf.mxu0
      %v8740 = vadd.f32 0.0, %v8739
      %v8741 = vpop.f32.mrf.mxu0
      %v8742 = vadd.f32 0.0, %v8741
      %8743 = vmatmul.bf16.gmra.mxu0 %v7493
      %v8744 = vpop.f32.mrf.mxu0
      %v8745 = vadd.f32 0.0, %v8744
      %v8746 = vpop.f32.mrf.mxu0
      %8747 = vmatmul.bf16.gmra.mxu0 %v7496
      %v8748 = vpop.f32.mrf.mxu0
      %v8749 = vpop.f32.mrf.mxu0
      %v8750 = vadd.f32 0.0, %v8749
      %8751 = vmatmul.bf16.gmra.mxu0 %v7499
      %v8752 = vpop.f32.mrf.mxu0
      %v8753 = vadd.f32 0.0, %v8752
      %v8754 = vpop.f32.mrf.mxu0
      %v8755 = vadd.f32 0.0, %v8754
      %8756 = vmatmul.bf16.gmra.mxu0 %v7502
      %v8757 = vpop.f32.mrf.mxu0
      %v8758 = vadd.f32 0.0, %v8757
      %v8759 = vpop.f32.mrf.mxu0
      %v8760 = vadd.f32 0.0, %v8759
      %8761 = vmatmul.bf16.gmra.mxu0 %v7505
      %v8762 = vpop.f32.mrf.mxu0
      %v8763 = vadd.f32 0.0, %v8762
      %v8764 = vpop.f32.mrf.mxu0
      %v8765 = vadd.f32 0.0, %v8764
      %8766 = vmatmul.bf16.gmra.mxu0 %v7508
      %v8767 = vpop.f32.mrf.mxu0
      %v8768 = vadd.f32 0.0, %v8767
      %v8769 = vpop.f32.mrf.mxu0
      %8770 = vmatmul.bf16.gmra.mxu0 %v7511
      %v8771 = vpop.f32.mrf.mxu0
      %v8772 = vpop.f32.mrf.mxu0
      %v8773 = vadd.f32 0.0, %v8772
      %8774 = vmatmul.bf16.gmra.mxu0 %v7514
      %v8775 = vpop.f32.mrf.mxu0
      %v8776 = vadd.f32 0.0, %v8775
      %v8777 = vpop.f32.mrf.mxu0
      %v8778 = vadd.f32 0.0, %v8777
      %8779 = vmatmul.bf16.gmra.mxu0 %v7517
      %v8780 = vpop.f32.mrf.mxu0
      %v8781 = vadd.f32 0.0, %v8780
      %v8782 = vpop.f32.mrf.mxu0
      %v8783 = vadd.f32 0.0, %v8782
      %8784 = vmatmul.bf16.gmra.mxu0 %v7520
      %v8785 = vpop.f32.mrf.mxu0
      %v8786 = vadd.f32 0.0, %v8785
      %v8787 = vpop.f32.mrf.mxu0
      %v8788 = vadd.f32 0.0, %v8787
      %8789 = vmatmul.bf16.gmra.mxu0 %v7523
      %v8790 = vpop.f32.mrf.mxu0
      %v8791 = vadd.f32 0.0, %v8790
      %v8792 = vpop.f32.mrf.mxu0
      %8793 = vmatmul.bf16.gmra.mxu0 %v7526
      %v8794 = vpop.f32.mrf.mxu0
      %v8795 = vpop.f32.mrf.mxu0
      %v8796 = vadd.f32 0.0, %v8795
      %8797 = vmatmul.bf16.gmra.mxu0 %v7529
      %v8798 = vpop.f32.mrf.mxu0
      %v8799 = vadd.f32 0.0, %v8798
      %v8800 = vpop.f32.mrf.mxu0
      %v8801 = vadd.f32 0.0, %v8800
      %8802 = vmatmul.bf16.gmra.mxu0 %v7532
      %v8803 = vpop.f32.mrf.mxu0
      %v8804 = vadd.f32 0.0, %v8803
      %v8805 = vpop.f32.mrf.mxu0
      %v8806 = vadd.f32 0.0, %v8805
      %8807 = vmatmul.bf16.gmra.mxu0 %v7535
      %v8808 = vpop.f32.mrf.mxu0
      %v8809 = vadd.f32 0.0, %v8808
      %v8810 = vpop.f32.mrf.mxu0
      %v8811 = vadd.f32 0.0, %v8810
      %8812 = vmatmul.bf16.gmra.mxu0 %v7538
      %v8813 = vpop.f32.mrf.mxu0
      %v8814 = vadd.f32 0.0, %v8813
      %v8815 = vpop.f32.mrf.mxu0
      %8816 = vdwg.mxu0
      %8817 = vmatpush.bf16.msra.mxu0 %v7947
      %8818 = vmatpush.bf16.msra.mxu0 %v7944
      %8819 = vmatpush.bf16.msra.mxu0 %v7941
      %8820 = vmatpush.bf16.msra.mxu0 %v7938
      %8821 = vmatpush.bf16.msra.mxu0 %v7935
      %8822 = vmatpush.bf16.msra.mxu0 %v7932
      %8823 = vmatpush.bf16.msra.mxu0 %v7929
      %8824 = vmatpush.bf16.msra.mxu0 %v7926
      %8825 = vmatmul.bf16.gmra.mxu0 %v7422
      %v8826 = vpop.f32.mrf.mxu0
      %v8827 = vpop.f32.mrf.mxu0
      %v8828 = vadd.f32 %v8635, %v8827
      %8829 = vmatmul.bf16.gmra.mxu0 %v7425
      %v8830 = vpop.f32.mrf.mxu0
      %v8831 = vadd.f32 %v8638, %v8830
      %v8832 = vpop.f32.mrf.mxu0
      %v8833 = vadd.f32 %v8640, %v8832
      %8834 = vmatmul.bf16.gmra.mxu0 %v7428
      %v8835 = vpop.f32.mrf.mxu0
      %v8836 = vadd.f32 %v8643, %v8835
      %v8837 = vpop.f32.mrf.mxu0
      %v8838 = vadd.f32 %v8645, %v8837
      %8839 = vmatmul.bf16.gmra.mxu0 %v7431
      %v8840 = vpop.f32.mrf.mxu0
      %v8841 = vadd.f32 %v8648, %v8840
      %v8842 = vpop.f32.mrf.mxu0
      %v8843 = vadd.f32 %v8650, %v8842
      %8844 = vmatmul.bf16.gmra.mxu0 %v7434
      %v8845 = vpop.f32.mrf.mxu0
      %v8846 = vadd.f32 %v8653, %v8845
      %v8847 = vpop.f32.mrf.mxu0
      %8848 = vmatmul.bf16.gmra.mxu0 %v7437
      %v8849 = vpop.f32.mrf.mxu0
      %v8850 = vpop.f32.mrf.mxu0
      %v8851 = vadd.f32 %v8658, %v8850
      %8852 = vmatmul.bf16.gmra.mxu0 %v7440
      %v8853 = vpop.f32.mrf.mxu0
      %v8854 = vadd.f32 %v8661, %v8853
      %v8855 = vpop.f32.mrf.mxu0
      %v8856 = vadd.f32 %v8663, %v8855
      %8857 = vmatmul.bf16.gmra.mxu0 %v7443
      %v8858 = vpop.f32.mrf.mxu0
      %v8859 = vadd.f32 %v8666, %v8858
      %v8860 = vpop.f32.mrf.mxu0
      %v8861 = vadd.f32 %v8668, %v8860
      %8862 = vmatmul.bf16.gmra.mxu0 %v7446
      %v8863 = vpop.f32.mrf.mxu0
      %v8864 = vadd.f32 %v8671, %v8863
      %v8865 = vpop.f32.mrf.mxu0
      %v8866 = vadd.f32 %v8673, %v8865
      %8867 = vmatmul.bf16.gmra.mxu0 %v7449
      %v8868 = vpop.f32.mrf.mxu0
      %v8869 = vadd.f32 %v8676, %v8868
      %v8870 = vpop.f32.mrf.mxu0
      %8871 = vmatmul.bf16.gmra.mxu0 %v7452
      %v8872 = vpop.f32.mrf.mxu0
      %v8873 = vpop.f32.mrf.mxu0
      %v8874 = vadd.f32 %v8681, %v8873
      %8875 = vmatmul.bf16.gmra.mxu0 %v7455
      %v8876 = vpop.f32.mrf.mxu0
      %v8877 = vadd.f32 %v8684, %v8876
      %v8878 = vpop.f32.mrf.mxu0
      %v8879 = vadd.f32 %v8686, %v8878
      %8880 = vmatmul.bf16.gmra.mxu0 %v7458
      %v8881 = vpop.f32.mrf.mxu0
      %v8882 = vadd.f32 %v8689, %v8881
      %v8883 = vpop.f32.mrf.mxu0
      %v8884 = vadd.f32 %v8691, %v8883
      %8885 = vmatmul.bf16.gmra.mxu0 %v7461
      %v8886 = vpop.f32.mrf.mxu0
      %v8887 = vadd.f32 %v8694, %v8886
      %v8888 = vpop.f32.mrf.mxu0
      %v8889 = vadd.f32 %v8696, %v8888
      %8890 = vmatmul.bf16.gmra.mxu0 %v7464
      %v8891 = vpop.f32.mrf.mxu0
      %v8892 = vadd.f32 %v8699, %v8891
      %v8893 = vpop.f32.mrf.mxu0
      %8894 = vmatmul.bf16.gmra.mxu0 %v7467
      %v8895 = vpop.f32.mrf.mxu0
      %v8896 = vpop.f32.mrf.mxu0
      %v8897 = vadd.f32 %v8704, %v8896
      %8898 = vmatmul.bf16.gmra.mxu0 %v7470
      %v8899 = vpop.f32.mrf.mxu0
      %v8900 = vadd.f32 %v8707, %v8899
      %v8901 = vpop.f32.mrf.mxu0
      %v8902 = vadd.f32 %v8709, %v8901
      %8903 = vmatmul.bf16.gmra.mxu0 %v7473
      %v8904 = vpop.f32.mrf.mxu0
      %v8905 = vadd.f32 %v8712, %v8904
      %v8906 = vpop.f32.mrf.mxu0
      %v8907 = vadd.f32 %v8714, %v8906
      %8908 = vmatmul.bf16.gmra.mxu0 %v7476
      %v8909 = vpop.f32.mrf.mxu0
      %v8910 = vadd.f32 %v8717, %v8909
      %v8911 = vpop.f32.mrf.mxu0
      %v8912 = vadd.f32 %v8719, %v8911
      %8913 = vmatmul.bf16.gmra.mxu0 %v7479
      %v8914 = vpop.f32.mrf.mxu0
      %v8915 = vadd.f32 %v8722, %v8914
      %v8916 = vpop.f32.mrf.mxu0
      %8917 = vmatmul.bf16.gmra.mxu0 %v7482
      %v8918 = vpop.f32.mrf.mxu0
      %v8919 = vpop.f32.mrf.mxu0
      %v8920 = vadd.f32 %v8727, %v8919
      %8921 = vmatmul.bf16.gmra.mxu0 %v7485
      %v8922 = vpop.f32.mrf.mxu0
      %v8923 = vadd.f32 %v8730, %v8922
      %v8924 = vpop.f32.mrf.mxu0
      %v8925 = vadd.f32 %v8732, %v8924
      %8926 = vmatmul.bf16.gmra.mxu0 %v7488
      %v8927 = vpop.f32.mrf.mxu0
      %v8928 = vadd.f32 %v8735, %v8927
      %v8929 = vpop.f32.mrf.mxu0
      %v8930 = vadd.f32 %v8737, %v8929
      %8931 = vmatmul.bf16.gmra.mxu0 %v7491
      %v8932 = vpop.f32.mrf.mxu0
      %v8933 = vadd.f32 %v8740, %v8932
      %v8934 = vpop.f32.mrf.mxu0
      %v8935 = vadd.f32 %v8742, %v8934
      %8936 = vmatmul.bf16.gmra.mxu0 %v7494
      %v8937 = vpop.f32.mrf.mxu0
      %v8938 = vadd.f32 %v8745, %v8937
      %v8939 = vpop.f32.mrf.mxu0
      %8940 = vmatmul.bf16.gmra.mxu0 %v7497
      %v8941 = vpop.f32.mrf.mxu0
      %v8942 = vpop.f32.mrf.mxu0
      %v8943 = vadd.f32 %v8750, %v8942
      %8944 = vmatmul.bf16.gmra.mxu0 %v7500
      %v8945 = vpop.f32.mrf.mxu0
      %v8946 = vadd.f32 %v8753, %v8945
      %v8947 = vpop.f32.mrf.mxu0
      %v8948 = vadd.f32 %v8755, %v8947
      %8949 = vmatmul.bf16.gmra.mxu0 %v7503
      %v8950 = vpop.f32.mrf.mxu0
      %v8951 = vadd.f32 %v8758, %v8950
      %v8952 = vpop.f32.mrf.mxu0
      %v8953 = vadd.f32 %v8760, %v8952
      %8954 = vmatmul.bf16.gmra.mxu0 %v7506
      %v8955 = vpop.f32.mrf.mxu0
      %v8956 = vadd.f32 %v8763, %v8955
      %v8957 = vpop.f32.mrf.mxu0
      %v8958 = vadd.f32 %v8765, %v8957
      %8959 = vmatmul.bf16.gmra.mxu0 %v7509
      %v8960 = vpop.f32.mrf.mxu0
      %v8961 = vadd.f32 %v8768, %v8960
      %v8962 = vpop.f32.mrf.mxu0
      %8963 = vmatmul.bf16.gmra.mxu0 %v7512
      %v8964 = vpop.f32.mrf.mxu0
      %v8965 = vpop.f32.mrf.mxu0
      %v8966 = vadd.f32 %v8773, %v8965
      %8967 = vmatmul.bf16.gmra.mxu0 %v7515
      %v8968 = vpop.f32.mrf.mxu0
      %v8969 = vadd.f32 %v8776, %v8968
      %v8970 = vpop.f32.mrf.mxu0
      %v8971 = vadd.f32 %v8778, %v8970
      %8972 = vmatmul.bf16.gmra.mxu0 %v7518
      %v8973 = vpop.f32.mrf.mxu0
      %v8974 = vadd.f32 %v8781, %v8973
      %v8975 = vpop.f32.mrf.mxu0
      %v8976 = vadd.f32 %v8783, %v8975
      %8977 = vmatmul.bf16.gmra.mxu0 %v7521
      %v8978 = vpop.f32.mrf.mxu0
      %v8979 = vadd.f32 %v8786, %v8978
      %v8980 = vpop.f32.mrf.mxu0
      %v8981 = vadd.f32 %v8788, %v8980
      %8982 = vmatmul.bf16.gmra.mxu0 %v7524
      %v8983 = vpop.f32.mrf.mxu0
      %v8984 = vadd.f32 %v8791, %v8983
      %v8985 = vpop.f32.mrf.mxu0
      %8986 = vmatmul.bf16.gmra.mxu0 %v7527
      %v8987 = vpop.f32.mrf.mxu0
      %v8988 = vpop.f32.mrf.mxu0
      %v8989 = vadd.f32 %v8796, %v8988
      %8990 = vmatmul.bf16.gmra.mxu0 %v7530
      %v8991 = vpop.f32.mrf.mxu0
      %v8992 = vadd.f32 %v8799, %v8991
      %v8993 = vpop.f32.mrf.mxu0
      %v8994 = vadd.f32 %v8801, %v8993
      %8995 = vmatmul.bf16.gmra.mxu0 %v7533
      %v8996 = vpop.f32.mrf.mxu0
      %v8997 = vadd.f32 %v8804, %v8996
      %v8998 = vpop.f32.mrf.mxu0
      %v8999 = vadd.f32 %v8806, %v8998
      %9000 = vmatmul.bf16.gmra.mxu0 %v7536
      %v9001 = vpop.f32.mrf.mxu0
      %v9002 = vadd.f32 %v8809, %v9001
      %v9003 = vpop.f32.mrf.mxu0
      %v9004 = vadd.f32 %v8811, %v9003
      %9005 = vmatmul.bf16.gmra.mxu0 %v7539
      %v9006 = vpop.f32.mrf.mxu0
      %v9007 = vadd.f32 %v8814, %v9006
      %v9008 = vpop.f32.mrf.mxu0
      %9009 = vdwg.mxu0
      %9010 = vmatpush.bf16.msra.mxu0 %v7971
      %9011 = vmatpush.bf16.msra.mxu0 %v7968
      %9012 = vmatpush.bf16.msra.mxu0 %v7965
      %9013 = vmatpush.bf16.msra.mxu0 %v7962
      %9014 = vmatpush.bf16.msra.mxu0 %v7959
      %9015 = vmatpush.bf16.msra.mxu0 %v7956
      %9016 = vmatpush.bf16.msra.mxu0 %v7953
      %9017 = vmatpush.bf16.msra.mxu0 %v7950
      %9018 = vmatmul.bf16.gmra.mxu0 %v7423
      %v9019 = vpop.f32.mrf.mxu0
      %v9020 = vpop.f32.mrf.mxu0
      %v9021 = vadd.f32 %v8828, %v9020
      %9022 = vmatmul.bf16.gmra.mxu0 %v7426
      %v9023 = vpop.f32.mrf.mxu0
      %v9024 = vadd.f32 %v8831, %v9023
      %v9025 = vpop.f32.mrf.mxu0
      %v9026 = vadd.f32 %v8833, %v9025
      %9027 = vmatmul.bf16.gmra.mxu0 %v7429
      %v9028 = vpop.f32.mrf.mxu0
      %v9029 = vadd.f32 %v8836, %v9028
      %v9030 = vpop.f32.mrf.mxu0
      %v9031 = vadd.f32 %v8838, %v9030
      %9032 = vmatmul.bf16.gmra.mxu0 %v7432
      %v9033 = vpop.f32.mrf.mxu0
      %v9034 = vadd.f32 %v8841, %v9033
      %v9035 = vpop.f32.mrf.mxu0
      %v9036 = vadd.f32 %v8843, %v9035
      %9037 = vmatmul.bf16.gmra.mxu0 %v7435
      %v9038 = vpop.f32.mrf.mxu0
      %v9039 = vadd.f32 %v8846, %v9038
      %v9040 = vpop.f32.mrf.mxu0
      %9041 = vmatmul.bf16.gmra.mxu0 %v7438
      %v9042 = vpop.f32.mrf.mxu0
      %v9043 = vpop.f32.mrf.mxu0
      %v9044 = vadd.f32 %v8851, %v9043
      %9045 = vmatmul.bf16.gmra.mxu0 %v7441
      %v9046 = vpop.f32.mrf.mxu0
      %v9047 = vadd.f32 %v8854, %v9046
      %v9048 = vpop.f32.mrf.mxu0
      %v9049 = vadd.f32 %v8856, %v9048
      %9050 = vmatmul.bf16.gmra.mxu0 %v7444
      %v9051 = vpop.f32.mrf.mxu0
      %v9052 = vadd.f32 %v8859, %v9051
      %v9053 = vpop.f32.mrf.mxu0
      %v9054 = vadd.f32 %v8861, %v9053
      %9055 = vmatmul.bf16.gmra.mxu0 %v7447
      %v9056 = vpop.f32.mrf.mxu0
      %v9057 = vadd.f32 %v8864, %v9056
      %v9058 = vpop.f32.mrf.mxu0
      %v9059 = vadd.f32 %v8866, %v9058
      %9060 = vmatmul.bf16.gmra.mxu0 %v7450
      %v9061 = vpop.f32.mrf.mxu0
      %v9062 = vadd.f32 %v8869, %v9061
      %v9063 = vpop.f32.mrf.mxu0
      %9064 = vmatmul.bf16.gmra.mxu0 %v7453
      %v9065 = vpop.f32.mrf.mxu0
      %v9066 = vpop.f32.mrf.mxu0
      %v9067 = vadd.f32 %v8874, %v9066
      %9068 = vmatmul.bf16.gmra.mxu0 %v7456
      %v9069 = vpop.f32.mrf.mxu0
      %v9070 = vadd.f32 %v8877, %v9069
      %v9071 = vpop.f32.mrf.mxu0
      %v9072 = vadd.f32 %v8879, %v9071
      %9073 = vmatmul.bf16.gmra.mxu0 %v7459
      %v9074 = vpop.f32.mrf.mxu0
      %v9075 = vadd.f32 %v8882, %v9074
      %v9076 = vpop.f32.mrf.mxu0
      %v9077 = vadd.f32 %v8884, %v9076
      %9078 = vmatmul.bf16.gmra.mxu0 %v7462
      %v9079 = vpop.f32.mrf.mxu0
      %v9080 = vadd.f32 %v8887, %v9079
      %v9081 = vpop.f32.mrf.mxu0
      %v9082 = vadd.f32 %v8889, %v9081
      %9083 = vmatmul.bf16.gmra.mxu0 %v7465
      %v9084 = vpop.f32.mrf.mxu0
      %v9085 = vadd.f32 %v8892, %v9084
      %v9086 = vpop.f32.mrf.mxu0
      %9087 = vmatmul.bf16.gmra.mxu0 %v7468
      %v9088 = vpop.f32.mrf.mxu0
      %v9089 = vpop.f32.mrf.mxu0
      %v9090 = vadd.f32 %v8897, %v9089
      %9091 = vmatmul.bf16.gmra.mxu0 %v7471
      %v9092 = vpop.f32.mrf.mxu0
      %v9093 = vadd.f32 %v8900, %v9092
      %v9094 = vpop.f32.mrf.mxu0
      %v9095 = vadd.f32 %v8902, %v9094
      %9096 = vmatmul.bf16.gmra.mxu0 %v7474
      %v9097 = vpop.f32.mrf.mxu0
      %v9098 = vadd.f32 %v8905, %v9097
      %v9099 = vpop.f32.mrf.mxu0
      %v9100 = vadd.f32 %v8907, %v9099
      %9101 = vmatmul.bf16.gmra.mxu0 %v7477
      %v9102 = vpop.f32.mrf.mxu0
      %v9103 = vadd.f32 %v8910, %v9102
      %v9104 = vpop.f32.mrf.mxu0
      %v9105 = vadd.f32 %v8912, %v9104
      %9106 = vmatmul.bf16.gmra.mxu0 %v7480
      %v9107 = vpop.f32.mrf.mxu0
      %v9108 = vadd.f32 %v8915, %v9107
      %v9109 = vpop.f32.mrf.mxu0
      %9110 = vmatmul.bf16.gmra.mxu0 %v7483
      %v9111 = vpop.f32.mrf.mxu0
      %v9112 = vpop.f32.mrf.mxu0
      %v9113 = vadd.f32 %v8920, %v9112
      %9114 = vmatmul.bf16.gmra.mxu0 %v7486
      %v9115 = vpop.f32.mrf.mxu0
      %v9116 = vadd.f32 %v8923, %v9115
      %v9117 = vpop.f32.mrf.mxu0
      %v9118 = vadd.f32 %v8925, %v9117
      %9119 = vmatmul.bf16.gmra.mxu0 %v7489
      %v9120 = vpop.f32.mrf.mxu0
      %v9121 = vadd.f32 %v8928, %v9120
      %v9122 = vpop.f32.mrf.mxu0
      %v9123 = vadd.f32 %v8930, %v9122
      %9124 = vmatmul.bf16.gmra.mxu0 %v7492
      %v9125 = vpop.f32.mrf.mxu0
      %v9126 = vadd.f32 %v8933, %v9125
      %v9127 = vpop.f32.mrf.mxu0
      %v9128 = vadd.f32 %v8935, %v9127
      %9129 = vmatmul.bf16.gmra.mxu0 %v7495
      %v9130 = vpop.f32.mrf.mxu0
      %v9131 = vadd.f32 %v8938, %v9130
      %v9132 = vpop.f32.mrf.mxu0
      %9133 = vmatmul.bf16.gmra.mxu0 %v7498
      %v9134 = vpop.f32.mrf.mxu0
      %v9135 = vpop.f32.mrf.mxu0
      %v9136 = vadd.f32 %v8943, %v9135
      %9137 = vmatmul.bf16.gmra.mxu0 %v7501
      %v9138 = vpop.f32.mrf.mxu0
      %v9139 = vadd.f32 %v8946, %v9138
      %v9140 = vpop.f32.mrf.mxu0
      %v9141 = vadd.f32 %v8948, %v9140
      %9142 = vmatmul.bf16.gmra.mxu0 %v7504
      %v9143 = vpop.f32.mrf.mxu0
      %v9144 = vadd.f32 %v8951, %v9143
      %v9145 = vpop.f32.mrf.mxu0
      %v9146 = vadd.f32 %v8953, %v9145
      %9147 = vmatmul.bf16.gmra.mxu0 %v7507
      %v9148 = vpop.f32.mrf.mxu0
      %v9149 = vadd.f32 %v8956, %v9148
      %v9150 = vpop.f32.mrf.mxu0
      %v9151 = vadd.f32 %v8958, %v9150
      %9152 = vmatmul.bf16.gmra.mxu0 %v7510
      %v9153 = vpop.f32.mrf.mxu0
      %v9154 = vadd.f32 %v8961, %v9153
      %v9155 = vpop.f32.mrf.mxu0
      %9156 = vmatmul.bf16.gmra.mxu0 %v7513
      %v9157 = vpop.f32.mrf.mxu0
      %v9158 = vpop.f32.mrf.mxu0
      %v9159 = vadd.f32 %v8966, %v9158
      %9160 = vmatmul.bf16.gmra.mxu0 %v7516
      %v9161 = vpop.f32.mrf.mxu0
      %v9162 = vadd.f32 %v8969, %v9161
      %v9163 = vpop.f32.mrf.mxu0
      %v9164 = vadd.f32 %v8971, %v9163
      %9165 = vmatmul.bf16.gmra.mxu0 %v7519
      %v9166 = vpop.f32.mrf.mxu0
      %v9167 = vadd.f32 %v8974, %v9166
      %v9168 = vpop.f32.mrf.mxu0
      %v9169 = vadd.f32 %v8976, %v9168
      %9170 = vmatmul.bf16.gmra.mxu0 %v7522
      %v9171 = vpop.f32.mrf.mxu0
      %v9172 = vadd.f32 %v8979, %v9171
      %v9173 = vpop.f32.mrf.mxu0
      %v9174 = vadd.f32 %v8981, %v9173
      %9175 = vmatmul.bf16.gmra.mxu0 %v7525
      %v9176 = vpop.f32.mrf.mxu0
      %v9177 = vadd.f32 %v8984, %v9176
      %v9178 = vpop.f32.mrf.mxu0
      %9179 = vmatmul.bf16.gmra.mxu0 %v7528
      %v9180 = vpop.f32.mrf.mxu0
      %v9181 = vpop.f32.mrf.mxu0
      %v9182 = vadd.f32 %v8989, %v9181
      %9183 = vmatmul.bf16.gmra.mxu0 %v7531
      %v9184 = vpop.f32.mrf.mxu0
      %v9185 = vadd.f32 %v8992, %v9184
      %v9186 = vpop.f32.mrf.mxu0
      %v9187 = vadd.f32 %v8994, %v9186
      %9188 = vmatmul.bf16.gmra.mxu0 %v7534
      %v9189 = vpop.f32.mrf.mxu0
      %v9190 = vadd.f32 %v8997, %v9189
      %v9191 = vpop.f32.mrf.mxu0
      %v9192 = vadd.f32 %v8999, %v9191
      %9193 = vmatmul.bf16.gmra.mxu0 %v7537
      %v9194 = vpop.f32.mrf.mxu0
      %v9195 = vadd.f32 %v9002, %v9194
      %v9196 = vpop.f32.mrf.mxu0
      %v9197 = vadd.f32 %v9004, %v9196
      %9198 = vmatmul.bf16.gmra.mxu0 %v7540
      %v9199 = vpop.f32.mrf.mxu0
      %v9200 = vadd.f32 %v9007, %v9199
      %v9201 = vpop.f32.mrf.mxu0
      %9202 = vdwg.mxu0
      %9203 = vmatpush.bf16.msra.mxu0 %v7924
      %9204 = vmatpush.bf16.msra.mxu0 %v7921
      %9205 = vmatpush.bf16.msra.mxu0 %v7918
      %9206 = vmatpush.bf16.msra.mxu0 %v7915
      %9207 = vmatpush.bf16.msra.mxu0 %v7912
      %9208 = vmatpush.bf16.msra.mxu0 %v7909
      %9209 = vmatpush.bf16.msra.mxu0 %v7906
      %9210 = vmatpush.bf16.msra.mxu0 %v7903
      %9211 = vmatmul.bf16.gmra.mxu0 %v7421
      %v9212 = vpop.f32.mrf.mxu0
      %v9213 = vpop.f32.mrf.mxu0
      %9214 = vmatmul.bf16.gmra.mxu0 %v7424
      %v9215 = vpop.f32.mrf.mxu0
      %v9216 = vadd.f32 0.0, %v9215
      %v9217 = vpop.f32.mrf.mxu0
      %v9218 = vadd.f32 0.0, %v9217
      %9219 = vmatmul.bf16.gmra.mxu0 %v7427
      %v9220 = vpop.f32.mrf.mxu0
      %v9221 = vadd.f32 0.0, %v9220
      %v9222 = vpop.f32.mrf.mxu0
      %v9223 = vadd.f32 0.0, %v9222
      %9224 = vmatmul.bf16.gmra.mxu0 %v7430
      %v9225 = vpop.f32.mrf.mxu0
      %v9226 = vadd.f32 0.0, %v9225
      %v9227 = vpop.f32.mrf.mxu0
      %v9228 = vadd.f32 0.0, %v9227
      %9229 = vmatmul.bf16.gmra.mxu0 %v7433
      %v9230 = vpop.f32.mrf.mxu0
      %v9231 = vadd.f32 0.0, %v9230
      %v9232 = vpop.f32.mrf.mxu0
      %v9233 = vadd.f32 0.0, %v9232
      %9234 = vmatmul.bf16.gmra.mxu0 %v7436
      %v9235 = vpop.f32.mrf.mxu0
      %v9236 = vpop.f32.mrf.mxu0
      %9237 = vmatmul.bf16.gmra.mxu0 %v7439
      %v9238 = vpop.f32.mrf.mxu0
      %v9239 = vadd.f32 0.0, %v9238
      %v9240 = vpop.f32.mrf.mxu0
      %v9241 = vadd.f32 0.0, %v9240
      %9242 = vmatmul.bf16.gmra.mxu0 %v7442
      %v9243 = vpop.f32.mrf.mxu0
      %v9244 = vadd.f32 0.0, %v9243
      %v9245 = vpop.f32.mrf.mxu0
      %v9246 = vadd.f32 0.0, %v9245
      %9247 = vmatmul.bf16.gmra.mxu0 %v7445
      %v9248 = vpop.f32.mrf.mxu0
      %v9249 = vadd.f32 0.0, %v9248
      %v9250 = vpop.f32.mrf.mxu0
      %v9251 = vadd.f32 0.0, %v9250
      %9252 = vmatmul.bf16.gmra.mxu0 %v7448
      %v9253 = vpop.f32.mrf.mxu0
      %v9254 = vadd.f32 0.0, %v9253
      %v9255 = vpop.f32.mrf.mxu0
      %v9256 = vadd.f32 0.0, %v9255
      %9257 = vmatmul.bf16.gmra.mxu0 %v7451
      %v9258 = vpop.f32.mrf.mxu0
      %v9259 = vpop.f32.mrf.mxu0
      %9260 = vmatmul.bf16.gmra.mxu0 %v7454
      %v9261 = vpop.f32.mrf.mxu0
      %v9262 = vadd.f32 0.0, %v9261
      %v9263 = vpop.f32.mrf.mxu0
      %v9264 = vadd.f32 0.0, %v9263
      %9265 = vmatmul.bf16.gmra.mxu0 %v7457
      %v9266 = vpop.f32.mrf.mxu0
      %v9267 = vadd.f32 0.0, %v9266
      %v9268 = vpop.f32.mrf.mxu0
      %v9269 = vadd.f32 0.0, %v9268
      %9270 = vmatmul.bf16.gmra.mxu0 %v7460
      %v9271 = vpop.f32.mrf.mxu0
      %v9272 = vadd.f32 0.0, %v9271
      %v9273 = vpop.f32.mrf.mxu0
      %v9274 = vadd.f32 0.0, %v9273
      %9275 = vmatmul.bf16.gmra.mxu0 %v7463
      %v9276 = vpop.f32.mrf.mxu0
      %v9277 = vadd.f32 0.0, %v9276
      %v9278 = vpop.f32.mrf.mxu0
      %v9279 = vadd.f32 0.0, %v9278
      %9280 = vmatmul.bf16.gmra.mxu0 %v7466
      %v9281 = vpop.f32.mrf.mxu0
      %v9282 = vpop.f32.mrf.mxu0
      %9283 = vmatmul.bf16.gmra.mxu0 %v7469
      %v9284 = vpop.f32.mrf.mxu0
      %v9285 = vadd.f32 0.0, %v9284
      %v9286 = vpop.f32.mrf.mxu0
      %v9287 = vadd.f32 0.0, %v9286
      %9288 = vmatmul.bf16.gmra.mxu0 %v7472
      %v9289 = vpop.f32.mrf.mxu0
      %v9290 = vadd.f32 0.0, %v9289
      %v9291 = vpop.f32.mrf.mxu0
      %v9292 = vadd.f32 0.0, %v9291
      %9293 = vmatmul.bf16.gmra.mxu0 %v7475
      %v9294 = vpop.f32.mrf.mxu0
      %v9295 = vadd.f32 0.0, %v9294
      %v9296 = vpop.f32.mrf.mxu0
      %v9297 = vadd.f32 0.0, %v9296
      %9298 = vmatmul.bf16.gmra.mxu0 %v7478
      %v9299 = vpop.f32.mrf.mxu0
      %v9300 = vadd.f32 0.0, %v9299
      %v9301 = vpop.f32.mrf.mxu0
      %v9302 = vadd.f32 0.0, %v9301
      %9303 = vmatmul.bf16.gmra.mxu0 %v7481
      %v9304 = vpop.f32.mrf.mxu0
      %v9305 = vpop.f32.mrf.mxu0
      %9306 = vmatmul.bf16.gmra.mxu0 %v7484
      %v9307 = vpop.f32.mrf.mxu0
      %v9308 = vadd.f32 0.0, %v9307
      %v9309 = vpop.f32.mrf.mxu0
      %v9310 = vadd.f32 0.0, %v9309
      %9311 = vmatmul.bf16.gmra.mxu0 %v7487
      %v9312 = vpop.f32.mrf.mxu0
      %v9313 = vadd.f32 0.0, %v9312
      %v9314 = vpop.f32.mrf.mxu0
      %v9315 = vadd.f32 0.0, %v9314
      %9316 = vmatmul.bf16.gmra.mxu0 %v7490
      %v9317 = vpop.f32.mrf.mxu0
      %v9318 = vadd.f32 0.0, %v9317
      %v9319 = vpop.f32.mrf.mxu0
      %v9320 = vadd.f32 0.0, %v9319
      %9321 = vmatmul.bf16.gmra.mxu0 %v7493
      %v9322 = vpop.f32.mrf.mxu0
      %v9323 = vadd.f32 0.0, %v9322
      %v9324 = vpop.f32.mrf.mxu0
      %v9325 = vadd.f32 0.0, %v9324
      %9326 = vmatmul.bf16.gmra.mxu0 %v7496
      %v9327 = vpop.f32.mrf.mxu0
      %v9328 = vpop.f32.mrf.mxu0
      %9329 = vmatmul.bf16.gmra.mxu0 %v7499
      %v9330 = vpop.f32.mrf.mxu0
      %v9331 = vadd.f32 0.0, %v9330
      %v9332 = vpop.f32.mrf.mxu0
      %v9333 = vadd.f32 0.0, %v9332
      %9334 = vmatmul.bf16.gmra.mxu0 %v7502
      %v9335 = vpop.f32.mrf.mxu0
      %v9336 = vadd.f32 0.0, %v9335
      %v9337 = vpop.f32.mrf.mxu0
      %v9338 = vadd.f32 0.0, %v9337
      %9339 = vmatmul.bf16.gmra.mxu0 %v7505
      %v9340 = vpop.f32.mrf.mxu0
      %v9341 = vadd.f32 0.0, %v9340
      %v9342 = vpop.f32.mrf.mxu0
      %v9343 = vadd.f32 0.0, %v9342
      %9344 = vmatmul.bf16.gmra.mxu0 %v7508
      %v9345 = vpop.f32.mrf.mxu0
      %v9346 = vadd.f32 0.0, %v9345
      %v9347 = vpop.f32.mrf.mxu0
      %v9348 = vadd.f32 0.0, %v9347
      %9349 = vmatmul.bf16.gmra.mxu0 %v7511
      %v9350 = vpop.f32.mrf.mxu0
      %v9351 = vpop.f32.mrf.mxu0
      %9352 = vmatmul.bf16.gmra.mxu0 %v7514
      %v9353 = vpop.f32.mrf.mxu0
      %v9354 = vadd.f32 0.0, %v9353
      %v9355 = vpop.f32.mrf.mxu0
      %v9356 = vadd.f32 0.0, %v9355
      %9357 = vmatmul.bf16.gmra.mxu0 %v7517
      %v9358 = vpop.f32.mrf.mxu0
      %v9359 = vadd.f32 0.0, %v9358
      %v9360 = vpop.f32.mrf.mxu0
      %v9361 = vadd.f32 0.0, %v9360
      %9362 = vmatmul.bf16.gmra.mxu0 %v7520
      %v9363 = vpop.f32.mrf.mxu0
      %v9364 = vadd.f32 0.0, %v9363
      %v9365 = vpop.f32.mrf.mxu0
      %v9366 = vadd.f32 0.0, %v9365
      %9367 = vmatmul.bf16.gmra.mxu0 %v7523
      %v9368 = vpop.f32.mrf.mxu0
      %v9369 = vadd.f32 0.0, %v9368
      %v9370 = vpop.f32.mrf.mxu0
      %v9371 = vadd.f32 0.0, %v9370
      %9372 = vmatmul.bf16.gmra.mxu0 %v7526
      %v9373 = vpop.f32.mrf.mxu0
      %v9374 = vpop.f32.mrf.mxu0
      %9375 = vmatmul.bf16.gmra.mxu0 %v7529
      %v9376 = vpop.f32.mrf.mxu0
      %v9377 = vadd.f32 0.0, %v9376
      %v9378 = vpop.f32.mrf.mxu0
      %v9379 = vadd.f32 0.0, %v9378
      %9380 = vmatmul.bf16.gmra.mxu0 %v7532
      %v9381 = vpop.f32.mrf.mxu0
      %v9382 = vadd.f32 0.0, %v9381
      %v9383 = vpop.f32.mrf.mxu0
      %v9384 = vadd.f32 0.0, %v9383
      %9385 = vmatmul.bf16.gmra.mxu0 %v7535
      %v9386 = vpop.f32.mrf.mxu0
      %v9387 = vadd.f32 0.0, %v9386
      %v9388 = vpop.f32.mrf.mxu0
      %v9389 = vadd.f32 0.0, %v9388
      %9390 = vmatmul.bf16.gmra.mxu0 %v7538
      %v9391 = vpop.f32.mrf.mxu0
      %v9392 = vadd.f32 0.0, %v9391
      %v9393 = vpop.f32.mrf.mxu0
      %v9394 = vadd.f32 0.0, %v9393
      %9395 = vdwg.mxu0
      %9396 = vmatpush.bf16.msra.mxu0 %v7948
      %9397 = vmatpush.bf16.msra.mxu0 %v7945
      %9398 = vmatpush.bf16.msra.mxu0 %v7942
      %9399 = vmatpush.bf16.msra.mxu0 %v7939
      %9400 = vmatpush.bf16.msra.mxu0 %v7936
      %9401 = vmatpush.bf16.msra.mxu0 %v7933
      %9402 = vmatpush.bf16.msra.mxu0 %v7930
      %9403 = vmatpush.bf16.msra.mxu0 %v7927
      %9404 = vmatmul.bf16.gmra.mxu0 %v7422
      %v9405 = vpop.f32.mrf.mxu0
      %v9406 = vpop.f32.mrf.mxu0
      %9407 = vmatmul.bf16.gmra.mxu0 %v7425
      %v9408 = vpop.f32.mrf.mxu0
      %v9409 = vadd.f32 %v9216, %v9408
      %v9410 = vpop.f32.mrf.mxu0
      %v9411 = vadd.f32 %v9218, %v9410
      %9412 = vmatmul.bf16.gmra.mxu0 %v7428
      %v9413 = vpop.f32.mrf.mxu0
      %v9414 = vadd.f32 %v9221, %v9413
      %v9415 = vpop.f32.mrf.mxu0
      %v9416 = vadd.f32 %v9223, %v9415
      %9417 = vmatmul.bf16.gmra.mxu0 %v7431
      %v9418 = vpop.f32.mrf.mxu0
      %v9419 = vadd.f32 %v9226, %v9418
      %v9420 = vpop.f32.mrf.mxu0
      %v9421 = vadd.f32 %v9228, %v9420
      %9422 = vmatmul.bf16.gmra.mxu0 %v7434
      %v9423 = vpop.f32.mrf.mxu0
      %v9424 = vadd.f32 %v9231, %v9423
      %v9425 = vpop.f32.mrf.mxu0
      %v9426 = vadd.f32 %v9233, %v9425
      %9427 = vmatmul.bf16.gmra.mxu0 %v7437
      %v9428 = vpop.f32.mrf.mxu0
      %v9429 = vpop.f32.mrf.mxu0
      %9430 = vmatmul.bf16.gmra.mxu0 %v7440
      %v9431 = vpop.f32.mrf.mxu0
      %v9432 = vadd.f32 %v9239, %v9431
      %v9433 = vpop.f32.mrf.mxu0
      %v9434 = vadd.f32 %v9241, %v9433
      %9435 = vmatmul.bf16.gmra.mxu0 %v7443
      %v9436 = vpop.f32.mrf.mxu0
      %v9437 = vadd.f32 %v9244, %v9436
      %v9438 = vpop.f32.mrf.mxu0
      %v9439 = vadd.f32 %v9246, %v9438
      %9440 = vmatmul.bf16.gmra.mxu0 %v7446
      %v9441 = vpop.f32.mrf.mxu0
      %v9442 = vadd.f32 %v9249, %v9441
      %v9443 = vpop.f32.mrf.mxu0
      %v9444 = vadd.f32 %v9251, %v9443
      %9445 = vmatmul.bf16.gmra.mxu0 %v7449
      %v9446 = vpop.f32.mrf.mxu0
      %v9447 = vadd.f32 %v9254, %v9446
      %v9448 = vpop.f32.mrf.mxu0
      %v9449 = vadd.f32 %v9256, %v9448
      %9450 = vmatmul.bf16.gmra.mxu0 %v7452
      %v9451 = vpop.f32.mrf.mxu0
      %v9452 = vpop.f32.mrf.mxu0
      %9453 = vmatmul.bf16.gmra.mxu0 %v7455
      %v9454 = vpop.f32.mrf.mxu0
      %v9455 = vadd.f32 %v9262, %v9454
      %v9456 = vpop.f32.mrf.mxu0
      %v9457 = vadd.f32 %v9264, %v9456
      %9458 = vmatmul.bf16.gmra.mxu0 %v7458
      %v9459 = vpop.f32.mrf.mxu0
      %v9460 = vadd.f32 %v9267, %v9459
      %v9461 = vpop.f32.mrf.mxu0
      %v9462 = vadd.f32 %v9269, %v9461
      %9463 = vmatmul.bf16.gmra.mxu0 %v7461
      %v9464 = vpop.f32.mrf.mxu0
      %v9465 = vadd.f32 %v9272, %v9464
      %v9466 = vpop.f32.mrf.mxu0
      %v9467 = vadd.f32 %v9274, %v9466
      %9468 = vmatmul.bf16.gmra.mxu0 %v7464
      %v9469 = vpop.f32.mrf.mxu0
      %v9470 = vadd.f32 %v9277, %v9469
      %v9471 = vpop.f32.mrf.mxu0
      %v9472 = vadd.f32 %v9279, %v9471
      %9473 = vmatmul.bf16.gmra.mxu0 %v7467
      %v9474 = vpop.f32.mrf.mxu0
      %v9475 = vpop.f32.mrf.mxu0
      %9476 = vmatmul.bf16.gmra.mxu0 %v7470
      %v9477 = vpop.f32.mrf.mxu0
      %v9478 = vadd.f32 %v9285, %v9477
      %v9479 = vpop.f32.mrf.mxu0
      %v9480 = vadd.f32 %v9287, %v9479
      %9481 = vmatmul.bf16.gmra.mxu0 %v7473
      %v9482 = vpop.f32.mrf.mxu0
      %v9483 = vadd.f32 %v9290, %v9482
      %v9484 = vpop.f32.mrf.mxu0
      %v9485 = vadd.f32 %v9292, %v9484
      %9486 = vmatmul.bf16.gmra.mxu0 %v7476
      %v9487 = vpop.f32.mrf.mxu0
      %v9488 = vadd.f32 %v9295, %v9487
      %v9489 = vpop.f32.mrf.mxu0
      %v9490 = vadd.f32 %v9297, %v9489
      %9491 = vmatmul.bf16.gmra.mxu0 %v7479
      %v9492 = vpop.f32.mrf.mxu0
      %v9493 = vadd.f32 %v9300, %v9492
      %v9494 = vpop.f32.mrf.mxu0
      %v9495 = vadd.f32 %v9302, %v9494
      %9496 = vmatmul.bf16.gmra.mxu0 %v7482
      %v9497 = vpop.f32.mrf.mxu0
      %v9498 = vpop.f32.mrf.mxu0
      %9499 = vmatmul.bf16.gmra.mxu0 %v7485
      %v9500 = vpop.f32.mrf.mxu0
      %v9501 = vadd.f32 %v9308, %v9500
      %v9502 = vpop.f32.mrf.mxu0
      %v9503 = vadd.f32 %v9310, %v9502
      %9504 = vmatmul.bf16.gmra.mxu0 %v7488
      %v9505 = vpop.f32.mrf.mxu0
      %v9506 = vadd.f32 %v9313, %v9505
      %v9507 = vpop.f32.mrf.mxu0
      %v9508 = vadd.f32 %v9315, %v9507
      %9509 = vmatmul.bf16.gmra.mxu0 %v7491
      %v9510 = vpop.f32.mrf.mxu0
      %v9511 = vadd.f32 %v9318, %v9510
      %v9512 = vpop.f32.mrf.mxu0
      %v9513 = vadd.f32 %v9320, %v9512
      %9514 = vmatmul.bf16.gmra.mxu0 %v7494
      %v9515 = vpop.f32.mrf.mxu0
      %v9516 = vadd.f32 %v9323, %v9515
      %v9517 = vpop.f32.mrf.mxu0
      %v9518 = vadd.f32 %v9325, %v9517
      %9519 = vmatmul.bf16.gmra.mxu0 %v7497
      %v9520 = vpop.f32.mrf.mxu0
      %v9521 = vpop.f32.mrf.mxu0
      %9522 = vmatmul.bf16.gmra.mxu0 %v7500
      %v9523 = vpop.f32.mrf.mxu0
      %v9524 = vadd.f32 %v9331, %v9523
      %v9525 = vpop.f32.mrf.mxu0
      %v9526 = vadd.f32 %v9333, %v9525
      %9527 = vmatmul.bf16.gmra.mxu0 %v7503
      %v9528 = vpop.f32.mrf.mxu0
      %v9529 = vadd.f32 %v9336, %v9528
      %v9530 = vpop.f32.mrf.mxu0
      %v9531 = vadd.f32 %v9338, %v9530
      %9532 = vmatmul.bf16.gmra.mxu0 %v7506
      %v9533 = vpop.f32.mrf.mxu0
      %v9534 = vadd.f32 %v9341, %v9533
      %v9535 = vpop.f32.mrf.mxu0
      %v9536 = vadd.f32 %v9343, %v9535
      %9537 = vmatmul.bf16.gmra.mxu0 %v7509
      %v9538 = vpop.f32.mrf.mxu0
      %v9539 = vadd.f32 %v9346, %v9538
      %v9540 = vpop.f32.mrf.mxu0
      %v9541 = vadd.f32 %v9348, %v9540
      %9542 = vmatmul.bf16.gmra.mxu0 %v7512
      %v9543 = vpop.f32.mrf.mxu0
      %v9544 = vpop.f32.mrf.mxu0
      %9545 = vmatmul.bf16.gmra.mxu0 %v7515
      %v9546 = vpop.f32.mrf.mxu0
      %v9547 = vadd.f32 %v9354, %v9546
      %v9548 = vpop.f32.mrf.mxu0
      %v9549 = vadd.f32 %v9356, %v9548
      %9550 = vmatmul.bf16.gmra.mxu0 %v7518
      %v9551 = vpop.f32.mrf.mxu0
      %v9552 = vadd.f32 %v9359, %v9551
      %v9553 = vpop.f32.mrf.mxu0
      %v9554 = vadd.f32 %v9361, %v9553
      %9555 = vmatmul.bf16.gmra.mxu0 %v7521
      %v9556 = vpop.f32.mrf.mxu0
      %v9557 = vadd.f32 %v9364, %v9556
      %v9558 = vpop.f32.mrf.mxu0
      %v9559 = vadd.f32 %v9366, %v9558
      %9560 = vmatmul.bf16.gmra.mxu0 %v7524
      %v9561 = vpop.f32.mrf.mxu0
      %v9562 = vadd.f32 %v9369, %v9561
      %v9563 = vpop.f32.mrf.mxu0
      %v9564 = vadd.f32 %v9371, %v9563
      %9565 = vmatmul.bf16.gmra.mxu0 %v7527
      %v9566 = vpop.f32.mrf.mxu0
      %v9567 = vpop.f32.mrf.mxu0
      %9568 = vmatmul.bf16.gmra.mxu0 %v7530
      %v9569 = vpop.f32.mrf.mxu0
      %v9570 = vadd.f32 %v9377, %v9569
      %v9571 = vpop.f32.mrf.mxu0
      %v9572 = vadd.f32 %v9379, %v9571
      %9573 = vmatmul.bf16.gmra.mxu0 %v7533
      %v9574 = vpop.f32.mrf.mxu0
      %v9575 = vadd.f32 %v9382, %v9574
      %v9576 = vpop.f32.mrf.mxu0
      %v9577 = vadd.f32 %v9384, %v9576
      %9578 = vmatmul.bf16.gmra.mxu0 %v7536
      %v9579 = vpop.f32.mrf.mxu0
      %v9580 = vadd.f32 %v9387, %v9579
      %v9581 = vpop.f32.mrf.mxu0
      %v9582 = vadd.f32 %v9389, %v9581
      %9583 = vmatmul.bf16.gmra.mxu0 %v7539
      %v9584 = vpop.f32.mrf.mxu0
      %v9585 = vadd.f32 %v9392, %v9584
      %v9586 = vpop.f32.mrf.mxu0
      %v9587 = vadd.f32 %v9394, %v9586
      %9588 = vdwg.mxu0
      %9589 = vmatpush.bf16.msra.mxu0 %v7972
      %9590 = vmatpush.bf16.msra.mxu0 %v7969
      %9591 = vmatpush.bf16.msra.mxu0 %v7966
      %9592 = vmatpush.bf16.msra.mxu0 %v7963
      %9593 = vmatpush.bf16.msra.mxu0 %v7960
      %9594 = vmatpush.bf16.msra.mxu0 %v7957
      %9595 = vmatpush.bf16.msra.mxu0 %v7954
      %9596 = vmatpush.bf16.msra.mxu0 %v7951
      %9597 = vmatmul.bf16.gmra.mxu0 %v7423
      %v9598 = vpop.f32.mrf.mxu0
      %v9599 = vpop.f32.mrf.mxu0
      %9600 = vmatmul.bf16.gmra.mxu0 %v7426
      %v9601 = vpop.f32.mrf.mxu0
      %v9602 = vadd.f32 %v9409, %v9601
      %v9603 = vpop.f32.mrf.mxu0
      %v9604 = vadd.f32 %v9411, %v9603
      %9605 = vmatmul.bf16.gmra.mxu0 %v7429
      %v9606 = vpop.f32.mrf.mxu0
      %v9607 = vadd.f32 %v9414, %v9606
      %v9608 = vpop.f32.mrf.mxu0
      %v9609 = vadd.f32 %v9416, %v9608
      %9610 = vmatmul.bf16.gmra.mxu0 %v7432
      %v9611 = vpop.f32.mrf.mxu0
      %v9612 = vadd.f32 %v9419, %v9611
      %v9613 = vpop.f32.mrf.mxu0
      %v9614 = vadd.f32 %v9421, %v9613
      %9615 = vmatmul.bf16.gmra.mxu0 %v7435
      %v9616 = vpop.f32.mrf.mxu0
      %v9617 = vadd.f32 %v9424, %v9616
      %v9618 = vpop.f32.mrf.mxu0
      %v9619 = vadd.f32 %v9426, %v9618
      %9620 = vmatmul.bf16.gmra.mxu0 %v7438
      %v9621 = vpop.f32.mrf.mxu0
      %v9622 = vpop.f32.mrf.mxu0
      %9623 = vmatmul.bf16.gmra.mxu0 %v7441
      %v9624 = vpop.f32.mrf.mxu0
      %v9625 = vadd.f32 %v9432, %v9624
      %v9626 = vpop.f32.mrf.mxu0
      %v9627 = vadd.f32 %v9434, %v9626
      %9628 = vmatmul.bf16.gmra.mxu0 %v7444
      %v9629 = vpop.f32.mrf.mxu0
      %v9630 = vadd.f32 %v9437, %v9629
      %v9631 = vpop.f32.mrf.mxu0
      %v9632 = vadd.f32 %v9439, %v9631
      %9633 = vmatmul.bf16.gmra.mxu0 %v7447
      %v9634 = vpop.f32.mrf.mxu0
      %v9635 = vadd.f32 %v9442, %v9634
      %v9636 = vpop.f32.mrf.mxu0
      %v9637 = vadd.f32 %v9444, %v9636
      %9638 = vmatmul.bf16.gmra.mxu0 %v7450
      %v9639 = vpop.f32.mrf.mxu0
      %v9640 = vadd.f32 %v9447, %v9639
      %v9641 = vpop.f32.mrf.mxu0
      %v9642 = vadd.f32 %v9449, %v9641
      %9643 = vmatmul.bf16.gmra.mxu0 %v7453
      %v9644 = vpop.f32.mrf.mxu0
      %v9645 = vpop.f32.mrf.mxu0
      %9646 = vmatmul.bf16.gmra.mxu0 %v7456
      %v9647 = vpop.f32.mrf.mxu0
      %v9648 = vadd.f32 %v9455, %v9647
      %v9649 = vpop.f32.mrf.mxu0
      %v9650 = vadd.f32 %v9457, %v9649
      %9651 = vmatmul.bf16.gmra.mxu0 %v7459
      %v9652 = vpop.f32.mrf.mxu0
      %v9653 = vadd.f32 %v9460, %v9652
      %v9654 = vpop.f32.mrf.mxu0
      %v9655 = vadd.f32 %v9462, %v9654
      %9656 = vmatmul.bf16.gmra.mxu0 %v7462
      %v9657 = vpop.f32.mrf.mxu0
      %v9658 = vadd.f32 %v9465, %v9657
      %v9659 = vpop.f32.mrf.mxu0
      %v9660 = vadd.f32 %v9467, %v9659
      %9661 = vmatmul.bf16.gmra.mxu0 %v7465
      %v9662 = vpop.f32.mrf.mxu0
      %v9663 = vadd.f32 %v9470, %v9662
      %v9664 = vpop.f32.mrf.mxu0
      %v9665 = vadd.f32 %v9472, %v9664
      %9666 = vmatmul.bf16.gmra.mxu0 %v7468
      %v9667 = vpop.f32.mrf.mxu0
      %v9668 = vpop.f32.mrf.mxu0
      %9669 = vmatmul.bf16.gmra.mxu0 %v7471
      %v9670 = vpop.f32.mrf.mxu0
      %v9671 = vadd.f32 %v9478, %v9670
      %v9672 = vpop.f32.mrf.mxu0
      %v9673 = vadd.f32 %v9480, %v9672
      %9674 = vmatmul.bf16.gmra.mxu0 %v7474
      %v9675 = vpop.f32.mrf.mxu0
      %v9676 = vadd.f32 %v9483, %v9675
      %v9677 = vpop.f32.mrf.mxu0
      %v9678 = vadd.f32 %v9485, %v9677
      %9679 = vmatmul.bf16.gmra.mxu0 %v7477
      %v9680 = vpop.f32.mrf.mxu0
      %v9681 = vadd.f32 %v9488, %v9680
      %v9682 = vpop.f32.mrf.mxu0
      %v9683 = vadd.f32 %v9490, %v9682
      %9684 = vmatmul.bf16.gmra.mxu0 %v7480
      %v9685 = vpop.f32.mrf.mxu0
      %v9686 = vadd.f32 %v9493, %v9685
      %v9687 = vpop.f32.mrf.mxu0
      %v9688 = vadd.f32 %v9495, %v9687
      %9689 = vmatmul.bf16.gmra.mxu0 %v7483
      %v9690 = vpop.f32.mrf.mxu0
      %v9691 = vpop.f32.mrf.mxu0
      %9692 = vmatmul.bf16.gmra.mxu0 %v7486
      %v9693 = vpop.f32.mrf.mxu0
      %v9694 = vadd.f32 %v9501, %v9693
      %v9695 = vpop.f32.mrf.mxu0
      %v9696 = vadd.f32 %v9503, %v9695
      %9697 = vmatmul.bf16.gmra.mxu0 %v7489
      %v9698 = vpop.f32.mrf.mxu0
      %v9699 = vadd.f32 %v9506, %v9698
      %v9700 = vpop.f32.mrf.mxu0
      %v9701 = vadd.f32 %v9508, %v9700
      %9702 = vmatmul.bf16.gmra.mxu0 %v7492
      %v9703 = vpop.f32.mrf.mxu0
      %v9704 = vadd.f32 %v9511, %v9703
      %v9705 = vpop.f32.mrf.mxu0
      %v9706 = vadd.f32 %v9513, %v9705
      %9707 = vmatmul.bf16.gmra.mxu0 %v7495
      %v9708 = vpop.f32.mrf.mxu0
      %v9709 = vadd.f32 %v9516, %v9708
      %v9710 = vpop.f32.mrf.mxu0
      %v9711 = vadd.f32 %v9518, %v9710
      %9712 = vmatmul.bf16.gmra.mxu0 %v7498
      %v9713 = vpop.f32.mrf.mxu0
      %v9714 = vpop.f32.mrf.mxu0
      %9715 = vmatmul.bf16.gmra.mxu0 %v7501
      %v9716 = vpop.f32.mrf.mxu0
      %v9717 = vadd.f32 %v9524, %v9716
      %v9718 = vpop.f32.mrf.mxu0
      %v9719 = vadd.f32 %v9526, %v9718
      %9720 = vmatmul.bf16.gmra.mxu0 %v7504
      %v9721 = vpop.f32.mrf.mxu0
      %v9722 = vadd.f32 %v9529, %v9721
      %v9723 = vpop.f32.mrf.mxu0
      %v9724 = vadd.f32 %v9531, %v9723
      %9725 = vmatmul.bf16.gmra.mxu0 %v7507
      %v9726 = vpop.f32.mrf.mxu0
      %v9727 = vadd.f32 %v9534, %v9726
      %v9728 = vpop.f32.mrf.mxu0
      %v9729 = vadd.f32 %v9536, %v9728
      %9730 = vmatmul.bf16.gmra.mxu0 %v7510
      %v9731 = vpop.f32.mrf.mxu0
      %v9732 = vadd.f32 %v9539, %v9731
      %v9733 = vpop.f32.mrf.mxu0
      %v9734 = vadd.f32 %v9541, %v9733
      %9735 = vmatmul.bf16.gmra.mxu0 %v7513
      %v9736 = vpop.f32.mrf.mxu0
      %v9737 = vpop.f32.mrf.mxu0
      %9738 = vmatmul.bf16.gmra.mxu0 %v7516
      %v9739 = vpop.f32.mrf.mxu0
      %v9740 = vadd.f32 %v9547, %v9739
      %v9741 = vpop.f32.mrf.mxu0
      %v9742 = vadd.f32 %v9549, %v9741
      %9743 = vmatmul.bf16.gmra.mxu0 %v7519
      %v9744 = vpop.f32.mrf.mxu0
      %v9745 = vadd.f32 %v9552, %v9744
      %v9746 = vpop.f32.mrf.mxu0
      %v9747 = vadd.f32 %v9554, %v9746
      %9748 = vmatmul.bf16.gmra.mxu0 %v7522
      %v9749 = vpop.f32.mrf.mxu0
      %v9750 = vadd.f32 %v9557, %v9749
      %v9751 = vpop.f32.mrf.mxu0
      %v9752 = vadd.f32 %v9559, %v9751
      %9753 = vmatmul.bf16.gmra.mxu0 %v7525
      %v9754 = vpop.f32.mrf.mxu0
      %v9755 = vadd.f32 %v9562, %v9754
      %v9756 = vpop.f32.mrf.mxu0
      %v9757 = vadd.f32 %v9564, %v9756
      %9758 = vmatmul.bf16.gmra.mxu0 %v7528
      %v9759 = vpop.f32.mrf.mxu0
      %v9760 = vpop.f32.mrf.mxu0
      %9761 = vmatmul.bf16.gmra.mxu0 %v7531
      %v9762 = vpop.f32.mrf.mxu0
      %v9763 = vadd.f32 %v9570, %v9762
      %v9764 = vpop.f32.mrf.mxu0
      %v9765 = vadd.f32 %v9572, %v9764
      %9766 = vmatmul.bf16.gmra.mxu0 %v7534
      %v9767 = vpop.f32.mrf.mxu0
      %v9768 = vadd.f32 %v9575, %v9767
      %v9769 = vpop.f32.mrf.mxu0
      %v9770 = vadd.f32 %v9577, %v9769
      %9771 = vmatmul.bf16.gmra.mxu0 %v7537
      %v9772 = vpop.f32.mrf.mxu0
      %v9773 = vadd.f32 %v9580, %v9772
      %v9774 = vpop.f32.mrf.mxu0
      %v9775 = vadd.f32 %v9582, %v9774
      %9776 = vmatmul.bf16.gmra.mxu0 %v7540
      %v9777 = vpop.f32.mrf.mxu0
      %v9778 = vadd.f32 %v9585, %v9777
      %v9779 = vpop.f32.mrf.mxu0
      %v9780 = vadd.f32 %v9587, %v9779
      %9781 = vdwg.mxu0
      %v9782 = vadd.f32 %v8441, %v9021
      %v9783 = vadd.f32 %v8443, %v9024
      %v9784 = vadd.f32 %v8446, %v9026
      %v9785 = vadd.f32 %v8448, %v9029
      %v9786 = vadd.f32 %v8451, %v9031
      %v9787 = vadd.f32 %v8453, %v9034
      %v9788 = vadd.f32 %v8456, %v9036
      %v9789 = vadd.f32 %v8458, %v9039
      %v9790 = vadd.f32 %v8464, %v9044
      %v9791 = vadd.f32 %v8466, %v9047
      %v9792 = vadd.f32 %v8469, %v9049
      %v9793 = vadd.f32 %v8471, %v9052
      %v9794 = vadd.f32 %v8474, %v9054
      %v9795 = vadd.f32 %v8476, %v9057
      %v9796 = vadd.f32 %v8479, %v9059
      %v9797 = vadd.f32 %v8481, %v9062
      %v9798 = vadd.f32 %v8487, %v9067
      %v9799 = vadd.f32 %v8489, %v9070
      %v9800 = vadd.f32 %v8492, %v9072
      %v9801 = vadd.f32 %v8494, %v9075
      %v9802 = vadd.f32 %v8497, %v9077
      %v9803 = vadd.f32 %v8499, %v9080
      %v9804 = vadd.f32 %v8502, %v9082
      %v9805 = vadd.f32 %v8504, %v9085
      %v9806 = vadd.f32 %v8510, %v9090
      %v9807 = vadd.f32 %v8512, %v9093
      %v9808 = vadd.f32 %v8515, %v9095
      %v9809 = vadd.f32 %v8517, %v9098
      %v9810 = vadd.f32 %v8520, %v9100
      %v9811 = vadd.f32 %v8522, %v9103
      %v9812 = vadd.f32 %v8525, %v9105
      %v9813 = vadd.f32 %v8527, %v9108
      %v9814 = vadd.f32 %v8533, %v9113
      %v9815 = vadd.f32 %v8535, %v9116
      %v9816 = vadd.f32 %v8538, %v9118
      %v9817 = vadd.f32 %v8540, %v9121
      %v9818 = vadd.f32 %v8543, %v9123
      %v9819 = vadd.f32 %v8545, %v9126
      %v9820 = vadd.f32 %v8548, %v9128
      %v9821 = vadd.f32 %v8550, %v9131
      %v9822 = vadd.f32 %v8556, %v9136
      %v9823 = vadd.f32 %v8558, %v9139
      %v9824 = vadd.f32 %v8561, %v9141
      %v9825 = vadd.f32 %v8563, %v9144
      %v9826 = vadd.f32 %v8566, %v9146
      %v9827 = vadd.f32 %v8568, %v9149
      %v9828 = vadd.f32 %v8571, %v9151
      %v9829 = vadd.f32 %v8573, %v9154
      %v9830 = vadd.f32 %v8579, %v9159
      %v9831 = vadd.f32 %v8581, %v9162
      %v9832 = vadd.f32 %v8584, %v9164
      %v9833 = vadd.f32 %v8586, %v9167
      %v9834 = vadd.f32 %v8589, %v9169
      %v9835 = vadd.f32 %v8591, %v9172
      %v9836 = vadd.f32 %v8594, %v9174
      %v9837 = vadd.f32 %v8596, %v9177
      %v9838 = vadd.f32 %v8602, %v9182
      %v9839 = vadd.f32 %v8604, %v9185
      %v9840 = vadd.f32 %v8607, %v9187
      %v9841 = vadd.f32 %v8609, %v9190
      %v9842 = vadd.f32 %v8612, %v9192
      %v9843 = vadd.f32 %v8614, %v9195
      %v9844 = vadd.f32 %v8617, %v9197
      %v9845 = vadd.f32 %v8619, %v9200
      %v9846 = vadd.f32 %v9782, %v9602
      %v9847 = vadd.f32 %v9783, %v9604
      %v9848 = vadd.f32 %v9784, %v9607
      %v9849 = vadd.f32 %v9785, %v9609
      %v9850 = vadd.f32 %v9786, %v9612
      %v9851 = vadd.f32 %v9787, %v9614
      %v9852 = vadd.f32 %v9788, %v9617
      %v9853 = vadd.f32 %v9789, %v9619
      %v9854 = vadd.f32 %v9790, %v9625
      %v9855 = vadd.f32 %v9791, %v9627
      %v9856 = vadd.f32 %v9792, %v9630
      %v9857 = vadd.f32 %v9793, %v9632
      %v9858 = vadd.f32 %v9794, %v9635
      %v9859 = vadd.f32 %v9795, %v9637
      %v9860 = vadd.f32 %v9796, %v9640
      %v9861 = vadd.f32 %v9797, %v9642
      %v9862 = vadd.f32 %v9798, %v9648
      %v9863 = vadd.f32 %v9799, %v9650
      %v9864 = vadd.f32 %v9800, %v9653
      %v9865 = vadd.f32 %v9801, %v9655
      %v9866 = vadd.f32 %v9802, %v9658
      %v9867 = vadd.f32 %v9803, %v9660
      %v9868 = vadd.f32 %v9804, %v9663
      %v9869 = vadd.f32 %v9805, %v9665
      %v9870 = vadd.f32 %v9806, %v9671
      %v9871 = vadd.f32 %v9807, %v9673
      %v9872 = vadd.f32 %v9808, %v9676
      %v9873 = vadd.f32 %v9809, %v9678
      %v9874 = vadd.f32 %v9810, %v9681
      %v9875 = vadd.f32 %v9811, %v9683
      %v9876 = vadd.f32 %v9812, %v9686
      %v9877 = vadd.f32 %v9813, %v9688
      %v9878 = vadd.f32 %v9814, %v9694
      %v9879 = vadd.f32 %v9815, %v9696
      %v9880 = vadd.f32 %v9816, %v9699
      %v9881 = vadd.f32 %v9817, %v9701
      %v9882 = vadd.f32 %v9818, %v9704
      %v9883 = vadd.f32 %v9819, %v9706
      %v9884 = vadd.f32 %v9820, %v9709
      %v9885 = vadd.f32 %v9821, %v9711
      %v9886 = vadd.f32 %v9822, %v9717
      %v9887 = vadd.f32 %v9823, %v9719
      %v9888 = vadd.f32 %v9824, %v9722
      %v9889 = vadd.f32 %v9825, %v9724
      %v9890 = vadd.f32 %v9826, %v9727
      %v9891 = vadd.f32 %v9827, %v9729
      %v9892 = vadd.f32 %v9828, %v9732
      %v9893 = vadd.f32 %v9829, %v9734
      %v9894 = vadd.f32 %v9830, %v9740
      %v9895 = vadd.f32 %v9831, %v9742
      %v9896 = vadd.f32 %v9832, %v9745
      %v9897 = vadd.f32 %v9833, %v9747
      %v9898 = vadd.f32 %v9834, %v9750
      %v9899 = vadd.f32 %v9835, %v9752
      %v9900 = vadd.f32 %v9836, %v9755
      %v9901 = vadd.f32 %v9837, %v9757
      %v9902 = vadd.f32 %v9838, %v9763
      %v9903 = vadd.f32 %v9839, %v9765
      %v9904 = vadd.f32 %v9840, %v9768
      %v9905 = vadd.f32 %v9841, %v9770
      %v9906 = vadd.f32 %v9842, %v9773
      %v9907 = vadd.f32 %v9843, %v9775
      %v9908 = vadd.f32 %v9844, %v9778
      %v9909 = vadd.f32 %v9845, %v9780
      %v9910 = vld [vmem:[%s208] sm:$0xff]
      %v9911 = vld [vmem:[%s208 + $0x8] sm:$0xff]
      %v9912 = vld [vmem:[%s208 + $0x10] sm:$0xff]
      %v9913 = vld [vmem:[%s208 + $0x18] sm:$0xff]
      %v9914 = vld [vmem:[%s208 + $0x20] sm:$0xff]
      %v9915 = vld [vmem:[%s208 + $0x28] sm:$0xff]
      %v9916 = vld [vmem:[%s208 + $0x30] sm:$0xff]
      %v9917 = vld [vmem:[%s208 + $0x38] sm:$0xff]
      %v9918 = vld [vmem:[%s208 + $0x40] sm:$0xff]
      %v9919 = vld [vmem:[%s208 + $0x48] sm:$0xff]
      %v9920 = vld [vmem:[%s208 + $0x50] sm:$0xff]
      %v9921 = vld [vmem:[%s208 + $0x58] sm:$0xff]
      %v9922 = vld [vmem:[%s208 + $0x60] sm:$0xff]
      %v9923 = vld [vmem:[%s208 + $0x68] sm:$0xff]
      %v9924 = vld [vmem:[%s208 + $0x70] sm:$0xff]
      %v9925 = vld [vmem:[%s208 + $0x78] sm:$0xff]
      %v9926 = vld [vmem:[%s208 + $0x80] sm:$0xff]
      %v9927 = vld [vmem:[%s208 + $0x88] sm:$0xff]
      %v9928 = vld [vmem:[%s208 + $0x90] sm:$0xff]
      %v9929 = vld [vmem:[%s208 + $0x98] sm:$0xff]
      %v9930 = vld [vmem:[%s208 + $0xa0] sm:$0xff]
      %v9931 = vld [vmem:[%s208 + $0xa8] sm:$0xff]
      %v9932 = vld [vmem:[%s208 + $0xb0] sm:$0xff]
      %v9933 = vld [vmem:[%s208 + $0xb8] sm:$0xff]
      %v9934 = vld [vmem:[%s208 + $0xc0] sm:$0xff]
      %v9935 = vld [vmem:[%s208 + $0xc8] sm:$0xff]
      %v9936 = vld [vmem:[%s208 + $0xd0] sm:$0xff]
      %v9937 = vld [vmem:[%s208 + $0xd8] sm:$0xff]
      %v9938 = vld [vmem:[%s208 + $0xe0] sm:$0xff]
      %v9939 = vld [vmem:[%s208 + $0xe8] sm:$0xff]
      %v9940 = vld [vmem:[%s208 + $0xf0] sm:$0xff]
      %v9941 = vld [vmem:[%s208 + $0xf8] sm:$0xff]
      %v9942 = vld [vmem:[%s208 + $0x100] sm:$0xff]
      %v9943 = vld [vmem:[%s208 + $0x108] sm:$0xff]
      %v9944 = vld [vmem:[%s208 + $0x110] sm:$0xff]
      %v9945 = vld [vmem:[%s208 + $0x118] sm:$0xff]
      %v9946 = vld [vmem:[%s208 + $0x120] sm:$0xff]
      %v9947 = vld [vmem:[%s208 + $0x128] sm:$0xff]
      %v9948 = vld [vmem:[%s208 + $0x130] sm:$0xff]
      %v9949 = vld [vmem:[%s208 + $0x138] sm:$0xff]
      %v9950 = vld [vmem:[%s208 + $0x140] sm:$0xff]
      %v9951 = vld [vmem:[%s208 + $0x148] sm:$0xff]
      %v9952 = vld [vmem:[%s208 + $0x150] sm:$0xff]
      %v9953 = vld [vmem:[%s208 + $0x158] sm:$0xff]
      %v9954 = vld [vmem:[%s208 + $0x160] sm:$0xff]
      %v9955 = vld [vmem:[%s208 + $0x168] sm:$0xff]
      %v9956 = vld [vmem:[%s208 + $0x170] sm:$0xff]
      %v9957 = vld [vmem:[%s208 + $0x178] sm:$0xff]
      %v9958 = vld [vmem:[%s208 + $0x180] sm:$0xff]
      %v9959 = vld [vmem:[%s208 + $0x188] sm:$0xff]
      %v9960 = vld [vmem:[%s208 + $0x190] sm:$0xff]
      %v9961 = vld [vmem:[%s208 + $0x198] sm:$0xff]
      %v9962 = vld [vmem:[%s208 + $0x1a0] sm:$0xff]
      %v9963 = vld [vmem:[%s208 + $0x1a8] sm:$0xff]
      %v9964 = vld [vmem:[%s208 + $0x1b0] sm:$0xff]
      %v9965 = vld [vmem:[%s208 + $0x1b8] sm:$0xff]
      %v9966 = vld [vmem:[%s208 + $0x1c0] sm:$0xff]
      %v9967 = vld [vmem:[%s208 + $0x1c8] sm:$0xff]
      %v9968 = vld [vmem:[%s208 + $0x1d0] sm:$0xff]
      %v9969 = vld [vmem:[%s208 + $0x1d8] sm:$0xff]
      %v9970 = vld [vmem:[%s208 + $0x1e0] sm:$0xff]
      %v9971 = vld [vmem:[%s208 + $0x1e8] sm:$0xff]
      %v9972 = vld [vmem:[%s208 + $0x1f0] sm:$0xff]
      %v9973 = vld [vmem:[%s208 + $0x1f8] sm:$0xff]
      %v9974 = vadd.f32 %v9910, %v9846
      %v9975 = vadd.f32 %v9911, %v9847
      %v9976 = vadd.f32 %v9912, %v9848
      %v9977 = vadd.f32 %v9913, %v9849
      %v9978 = vadd.f32 %v9914, %v9850
      %v9979 = vadd.f32 %v9915, %v9851
      %v9980 = vadd.f32 %v9916, %v9852
      %v9981 = vadd.f32 %v9917, %v9853
      %v9982 = vadd.f32 %v9918, %v9854
      %v9983 = vadd.f32 %v9919, %v9855
      %v9984 = vadd.f32 %v9920, %v9856
      %v9985 = vadd.f32 %v9921, %v9857
      %v9986 = vadd.f32 %v9922, %v9858
      %v9987 = vadd.f32 %v9923, %v9859
      %v9988 = vadd.f32 %v9924, %v9860
      %v9989 = vadd.f32 %v9925, %v9861
      %v9990 = vadd.f32 %v9926, %v9862
      %v9991 = vadd.f32 %v9927, %v9863
      %v9992 = vadd.f32 %v9928, %v9864
      %v9993 = vadd.f32 %v9929, %v9865
      %v9994 = vadd.f32 %v9930, %v9866
      %v9995 = vadd.f32 %v9931, %v9867
      %v9996 = vadd.f32 %v9932, %v9868
      %v9997 = vadd.f32 %v9933, %v9869
      %v9998 = vadd.f32 %v9934, %v9870
      %v9999 = vadd.f32 %v9935, %v9871
      %v10000 = vadd.f32 %v9936, %v9872
      %v10001 = vadd.f32 %v9937, %v9873
      %v10002 = vadd.f32 %v9938, %v9874
      %v10003 = vadd.f32 %v9939, %v9875
      %v10004 = vadd.f32 %v9940, %v9876
      %v10005 = vadd.f32 %v9941, %v9877
      %v10006 = vadd.f32 %v9942, %v9878
      %v10007 = vadd.f32 %v9943, %v9879
      %v10008 = vadd.f32 %v9944, %v9880
      %v10009 = vadd.f32 %v9945, %v9881
      %v10010 = vadd.f32 %v9946, %v9882
      %v10011 = vadd.f32 %v9947, %v9883
      %v10012 = vadd.f32 %v9948, %v9884
      %v10013 = vadd.f32 %v9949, %v9885
      %v10014 = vadd.f32 %v9950, %v9886
      %v10015 = vadd.f32 %v9951, %v9887
      %v10016 = vadd.f32 %v9952, %v9888
      %v10017 = vadd.f32 %v9953, %v9889
      %v10018 = vadd.f32 %v9954, %v9890
      %v10019 = vadd.f32 %v9955, %v9891
      %v10020 = vadd.f32 %v9956, %v9892
      %v10021 = vadd.f32 %v9957, %v9893
      %v10022 = vadd.f32 %v9958, %v9894
      %v10023 = vadd.f32 %v9959, %v9895
      %v10024 = vadd.f32 %v9960, %v9896
      %v10025 = vadd.f32 %v9961, %v9897
      %v10026 = vadd.f32 %v9962, %v9898
      %v10027 = vadd.f32 %v9963, %v9899
      %v10028 = vadd.f32 %v9964, %v9900
      %v10029 = vadd.f32 %v9965, %v9901
      %v10030 = vadd.f32 %v9966, %v9902
      %v10031 = vadd.f32 %v9967, %v9903
      %v10032 = vadd.f32 %v9968, %v9904
      %v10033 = vadd.f32 %v9969, %v9905
      %v10034 = vadd.f32 %v9970, %v9906
      %v10035 = vadd.f32 %v9971, %v9907
      %v10036 = vadd.f32 %v9972, %v9908
      %v10037 = vadd.f32 %v9973, %v9909
      %10038 = vst [vmem:[%s208] sm:$0xff] %v9974
      %10039 = vst [vmem:[%s208 + $0x8] sm:$0xff] %v9975
      %10040 = vst [vmem:[%s208 + $0x10] sm:$0xff] %v9976
      %10041 = vst [vmem:[%s208 + $0x18] sm:$0xff] %v9977
      %10042 = vst [vmem:[%s208 + $0x20] sm:$0xff] %v9978
      %10043 = vst [vmem:[%s208 + $0x28] sm:$0xff] %v9979
      %10044 = vst [vmem:[%s208 + $0x30] sm:$0xff] %v9980
      %10045 = vst [vmem:[%s208 + $0x38] sm:$0xff] %v9981
      %10046 = vst [vmem:[%s208 + $0x40] sm:$0xff] %v9982
      %10047 = vst [vmem:[%s208 + $0x48] sm:$0xff] %v9983
      %10048 = vst [vmem:[%s208 + $0x50] sm:$0xff] %v9984
      %10049 = vst [vmem:[%s208 + $0x58] sm:$0xff] %v9985
      %10050 = vst [vmem:[%s208 + $0x60] sm:$0xff] %v9986
      %10051 = vst [vmem:[%s208 + $0x68] sm:$0xff] %v9987
      %10052 = vst [vmem:[%s208 + $0x70] sm:$0xff] %v9988
      %10053 = vst [vmem:[%s208 + $0x78] sm:$0xff] %v9989
      %10054 = vst [vmem:[%s208 + $0x80] sm:$0xff] %v9990
      %10055 = vst [vmem:[%s208 + $0x88] sm:$0xff] %v9991
      %10056 = vst [vmem:[%s208 + $0x90] sm:$0xff] %v9992
      %10057 = vst [vmem:[%s208 + $0x98] sm:$0xff] %v9993
      %10058 = vst [vmem:[%s208 + $0xa0] sm:$0xff] %v9994
      %10059 = vst [vmem:[%s208 + $0xa8] sm:$0xff] %v9995
      %10060 = vst [vmem:[%s208 + $0xb0] sm:$0xff] %v9996
      %10061 = vst [vmem:[%s208 + $0xb8] sm:$0xff] %v9997
      %10062 = vst [vmem:[%s208 + $0xc0] sm:$0xff] %v9998
      %10063 = vst [vmem:[%s208 + $0xc8] sm:$0xff] %v9999
      %10064 = vst [vmem:[%s208 + $0xd0] sm:$0xff] %v10000
      %10065 = vst [vmem:[%s208 + $0xd8] sm:$0xff] %v10001
      %10066 = vst [vmem:[%s208 + $0xe0] sm:$0xff] %v10002
      %10067 = vst [vmem:[%s208 + $0xe8] sm:$0xff] %v10003
      %10068 = vst [vmem:[%s208 + $0xf0] sm:$0xff] %v10004
      %10069 = vst [vmem:[%s208 + $0xf8] sm:$0xff] %v10005
      %10070 = vst [vmem:[%s208 + $0x100] sm:$0xff] %v10006
      %10071 = vst [vmem:[%s208 + $0x108] sm:$0xff] %v10007
      %10072 = vst [vmem:[%s208 + $0x110] sm:$0xff] %v10008
      %10073 = vst [vmem:[%s208 + $0x118] sm:$0xff] %v10009
      %10074 = vst [vmem:[%s208 + $0x120] sm:$0xff] %v10010
      %10075 = vst [vmem:[%s208 + $0x128] sm:$0xff] %v10011
      %10076 = vst [vmem:[%s208 + $0x130] sm:$0xff] %v10012
      %10077 = vst [vmem:[%s208 + $0x138] sm:$0xff] %v10013
      %10078 = vst [vmem:[%s208 + $0x140] sm:$0xff] %v10014
      %10079 = vst [vmem:[%s208 + $0x148] sm:$0xff] %v10015
      %10080 = vst [vmem:[%s208 + $0x150] sm:$0xff] %v10016
      %10081 = vst [vmem:[%s208 + $0x158] sm:$0xff] %v10017
      %10082 = vst [vmem:[%s208 + $0x160] sm:$0xff] %v10018
      %10083 = vst [vmem:[%s208 + $0x168] sm:$0xff] %v10019
      %10084 = vst [vmem:[%s208 + $0x170] sm:$0xff] %v10020
      %10085 = vst [vmem:[%s208 + $0x178] sm:$0xff] %v10021
      %10086 = vst [vmem:[%s208 + $0x180] sm:$0xff] %v10022
      %10087 = vst [vmem:[%s208 + $0x188] sm:$0xff] %v10023
      %10088 = vst [vmem:[%s208 + $0x190] sm:$0xff] %v10024
      %10089 = vst [vmem:[%s208 + $0x198] sm:$0xff] %v10025
      %10090 = vst [vmem:[%s208 + $0x1a0] sm:$0xff] %v10026
      %10091 = vst [vmem:[%s208 + $0x1a8] sm:$0xff] %v10027
      %10092 = vst [vmem:[%s208 + $0x1b0] sm:$0xff] %v10028
      %10093 = vst [vmem:[%s208 + $0x1b8] sm:$0xff] %v10029
      %10094 = vst [vmem:[%s208 + $0x1c0] sm:$0xff] %v10030
      %10095 = vst [vmem:[%s208 + $0x1c8] sm:$0xff] %v10031
      %10096 = vst [vmem:[%s208 + $0x1d0] sm:$0xff] %v10032
      %10097 = vst [vmem:[%s208 + $0x1d8] sm:$0xff] %v10033
      %10098 = vst [vmem:[%s208 + $0x1e0] sm:$0xff] %v10034
      %10099 = vst [vmem:[%s208 + $0x1e8] sm:$0xff] %v10035
      %10100 = vst [vmem:[%s208 + $0x1f0] sm:$0xff] %v10036
      %10101 = vst [vmem:[%s208 + $0x1f8] sm:$0xff] %v10037
      %v10102 = vld [vmem:[%s208] sm:$0xff]
      %v10103 = vld [vmem:[%s208 + $0x8] sm:$0xff]
      %v10104 = vld [vmem:[%s208 + $0x10] sm:$0xff]
      %v10105 = vld [vmem:[%s208 + $0x18] sm:$0xff]
      %v10106 = vld [vmem:[%s208 + $0x20] sm:$0xff]
      %v10107 = vld [vmem:[%s208 + $0x28] sm:$0xff]
      %v10108 = vld [vmem:[%s208 + $0x30] sm:$0xff]
      %v10109 = vld [vmem:[%s208 + $0x38] sm:$0xff]
      %v10110 = vld [vmem:[%s208 + $0x40] sm:$0xff]
      %v10111 = vld [vmem:[%s208 + $0x48] sm:$0xff]
      %v10112 = vld [vmem:[%s208 + $0x50] sm:$0xff]
      %v10113 = vld [vmem:[%s208 + $0x58] sm:$0xff]
      %v10114 = vld [vmem:[%s208 + $0x60] sm:$0xff]
      %v10115 = vld [vmem:[%s208 + $0x68] sm:$0xff]
      %v10116 = vld [vmem:[%s208 + $0x70] sm:$0xff]
      %v10117 = vld [vmem:[%s208 + $0x78] sm:$0xff]
      %v10118 = vld [vmem:[%s208 + $0x80] sm:$0xff]
      %v10119 = vld [vmem:[%s208 + $0x88] sm:$0xff]
      %v10120 = vld [vmem:[%s208 + $0x90] sm:$0xff]
      %v10121 = vld [vmem:[%s208 + $0x98] sm:$0xff]
      %v10122 = vld [vmem:[%s208 + $0xa0] sm:$0xff]
      %v10123 = vld [vmem:[%s208 + $0xa8] sm:$0xff]
      %v10124 = vld [vmem:[%s208 + $0xb0] sm:$0xff]
      %v10125 = vld [vmem:[%s208 + $0xb8] sm:$0xff]
      %v10126 = vld [vmem:[%s208 + $0xc0] sm:$0xff]
      %v10127 = vld [vmem:[%s208 + $0xc8] sm:$0xff]
      %v10128 = vld [vmem:[%s208 + $0xd0] sm:$0xff]
      %v10129 = vld [vmem:[%s208 + $0xd8] sm:$0xff]
      %v10130 = vld [vmem:[%s208 + $0xe0] sm:$0xff]
      %v10131 = vld [vmem:[%s208 + $0xe8] sm:$0xff]
      %v10132 = vld [vmem:[%s208 + $0xf0] sm:$0xff]
      %v10133 = vld [vmem:[%s208 + $0xf8] sm:$0xff]
      %v10134 = vld [vmem:[%s208 + $0x100] sm:$0xff]
      %v10135 = vld [vmem:[%s208 + $0x108] sm:$0xff]
      %v10136 = vld [vmem:[%s208 + $0x110] sm:$0xff]
      %v10137 = vld [vmem:[%s208 + $0x118] sm:$0xff]
      %v10138 = vld [vmem:[%s208 + $0x120] sm:$0xff]
      %v10139 = vld [vmem:[%s208 + $0x128] sm:$0xff]
      %v10140 = vld [vmem:[%s208 + $0x130] sm:$0xff]
      %v10141 = vld [vmem:[%s208 + $0x138] sm:$0xff]
      %v10142 = vld [vmem:[%s208 + $0x140] sm:$0xff]
      %v10143 = vld [vmem:[%s208 + $0x148] sm:$0xff]
      %v10144 = vld [vmem:[%s208 + $0x150] sm:$0xff]
      %v10145 = vld [vmem:[%s208 + $0x158] sm:$0xff]
      %v10146 = vld [vmem:[%s208 + $0x160] sm:$0xff]
      %v10147 = vld [vmem:[%s208 + $0x168] sm:$0xff]
      %v10148 = vld [vmem:[%s208 + $0x170] sm:$0xff]
      %v10149 = vld [vmem:[%s208 + $0x178] sm:$0xff]
      %v10150 = vld [vmem:[%s208 + $0x180] sm:$0xff]
      %v10151 = vld [vmem:[%s208 + $0x188] sm:$0xff]
      %v10152 = vld [vmem:[%s208 + $0x190] sm:$0xff]
      %v10153 = vld [vmem:[%s208 + $0x198] sm:$0xff]
      %v10154 = vld [vmem:[%s208 + $0x1a0] sm:$0xff]
      %v10155 = vld [vmem:[%s208 + $0x1a8] sm:$0xff]
      %v10156 = vld [vmem:[%s208 + $0x1b0] sm:$0xff]
      %v10157 = vld [vmem:[%s208 + $0x1b8] sm:$0xff]
      %v10158 = vld [vmem:[%s208 + $0x1c0] sm:$0xff]
      %v10159 = vld [vmem:[%s208 + $0x1c8] sm:$0xff]
      %v10160 = vld [vmem:[%s208 + $0x1d0] sm:$0xff]
      %v10161 = vld [vmem:[%s208 + $0x1d8] sm:$0xff]
      %v10162 = vld [vmem:[%s208 + $0x1e0] sm:$0xff]
      %v10163 = vld [vmem:[%s208 + $0x1e8] sm:$0xff]
      %v10164 = vld [vmem:[%s208 + $0x1f0] sm:$0xff]
      %v10165 = vld [vmem:[%s208 + $0x1f8] sm:$0xff]
      %v10166 = vadd.f32 %v10102, %v10103
      %v10167 = vadd.f32 %v10166, %v10104
      %v10168 = vadd.f32 %v10167, %v10105
      %v10169 = vadd.f32 %v10168, %v10106
      %v10170 = vadd.f32 %v10169, %v10107
      %v10171 = vadd.f32 %v10170, %v10108
      %v10172 = vadd.f32 %v10171, %v10109
      %v10173 = vadd.f32 %v10172, %v10110
      %v10174 = vadd.f32 %v10173, %v10111
      %v10175 = vadd.f32 %v10174, %v10112
      %v10176 = vadd.f32 %v10175, %v10113
      %v10177 = vadd.f32 %v10176, %v10114
      %v10178 = vadd.f32 %v10177, %v10115
      %v10179 = vadd.f32 %v10178, %v10116
      %v10180 = vadd.f32 %v10179, %v10117
      %v10181 = vadd.f32 %v10180, %v10118
      %v10182 = vadd.f32 %v10181, %v10119
      %v10183 = vadd.f32 %v10182, %v10120
      %v10184 = vadd.f32 %v10183, %v10121
      %v10185 = vadd.f32 %v10184, %v10122
      %v10186 = vadd.f32 %v10185, %v10123
      %v10187 = vadd.f32 %v10186, %v10124
      %v10188 = vadd.f32 %v10187, %v10125
      %v10189 = vadd.f32 %v10188, %v10126
      %v10190 = vadd.f32 %v10189, %v10127
      %v10191 = vadd.f32 %v10190, %v10128
      %v10192 = vadd.f32 %v10191, %v10129
      %v10193 = vadd.f32 %v10192, %v10130
      %v10194 = vadd.f32 %v10193, %v10131
      %v10195 = vadd.f32 %v10194, %v10132
      %v10196 = vadd.f32 %v10195, %v10133
      %v10197 = vadd.f32 %v10196, %v10134
      %v10198 = vadd.f32 %v10197, %v10135
      %v10199 = vadd.f32 %v10198, %v10136
      %v10200 = vadd.f32 %v10199, %v10137
      %v10201 = vadd.f32 %v10200, %v10138
      %v10202 = vadd.f32 %v10201, %v10139
      %v10203 = vadd.f32 %v10202, %v10140
      %v10204 = vadd.f32 %v10203, %v10141
      %v10205 = vadd.f32 %v10204, %v10142
      %v10206 = vadd.f32 %v10205, %v10143
      %v10207 = vadd.f32 %v10206, %v10144
      %v10208 = vadd.f32 %v10207, %v10145
      %v10209 = vadd.f32 %v10208, %v10146
      %v10210 = vadd.f32 %v10209, %v10147
      %v10211 = vadd.f32 %v10210, %v10148
      %v10212 = vadd.f32 %v10211, %v10149
      %v10213 = vadd.f32 %v10212, %v10150
      %v10214 = vadd.f32 %v10213, %v10151
      %v10215 = vadd.f32 %v10214, %v10152
      %v10216 = vadd.f32 %v10215, %v10153
      %v10217 = vadd.f32 %v10216, %v10154
      %v10218 = vadd.f32 %v10217, %v10155
      %v10219 = vadd.f32 %v10218, %v10156
      %v10220 = vadd.f32 %v10219, %v10157
      %v10221 = vadd.f32 %v10220, %v10158
      %v10222 = vadd.f32 %v10221, %v10159
      %v10223 = vadd.f32 %v10222, %v10160
      %v10224 = vadd.f32 %v10223, %v10161
      %v10225 = vadd.f32 %v10224, %v10162
      %v10226 = vadd.f32 %v10225, %v10163
      %v10227 = vadd.f32 %v10226, %v10164
      %v10228 = vadd.f32 %v10227, %v10165
      %v10229 = vrot.slane %v10228, 4
      %v10230 = vadd.f32 %v10228, %v10229
      %v10231 = vrot.slane %v10230, 2
      %v10232 = vadd.f32 %v10230, %v10231
      %v10233 = vrot.slane %v10232, 1
      %v10234 = vadd.f32 %v10232, %v10233
      %10235 = vst [vmem:[%s211] sm:$0x1] %v10234
      %v10236 = vmul.f32 %v10102, %v10102
      %v10237 = vmul.f32 %v10103, %v10103
      %v10238 = vmul.f32 %v10104, %v10104
      %v10239 = vmul.f32 %v10105, %v10105
      %v10240 = vmul.f32 %v10106, %v10106
      %v10241 = vmul.f32 %v10107, %v10107
      %v10242 = vmul.f32 %v10108, %v10108
      %v10243 = vmul.f32 %v10109, %v10109
      %v10244 = vmul.f32 %v10110, %v10110
      %v10245 = vmul.f32 %v10111, %v10111
      %v10246 = vmul.f32 %v10112, %v10112
      %v10247 = vmul.f32 %v10113, %v10113
      %v10248 = vmul.f32 %v10114, %v10114
      %v10249 = vmul.f32 %v10115, %v10115
      %v10250 = vmul.f32 %v10116, %v10116
      %v10251 = vmul.f32 %v10117, %v10117
      %v10252 = vmul.f32 %v10118, %v10118
      %v10253 = vmul.f32 %v10119, %v10119
      %v10254 = vmul.f32 %v10120, %v10120
      %v10255 = vmul.f32 %v10121, %v10121
      %v10256 = vmul.f32 %v10122, %v10122
      %v10257 = vmul.f32 %v10123, %v10123
      %v10258 = vmul.f32 %v10124, %v10124
      %v10259 = vmul.f32 %v10125, %v10125
      %v10260 = vmul.f32 %v10126, %v10126
      %v10261 = vmul.f32 %v10127, %v10127
      %v10262 = vmul.f32 %v10128, %v10128
      %v10263 = vmul.f32 %v10129, %v10129
      %v10264 = vmul.f32 %v10130, %v10130
      %v10265 = vmul.f32 %v10131, %v10131
      %v10266 = vmul.f32 %v10132, %v10132
      %v10267 = vmul.f32 %v10133, %v10133
      %v10268 = vmul.f32 %v10134, %v10134
      %v10269 = vmul.f32 %v10135, %v10135
      %v10270 = vmul.f32 %v10136, %v10136
      %v10271 = vmul.f32 %v10137, %v10137
      %v10272 = vmul.f32 %v10138, %v10138
      %v10273 = vmul.f32 %v10139, %v10139
      %v10274 = vmul.f32 %v10140, %v10140
      %v10275 = vmul.f32 %v10141, %v10141
      %v10276 = vmul.f32 %v10142, %v10142
      %v10277 = vmul.f32 %v10143, %v10143
      %v10278 = vmul.f32 %v10144, %v10144
      %v10279 = vmul.f32 %v10145, %v10145
      %v10280 = vmul.f32 %v10146, %v10146
      %v10281 = vmul.f32 %v10147, %v10147
      %v10282 = vmul.f32 %v10148, %v10148
      %v10283 = vmul.f32 %v10149, %v10149
      %v10284 = vmul.f32 %v10150, %v10150
      %v10285 = vmul.f32 %v10151, %v10151
      %v10286 = vmul.f32 %v10152, %v10152
      %v10287 = vmul.f32 %v10153, %v10153
      %v10288 = vmul.f32 %v10154, %v10154
      %v10289 = vmul.f32 %v10155, %v10155
      %v10290 = vmul.f32 %v10156, %v10156
      %v10291 = vmul.f32 %v10157, %v10157
      %v10292 = vmul.f32 %v10158, %v10158
      %v10293 = vmul.f32 %v10159, %v10159
      %v10294 = vmul.f32 %v10160, %v10160
      %v10295 = vmul.f32 %v10161, %v10161
      %v10296 = vmul.f32 %v10162, %v10162
      %v10297 = vmul.f32 %v10163, %v10163
      %v10298 = vmul.f32 %v10164, %v10164
      %v10299 = vmul.f32 %v10165, %v10165
      %v10300 = vadd.f32 %v10236, %v10237
      %v10301 = vadd.f32 %v10300, %v10238
      %v10302 = vadd.f32 %v10301, %v10239
      %v10303 = vadd.f32 %v10302, %v10240
      %v10304 = vadd.f32 %v10303, %v10241
      %v10305 = vadd.f32 %v10304, %v10242
      %v10306 = vadd.f32 %v10305, %v10243
      %v10307 = vadd.f32 %v10306, %v10244
      %v10308 = vadd.f32 %v10307, %v10245
      %v10309 = vadd.f32 %v10308, %v10246
      %v10310 = vadd.f32 %v10309, %v10247
      %v10311 = vadd.f32 %v10310, %v10248
      %v10312 = vadd.f32 %v10311, %v10249
      %v10313 = vadd.f32 %v10312, %v10250
      %v10314 = vadd.f32 %v10313, %v10251
      %v10315 = vadd.f32 %v10314, %v10252
      %v10316 = vadd.f32 %v10315, %v10253
      %v10317 = vadd.f32 %v10316, %v10254
      %v10318 = vadd.f32 %v10317, %v10255
      %v10319 = vadd.f32 %v10318, %v10256
      %v10320 = vadd.f32 %v10319, %v10257
      %v10321 = vadd.f32 %v10320, %v10258
      %v10322 = vadd.f32 %v10321, %v10259
      %v10323 = vadd.f32 %v10322, %v10260
      %v10324 = vadd.f32 %v10323, %v10261
      %v10325 = vadd.f32 %v10324, %v10262
      %v10326 = vadd.f32 %v10325, %v10263
      %v10327 = vadd.f32 %v10326, %v10264
      %v10328 = vadd.f32 %v10327, %v10265
      %v10329 = vadd.f32 %v10328, %v10266
      %v10330 = vadd.f32 %v10329, %v10267
      %v10331 = vadd.f32 %v10330, %v10268
      %v10332 = vadd.f32 %v10331, %v10269
      %v10333 = vadd.f32 %v10332, %v10270
      %v10334 = vadd.f32 %v10333, %v10271
      %v10335 = vadd.f32 %v10334, %v10272
      %v10336 = vadd.f32 %v10335, %v10273
      %v10337 = vadd.f32 %v10336, %v10274
      %v10338 = vadd.f32 %v10337, %v10275
      %v10339 = vadd.f32 %v10338, %v10276
      %v10340 = vadd.f32 %v10339, %v10277
      %v10341 = vadd.f32 %v10340, %v10278
      %v10342 = vadd.f32 %v10341, %v10279
      %v10343 = vadd.f32 %v10342, %v10280
      %v10344 = vadd.f32 %v10343, %v10281
      %v10345 = vadd.f32 %v10344, %v10282
      %v10346 = vadd.f32 %v10345, %v10283
      %v10347 = vadd.f32 %v10346, %v10284
      %v10348 = vadd.f32 %v10347, %v10285
      %v10349 = vadd.f32 %v10348, %v10286
      %v10350 = vadd.f32 %v10349, %v10287
      %v10351 = vadd.f32 %v10350, %v10288
      %v10352 = vadd.f32 %v10351, %v10289
      %v10353 = vadd.f32 %v10352, %v10290
      %v10354 = vadd.f32 %v10353, %v10291
      %v10355 = vadd.f32 %v10354, %v10292
      %v10356 = vadd.f32 %v10355, %v10293
      %v10357 = vadd.f32 %v10356, %v10294
      %v10358 = vadd.f32 %v10357, %v10295
      %v10359 = vadd.f32 %v10358, %v10296
      %v10360 = vadd.f32 %v10359, %v10297
      %v10361 = vadd.f32 %v10360, %v10298
      %v10362 = vadd.f32 %v10361, %v10299
      %v10363 = vrot.slane %v10362, 4
      %v10364 = vadd.f32 %v10362, %v10363
      %v10365 = vrot.slane %v10364, 2
      %v10366 = vadd.f32 %v10364, %v10365
      %v10367 = vrot.slane %v10366, 1
      %v10368 = vadd.f32 %v10366, %v10367
      %10369 = vst [vmem:[%s214] sm:$0x1] %v10368
      %p10370 = scmp.lt.s32.totalorder %s16, 1
      %s10371 = scalar_select %p10370, %s16, 1
      %s10372 = smul.addr %s10371, 64
      %s10373 = smul.addr %s10372, 8
      %s10374 = scalar_lea.vmem %s2, %s10373
      %p10375 = scmp.lt.s32.totalorder %s16, 1
      %s10376 = scalar_select %p10375, %s16, 1
      %s10377 = scalar_lea.vmem %s3, %s10376
      %p10378 = scmp.lt.s32.totalorder %s16, 1
      %s10379 = scalar_select %p10378, %s16, 1
      %s10380 = scalar_lea.vmem %s4, %s10379
      // Predicated region
      $region29: #{basic_block_forward.4} parent=27 // pred_check
        %p10381 = pneg %p81
      $region30: #{basic_block_forward.4} parent=27 // pred_check_branch
        %10383 = sbr.rel (%p10381) target = $region32
      $region31: #{basic_block_forward.4} parent=27 // pred_region
        _
      $region32: #{basic_block_forward.4} parent=27 // pred_fallthru
        _
      // Predicated region
      $region33: #{basic_block_forward.4} parent=27 // pred_check
        %p10384 = pneg %p107
      $region34: #{basic_block_forward.4} parent=27 // pred_check_branch
        %10386 = sbr.rel (%p10384) target = $region36
      $region35: #{basic_block_forward.4} parent=27 // pred_region
        _
      $region36: #{basic_block_forward.4} parent=27 // pred_fallthru
        _
      // Predicated region
      $region37: #{basic_block_forward.4} parent=27 // pred_check
        %p10387 = pneg %p133
      $region38: #{basic_block_forward.4} parent=27 // pred_check_branch
        %10389 = sbr.rel (%p10387) target = $region40
      $region39: #{basic_block_forward.4} parent=27 // pred_region
        _
      $region40: #{basic_block_forward.4} parent=27 // pred_fallthru
        _
    $region28: #{basic_block_forward.4} parent=5 // pred_fallthru
      _
    %p10390 = scmp.le.s32.totalorder 2, %s11
    // Predicated region
    $region41: #{basic_block_forward.4} parent=5 // pred_check
      %p10391 = pneg %p10390
    $region42: #{basic_block_forward.4} parent=5 // pred_check_branch
      %10393 = sbr.rel (%p10391) target = $region44
    $region43: #{basic_block_forward.4} parent=5 // pred_region
      %s10394 = ssub.s32 %s11, 2
      // Predicated region
      $region45: #{basic_block_forward.4} parent=43 // pred_check
        %p10395 = pneg %p87
      $region46: #{basic_block_forward.4} parent=43 // pred_check_branch
        %10397 = sbr.rel (%p10395) target = $region48
      $region47: #{basic_block_forward.4} parent=43 // pred_region
        %p10398 = scmp.lt.s32.totalorder %s17, 1
        %s10399 = scalar_select %p10398, %s17, 1
        %s10400 = smul.addr %s10399, 64
        %s10401 = smul.addr %s10400, 8
        %s10402 = scalar_lea.vmem %s2, %s10401
      $region48: #{basic_block_forward.4} parent=43 // pred_fallthru
        _
      // Predicated region
      $region49: #{basic_block_forward.4} parent=43 // pred_check
        %p10403 = pneg %p113
      $region50: #{basic_block_forward.4} parent=43 // pred_check_branch
        %10405 = sbr.rel (%p10403) target = $region52
      $region51: #{basic_block_forward.4} parent=43 // pred_region
        %p10406 = scmp.lt.s32.totalorder %s17, 1
        %s10407 = scalar_select %p10406, %s17, 1
        %s10408 = scalar_lea.vmem %s3, %s10407
      $region52: #{basic_block_forward.4} parent=43 // pred_fallthru
        _
      // Predicated region
      $region53: #{basic_block_forward.4} parent=43 // pred_check
        %p10409 = pneg %p139
      $region54: #{basic_block_forward.4} parent=43 // pred_check_branch
        %10411 = sbr.rel (%p10409) target = $region56
      $region55: #{basic_block_forward.4} parent=43 // pred_region
        %p10412 = scmp.lt.s32.totalorder %s17, 1
        %s10413 = scalar_select %p10412, %s17, 1
        %s10414 = scalar_lea.vmem %s4, %s10413
      $region56: #{basic_block_forward.4} parent=43 // pred_fallthru
        _
    $region44: #{basic_block_forward.4} parent=5 // pred_fallthru
      _
  $region6: #{basic_block_forward.4} parent=0 // loop_footer
    %s15 = sadd.s32 1, %s11
  $region7: #{basic_block_forward.4} parent=0 // loop_footer_branch
    %10 = sbr.rel target = $region3
  $region8: #{basic_block_forward.4} parent=0 // loop_exit
    _

</llo_original>
